<compile_context>
chip_gen: v7x
topology: tpu7x:2x2x1
jax: 0.10.0
libtpu: 0.0.40
codegen_flags: <defaults>
</compile_context>

<pallas_src>
import jax
import jax.numpy as jnp
from jax import lax
from jax.experimental import pallas as pl
from jax.experimental.pallas import tpu as pltpu

LANE = 128
VMEM_LIMIT = 32 * 1024 * 1024   # safe on v5e/v6e (128 MiB physical) and v7x (64 MiB physical)


# ----------------------------------------------------------------------------
# Fused Pallas kernel: conv1 -> conv2 -> conv3 -> 1x1 proj -> Flatten -> Linear
# ----------------------------------------------------------------------------
def _make_fused_kernel(bs, H3, W3):
    """bs images per grid step; H3 x W3 = final feature-map size (= seq_len positions)."""
    Mp = H3 * W3   # positions per phase == final seq_len

    def kernel(l_ref, w1_ref, b1_ref, w2_ref, b2_ref, w3_ref, b3_ref,
               pw_ref, pb_ref, wfc_ref, fcb_ref, o_ref, q_ref, p3_ref):
        # Padded-plane scratches: their halo borders must read as zero (conv zero-padding).
        # Zeroed every step (tens of KB of vst, negligible) so the kernel stays correct under a
        # "parallel"-sharded grid where a core's first step need not be program_id 0.
        q_ref[...] = jnp.zeros_like(q_ref)
        p3_ref[...] = jnp.zeros_like(p3_ref)

        def mm(a, b):
            return jnp.dot(a, b, preferred_element_type=jnp.float32)

        k1 = l_ref.shape[-1]   # 9 * Cin

        # ----- layer 1: 3x3/s2 conv + ReLU, one K=9*Cin matmul per mod-4 output phase -----
        # Each phase's output is exactly one padded mod-4 plane of layer 2's input, so the store
        # is a contiguous window write into VMEM scratch (no HBM, no strided ops).
        for r4 in range(4):
            a4, ro = (r4 + 1) % 4, (1 if r4 == 3 else 0)
            for c4 in range(4):
                b4, co = (c4 + 1) % 4, (1 if c4 == 3 else 0)
                ph = r4 * 4 + c4
                lhs = l_ref[:, ph * Mp:(ph + 1) * Mp, :].reshape(bs * Mp, k1)
                acc = jnp.maximum(mm(lhs, w1_ref[...]) + b1_ref[...], 0.0)
                q_ref[a4 * 4 + b4, :, ro:ro + H3, co:co + W3, :] = (
                    acc.astype(q_ref.dtype).reshape(bs, H3, W3, LANE))

        # ----- layer 2: 3x3/s2 conv + ReLU, 9 accumulated K=128 matmuls per mod-2 output phase ----
        # Every tap is a contiguous window of one mod-4 plane; each output phase is written straight
        # into the padded mod-2 plane layer 3 needs.
        for al in range(2):
            for be in range(2):
                acc = jnp.zeros((bs * Mp, LANE), jnp.float32)
                for i in range(3):
                    for j in range(3):
                        ki, kj = 2 * al + i, 2 * be + j
                        tap = q_ref[(ki % 4) * 4 + (kj % 4), :,
                                    ki // 4:ki // 4 + H3,
                                    kj // 4:kj // 4 + W3, :]
                        acc = acc + mm(tap.reshape(bs * Mp, LANE), w2_ref[i * 3 + j])
                acc = jnp.maximum(acc + b2_ref[...], 0.0)
                p3_ref[(1 - al) * 2 + (1 - be), :, al:al + H3, be:be + W3, :] = (
                    acc.astype(p3_ref.dtype).reshape(bs, H3, W3, LANE))

        # ----- layer 3: 3x3/s2 conv + ReLU, then fused 1x1 projection (no HBM in between) -----
        acc = jnp.zeros((bs * Mp, LANE), jnp.float32)
        for i in range(3):
            for j in range(3):
                tap = p3_ref[(i % 2) * 2 + (j % 2), :,
                             i // 2:i // 2 + H3, j // 2:j // 2 + W3, :]
                acc = acc + mm(tap.reshape(bs * Mp, LANE), w3_ref[i * 3 + j])
        acc = jnp.maximum(acc + b3_ref[...], 0.0)
        feat = mm(acc.astype(jnp.bfloat16), pw_ref[...]) + pb_ref[...]      # (bs*Mp, 128) f32

        # ----- fused Flatten + Linear(flat_size -> h_size), accumulated over seq positions -----
        # TODO(synk): for large seq_len switch this unrolled per-position loop to a single
        #             lane-concatenated matmul.
        feat3 = feat.astype(jnp.bfloat16).reshape(bs, Mp, LANE)
        out = jnp.zeros((bs, LANE), jnp.float32) + fcb_ref[...]
        for s in range(Mp):
            out = out + mm(feat3[:, s, :], wfc_ref[s])
        o_ref[:, 0, :] = out

    return kernel


def _pick_block_batch(B):
    """Several images per grid step raises matmul M (review #2); keep >=2 grid steps when possible
    so v7x's two TensorCores are both fed via the 'parallel' axis (review #10)."""
    cap = max(1, min(8, B // 2))
    for bs in range(cap, 0, -1):
        if B % bs == 0:
            return bs
    return 1


def _fused_forward_call(L, p, bs, H3, W3):
    B = L.shape[0]
    Mp = H3 * W3
    K1 = L.shape[-1]

    def const(shape):
        return pl.BlockSpec(shape, lambda b, _n=len(shape): (0,) * _n)

    return pl.pallas_call(
        _make_fused_kernel(bs, H3, W3),
        out_shape=jax.ShapeDtypeStruct((B, 1, LANE), jnp.float32),
        grid=(B // bs,),
        in_specs=[
            pl.BlockSpec((bs, 16 * Mp, K1), lambda b: (b, 0, 0)),   # layer-1 phase im2col
            const((K1, LANE)), const((1, LANE)),                    # conv1 weight / bias
            const((9, LANE, LANE)), const((1, LANE)),               # conv2
            const((9, LANE, LANE)), const((1, LANE)),               # conv3
            const((LANE, LANE)), const((1, LANE)),                  # 1x1 proj
            const((Mp, LANE, LANE)), const((1, LANE)),              # fc
        ],
        out_specs=pl.BlockSpec((bs, 1, LANE), lambda b: (b, 0, 0)),
        scratch_shapes=[
            # mod-4 phase planes of layer-1 output (layer-2 input), zero halo included
            pltpu.VMEM((16, bs, H3 + 1, W3 + 1, LANE), jnp.bfloat16),
            # mod-2 phase planes of layer-2 output (layer-3 input)
            pltpu.VMEM((4, bs, H3 + 1, W3 + 1, LANE), jnp.bfloat16),
        ],
        compiler_params=pltpu.CompilerParams(
            dimension_semantics=("parallel",),
            vmem_limit_bytes=VMEM_LIMIT),
    )(L, p["w1"], p["b1"], p["w2"], p["b2"], p["w3"], p["b3"],
      p["pw"], p["pb"], p["fc_w"], p["fc_b"])


# ----------------------------------------------------------------------------
# ConvEmbedder forward
# ----------------------------------------------------------------------------
def conv_embedder_forward(prepped, x_nchw, h_size):
    """x: (B, C, H, W) float32 -> (B, h_size) float32"""
    x = jnp.transpose(x_nchw, (0, 2, 3, 1))              # NCHW -> NHWC
    B, H0, W0, Cin = x.shape
    # Three stride-2/pad-1/k3 convs + mod-4 output-phase split => H, W divisible by 8.
    # TODO(synk): general/odd spatial sizes (e.g. 84 -> 42 -> 21 -> 11).
    assert H0 % 8 == 0 and W0 % 8 == 0, (H0, W0)
    H3, W3 = H0 // 8, W0 // 8

    # Layer-1 im2col, grouped per mod-4 output phase.  This is the ONLY wrapper-side data prep:
    # cheap XLA strided slices of the raw Cin-channel input (~2.25x its element count in bf16);
    # everything downstream stays in VMEM inside the fused kernel.
    xp = jnp.pad(x, ((0, 0), (1, 1), (1, 1), (0, 0)))
    taps = [xp[:, i:i + H0:2, j:j + W0:2, :] for i in range(3) for j in range(3)]
    col = jnp.concatenate(taps, axis=-1)                 # (B, H0/2, W0/2, 9*Cin)
    phases = [col[:, r4::4, c4::4, :].reshape(B, H3 * W3, 9 * Cin)
              for r4 in range(4) for c4 in range(4)]
    L = jnp.concatenate(phases, axis=1).astype(jnp.bfloat16)   # (B, 16*H3*W3, 9*Cin)

    bs = _pick_block_batch(B)
    out = _fused_forward_call(L, prepped, bs, H3, W3)    # (B, 1, 128) f32, lane-dense
    return out[:, 0, :h_size]


# ----------------------------------------------------------------------------
# Parameters (PyTorch layout) + one-time prep into lane-dense / bf16 matmul form
# ----------------------------------------------------------------------------
def init_params(key, in_ch, h_size, img_hw):
    ks = jax.random.split(key, 10)

    def w(k, shape, fan_in):
        return (jax.random.normal(k, shape, jnp.float32) / jnp.sqrt(fan_in)).astype(jnp.float32)

    c1, c2, c3 = 16, 32, 32
    params = {
        "conv1_w": w(ks[0], (c1, in_ch, 3, 3), in_ch * 9),
        "conv1_b": 0.1 * jax.random.normal(ks[5], (c1,), jnp.float32),
        "conv2_w": w(ks[1], (c2, c1, 3, 3), c1 * 9),
        "conv2_b": 0.1 * jax.random.normal(ks[6], (c2,), jnp.float32),
        "conv3_w": w(ks[2], (c3, c2, 3, 3), c2 * 9),
        "conv3_b": 0.1 * jax.random.normal(ks[7], (c3,), jnp.float32),
        "proj_w": w(ks[3], (h_size, c3, 1, 1), c3),      # 1x1 conv -> emb_size
        "proj_b": 0.1 * jax.random.normal(ks[8], (h_size,), jnp.float32),
    }
    hh, ww = img_hw
    for _ in range(3):                                   # three stride-2, pad-1, k=3 convs
        hh = (hh + 2 - 3) // 2 + 1
        ww = (ww + 2 - 3) // 2 + 1
    seq_len = hh * ww
    flat_size = seq_len * h_size
    params["fc_w"] = w(ks[4], (h_size, flat_size), flat_size)   # PyTorch Linear: (out, in)
    params["fc_b"] = 0.1 * jax.random.normal(ks[9], (h_size,), jnp.float32)
    return params, seq_len, flat_size


def prep_params(params, h_size, seq_len):
    """One-time weight prep: transpose to matmul layout, zero-pad channels to 128 lanes, bf16."""
    assert h_size <= LANE

    def pad_axis(a, axis, n):
        pw = [(0, 0)] * a.ndim
        pw[axis] = (0, n - a.shape[axis])
        return jnp.pad(a, pw)

    def pad_bias(b):
        return pad_axis(b, 0, LANE).reshape(1, LANE).astype(jnp.float32)

    def conv_w_taps(w_oihw):
        cout, cin, kh, kw = w_oihw.shape
        w = jnp.transpose(w_oihw, (2, 3, 1, 0)).reshape(kh * kw, cin, cout)   # (9, Cin, Cout)
        return pad_axis(pad_axis(w, 1, LANE), 2, LANE).astype(jnp.bfloat16)

    cin = params["conv1_w"].shape[1]
    c1 = params["conv1_w"].shape[0]
    w1 = jnp.transpose(params["conv1_w"], (2, 3, 1, 0)).reshape(9 * cin, c1)  # (9*Cin, Cout)
    prepped = {
        "w1": pad_axis(w1, 1, LANE).astype(jnp.bfloat16),     # single K=9*Cin matmul weight
        "b1": pad_bias(params["conv1_b"]),
        "w2": conv_w_taps(params["conv2_w"]),                 # (9, 128, 128)
        "b2": pad_bias(params["conv2_b"]),
        "w3": conv_w_taps(params["conv3_w"]),
        "b3": pad_bias(params["conv3_b"]),
    }
    c3 = params["proj_w"].shape[1]
    pw = jnp.transpose(params["proj_w"], (2, 3, 1, 0)).reshape(c3, h_size)
    prepped["pw"] = pad_axis(pad_axis(pw, 0, LANE), 1, LANE).astype(jnp.bfloat16)   # (128, 128)
    prepped["pb"] = pad_bias(params["proj_b"])
    # Linear(flat_size, h_size): rows reorganised to (seq, emb, out); emb/out padded to 128 lanes.
    fc = params["fc_w"].T.reshape(seq_len, h_size, h_size)
    prepped["fc_w"] = pad_axis(pad_axis(fc, 1, LANE), 2, LANE).astype(jnp.bfloat16)  # (seq,128,128)
    prepped["fc_b"] = pad_bias(params["fc_b"])
    return prepped


# ----------------------------------------------------------------------------
# Pure-JAX reference (same bf16-input / f32-accumulate quantization points)
# ----------------------------------------------------------------------------
def conv_ref(x, w_oihw, b, stride, pad, relu):
    w = jnp.transpose(w_oihw, (2, 3, 1, 0)).astype(jnp.bfloat16)
    y = lax.conv_general_dilated(
        x.astype(jnp.bfloat16), w, (stride, stride), [(pad, pad), (pad, pad)],
        dimension_numbers=("NHWC", "HWIO", "NHWC"),
        preferred_element_type=jnp.float32)
    y = y + b.reshape(1, 1, 1, -1)
    return jnp.maximum(y, 0.0) if relu else y


def reference_forward(params, x_nchw):
    x = jnp.transpose(x_nchw, (0, 2, 3, 1))
    x = conv_ref(x, params["conv1_w"], params["conv1_b"], 2, 1, True)
    x = conv_ref(x, params["conv2_w"], params["conv2_b"], 2, 1, True)
    x = conv_ref(x, params["conv3_w"], params["conv3_b"], 2, 1, True)
    x = conv_ref(x, params["proj_w"], params["proj_b"], 1, 0, False)
    B = x.shape[0]
    flat = x.reshape(B, -1).astype(jnp.bfloat16)
    return jnp.dot(flat, params["fc_w"].T.astype(jnp.bfloat16),
                   preferred_element_type=jnp.float32) + params["fc_b"]


if __name__ == "__main__":
    B, C, H, W = 2, 4, 16, 16
    H_SIZE = 32
    key = jax.random.PRNGKey(0)
    k_x, k_p = jax.random.split(key)
    x = jax.random.normal(k_x, (B, C, H, W), jnp.float32)

    params, seq_len, flat_size = init_params(k_p, C, H_SIZE, (H, W))
    # ConvEmbedder.__init__ prints the flat feature size
    print("Flat Features Size:", flat_size)

    prepped = prep_params(params, H_SIZE, seq_len)
    fwd = jax.jit(conv_embedder_forward, static_argnames=("h_size",))
    out = jax.block_until_ready(fwd(prepped, x, h_size=H_SIZE))
    assert out.shape == (B, H_SIZE), out.shape

    ref = jax.block_until_ready(reference_forward(params, x))
    max_err = float(jnp.max(jnp.abs(out - ref)))
    assert jnp.allclose(out, ref, atol=2e-2, rtol=2e-2), max_err

    print("KERNEL_OK")
</pallas_src>

<mosaic_0001>
module attributes {stable_mosaic.version = 11 : i64} {
  func.func @kernel(%arg0: i32, %arg1: memref<1x64x36xbf16, #tpu.memory_space<vmem>>, %arg2: memref<36x128xbf16, #tpu.memory_space<vmem>>, %arg3: memref<1x128xf32, #tpu.memory_space<vmem>>, %arg4: memref<9x128x128xbf16, #tpu.memory_space<vmem>>, %arg5: memref<1x128xf32, #tpu.memory_space<vmem>>, %arg6: memref<9x128x128xbf16, #tpu.memory_space<vmem>>, %arg7: memref<1x128xf32, #tpu.memory_space<vmem>>, %arg8: memref<128x128xbf16, #tpu.memory_space<vmem>>, %arg9: memref<1x128xf32, #tpu.memory_space<vmem>>, %arg10: memref<4x128x128xbf16, #tpu.memory_space<vmem>>, %arg11: memref<1x128xf32, #tpu.memory_space<vmem>>, %arg12: memref<1x1x128xf32, #tpu.memory_space<vmem>>, %arg13: memref<16x1x3x3x128xbf16, #tpu.memory_space<vmem>>, %arg14: memref<4x1x3x3x128xbf16, #tpu.memory_space<vmem>>) attributes {dimension_semantics = [#tpu.dimension_semantics<parallel>], iteration_bounds = array<i64: 2>, scalar_prefetch = 0 : i64, scratch_operands = 2 : i64, tpu.core_type = #tpu.core_type<tc>, window_params = [{transform_indices = @transform_0, window_bounds = array<i64: 1, 64, 36>}, {pipeline_mode = #tpu.pipeline_mode<synchronous>, transform_indices = @transform_1, window_bounds = array<i64: 36, 128>}, {pipeline_mode = #tpu.pipeline_mode<synchronous>, transform_indices = @transform_2, window_bounds = array<i64: 1, 128>}, {pipeline_mode = #tpu.pipeline_mode<synchronous>, transform_indices = @transform_3, window_bounds = array<i64: 9, 128, 128>}, {pipeline_mode = #tpu.pipeline_mode<synchronous>, transform_indices = @transform_4, window_bounds = array<i64: 1, 128>}, {pipeline_mode = #tpu.pipeline_mode<synchronous>, transform_indices = @transform_5, window_bounds = array<i64: 9, 128, 128>}, {pipeline_mode = #tpu.pipeline_mode<synchronous>, transform_indices = @transform_6, window_bounds = array<i64: 1, 128>}, {pipeline_mode = #tpu.pipeline_mode<synchronous>, transform_indices = @transform_7, window_bounds = array<i64: 128, 128>}, {pipeline_mode = #tpu.pipeline_mode<synchronous>, transform_indices = @transform_8, window_bounds = array<i64: 1, 128>}, {pipeline_mode = #tpu.pipeline_mode<synchronous>, transform_indices = @transform_9, window_bounds = array<i64: 4, 128, 128>}, {pipeline_mode = #tpu.pipeline_mode<synchronous>, transform_indices = @transform_10, window_bounds = array<i64: 1, 128>}, {transform_indices = @transform_11, window_bounds = array<i64: 1, 1, 128>}]} {
    %cst = arith.constant 0.000000e+00 : bf16
    %0 = vector.broadcast %cst : bf16 to vector<16x1x3x3x128xbf16>
    %c0 = arith.constant 0 : index
    %c0_0 = arith.constant 0 : index
    %c0_1 = arith.constant 0 : index
    %c0_2 = arith.constant 0 : index
    %c0_3 = arith.constant 0 : index
    %1 = vector.load %arg13[%c0, %c0_0, %c0_1, %c0_2, %c0_3] : memref<16x1x3x3x128xbf16, #tpu.memory_space<vmem>>, vector<16x1x3x3x128xbf16>
    tpu.vector_store %arg13[%c0, %c0_0, %c0_1, %c0_2, %c0_3], %0 {strides = array<i32>} : memref<16x1x3x3x128xbf16, #tpu.memory_space<vmem>>, vector<16x1x3x3x128xbf16>,
    %cst_4 = arith.constant 0.000000e+00 : bf16
    %2 = vector.broadcast %cst_4 : bf16 to vector<4x1x3x3x128xbf16>
    %c0_5 = arith.constant 0 : index
    %c0_6 = arith.constant 0 : index
    %c0_7 = arith.constant 0 : index
    %c0_8 = arith.constant 0 : index
    %c0_9 = arith.constant 0 : index
    %3 = vector.load %arg14[%c0_5, %c0_6, %c0_7, %c0_8, %c0_9] : memref<4x1x3x3x128xbf16, #tpu.memory_space<vmem>>, vector<4x1x3x3x128xbf16>
    tpu.vector_store %arg14[%c0_5, %c0_6, %c0_7, %c0_8, %c0_9], %2 {strides = array<i32>} : memref<4x1x3x3x128xbf16, #tpu.memory_space<vmem>>, vector<4x1x3x3x128xbf16>,
    %c0_10 = arith.constant 0 : index
    %c0_11 = arith.constant 0 : index
    %c0_12 = arith.constant 0 : index
    %4 = vector.load %arg1[%c0_10, %c0_11, %c0_12] : memref<1x64x36xbf16, #tpu.memory_space<vmem>>, vector<1x4x36xbf16>
    %5 = vector.shape_cast %4 : vector<1x4x36xbf16> to vector<4x36xbf16>
    %c0_13 = arith.constant 0 : index
    %c0_14 = arith.constant 0 : index
    %6 = vector.load %arg2[%c0_13, %c0_14] : memref<36x128xbf16, #tpu.memory_space<vmem>>, vector<36x128xbf16>
    %cst_15 = arith.constant dense<0.000000e+00> : vector<4x128xf32>
    %7 = tpu.matmul %5, %6, %cst_15 {dimension_numbers = #tpu.dot_dimension_numbers<[1], [0], [0], [1], [0, 0, 1, 1], [], []>} : vector<4x36xbf16>, vector<36x128xbf16>, vector<4x128xf32> -> vector<4x128xf32>
    %c0_16 = arith.constant 0 : index
    %c0_17 = arith.constant 0 : index
    %8 = vector.load %arg3[%c0_16, %c0_17] : memref<1x128xf32, #tpu.memory_space<vmem>>, vector<1x128xf32>
    %9 = vector.broadcast %8 : vector<1x128xf32> to vector<4x128xf32>
    %10 = arith.addf %7, %9 : vector<4x128xf32>
    %cst_18 = arith.constant 0.000000e+00 : f32
    %11 = vector.broadcast %cst_18 : f32 to vector<4x128xf32>
    %12 = arith.maximumf %10, %11 : vector<4x128xf32>
    %13 = arith.truncf %12 : vector<4x128xf32> to vector<4x128xbf16>
    %14 = vector.shape_cast %13 : vector<4x128xbf16> to vector<1x2x2x128xbf16>
    %c5 = arith.constant 5 : index
    %c0_19 = arith.constant 0 : index
    %c0_20 = arith.constant 0 : index
    %c0_21 = arith.constant 0 : index
    %c0_22 = arith.constant 0 : index
    %15 = vector.load %arg13[%c5, %c0_19, %c0_20, %c0_21, %c0_22] : memref<16x1x3x3x128xbf16, #tpu.memory_space<vmem>>, vector<1x1x2x2x128xbf16>
    %16 = vector.shape_cast %15 : vector<1x1x2x2x128xbf16> to vector<1x2x2x128xbf16>
    %17 = vector.shape_cast %14 : vector<1x2x2x128xbf16> to vector<1x1x2x2x128xbf16>
    tpu.vector_store %arg13[%c5, %c0_19, %c0_20, %c0_21, %c0_22], %17 {strides = array<i32>} : memref<16x1x3x3x128xbf16, #tpu.memory_space<vmem>>, vector<1x1x2x2x128xbf16>,
    %c0_23 = arith.constant 0 : index
    %c4 = arith.constant 4 : index
    %c0_24 = arith.constant 0 : index
    %18 = vector.load %arg1[%c0_23, %c4, %c0_24] : memref<1x64x36xbf16, #tpu.memory_space<vmem>>, vector<1x4x36xbf16>
    %19 = vector.shape_cast %18 : vector<1x4x36xbf16> to vector<4x36xbf16>
    %c0_25 = arith.constant 0 : index
    %c0_26 = arith.constant 0 : index
    %20 = vector.load %arg2[%c0_25, %c0_26] : memref<36x128xbf16, #tpu.memory_space<vmem>>, vector<36x128xbf16>
    %cst_27 = arith.constant dense<0.000000e+00> : vector<4x128xf32>
    %21 = tpu.matmul %19, %20, %cst_27 {dimension_numbers = #tpu.dot_dimension_numbers<[1], [0], [0], [1], [0, 0, 1, 1], [], []>} : vector<4x36xbf16>, vector<36x128xbf16>, vector<4x128xf32> -> vector<4x128xf32>
    %c0_28 = arith.constant 0 : index
    %c0_29 = arith.constant 0 : index
    %22 = vector.load %arg3[%c0_28, %c0_29] : memref<1x128xf32, #tpu.memory_space<vmem>>, vector<1x128xf32>
    %23 = vector.broadcast %22 : vector<1x128xf32> to vector<4x128xf32>
    %24 = arith.addf %21, %23 : vector<4x128xf32>
    %cst_30 = arith.constant 0.000000e+00 : f32
    %25 = vector.broadcast %cst_30 : f32 to vector<4x128xf32>
    %26 = arith.maximumf %24, %25 : vector<4x128xf32>
    %27 = arith.truncf %26 : vector<4x128xf32> to vector<4x128xbf16>
    %28 = vector.shape_cast %27 : vector<4x128xbf16> to vector<1x2x2x128xbf16>
    %c6 = arith.constant 6 : index
    %c0_31 = arith.constant 0 : index
    %c0_32 = arith.constant 0 : index
    %c0_33 = arith.constant 0 : index
    %c0_34 = arith.constant 0 : index
    %29 = vector.load %arg13[%c6, %c0_31, %c0_32, %c0_33, %c0_34] : memref<16x1x3x3x128xbf16, #tpu.memory_space<vmem>>, vector<1x1x2x2x128xbf16>
    %30 = vector.shape_cast %29 : vector<1x1x2x2x128xbf16> to vector<1x2x2x128xbf16>
    %31 = vector.shape_cast %28 : vector<1x2x2x128xbf16> to vector<1x1x2x2x128xbf16>
    tpu.vector_store %arg13[%c6, %c0_31, %c0_32, %c0_33, %c0_34], %31 {strides = array<i32>} : memref<16x1x3x3x128xbf16, #tpu.memory_space<vmem>>, vector<1x1x2x2x128xbf16>,
    %c0_35 = arith.constant 0 : index
    %c8 = arith.constant 8 : index
    %c0_36 = arith.constant 0 : index
    %32 = vector.load %arg1[%c0_35, %c8, %c0_36] : memref<1x64x36xbf16, #tpu.memory_space<vmem>>, vector<1x4x36xbf16>
    %33 = vector.shape_cast %32 : vector<1x4x36xbf16> to vector<4x36xbf16>
    %c0_37 = arith.constant 0 : index
    %c0_38 = arith.constant 0 : index
    %34 = vector.load %arg2[%c0_37, %c0_38] : memref<36x128xbf16, #tpu.memory_space<vmem>>, vector<36x128xbf16>
    %cst_39 = arith.constant dense<0.000000e+00> : vector<4x128xf32>
    %35 = tpu.matmul %33, %34, %cst_39 {dimension_numbers = #tpu.dot_dimension_numbers<[1], [0], [0], [1], [0, 0, 1, 1], [], []>} : vector<4x36xbf16>, vector<36x128xbf16>, vector<4x128xf32> -> vector<4x128xf32>
    %c0_40 = arith.constant 0 : index
    %c0_41 = arith.constant 0 : index
    %36 = vector.load %arg3[%c0_40, %c0_41] : memref<1x128xf32, #tpu.memory_space<vmem>>, vector<1x128xf32>
    %37 = vector.broadcast %36 : vector<1x128xf32> to vector<4x128xf32>
    %38 = arith.addf %35, %37 : vector<4x128xf32>
    %cst_42 = arith.constant 0.000000e+00 : f32
    %39 = vector.broadcast %cst_42 : f32 to vector<4x128xf32>
    %40 = arith.maximumf %38, %39 : vector<4x128xf32>
    %41 = arith.truncf %40 : vector<4x128xf32> to vector<4x128xbf16>
    %42 = vector.shape_cast %41 : vector<4x128xbf16> to vector<1x2x2x128xbf16>
    %c7 = arith.constant 7 : index
    %c0_43 = arith.constant 0 : index
    %c0_44 = arith.constant 0 : index
    %c0_45 = arith.constant 0 : index
    %c0_46 = arith.constant 0 : index
    %43 = vector.load %arg13[%c7, %c0_43, %c0_44, %c0_45, %c0_46] : memref<16x1x3x3x128xbf16, #tpu.memory_space<vmem>>, vector<1x1x2x2x128xbf16>
    %44 = vector.shape_cast %43 : vector<1x1x2x2x128xbf16> to vector<1x2x2x128xbf16>
    %45 = vector.shape_cast %42 : vector<1x2x2x128xbf16> to vector<1x1x2x2x128xbf16>
    tpu.vector_store %arg13[%c7, %c0_43, %c0_44, %c0_45, %c0_46], %45 {strides = array<i32>} : memref<16x1x3x3x128xbf16, #tpu.memory_space<vmem>>, vector<1x1x2x2x128xbf16>,
    %c0_47 = arith.constant 0 : index
    %c12 = arith.constant 12 : index
    %c0_48 = arith.constant 0 : index
    %46 = vector.load %arg1[%c0_47, %c12, %c0_48] : memref<1x64x36xbf16, #tpu.memory_space<vmem>>, vector<1x4x36xbf16>
    %47 = vector.shape_cast %46 : vector<1x4x36xbf16> to vector<4x36xbf16>
    %c0_49 = arith.constant 0 : index
    %c0_50 = arith.constant 0 : index
    %48 = vector.load %arg2[%c0_49, %c0_50] : memref<36x128xbf16, #tpu.memory_space<vmem>>, vector<36x128xbf16>
    %cst_51 = arith.constant dense<0.000000e+00> : vector<4x128xf32>
    %49 = tpu.matmul %47, %48, %cst_51 {dimension_numbers = #tpu.dot_dimension_numbers<[1], [0], [0], [1], [0, 0, 1, 1], [], []>} : vector<4x36xbf16>, vector<36x128xbf16>, vector<4x128xf32> -> vector<4x128xf32>
    %c0_52 = arith.constant 0 : index
    %c0_53 = arith.constant 0 : index
    %50 = vector.load %arg3[%c0_52, %c0_53] : memref<1x128xf32, #tpu.memory_space<vmem>>, vector<1x128xf32>
    %51 = vector.broadcast %50 : vector<1x128xf32> to vector<4x128xf32>
    %52 = arith.addf %49, %51 : vector<4x128xf32>
    %cst_54 = arith.constant 0.000000e+00 : f32
    %53 = vector.broadcast %cst_54 : f32 to vector<4x128xf32>
    %54 = arith.maximumf %52, %53 : vector<4x128xf32>
    %55 = arith.truncf %54 : vector<4x128xf32> to vector<4x128xbf16>
    %56 = vector.shape_cast %55 : vector<4x128xbf16> to vector<1x2x2x128xbf16>
    %c4_55 = arith.constant 4 : index
    %c0_56 = arith.constant 0 : index
    %c0_57 = arith.constant 0 : index
    %c1 = arith.constant 1 : index
    %c0_58 = arith.constant 0 : index
    %57 = vector.load %arg13[%c4_55, %c0_56, %c0_57, %c1, %c0_58] : memref<16x1x3x3x128xbf16, #tpu.memory_space<vmem>>, vector<1x1x2x2x128xbf16>
    %58 = vector.shape_cast %57 : vector<1x1x2x2x128xbf16> to vector<1x2x2x128xbf16>
    %59 = vector.shape_cast %56 : vector<1x2x2x128xbf16> to vector<1x1x2x2x128xbf16>
    tpu.vector_store %arg13[%c4_55, %c0_56, %c0_57, %c1, %c0_58], %59 {strides = array<i32>} : memref<16x1x3x3x128xbf16, #tpu.memory_space<vmem>>, vector<1x1x2x2x128xbf16>,
    %c0_59 = arith.constant 0 : index
    %c16 = arith.constant 16 : index
    %c0_60 = arith.constant 0 : index
    %60 = vector.load %arg1[%c0_59, %c16, %c0_60] : memref<1x64x36xbf16, #tpu.memory_space<vmem>>, vector<1x4x36xbf16>
    %61 = vector.shape_cast %60 : vector<1x4x36xbf16> to vector<4x36xbf16>
    %c0_61 = arith.constant 0 : index
    %c0_62 = arith.constant 0 : index
    %62 = vector.load %arg2[%c0_61, %c0_62] : memref<36x128xbf16, #tpu.memory_space<vmem>>, vector<36x128xbf16>
    %cst_63 = arith.constant dense<0.000000e+00> : vector<4x128xf32>
    %63 = tpu.matmul %61, %62, %cst_63 {dimension_numbers = #tpu.dot_dimension_numbers<[1], [0], [0], [1], [0, 0, 1, 1], [], []>} : vector<4x36xbf16>, vector<36x128xbf16>, vector<4x128xf32> -> vector<4x128xf32>
    %c0_64 = arith.constant 0 : index
    %c0_65 = arith.constant 0 : index
    %64 = vector.load %arg3[%c0_64, %c0_65] : memref<1x128xf32, #tpu.memory_space<vmem>>, vector<1x128xf32>
    %65 = vector.broadcast %64 : vector<1x128xf32> to vector<4x128xf32>
    %66 = arith.addf %63, %65 : vector<4x128xf32>
    %cst_66 = arith.constant 0.000000e+00 : f32
    %67 = vector.broadcast %cst_66 : f32 to vector<4x128xf32>
    %68 = arith.maximumf %66, %67 : vector<4x128xf32>
    %69 = arith.truncf %68 : vector<4x128xf32> to vector<4x128xbf16>
    %70 = vector.shape_cast %69 : vector<4x128xbf16> to vector<1x2x2x128xbf16>
    %c9 = arith.constant 9 : index
    %c0_67 = arith.constant 0 : index
    %c0_68 = arith.constant 0 : index
    %c0_69 = arith.constant 0 : index
    %c0_70 = arith.constant 0 : index
    %71 = vector.load %arg13[%c9, %c0_67, %c0_68, %c0_69, %c0_70] : memref<16x1x3x3x128xbf16, #tpu.memory_space<vmem>>, vector<1x1x2x2x128xbf16>
    %72 = vector.shape_cast %71 : vector<1x1x2x2x128xbf16> to vector<1x2x2x128xbf16>
    %73 = vector.shape_cast %70 : vector<1x2x2x128xbf16> to vector<1x1x2x2x128xbf16>
    tpu.vector_store %arg13[%c9, %c0_67, %c0_68, %c0_69, %c0_70], %73 {strides = array<i32>} : memref<16x1x3x3x128xbf16, #tpu.memory_space<vmem>>, vector<1x1x2x2x128xbf16>,
    %c0_71 = arith.constant 0 : index
    %c20 = arith.constant 20 : index
    %c0_72 = arith.constant 0 : index
    %74 = vector.load %arg1[%c0_71, %c20, %c0_72] : memref<1x64x36xbf16, #tpu.memory_space<vmem>>, vector<1x4x36xbf16>
    %75 = vector.shape_cast %74 : vector<1x4x36xbf16> to vector<4x36xbf16>
    %c0_73 = arith.constant 0 : index
    %c0_74 = arith.constant 0 : index
    %76 = vector.load %arg2[%c0_73, %c0_74] : memref<36x128xbf16, #tpu.memory_space<vmem>>, vector<36x128xbf16>
    %cst_75 = arith.constant dense<0.000000e+00> : vector<4x128xf32>
    %77 = tpu.matmul %75, %76, %cst_75 {dimension_numbers = #tpu.dot_dimension_numbers<[1], [0], [0], [1], [0, 0, 1, 1], [], []>} : vector<4x36xbf16>, vector<36x128xbf16>, vector<4x128xf32> -> vector<4x128xf32>
    %c0_76 = arith.constant 0 : index
    %c0_77 = arith.constant 0 : index
    %78 = vector.load %arg3[%c0_76, %c0_77] : memref<1x128xf32, #tpu.memory_space<vmem>>, vector<1x128xf32>
    %79 = vector.broadcast %78 : vector<1x128xf32> to vector<4x128xf32>
    %80 = arith.addf %77, %79 : vector<4x128xf32>
    %cst_78 = arith.constant 0.000000e+00 : f32
    %81 = vector.broadcast %cst_78 : f32 to vector<4x128xf32>
    %82 = arith.maximumf %80, %81 : vector<4x128xf32>
    %83 = arith.truncf %82 : vector<4x128xf32> to vector<4x128xbf16>
    %84 = vector.shape_cast %83 : vector<4x128xbf16> to vector<1x2x2x128xbf16>
    %c10 = arith.constant 10 : index
    %c0_79 = arith.constant 0 : index
    %c0_80 = arith.constant 0 : index
    %c0_81 = arith.constant 0 : index
    %c0_82 = arith.constant 0 : index
    %85 = vector.load %arg13[%c10, %c0_79, %c0_80, %c0_81, %c0_82] : memref<16x1x3x3x128xbf16, #tpu.memory_space<vmem>>, vector<1x1x2x2x128xbf16>
    %86 = vector.shape_cast %85 : vector<1x1x2x2x128xbf16> to vector<1x2x2x128xbf16>
    %87 = vector.shape_cast %84 : vector<1x2x2x128xbf16> to vector<1x1x2x2x128xbf16>
    tpu.vector_store %arg13[%c10, %c0_79, %c0_80, %c0_81, %c0_82], %87 {strides = array<i32>} : memref<16x1x3x3x128xbf16, #tpu.memory_space<vmem>>, vector<1x1x2x2x128xbf16>,
    %c0_83 = arith.constant 0 : index
    %c24 = arith.constant 24 : index
    %c0_84 = arith.constant 0 : index
    %88 = vector.load %arg1[%c0_83, %c24, %c0_84] : memref<1x64x36xbf16, #tpu.memory_space<vmem>>, vector<1x4x36xbf16>
    %89 = vector.shape_cast %88 : vector<1x4x36xbf16> to vector<4x36xbf16>
    %c0_85 = arith.constant 0 : index
    %c0_86 = arith.constant 0 : index
    %90 = vector.load %arg2[%c0_85, %c0_86] : memref<36x128xbf16, #tpu.memory_space<vmem>>, vector<36x128xbf16>
    %cst_87 = arith.constant dense<0.000000e+00> : vector<4x128xf32>
    %91 = tpu.matmul %89, %90, %cst_87 {dimension_numbers = #tpu.dot_dimension_numbers<[1], [0], [0], [1], [0, 0, 1, 1], [], []>} : vector<4x36xbf16>, vector<36x128xbf16>, vector<4x128xf32> -> vector<4x128xf32>
    %c0_88 = arith.constant 0 : index
    %c0_89 = arith.constant 0 : index
    %92 = vector.load %arg3[%c0_88, %c0_89] : memref<1x128xf32, #tpu.memory_space<vmem>>, vector<1x128xf32>
    %93 = vector.broadcast %92 : vector<1x128xf32> to vector<4x128xf32>
    %94 = arith.addf %91, %93 : vector<4x128xf32>
    %cst_90 = arith.constant 0.000000e+00 : f32
    %95 = vector.broadcast %cst_90 : f32 to vector<4x128xf32>
    %96 = arith.maximumf %94, %95 : vector<4x128xf32>
    %97 = arith.truncf %96 : vector<4x128xf32> to vector<4x128xbf16>
    %98 = vector.shape_cast %97 : vector<4x128xbf16> to vector<1x2x2x128xbf16>
    %c11 = arith.constant 11 : index
    %c0_91 = arith.constant 0 : index
    %c0_92 = arith.constant 0 : index
    %c0_93 = arith.constant 0 : index
    %c0_94 = arith.constant 0 : index
    %99 = vector.load %arg13[%c11, %c0_91, %c0_92, %c0_93, %c0_94] : memref<16x1x3x3x128xbf16, #tpu.memory_space<vmem>>, vector<1x1x2x2x128xbf16>
    %100 = vector.shape_cast %99 : vector<1x1x2x2x128xbf16> to vector<1x2x2x128xbf16>
    %101 = vector.shape_cast %98 : vector<1x2x2x128xbf16> to vector<1x1x2x2x128xbf16>
    tpu.vector_store %arg13[%c11, %c0_91, %c0_92, %c0_93, %c0_94], %101 {strides = array<i32>} : memref<16x1x3x3x128xbf16, #tpu.memory_space<vmem>>, vector<1x1x2x2x128xbf16>,
    %c0_95 = arith.constant 0 : index
    %c28 = arith.constant 28 : index
    %c0_96 = arith.constant 0 : index
    %102 = vector.load %arg1[%c0_95, %c28, %c0_96] : memref<1x64x36xbf16, #tpu.memory_space<vmem>>, vector<1x4x36xbf16>
    %103 = vector.shape_cast %102 : vector<1x4x36xbf16> to vector<4x36xbf16>
    %c0_97 = arith.constant 0 : index
    %c0_98 = arith.constant 0 : index
    %104 = vector.load %arg2[%c0_97, %c0_98] : memref<36x128xbf16, #tpu.memory_space<vmem>>, vector<36x128xbf16>
    %cst_99 = arith.constant dense<0.000000e+00> : vector<4x128xf32>
    %105 = tpu.matmul %103, %104, %cst_99 {dimension_numbers = #tpu.dot_dimension_numbers<[1], [0], [0], [1], [0, 0, 1, 1], [], []>} : vector<4x36xbf16>, vector<36x128xbf16>, vector<4x128xf32> -> vector<4x128xf32>
    %c0_100 = arith.constant 0 : index
    %c0_101 = arith.constant 0 : index
    %106 = vector.load %arg3[%c0_100, %c0_101] : memref<1x128xf32, #tpu.memory_space<vmem>>, vector<1x128xf32>
    %107 = vector.broadcast %106 : vector<1x128xf32> to vector<4x128xf32>
    %108 = arith.addf %105, %107 : vector<4x128xf32>
    %cst_102 = arith.constant 0.000000e+00 : f32
    %109 = vector.broadcast %cst_102 : f32 to vector<4x128xf32>
    %110 = arith.maximumf %108, %109 : vector<4x128xf32>
    %111 = arith.truncf %110 : vector<4x128xf32> to vector<4x128xbf16>
    %112 = vector.shape_cast %111 : vector<4x128xbf16> to vector<1x2x2x128xbf16>
    %c8_103 = arith.constant 8 : index
    %c0_104 = arith.constant 0 : index
    %c0_105 = arith.constant 0 : index
    %c1_106 = arith.constant 1 : index
    %c0_107 = arith.constant 0 : index
    %113 = vector.load %arg13[%c8_103, %c0_104, %c0_105, %c1_106, %c0_107] : memref<16x1x3x3x128xbf16, #tpu.memory_space<vmem>>, vector<1x1x2x2x128xbf16>
    %114 = vector.shape_cast %113 : vector<1x1x2x2x128xbf16> to vector<1x2x2x128xbf16>
    %115 = vector.shape_cast %112 : vector<1x2x2x128xbf16> to vector<1x1x2x2x128xbf16>
    tpu.vector_store %arg13[%c8_103, %c0_104, %c0_105, %c1_106, %c0_107], %115 {strides = array<i32>} : memref<16x1x3x3x128xbf16, #tpu.memory_space<vmem>>, vector<1x1x2x2x128xbf16>,
    %c0_108 = arith.constant 0 : index
    %c32 = arith.constant 32 : index
    %c0_109 = arith.constant 0 : index
    %116 = vector.load %arg1[%c0_108, %c32, %c0_109] : memref<1x64x36xbf16, #tpu.memory_space<vmem>>, vector<1x4x36xbf16>
    %117 = vector.shape_cast %116 : vector<1x4x36xbf16> to vector<4x36xbf16>
    %c0_110 = arith.constant 0 : index
    %c0_111 = arith.constant 0 : index
    %118 = vector.load %arg2[%c0_110, %c0_111] : memref<36x128xbf16, #tpu.memory_space<vmem>>, vector<36x128xbf16>
    %cst_112 = arith.constant dense<0.000000e+00> : vector<4x128xf32>
    %119 = tpu.matmul %117, %118, %cst_112 {dimension_numbers = #tpu.dot_dimension_numbers<[1], [0], [0], [1], [0, 0, 1, 1], [], []>} : vector<4x36xbf16>, vector<36x128xbf16>, vector<4x128xf32> -> vector<4x128xf32>
    %c0_113 = arith.constant 0 : index
    %c0_114 = arith.constant 0 : index
    %120 = vector.load %arg3[%c0_113, %c0_114] : memref<1x128xf32, #tpu.memory_space<vmem>>, vector<1x128xf32>
    %121 = vector.broadcast %120 : vector<1x128xf32> to vector<4x128xf32>
    %122 = arith.addf %119, %121 : vector<4x128xf32>
    %cst_115 = arith.constant 0.000000e+00 : f32
    %123 = vector.broadcast %cst_115 : f32 to vector<4x128xf32>
    %124 = arith.maximumf %122, %123 : vector<4x128xf32>
    %125 = arith.truncf %124 : vector<4x128xf32> to vector<4x128xbf16>
    %126 = vector.shape_cast %125 : vector<4x128xbf16> to vector<1x2x2x128xbf16>
    %c13 = arith.constant 13 : index
    %c0_116 = arith.constant 0 : index
    %c0_117 = arith.constant 0 : index
    %c0_118 = arith.constant 0 : index
    %c0_119 = arith.constant 0 : index
    %127 = vector.load %arg13[%c13, %c0_116, %c0_117, %c0_118, %c0_119] : memref<16x1x3x3x128xbf16, #tpu.memory_space<vmem>>, vector<1x1x2x2x128xbf16>
    %128 = vector.shape_cast %127 : vector<1x1x2x2x128xbf16> to vector<1x2x2x128xbf16>
    %129 = vector.shape_cast %126 : vector<1x2x2x128xbf16> to vector<1x1x2x2x128xbf16>
    tpu.vector_store %arg13[%c13, %c0_116, %c0_117, %c0_118, %c0_119], %129 {strides = array<i32>} : memref<16x1x3x3x128xbf16, #tpu.memory_space<vmem>>, vector<1x1x2x2x128xbf16>,
    %c0_120 = arith.constant 0 : index
    %c36 = arith.constant 36 : index
    %c0_121 = arith.constant 0 : index
    %130 = vector.load %arg1[%c0_120, %c36, %c0_121] : memref<1x64x36xbf16, #tpu.memory_space<vmem>>, vector<1x4x36xbf16>
    %131 = vector.shape_cast %130 : vector<1x4x36xbf16> to vector<4x36xbf16>
    %c0_122 = arith.constant 0 : index
    %c0_123 = arith.constant 0 : index
    %132 = vector.load %arg2[%c0_122, %c0_123] : memref<36x128xbf16, #tpu.memory_space<vmem>>, vector<36x128xbf16>
    %cst_124 = arith.constant dense<0.000000e+00> : vector<4x128xf32>
    %133 = tpu.matmul %131, %132, %cst_124 {dimension_numbers = #tpu.dot_dimension_numbers<[1], [0], [0], [1], [0, 0, 1, 1], [], []>} : vector<4x36xbf16>, vector<36x128xbf16>, vector<4x128xf32> -> vector<4x128xf32>
    %c0_125 = arith.constant 0 : index
    %c0_126 = arith.constant 0 : index
    %134 = vector.load %arg3[%c0_125, %c0_126] : memref<1x128xf32, #tpu.memory_space<vmem>>, vector<1x128xf32>
    %135 = vector.broadcast %134 : vector<1x128xf32> to vector<4x128xf32>
    %136 = arith.addf %133, %135 : vector<4x128xf32>
    %cst_127 = arith.constant 0.000000e+00 : f32
    %137 = vector.broadcast %cst_127 : f32 to vector<4x128xf32>
    %138 = arith.maximumf %136, %137 : vector<4x128xf32>
    %139 = arith.truncf %138 : vector<4x128xf32> to vector<4x128xbf16>
    %140 = vector.shape_cast %139 : vector<4x128xbf16> to vector<1x2x2x128xbf16>
    %c14 = arith.constant 14 : index
    %c0_128 = arith.constant 0 : index
    %c0_129 = arith.constant 0 : index
    %c0_130 = arith.constant 0 : index
    %c0_131 = arith.constant 0 : index
    %141 = vector.load %arg13[%c14, %c0_128, %c0_129, %c0_130, %c0_131] : memref<16x1x3x3x128xbf16, #tpu.memory_space<vmem>>, vector<1x1x2x2x128xbf16>
    %142 = vector.shape_cast %141 : vector<1x1x2x2x128xbf16> to vector<1x2x2x128xbf16>
    %143 = vector.shape_cast %140 : vector<1x2x2x128xbf16> to vector<1x1x2x2x128xbf16>
    tpu.vector_store %arg13[%c14, %c0_128, %c0_129, %c0_130, %c0_131], %143 {strides = array<i32>} : memref<16x1x3x3x128xbf16, #tpu.memory_space<vmem>>, vector<1x1x2x2x128xbf16>,
    %c0_132 = arith.constant 0 : index
    %c40 = arith.constant 40 : index
    %c0_133 = arith.constant 0 : index
    %144 = vector.load %arg1[%c0_132, %c40, %c0_133] : memref<1x64x36xbf16, #tpu.memory_space<vmem>>, vector<1x4x36xbf16>
    %145 = vector.shape_cast %144 : vector<1x4x36xbf16> to vector<4x36xbf16>
    %c0_134 = arith.constant 0 : index
    %c0_135 = arith.constant 0 : index
    %146 = vector.load %arg2[%c0_134, %c0_135] : memref<36x128xbf16, #tpu.memory_space<vmem>>, vector<36x128xbf16>
    %cst_136 = arith.constant dense<0.000000e+00> : vector<4x128xf32>
    %147 = tpu.matmul %145, %146, %cst_136 {dimension_numbers = #tpu.dot_dimension_numbers<[1], [0], [0], [1], [0, 0, 1, 1], [], []>} : vector<4x36xbf16>, vector<36x128xbf16>, vector<4x128xf32> -> vector<4x128xf32>
    %c0_137 = arith.constant 0 : index
    %c0_138 = arith.constant 0 : index
    %148 = vector.load %arg3[%c0_137, %c0_138] : memref<1x128xf32, #tpu.memory_space<vmem>>, vector<1x128xf32>
    %149 = vector.broadcast %148 : vector<1x128xf32> to vector<4x128xf32>
    %150 = arith.addf %147, %149 : vector<4x128xf32>
    %cst_139 = arith.constant 0.000000e+00 : f32
    %151 = vector.broadcast %cst_139 : f32 to vector<4x128xf32>
    %152 = arith.maximumf %150, %151 : vector<4x128xf32>
    %153 = arith.truncf %152 : vector<4x128xf32> to vector<4x128xbf16>
    %154 = vector.shape_cast %153 : vector<4x128xbf16> to vector<1x2x2x128xbf16>
    %c15 = arith.constant 15 : index
    %c0_140 = arith.constant 0 : index
    %c0_141 = arith.constant 0 : index
    %c0_142 = arith.constant 0 : index
    %c0_143 = arith.constant 0 : index
    %155 = vector.load %arg13[%c15, %c0_140, %c0_141, %c0_142, %c0_143] : memref<16x1x3x3x128xbf16, #tpu.memory_space<vmem>>, vector<1x1x2x2x128xbf16>
    %156 = vector.shape_cast %155 : vector<1x1x2x2x128xbf16> to vector<1x2x2x128xbf16>
    %157 = vector.shape_cast %154 : vector<1x2x2x128xbf16> to vector<1x1x2x2x128xbf16>
    tpu.vector_store %arg13[%c15, %c0_140, %c0_141, %c0_142, %c0_143], %157 {strides = array<i32>} : memref<16x1x3x3x128xbf16, #tpu.memory_space<vmem>>, vector<1x1x2x2x128xbf16>,
    %c0_144 = arith.constant 0 : index
    %c44 = arith.constant 44 : index
    %c0_145 = arith.constant 0 : index
    %158 = vector.load %arg1[%c0_144, %c44, %c0_145] : memref<1x64x36xbf16, #tpu.memory_space<vmem>>, vector<1x4x36xbf16>
    %159 = vector.shape_cast %158 : vector<1x4x36xbf16> to vector<4x36xbf16>
    %c0_146 = arith.constant 0 : index
    %c0_147 = arith.constant 0 : index
    %160 = vector.load %arg2[%c0_146, %c0_147] : memref<36x128xbf16, #tpu.memory_space<vmem>>, vector<36x128xbf16>
    %cst_148 = arith.constant dense<0.000000e+00> : vector<4x128xf32>
    %161 = tpu.matmul %159, %160, %cst_148 {dimension_numbers = #tpu.dot_dimension_numbers<[1], [0], [0], [1], [0, 0, 1, 1], [], []>} : vector<4x36xbf16>, vector<36x128xbf16>, vector<4x128xf32> -> vector<4x128xf32>
    %c0_149 = arith.constant 0 : index
    %c0_150 = arith.constant 0 : index
    %162 = vector.load %arg3[%c0_149, %c0_150] : memref<1x128xf32, #tpu.memory_space<vmem>>, vector<1x128xf32>
    %163 = vector.broadcast %162 : vector<1x128xf32> to vector<4x128xf32>
    %164 = arith.addf %161, %163 : vector<4x128xf32>
    %cst_151 = arith.constant 0.000000e+00 : f32
    %165 = vector.broadcast %cst_151 : f32 to vector<4x128xf32>
    %166 = arith.maximumf %164, %165 : vector<4x128xf32>
    %167 = arith.truncf %166 : vector<4x128xf32> to vector<4x128xbf16>
    %168 = vector.shape_cast %167 : vector<4x128xbf16> to vector<1x2x2x128xbf16>
    %c12_152 = arith.constant 12 : index
    %c0_153 = arith.constant 0 : index
    %c0_154 = arith.constant 0 : index
    %c1_155 = arith.constant 1 : index
    %c0_156 = arith.constant 0 : index
    %169 = vector.load %arg13[%c12_152, %c0_153, %c0_154, %c1_155, %c0_156] : memref<16x1x3x3x128xbf16, #tpu.memory_space<vmem>>, vector<1x1x2x2x128xbf16>
    %170 = vector.shape_cast %169 : vector<1x1x2x2x128xbf16> to vector<1x2x2x128xbf16>
    %171 = vector.shape_cast %168 : vector<1x2x2x128xbf16> to vector<1x1x2x2x128xbf16>
    tpu.vector_store %arg13[%c12_152, %c0_153, %c0_154, %c1_155, %c0_156], %171 {strides = array<i32>} : memref<16x1x3x3x128xbf16, #tpu.memory_space<vmem>>, vector<1x1x2x2x128xbf16>,
    %c0_157 = arith.constant 0 : index
    %c48 = arith.constant 48 : index
    %c0_158 = arith.constant 0 : index
    %172 = vector.load %arg1[%c0_157, %c48, %c0_158] : memref<1x64x36xbf16, #tpu.memory_space<vmem>>, vector<1x4x36xbf16>
    %173 = vector.shape_cast %172 : vector<1x4x36xbf16> to vector<4x36xbf16>
    %c0_159 = arith.constant 0 : index
    %c0_160 = arith.constant 0 : index
    %174 = vector.load %arg2[%c0_159, %c0_160] : memref<36x128xbf16, #tpu.memory_space<vmem>>, vector<36x128xbf16>
    %cst_161 = arith.constant dense<0.000000e+00> : vector<4x128xf32>
    %175 = tpu.matmul %173, %174, %cst_161 {dimension_numbers = #tpu.dot_dimension_numbers<[1], [0], [0], [1], [0, 0, 1, 1], [], []>} : vector<4x36xbf16>, vector<36x128xbf16>, vector<4x128xf32> -> vector<4x128xf32>
    %c0_162 = arith.constant 0 : index
    %c0_163 = arith.constant 0 : index
    %176 = vector.load %arg3[%c0_162, %c0_163] : memref<1x128xf32, #tpu.memory_space<vmem>>, vector<1x128xf32>
    %177 = vector.broadcast %176 : vector<1x128xf32> to vector<4x128xf32>
    %178 = arith.addf %175, %177 : vector<4x128xf32>
    %cst_164 = arith.constant 0.000000e+00 : f32
    %179 = vector.broadcast %cst_164 : f32 to vector<4x128xf32>
    %180 = arith.maximumf %178, %179 : vector<4x128xf32>
    %181 = arith.truncf %180 : vector<4x128xf32> to vector<4x128xbf16>
    %182 = vector.shape_cast %181 : vector<4x128xbf16> to vector<1x2x2x128xbf16>
    %c1_165 = arith.constant 1 : index
    %c0_166 = arith.constant 0 : index
    %c1_167 = arith.constant 1 : index
    %c0_168 = arith.constant 0 : index
    %c0_169 = arith.constant 0 : index
    %183 = vector.load %arg13[%c1_165, %c0_166, %c1_167, %c0_168, %c0_169] : memref<16x1x3x3x128xbf16, #tpu.memory_space<vmem>>, vector<1x1x2x2x128xbf16>
    %184 = vector.shape_cast %183 : vector<1x1x2x2x128xbf16> to vector<1x2x2x128xbf16>
    %185 = vector.shape_cast %182 : vector<1x2x2x128xbf16> to vector<1x1x2x2x128xbf16>
    tpu.vector_store %arg13[%c1_165, %c0_166, %c1_167, %c0_168, %c0_169], %185 {strides = array<i32>} : memref<16x1x3x3x128xbf16, #tpu.memory_space<vmem>>, vector<1x1x2x2x128xbf16>,
    %c0_170 = arith.constant 0 : index
    %c52 = arith.constant 52 : index
    %c0_171 = arith.constant 0 : index
    %186 = vector.load %arg1[%c0_170, %c52, %c0_171] : memref<1x64x36xbf16, #tpu.memory_space<vmem>>, vector<1x4x36xbf16>
    %187 = vector.shape_cast %186 : vector<1x4x36xbf16> to vector<4x36xbf16>
    %c0_172 = arith.constant 0 : index
    %c0_173 = arith.constant 0 : index
    %188 = vector.load %arg2[%c0_172, %c0_173] : memref<36x128xbf16, #tpu.memory_space<vmem>>, vector<36x128xbf16>
    %cst_174 = arith.constant dense<0.000000e+00> : vector<4x128xf32>
    %189 = tpu.matmul %187, %188, %cst_174 {dimension_numbers = #tpu.dot_dimension_numbers<[1], [0], [0], [1], [0, 0, 1, 1], [], []>} : vector<4x36xbf16>, vector<36x128xbf16>, vector<4x128xf32> -> vector<4x128xf32>
    %c0_175 = arith.constant 0 : index
    %c0_176 = arith.constant 0 : index
    %190 = vector.load %arg3[%c0_175, %c0_176] : memref<1x128xf32, #tpu.memory_space<vmem>>, vector<1x128xf32>
    %191 = vector.broadcast %190 : vector<1x128xf32> to vector<4x128xf32>
    %192 = arith.addf %189, %191 : vector<4x128xf32>
    %cst_177 = arith.constant 0.000000e+00 : f32
    %193 = vector.broadcast %cst_177 : f32 to vector<4x128xf32>
    %194 = arith.maximumf %192, %193 : vector<4x128xf32>
    %195 = arith.truncf %194 : vector<4x128xf32> to vector<4x128xbf16>
    %196 = vector.shape_cast %195 : vector<4x128xbf16> to vector<1x2x2x128xbf16>
    %c2 = arith.constant 2 : index
    %c0_178 = arith.constant 0 : index
    %c1_179 = arith.constant 1 : index
    %c0_180 = arith.constant 0 : index
    %c0_181 = arith.constant 0 : index
    %197 = vector.load %arg13[%c2, %c0_178, %c1_179, %c0_180, %c0_181] : memref<16x1x3x3x128xbf16, #tpu.memory_space<vmem>>, vector<1x1x2x2x128xbf16>
    %198 = vector.shape_cast %197 : vector<1x1x2x2x128xbf16> to vector<1x2x2x128xbf16>
    %199 = vector.shape_cast %196 : vector<1x2x2x128xbf16> to vector<1x1x2x2x128xbf16>
    tpu.vector_store %arg13[%c2, %c0_178, %c1_179, %c0_180, %c0_181], %199 {strides = array<i32>} : memref<16x1x3x3x128xbf16, #tpu.memory_space<vmem>>, vector<1x1x2x2x128xbf16>,
    %c0_182 = arith.constant 0 : index
    %c56 = arith.constant 56 : index
    %c0_183 = arith.constant 0 : index
    %200 = vector.load %arg1[%c0_182, %c56, %c0_183] : memref<1x64x36xbf16, #tpu.memory_space<vmem>>, vector<1x4x36xbf16>
    %201 = vector.shape_cast %200 : vector<1x4x36xbf16> to vector<4x36xbf16>
    %c0_184 = arith.constant 0 : index
    %c0_185 = arith.constant 0 : index
    %202 = vector.load %arg2[%c0_184, %c0_185] : memref<36x128xbf16, #tpu.memory_space<vmem>>, vector<36x128xbf16>
    %cst_186 = arith.constant dense<0.000000e+00> : vector<4x128xf32>
    %203 = tpu.matmul %201, %202, %cst_186 {dimension_numbers = #tpu.dot_dimension_numbers<[1], [0], [0], [1], [0, 0, 1, 1], [], []>} : vector<4x36xbf16>, vector<36x128xbf16>, vector<4x128xf32> -> vector<4x128xf32>
    %c0_187 = arith.constant 0 : index
    %c0_188 = arith.constant 0 : index
    %204 = vector.load %arg3[%c0_187, %c0_188] : memref<1x128xf32, #tpu.memory_space<vmem>>, vector<1x128xf32>
    %205 = vector.broadcast %204 : vector<1x128xf32> to vector<4x128xf32>
    %206 = arith.addf %203, %205 : vector<4x128xf32>
    %cst_189 = arith.constant 0.000000e+00 : f32
    %207 = vector.broadcast %cst_189 : f32 to vector<4x128xf32>
    %208 = arith.maximumf %206, %207 : vector<4x128xf32>
    %209 = arith.truncf %208 : vector<4x128xf32> to vector<4x128xbf16>
    %210 = vector.shape_cast %209 : vector<4x128xbf16> to vector<1x2x2x128xbf16>
    %c3 = arith.constant 3 : index
    %c0_190 = arith.constant 0 : index
    %c1_191 = arith.constant 1 : index
    %c0_192 = arith.constant 0 : index
    %c0_193 = arith.constant 0 : index
    %211 = vector.load %arg13[%c3, %c0_190, %c1_191, %c0_192, %c0_193] : memref<16x1x3x3x128xbf16, #tpu.memory_space<vmem>>, vector<1x1x2x2x128xbf16>
    %212 = vector.shape_cast %211 : vector<1x1x2x2x128xbf16> to vector<1x2x2x128xbf16>
    %213 = vector.shape_cast %210 : vector<1x2x2x128xbf16> to vector<1x1x2x2x128xbf16>
    tpu.vector_store %arg13[%c3, %c0_190, %c1_191, %c0_192, %c0_193], %213 {strides = array<i32>} : memref<16x1x3x3x128xbf16, #tpu.memory_space<vmem>>, vector<1x1x2x2x128xbf16>,
    %c0_194 = arith.constant 0 : index
    %c60 = arith.constant 60 : index
    %c0_195 = arith.constant 0 : index
    %214 = vector.load %arg1[%c0_194, %c60, %c0_195] : memref<1x64x36xbf16, #tpu.memory_space<vmem>>, vector<1x4x36xbf16>
    %215 = vector.shape_cast %214 : vector<1x4x36xbf16> to vector<4x36xbf16>
    %c0_196 = arith.constant 0 : index
    %c0_197 = arith.constant 0 : index
    %216 = vector.load %arg2[%c0_196, %c0_197] : memref<36x128xbf16, #tpu.memory_space<vmem>>, vector<36x128xbf16>
    %cst_198 = arith.constant dense<0.000000e+00> : vector<4x128xf32>
    %217 = tpu.matmul %215, %216, %cst_198 {dimension_numbers = #tpu.dot_dimension_numbers<[1], [0], [0], [1], [0, 0, 1, 1], [], []>} : vector<4x36xbf16>, vector<36x128xbf16>, vector<4x128xf32> -> vector<4x128xf32>
    %c0_199 = arith.constant 0 : index
    %c0_200 = arith.constant 0 : index
    %218 = vector.load %arg3[%c0_199, %c0_200] : memref<1x128xf32, #tpu.memory_space<vmem>>, vector<1x128xf32>
    %219 = vector.broadcast %218 : vector<1x128xf32> to vector<4x128xf32>
    %220 = arith.addf %217, %219 : vector<4x128xf32>
    %cst_201 = arith.constant 0.000000e+00 : f32
    %221 = vector.broadcast %cst_201 : f32 to vector<4x128xf32>
    %222 = arith.maximumf %220, %221 : vector<4x128xf32>
    %223 = arith.truncf %222 : vector<4x128xf32> to vector<4x128xbf16>
    %224 = vector.shape_cast %223 : vector<4x128xbf16> to vector<1x2x2x128xbf16>
    %c0_202 = arith.constant 0 : index
    %c0_203 = arith.constant 0 : index
    %c1_204 = arith.constant 1 : index
    %c1_205 = arith.constant 1 : index
    %c0_206 = arith.constant 0 : index
    %225 = vector.load %arg13[%c0_202, %c0_203, %c1_204, %c1_205, %c0_206] : memref<16x1x3x3x128xbf16, #tpu.memory_space<vmem>>, vector<1x1x2x2x128xbf16>
    %226 = vector.shape_cast %225 : vector<1x1x2x2x128xbf16> to vector<1x2x2x128xbf16>
    %227 = vector.shape_cast %224 : vector<1x2x2x128xbf16> to vector<1x1x2x2x128xbf16>
    tpu.vector_store %arg13[%c0_202, %c0_203, %c1_204, %c1_205, %c0_206], %227 {strides = array<i32>} : memref<16x1x3x3x128xbf16, #tpu.memory_space<vmem>>, vector<1x1x2x2x128xbf16>,
    %cst_207 = arith.constant 0.000000e+00 : f32
    %228 = vector.broadcast %cst_207 : f32 to vector<4x128xf32>
    %c0_208 = arith.constant 0 : index
    %c0_209 = arith.constant 0 : index
    %c0_210 = arith.constant 0 : index
    %c0_211 = arith.constant 0 : index
    %c0_212 = arith.constant 0 : index
    %229 = vector.load %arg13[%c0_208, %c0_209, %c0_210, %c0_211, %c0_212] : memref<16x1x3x3x128xbf16, #tpu.memory_space<vmem>>, vector<1x1x2x2x128xbf16>
    %230 = vector.shape_cast %229 : vector<1x1x2x2x128xbf16> to vector<1x2x2x128xbf16>
    %231 = vector.shape_cast %230 : vector<1x2x2x128xbf16> to vector<4x128xbf16>
    %c0_213 = arith.constant 0 : index
    %c0_214 = arith.constant 0 : index
    %c0_215 = arith.constant 0 : index
    %232 = vector.load %arg4[%c0_213, %c0_214, %c0_215] : memref<9x128x128xbf16, #tpu.memory_space<vmem>>, vector<1x128x128xbf16>
    %233 = vector.shape_cast %232 : vector<1x128x128xbf16> to vector<128x128xbf16>
    %cst_216 = arith.constant dense<0.000000e+00> : vector<4x128xf32>
    %234 = tpu.matmul %231, %233, %cst_216 {dimension_numbers = #tpu.dot_dimension_numbers<[1], [0], [0], [1], [0, 0, 1, 1], [], []>} : vector<4x128xbf16>, vector<128x128xbf16>, vector<4x128xf32> -> vector<4x128xf32>
    %235 = arith.addf %228, %234 : vector<4x128xf32>
    %c1_217 = arith.constant 1 : index
    %c0_218 = arith.constant 0 : index
    %c0_219 = arith.constant 0 : index
    %c0_220 = arith.constant 0 : index
    %c0_221 = arith.constant 0 : index
    %236 = vector.load %arg13[%c1_217, %c0_218, %c0_219, %c0_220, %c0_221] : memref<16x1x3x3x128xbf16, #tpu.memory_space<vmem>>, vector<1x1x2x2x128xbf16>
    %237 = vector.shape_cast %236 : vector<1x1x2x2x128xbf16> to vector<1x2x2x128xbf16>
    %238 = vector.shape_cast %237 : vector<1x2x2x128xbf16> to vector<4x128xbf16>
    %c1_222 = arith.constant 1 : index
    %c0_223 = arith.constant 0 : index
    %c0_224 = arith.constant 0 : index
    %239 = vector.load %arg4[%c1_222, %c0_223, %c0_224] : memref<9x128x128xbf16, #tpu.memory_space<vmem>>, vector<1x128x128xbf16>
    %240 = vector.shape_cast %239 : vector<1x128x128xbf16> to vector<128x128xbf16>
    %cst_225 = arith.constant dense<0.000000e+00> : vector<4x128xf32>
    %241 = tpu.matmul %238, %240, %cst_225 {dimension_numbers = #tpu.dot_dimension_numbers<[1], [0], [0], [1], [0, 0, 1, 1], [], []>} : vector<4x128xbf16>, vector<128x128xbf16>, vector<4x128xf32> -> vector<4x128xf32>
    %242 = arith.addf %235, %241 : vector<4x128xf32>
    %c2_226 = arith.constant 2 : index
    %c0_227 = arith.constant 0 : index
    %c0_228 = arith.constant 0 : index
    %c0_229 = arith.constant 0 : index
    %c0_230 = arith.constant 0 : index
    %243 = vector.load %arg13[%c2_226, %c0_227, %c0_228, %c0_229, %c0_230] : memref<16x1x3x3x128xbf16, #tpu.memory_space<vmem>>, vector<1x1x2x2x128xbf16>
    %244 = vector.shape_cast %243 : vector<1x1x2x2x128xbf16> to vector<1x2x2x128xbf16>
    %245 = vector.shape_cast %244 : vector<1x2x2x128xbf16> to vector<4x128xbf16>
    %c2_231 = arith.constant 2 : index
    %c0_232 = arith.constant 0 : index
    %c0_233 = arith.constant 0 : index
    %246 = vector.load %arg4[%c2_231, %c0_232, %c0_233] : memref<9x128x128xbf16, #tpu.memory_space<vmem>>, vector<1x128x128xbf16>
    %247 = vector.shape_cast %246 : vector<1x128x128xbf16> to vector<128x128xbf16>
    %cst_234 = arith.constant dense<0.000000e+00> : vector<4x128xf32>
    %248 = tpu.matmul %245, %247, %cst_234 {dimension_numbers = #tpu.dot_dimension_numbers<[1], [0], [0], [1], [0, 0, 1, 1], [], []>} : vector<4x128xbf16>, vector<128x128xbf16>, vector<4x128xf32> -> vector<4x128xf32>
    %249 = arith.addf %242, %248 : vector<4x128xf32>
    %c4_235 = arith.constant 4 : index
    %c0_236 = arith.constant 0 : index
    %c0_237 = arith.constant 0 : index
    %c0_238 = arith.constant 0 : index
    %c0_239 = arith.constant 0 : index
    %250 = vector.load %arg13[%c4_235, %c0_236, %c0_237, %c0_238, %c0_239] : memref<16x1x3x3x128xbf16, #tpu.memory_space<vmem>>, vector<1x1x2x2x128xbf16>
    %251 = vector.shape_cast %250 : vector<1x1x2x2x128xbf16> to vector<1x2x2x128xbf16>
    %252 = vector.shape_cast %251 : vector<1x2x2x128xbf16> to vector<4x128xbf16>
    %c3_240 = arith.constant 3 : index
    %c0_241 = arith.constant 0 : index
    %c0_242 = arith.constant 0 : index
    %253 = vector.load %arg4[%c3_240, %c0_241, %c0_242] : memref<9x128x128xbf16, #tpu.memory_space<vmem>>, vector<1x128x128xbf16>
    %254 = vector.shape_cast %253 : vector<1x128x128xbf16> to vector<128x128xbf16>
    %cst_243 = arith.constant dense<0.000000e+00> : vector<4x128xf32>
    %255 = tpu.matmul %252, %254, %cst_243 {dimension_numbers = #tpu.dot_dimension_numbers<[1], [0], [0], [1], [0, 0, 1, 1], [], []>} : vector<4x128xbf16>, vector<128x128xbf16>, vector<4x128xf32> -> vector<4x128xf32>
    %256 = arith.addf %249, %255 : vector<4x128xf32>
    %c5_244 = arith.constant 5 : index
    %c0_245 = arith.constant 0 : index
    %c0_246 = arith.constant 0 : index
    %c0_247 = arith.constant 0 : index
    %c0_248 = arith.constant 0 : index
    %257 = vector.load %arg13[%c5_244, %c0_245, %c0_246, %c0_247, %c0_248] : memref<16x1x3x3x128xbf16, #tpu.memory_space<vmem>>, vector<1x1x2x2x128xbf16>
    %258 = vector.shape_cast %257 : vector<1x1x2x2x128xbf16> to vector<1x2x2x128xbf16>
    %259 = vector.shape_cast %258 : vector<1x2x2x128xbf16> to vector<4x128xbf16>
    %c4_249 = arith.constant 4 : index
    %c0_250 = arith.constant 0 : index
    %c0_251 = arith.constant 0 : index
    %260 = vector.load %arg4[%c4_249, %c0_250, %c0_251] : memref<9x128x128xbf16, #tpu.memory_space<vmem>>, vector<1x128x128xbf16>
    %261 = vector.shape_cast %260 : vector<1x128x128xbf16> to vector<128x128xbf16>
    %cst_252 = arith.constant dense<0.000000e+00> : vector<4x128xf32>
    %262 = tpu.matmul %259, %261, %cst_252 {dimension_numbers = #tpu.dot_dimension_numbers<[1], [0], [0], [1], [0, 0, 1, 1], [], []>} : vector<4x128xbf16>, vector<128x128xbf16>, vector<4x128xf32> -> vector<4x128xf32>
    %263 = arith.addf %256, %262 : vector<4x128xf32>
    %c6_253 = arith.constant 6 : index
    %c0_254 = arith.constant 0 : index
    %c0_255 = arith.constant 0 : index
    %c0_256 = arith.constant 0 : index
    %c0_257 = arith.constant 0 : index
    %264 = vector.load %arg13[%c6_253, %c0_254, %c0_255, %c0_256, %c0_257] : memref<16x1x3x3x128xbf16, #tpu.memory_space<vmem>>, vector<1x1x2x2x128xbf16>
    %265 = vector.shape_cast %264 : vector<1x1x2x2x128xbf16> to vector<1x2x2x128xbf16>
    %266 = vector.shape_cast %265 : vector<1x2x2x128xbf16> to vector<4x128xbf16>
    %c5_258 = arith.constant 5 : index
    %c0_259 = arith.constant 0 : index
    %c0_260 = arith.constant 0 : index
    %267 = vector.load %arg4[%c5_258, %c0_259, %c0_260] : memref<9x128x128xbf16, #tpu.memory_space<vmem>>, vector<1x128x128xbf16>
    %268 = vector.shape_cast %267 : vector<1x128x128xbf16> to vector<128x128xbf16>
    %cst_261 = arith.constant dense<0.000000e+00> : vector<4x128xf32>
    %269 = tpu.matmul %266, %268, %cst_261 {dimension_numbers = #tpu.dot_dimension_numbers<[1], [0], [0], [1], [0, 0, 1, 1], [], []>} : vector<4x128xbf16>, vector<128x128xbf16>, vector<4x128xf32> -> vector<4x128xf32>
    %270 = arith.addf %263, %269 : vector<4x128xf32>
    %c8_262 = arith.constant 8 : index
    %c0_263 = arith.constant 0 : index
    %c0_264 = arith.constant 0 : index
    %c0_265 = arith.constant 0 : index
    %c0_266 = arith.constant 0 : index
    %271 = vector.load %arg13[%c8_262, %c0_263, %c0_264, %c0_265, %c0_266] : memref<16x1x3x3x128xbf16, #tpu.memory_space<vmem>>, vector<1x1x2x2x128xbf16>
    %272 = vector.shape_cast %271 : vector<1x1x2x2x128xbf16> to vector<1x2x2x128xbf16>
    %273 = vector.shape_cast %272 : vector<1x2x2x128xbf16> to vector<4x128xbf16>
    %c6_267 = arith.constant 6 : index
    %c0_268 = arith.constant 0 : index
    %c0_269 = arith.constant 0 : index
    %274 = vector.load %arg4[%c6_267, %c0_268, %c0_269] : memref<9x128x128xbf16, #tpu.memory_space<vmem>>, vector<1x128x128xbf16>
    %275 = vector.shape_cast %274 : vector<1x128x128xbf16> to vector<128x128xbf16>
    %cst_270 = arith.constant dense<0.000000e+00> : vector<4x128xf32>
    %276 = tpu.matmul %273, %275, %cst_270 {dimension_numbers = #tpu.dot_dimension_numbers<[1], [0], [0], [1], [0, 0, 1, 1], [], []>} : vector<4x128xbf16>, vector<128x128xbf16>, vector<4x128xf32> -> vector<4x128xf32>
    %277 = arith.addf %270, %276 : vector<4x128xf32>
    %c9_271 = arith.constant 9 : index
    %c0_272 = arith.constant 0 : index
    %c0_273 = arith.constant 0 : index
    %c0_274 = arith.constant 0 : index
    %c0_275 = arith.constant 0 : index
    %278 = vector.load %arg13[%c9_271, %c0_272, %c0_273, %c0_274, %c0_275] : memref<16x1x3x3x128xbf16, #tpu.memory_space<vmem>>, vector<1x1x2x2x128xbf16>
    %279 = vector.shape_cast %278 : vector<1x1x2x2x128xbf16> to vector<1x2x2x128xbf16>
    %280 = vector.shape_cast %279 : vector<1x2x2x128xbf16> to vector<4x128xbf16>
    %c7_276 = arith.constant 7 : index
    %c0_277 = arith.constant 0 : index
    %c0_278 = arith.constant 0 : index
    %281 = vector.load %arg4[%c7_276, %c0_277, %c0_278] : memref<9x128x128xbf16, #tpu.memory_space<vmem>>, vector<1x128x128xbf16>
    %282 = vector.shape_cast %281 : vector<1x128x128xbf16> to vector<128x128xbf16>
    %cst_279 = arith.constant dense<0.000000e+00> : vector<4x128xf32>
    %283 = tpu.matmul %280, %282, %cst_279 {dimension_numbers = #tpu.dot_dimension_numbers<[1], [0], [0], [1], [0, 0, 1, 1], [], []>} : vector<4x128xbf16>, vector<128x128xbf16>, vector<4x128xf32> -> vector<4x128xf32>
    %284 = arith.addf %277, %283 : vector<4x128xf32>
    %c10_280 = arith.constant 10 : index
    %c0_281 = arith.constant 0 : index
    %c0_282 = arith.constant 0 : index
    %c0_283 = arith.constant 0 : index
    %c0_284 = arith.constant 0 : index
    %285 = vector.load %arg13[%c10_280, %c0_281, %c0_282, %c0_283, %c0_284] : memref<16x1x3x3x128xbf16, #tpu.memory_space<vmem>>, vector<1x1x2x2x128xbf16>
    %286 = vector.shape_cast %285 : vector<1x1x2x2x128xbf16> to vector<1x2x2x128xbf16>
    %287 = vector.shape_cast %286 : vector<1x2x2x128xbf16> to vector<4x128xbf16>
    %c8_285 = arith.constant 8 : index
    %c0_286 = arith.constant 0 : index
    %c0_287 = arith.constant 0 : index
    %288 = vector.load %arg4[%c8_285, %c0_286, %c0_287] : memref<9x128x128xbf16, #tpu.memory_space<vmem>>, vector<1x128x128xbf16>
    %289 = vector.shape_cast %288 : vector<1x128x128xbf16> to vector<128x128xbf16>
    %cst_288 = arith.constant dense<0.000000e+00> : vector<4x128xf32>
    %290 = tpu.matmul %287, %289, %cst_288 {dimension_numbers = #tpu.dot_dimension_numbers<[1], [0], [0], [1], [0, 0, 1, 1], [], []>} : vector<4x128xbf16>, vector<128x128xbf16>, vector<4x128xf32> -> vector<4x128xf32>
    %291 = arith.addf %284, %290 : vector<4x128xf32>
    %c0_289 = arith.constant 0 : index
    %c0_290 = arith.constant 0 : index
    %292 = vector.load %arg5[%c0_289, %c0_290] : memref<1x128xf32, #tpu.memory_space<vmem>>, vector<1x128xf32>
    %293 = vector.broadcast %292 : vector<1x128xf32> to vector<4x128xf32>
    %294 = arith.addf %291, %293 : vector<4x128xf32>
    %cst_291 = arith.constant 0.000000e+00 : f32
    %295 = vector.broadcast %cst_291 : f32 to vector<4x128xf32>
    %296 = arith.maximumf %294, %295 : vector<4x128xf32>
    %297 = arith.truncf %296 : vector<4x128xf32> to vector<4x128xbf16>
    %298 = vector.shape_cast %297 : vector<4x128xbf16> to vector<1x2x2x128xbf16>
    %c3_292 = arith.constant 3 : index
    %c0_293 = arith.constant 0 : index
    %c0_294 = arith.constant 0 : index
    %c0_295 = arith.constant 0 : index
    %c0_296 = arith.constant 0 : index
    %299 = vector.load %arg14[%c3_292, %c0_293, %c0_294, %c0_295, %c0_296] : memref<4x1x3x3x128xbf16, #tpu.memory_space<vmem>>, vector<1x1x2x2x128xbf16>
    %300 = vector.shape_cast %299 : vector<1x1x2x2x128xbf16> to vector<1x2x2x128xbf16>
    %301 = vector.shape_cast %298 : vector<1x2x2x128xbf16> to vector<1x1x2x2x128xbf16>
    tpu.vector_store %arg14[%c3_292, %c0_293, %c0_294, %c0_295, %c0_296], %301 {strides = array<i32>} : memref<4x1x3x3x128xbf16, #tpu.memory_space<vmem>>, vector<1x1x2x2x128xbf16>,
    %cst_297 = arith.constant 0.000000e+00 : f32
    %302 = vector.broadcast %cst_297 : f32 to vector<4x128xf32>
    %c2_298 = arith.constant 2 : index
    %c0_299 = arith.constant 0 : index
    %c0_300 = arith.constant 0 : index
    %c0_301 = arith.constant 0 : index
    %c0_302 = arith.constant 0 : index
    %303 = vector.load %arg13[%c2_298, %c0_299, %c0_300, %c0_301, %c0_302] : memref<16x1x3x3x128xbf16, #tpu.memory_space<vmem>>, vector<1x1x2x2x128xbf16>
    %304 = vector.shape_cast %303 : vector<1x1x2x2x128xbf16> to vector<1x2x2x128xbf16>
    %305 = vector.shape_cast %304 : vector<1x2x2x128xbf16> to vector<4x128xbf16>
    %c0_303 = arith.constant 0 : index
    %c0_304 = arith.constant 0 : index
    %c0_305 = arith.constant 0 : index
    %306 = vector.load %arg4[%c0_303, %c0_304, %c0_305] : memref<9x128x128xbf16, #tpu.memory_space<vmem>>, vector<1x128x128xbf16>
    %307 = vector.shape_cast %306 : vector<1x128x128xbf16> to vector<128x128xbf16>
    %cst_306 = arith.constant dense<0.000000e+00> : vector<4x128xf32>
    %308 = tpu.matmul %305, %307, %cst_306 {dimension_numbers = #tpu.dot_dimension_numbers<[1], [0], [0], [1], [0, 0, 1, 1], [], []>} : vector<4x128xbf16>, vector<128x128xbf16>, vector<4x128xf32> -> vector<4x128xf32>
    %309 = arith.addf %302, %308 : vector<4x128xf32>
    %c3_307 = arith.constant 3 : index
    %c0_308 = arith.constant 0 : index
    %c0_309 = arith.constant 0 : index
    %c0_310 = arith.constant 0 : index
    %c0_311 = arith.constant 0 : index
    %310 = vector.load %arg13[%c3_307, %c0_308, %c0_309, %c0_310, %c0_311] : memref<16x1x3x3x128xbf16, #tpu.memory_space<vmem>>, vector<1x1x2x2x128xbf16>
    %311 = vector.shape_cast %310 : vector<1x1x2x2x128xbf16> to vector<1x2x2x128xbf16>
    %312 = vector.shape_cast %311 : vector<1x2x2x128xbf16> to vector<4x128xbf16>
    %c1_312 = arith.constant 1 : index
    %c0_313 = arith.constant 0 : index
    %c0_314 = arith.constant 0 : index
    %313 = vector.load %arg4[%c1_312, %c0_313, %c0_314] : memref<9x128x128xbf16, #tpu.memory_space<vmem>>, vector<1x128x128xbf16>
    %314 = vector.shape_cast %313 : vector<1x128x128xbf16> to vector<128x128xbf16>
    %cst_315 = arith.constant dense<0.000000e+00> : vector<4x128xf32>
    %315 = tpu.matmul %312, %314, %cst_315 {dimension_numbers = #tpu.dot_dimension_numbers<[1], [0], [0], [1], [0, 0, 1, 1], [], []>} : vector<4x128xbf16>, vector<128x128xbf16>, vector<4x128xf32> -> vector<4x128xf32>
    %316 = arith.addf %309, %315 : vector<4x128xf32>
    %c0_316 = arith.constant 0 : index
    %c0_317 = arith.constant 0 : index
    %c0_318 = arith.constant 0 : index
    %c1_319 = arith.constant 1 : index
    %c0_320 = arith.constant 0 : index
    %317 = vector.load %arg13[%c0_316, %c0_317, %c0_318, %c1_319, %c0_320] : memref<16x1x3x3x128xbf16, #tpu.memory_space<vmem>>, vector<1x1x2x2x128xbf16>
    %318 = vector.shape_cast %317 : vector<1x1x2x2x128xbf16> to vector<1x2x2x128xbf16>
    %319 = vector.shape_cast %318 : vector<1x2x2x128xbf16> to vector<4x128xbf16>
    %c2_321 = arith.constant 2 : index
    %c0_322 = arith.constant 0 : index
    %c0_323 = arith.constant 0 : index
    %320 = vector.load %arg4[%c2_321, %c0_322, %c0_323] : memref<9x128x128xbf16, #tpu.memory_space<vmem>>, vector<1x128x128xbf16>
    %321 = vector.shape_cast %320 : vector<1x128x128xbf16> to vector<128x128xbf16>
    %cst_324 = arith.constant dense<0.000000e+00> : vector<4x128xf32>
    %322 = tpu.matmul %319, %321, %cst_324 {dimension_numbers = #tpu.dot_dimension_numbers<[1], [0], [0], [1], [0, 0, 1, 1], [], []>} : vector<4x128xbf16>, vector<128x128xbf16>, vector<4x128xf32> -> vector<4x128xf32>
    %323 = arith.addf %316, %322 : vector<4x128xf32>
    %c6_325 = arith.constant 6 : index
    %c0_326 = arith.constant 0 : index
    %c0_327 = arith.constant 0 : index
    %c0_328 = arith.constant 0 : index
    %c0_329 = arith.constant 0 : index
    %324 = vector.load %arg13[%c6_325, %c0_326, %c0_327, %c0_328, %c0_329] : memref<16x1x3x3x128xbf16, #tpu.memory_space<vmem>>, vector<1x1x2x2x128xbf16>
    %325 = vector.shape_cast %324 : vector<1x1x2x2x128xbf16> to vector<1x2x2x128xbf16>
    %326 = vector.shape_cast %325 : vector<1x2x2x128xbf16> to vector<4x128xbf16>
    %c3_330 = arith.constant 3 : index
    %c0_331 = arith.constant 0 : index
    %c0_332 = arith.constant 0 : index
    %327 = vector.load %arg4[%c3_330, %c0_331, %c0_332] : memref<9x128x128xbf16, #tpu.memory_space<vmem>>, vector<1x128x128xbf16>
    %328 = vector.shape_cast %327 : vector<1x128x128xbf16> to vector<128x128xbf16>
    %cst_333 = arith.constant dense<0.000000e+00> : vector<4x128xf32>
    %329 = tpu.matmul %326, %328, %cst_333 {dimension_numbers = #tpu.dot_dimension_numbers<[1], [0], [0], [1], [0, 0, 1, 1], [], []>} : vector<4x128xbf16>, vector<128x128xbf16>, vector<4x128xf32> -> vector<4x128xf32>
    %330 = arith.addf %323, %329 : vector<4x128xf32>
    %c7_334 = arith.constant 7 : index
    %c0_335 = arith.constant 0 : index
    %c0_336 = arith.constant 0 : index
    %c0_337 = arith.constant 0 : index
    %c0_338 = arith.constant 0 : index
    %331 = vector.load %arg13[%c7_334, %c0_335, %c0_336, %c0_337, %c0_338] : memref<16x1x3x3x128xbf16, #tpu.memory_space<vmem>>, vector<1x1x2x2x128xbf16>
    %332 = vector.shape_cast %331 : vector<1x1x2x2x128xbf16> to vector<1x2x2x128xbf16>
    %333 = vector.shape_cast %332 : vector<1x2x2x128xbf16> to vector<4x128xbf16>
    %c4_339 = arith.constant 4 : index
    %c0_340 = arith.constant 0 : index
    %c0_341 = arith.constant 0 : index
    %334 = vector.load %arg4[%c4_339, %c0_340, %c0_341] : memref<9x128x128xbf16, #tpu.memory_space<vmem>>, vector<1x128x128xbf16>
    %335 = vector.shape_cast %334 : vector<1x128x128xbf16> to vector<128x128xbf16>
    %cst_342 = arith.constant dense<0.000000e+00> : vector<4x128xf32>
    %336 = tpu.matmul %333, %335, %cst_342 {dimension_numbers = #tpu.dot_dimension_numbers<[1], [0], [0], [1], [0, 0, 1, 1], [], []>} : vector<4x128xbf16>, vector<128x128xbf16>, vector<4x128xf32> -> vector<4x128xf32>
    %337 = arith.addf %330, %336 : vector<4x128xf32>
    %c4_343 = arith.constant 4 : index
    %c0_344 = arith.constant 0 : index
    %c0_345 = arith.constant 0 : index
    %c1_346 = arith.constant 1 : index
    %c0_347 = arith.constant 0 : index
    %338 = vector.load %arg13[%c4_343, %c0_344, %c0_345, %c1_346, %c0_347] : memref<16x1x3x3x128xbf16, #tpu.memory_space<vmem>>, vector<1x1x2x2x128xbf16>
    %339 = vector.shape_cast %338 : vector<1x1x2x2x128xbf16> to vector<1x2x2x128xbf16>
    %340 = vector.shape_cast %339 : vector<1x2x2x128xbf16> to vector<4x128xbf16>
    %c5_348 = arith.constant 5 : index
    %c0_349 = arith.constant 0 : index
    %c0_350 = arith.constant 0 : index
    %341 = vector.load %arg4[%c5_348, %c0_349, %c0_350] : memref<9x128x128xbf16, #tpu.memory_space<vmem>>, vector<1x128x128xbf16>
    %342 = vector.shape_cast %341 : vector<1x128x128xbf16> to vector<128x128xbf16>
    %cst_351 = arith.constant dense<0.000000e+00> : vector<4x128xf32>
    %343 = tpu.matmul %340, %342, %cst_351 {dimension_numbers = #tpu.dot_dimension_numbers<[1], [0], [0], [1], [0, 0, 1, 1], [], []>} : vector<4x128xbf16>, vector<128x128xbf16>, vector<4x128xf32> -> vector<4x128xf32>
    %344 = arith.addf %337, %343 : vector<4x128xf32>
    %c10_352 = arith.constant 10 : index
    %c0_353 = arith.constant 0 : index
    %c0_354 = arith.constant 0 : index
    %c0_355 = arith.constant 0 : index
    %c0_356 = arith.constant 0 : index
    %345 = vector.load %arg13[%c10_352, %c0_353, %c0_354, %c0_355, %c0_356] : memref<16x1x3x3x128xbf16, #tpu.memory_space<vmem>>, vector<1x1x2x2x128xbf16>
    %346 = vector.shape_cast %345 : vector<1x1x2x2x128xbf16> to vector<1x2x2x128xbf16>
    %347 = vector.shape_cast %346 : vector<1x2x2x128xbf16> to vector<4x128xbf16>
    %c6_357 = arith.constant 6 : index
    %c0_358 = arith.constant 0 : index
    %c0_359 = arith.constant 0 : index
    %348 = vector.load %arg4[%c6_357, %c0_358, %c0_359] : memref<9x128x128xbf16, #tpu.memory_space<vmem>>, vector<1x128x128xbf16>
    %349 = vector.shape_cast %348 : vector<1x128x128xbf16> to vector<128x128xbf16>
    %cst_360 = arith.constant dense<0.000000e+00> : vector<4x128xf32>
    %350 = tpu.matmul %347, %349, %cst_360 {dimension_numbers = #tpu.dot_dimension_numbers<[1], [0], [0], [1], [0, 0, 1, 1], [], []>} : vector<4x128xbf16>, vector<128x128xbf16>, vector<4x128xf32> -> vector<4x128xf32>
    %351 = arith.addf %344, %350 : vector<4x128xf32>
    %c11_361 = arith.constant 11 : index
    %c0_362 = arith.constant 0 : index
    %c0_363 = arith.constant 0 : index
    %c0_364 = arith.constant 0 : index
    %c0_365 = arith.constant 0 : index
    %352 = vector.load %arg13[%c11_361, %c0_362, %c0_363, %c0_364, %c0_365] : memref<16x1x3x3x128xbf16, #tpu.memory_space<vmem>>, vector<1x1x2x2x128xbf16>
    %353 = vector.shape_cast %352 : vector<1x1x2x2x128xbf16> to vector<1x2x2x128xbf16>
    %354 = vector.shape_cast %353 : vector<1x2x2x128xbf16> to vector<4x128xbf16>
    %c7_366 = arith.constant 7 : index
    %c0_367 = arith.constant 0 : index
    %c0_368 = arith.constant 0 : index
    %355 = vector.load %arg4[%c7_366, %c0_367, %c0_368] : memref<9x128x128xbf16, #tpu.memory_space<vmem>>, vector<1x128x128xbf16>
    %356 = vector.shape_cast %355 : vector<1x128x128xbf16> to vector<128x128xbf16>
    %cst_369 = arith.constant dense<0.000000e+00> : vector<4x128xf32>
    %357 = tpu.matmul %354, %356, %cst_369 {dimension_numbers = #tpu.dot_dimension_numbers<[1], [0], [0], [1], [0, 0, 1, 1], [], []>} : vector<4x128xbf16>, vector<128x128xbf16>, vector<4x128xf32> -> vector<4x128xf32>
    %358 = arith.addf %351, %357 : vector<4x128xf32>
    %c8_370 = arith.constant 8 : index
    %c0_371 = arith.constant 0 : index
    %c0_372 = arith.constant 0 : index
    %c1_373 = arith.constant 1 : index
    %c0_374 = arith.constant 0 : index
    %359 = vector.load %arg13[%c8_370, %c0_371, %c0_372, %c1_373, %c0_374] : memref<16x1x3x3x128xbf16, #tpu.memory_space<vmem>>, vector<1x1x2x2x128xbf16>
    %360 = vector.shape_cast %359 : vector<1x1x2x2x128xbf16> to vector<1x2x2x128xbf16>
    %361 = vector.shape_cast %360 : vector<1x2x2x128xbf16> to vector<4x128xbf16>
    %c8_375 = arith.constant 8 : index
    %c0_376 = arith.constant 0 : index
    %c0_377 = arith.constant 0 : index
    %362 = vector.load %arg4[%c8_375, %c0_376, %c0_377] : memref<9x128x128xbf16, #tpu.memory_space<vmem>>, vector<1x128x128xbf16>
    %363 = vector.shape_cast %362 : vector<1x128x128xbf16> to vector<128x128xbf16>
    %cst_378 = arith.constant dense<0.000000e+00> : vector<4x128xf32>
    %364 = tpu.matmul %361, %363, %cst_378 {dimension_numbers = #tpu.dot_dimension_numbers<[1], [0], [0], [1], [0, 0, 1, 1], [], []>} : vector<4x128xbf16>, vector<128x128xbf16>, vector<4x128xf32> -> vector<4x128xf32>
    %365 = arith.addf %358, %364 : vector<4x128xf32>
    %c0_379 = arith.constant 0 : index
    %c0_380 = arith.constant 0 : index
    %366 = vector.load %arg5[%c0_379, %c0_380] : memref<1x128xf32, #tpu.memory_space<vmem>>, vector<1x128xf32>
    %367 = vector.broadcast %366 : vector<1x128xf32> to vector<4x128xf32>
    %368 = arith.addf %365, %367 : vector<4x128xf32>
    %cst_381 = arith.constant 0.000000e+00 : f32
    %369 = vector.broadcast %cst_381 : f32 to vector<4x128xf32>
    %370 = arith.maximumf %368, %369 : vector<4x128xf32>
    %371 = arith.truncf %370 : vector<4x128xf32> to vector<4x128xbf16>
    %372 = vector.shape_cast %371 : vector<4x128xbf16> to vector<1x2x2x128xbf16>
    %c2_382 = arith.constant 2 : index
    %c0_383 = arith.constant 0 : index
    %c0_384 = arith.constant 0 : index
    %c1_385 = arith.constant 1 : index
    %c0_386 = arith.constant 0 : index
    %373 = vector.load %arg14[%c2_382, %c0_383, %c0_384, %c1_385, %c0_386] : memref<4x1x3x3x128xbf16, #tpu.memory_space<vmem>>, vector<1x1x2x2x128xbf16>
    %374 = vector.shape_cast %373 : vector<1x1x2x2x128xbf16> to vector<1x2x2x128xbf16>
    %375 = vector.shape_cast %372 : vector<1x2x2x128xbf16> to vector<1x1x2x2x128xbf16>
    tpu.vector_store %arg14[%c2_382, %c0_383, %c0_384, %c1_385, %c0_386], %375 {strides = array<i32>} : memref<4x1x3x3x128xbf16, #tpu.memory_space<vmem>>, vector<1x1x2x2x128xbf16>,
    %cst_387 = arith.constant 0.000000e+00 : f32
    %376 = vector.broadcast %cst_387 : f32 to vector<4x128xf32>
    %c8_388 = arith.constant 8 : index
    %c0_389 = arith.constant 0 : index
    %c0_390 = arith.constant 0 : index
    %c0_391 = arith.constant 0 : index
    %c0_392 = arith.constant 0 : index
    %377 = vector.load %arg13[%c8_388, %c0_389, %c0_390, %c0_391, %c0_392] : memref<16x1x3x3x128xbf16, #tpu.memory_space<vmem>>, vector<1x1x2x2x128xbf16>
    %378 = vector.shape_cast %377 : vector<1x1x2x2x128xbf16> to vector<1x2x2x128xbf16>
    %379 = vector.shape_cast %378 : vector<1x2x2x128xbf16> to vector<4x128xbf16>
    %c0_393 = arith.constant 0 : index
    %c0_394 = arith.constant 0 : index
    %c0_395 = arith.constant 0 : index
    %380 = vector.load %arg4[%c0_393, %c0_394, %c0_395] : memref<9x128x128xbf16, #tpu.memory_space<vmem>>, vector<1x128x128xbf16>
    %381 = vector.shape_cast %380 : vector<1x128x128xbf16> to vector<128x128xbf16>
    %cst_396 = arith.constant dense<0.000000e+00> : vector<4x128xf32>
    %382 = tpu.matmul %379, %381, %cst_396 {dimension_numbers = #tpu.dot_dimension_numbers<[1], [0], [0], [1], [0, 0, 1, 1], [], []>} : vector<4x128xbf16>, vector<128x128xbf16>, vector<4x128xf32> -> vector<4x128xf32>
    %383 = arith.addf %376, %382 : vector<4x128xf32>
    %c9_397 = arith.constant 9 : index
    %c0_398 = arith.constant 0 : index
    %c0_399 = arith.constant 0 : index
    %c0_400 = arith.constant 0 : index
    %c0_401 = arith.constant 0 : index
    %384 = vector.load %arg13[%c9_397, %c0_398, %c0_399, %c0_400, %c0_401] : memref<16x1x3x3x128xbf16, #tpu.memory_space<vmem>>, vector<1x1x2x2x128xbf16>
    %385 = vector.shape_cast %384 : vector<1x1x2x2x128xbf16> to vector<1x2x2x128xbf16>
    %386 = vector.shape_cast %385 : vector<1x2x2x128xbf16> to vector<4x128xbf16>
    %c1_402 = arith.constant 1 : index
    %c0_403 = arith.constant 0 : index
    %c0_404 = arith.constant 0 : index
    %387 = vector.load %arg4[%c1_402, %c0_403, %c0_404] : memref<9x128x128xbf16, #tpu.memory_space<vmem>>, vector<1x128x128xbf16>
    %388 = vector.shape_cast %387 : vector<1x128x128xbf16> to vector<128x128xbf16>
    %cst_405 = arith.constant dense<0.000000e+00> : vector<4x128xf32>
    %389 = tpu.matmul %386, %388, %cst_405 {dimension_numbers = #tpu.dot_dimension_numbers<[1], [0], [0], [1], [0, 0, 1, 1], [], []>} : vector<4x128xbf16>, vector<128x128xbf16>, vector<4x128xf32> -> vector<4x128xf32>
    %390 = arith.addf %383, %389 : vector<4x128xf32>
    %c10_406 = arith.constant 10 : index
    %c0_407 = arith.constant 0 : index
    %c0_408 = arith.constant 0 : index
    %c0_409 = arith.constant 0 : index
    %c0_410 = arith.constant 0 : index
    %391 = vector.load %arg13[%c10_406, %c0_407, %c0_408, %c0_409, %c0_410] : memref<16x1x3x3x128xbf16, #tpu.memory_space<vmem>>, vector<1x1x2x2x128xbf16>
    %392 = vector.shape_cast %391 : vector<1x1x2x2x128xbf16> to vector<1x2x2x128xbf16>
    %393 = vector.shape_cast %392 : vector<1x2x2x128xbf16> to vector<4x128xbf16>
    %c2_411 = arith.constant 2 : index
    %c0_412 = arith.constant 0 : index
    %c0_413 = arith.constant 0 : index
    %394 = vector.load %arg4[%c2_411, %c0_412, %c0_413] : memref<9x128x128xbf16, #tpu.memory_space<vmem>>, vector<1x128x128xbf16>
    %395 = vector.shape_cast %394 : vector<1x128x128xbf16> to vector<128x128xbf16>
    %cst_414 = arith.constant dense<0.000000e+00> : vector<4x128xf32>
    %396 = tpu.matmul %393, %395, %cst_414 {dimension_numbers = #tpu.dot_dimension_numbers<[1], [0], [0], [1], [0, 0, 1, 1], [], []>} : vector<4x128xbf16>, vector<128x128xbf16>, vector<4x128xf32> -> vector<4x128xf32>
    %397 = arith.addf %390, %396 : vector<4x128xf32>
    %c12_415 = arith.constant 12 : index
    %c0_416 = arith.constant 0 : index
    %c0_417 = arith.constant 0 : index
    %c0_418 = arith.constant 0 : index
    %c0_419 = arith.constant 0 : index
    %398 = vector.load %arg13[%c12_415, %c0_416, %c0_417, %c0_418, %c0_419] : memref<16x1x3x3x128xbf16, #tpu.memory_space<vmem>>, vector<1x1x2x2x128xbf16>
    %399 = vector.shape_cast %398 : vector<1x1x2x2x128xbf16> to vector<1x2x2x128xbf16>
    %400 = vector.shape_cast %399 : vector<1x2x2x128xbf16> to vector<4x128xbf16>
    %c3_420 = arith.constant 3 : index
    %c0_421 = arith.constant 0 : index
    %c0_422 = arith.constant 0 : index
    %401 = vector.load %arg4[%c3_420, %c0_421, %c0_422] : memref<9x128x128xbf16, #tpu.memory_space<vmem>>, vector<1x128x128xbf16>
    %402 = vector.shape_cast %401 : vector<1x128x128xbf16> to vector<128x128xbf16>
    %cst_423 = arith.constant dense<0.000000e+00> : vector<4x128xf32>
    %403 = tpu.matmul %400, %402, %cst_423 {dimension_numbers = #tpu.dot_dimension_numbers<[1], [0], [0], [1], [0, 0, 1, 1], [], []>} : vector<4x128xbf16>, vector<128x128xbf16>, vector<4x128xf32> -> vector<4x128xf32>
    %404 = arith.addf %397, %403 : vector<4x128xf32>
    %c13_424 = arith.constant 13 : index
    %c0_425 = arith.constant 0 : index
    %c0_426 = arith.constant 0 : index
    %c0_427 = arith.constant 0 : index
    %c0_428 = arith.constant 0 : index
    %405 = vector.load %arg13[%c13_424, %c0_425, %c0_426, %c0_427, %c0_428] : memref<16x1x3x3x128xbf16, #tpu.memory_space<vmem>>, vector<1x1x2x2x128xbf16>
    %406 = vector.shape_cast %405 : vector<1x1x2x2x128xbf16> to vector<1x2x2x128xbf16>
    %407 = vector.shape_cast %406 : vector<1x2x2x128xbf16> to vector<4x128xbf16>
    %c4_429 = arith.constant 4 : index
    %c0_430 = arith.constant 0 : index
    %c0_431 = arith.constant 0 : index
    %408 = vector.load %arg4[%c4_429, %c0_430, %c0_431] : memref<9x128x128xbf16, #tpu.memory_space<vmem>>, vector<1x128x128xbf16>
    %409 = vector.shape_cast %408 : vector<1x128x128xbf16> to vector<128x128xbf16>
    %cst_432 = arith.constant dense<0.000000e+00> : vector<4x128xf32>
    %410 = tpu.matmul %407, %409, %cst_432 {dimension_numbers = #tpu.dot_dimension_numbers<[1], [0], [0], [1], [0, 0, 1, 1], [], []>} : vector<4x128xbf16>, vector<128x128xbf16>, vector<4x128xf32> -> vector<4x128xf32>
    %411 = arith.addf %404, %410 : vector<4x128xf32>
    %c14_433 = arith.constant 14 : index
    %c0_434 = arith.constant 0 : index
    %c0_435 = arith.constant 0 : index
    %c0_436 = arith.constant 0 : index
    %c0_437 = arith.constant 0 : index
    %412 = vector.load %arg13[%c14_433, %c0_434, %c0_435, %c0_436, %c0_437] : memref<16x1x3x3x128xbf16, #tpu.memory_space<vmem>>, vector<1x1x2x2x128xbf16>
    %413 = vector.shape_cast %412 : vector<1x1x2x2x128xbf16> to vector<1x2x2x128xbf16>
    %414 = vector.shape_cast %413 : vector<1x2x2x128xbf16> to vector<4x128xbf16>
    %c5_438 = arith.constant 5 : index
    %c0_439 = arith.constant 0 : index
    %c0_440 = arith.constant 0 : index
    %415 = vector.load %arg4[%c5_438, %c0_439, %c0_440] : memref<9x128x128xbf16, #tpu.memory_space<vmem>>, vector<1x128x128xbf16>
    %416 = vector.shape_cast %415 : vector<1x128x128xbf16> to vector<128x128xbf16>
    %cst_441 = arith.constant dense<0.000000e+00> : vector<4x128xf32>
    %417 = tpu.matmul %414, %416, %cst_441 {dimension_numbers = #tpu.dot_dimension_numbers<[1], [0], [0], [1], [0, 0, 1, 1], [], []>} : vector<4x128xbf16>, vector<128x128xbf16>, vector<4x128xf32> -> vector<4x128xf32>
    %418 = arith.addf %411, %417 : vector<4x128xf32>
    %c0_442 = arith.constant 0 : index
    %c0_443 = arith.constant 0 : index
    %c1_444 = arith.constant 1 : index
    %c0_445 = arith.constant 0 : index
    %c0_446 = arith.constant 0 : index
    %419 = vector.load %arg13[%c0_442, %c0_443, %c1_444, %c0_445, %c0_446] : memref<16x1x3x3x128xbf16, #tpu.memory_space<vmem>>, vector<1x1x2x2x128xbf16>
    %420 = vector.shape_cast %419 : vector<1x1x2x2x128xbf16> to vector<1x2x2x128xbf16>
    %421 = vector.shape_cast %420 : vector<1x2x2x128xbf16> to vector<4x128xbf16>
    %c6_447 = arith.constant 6 : index
    %c0_448 = arith.constant 0 : index
    %c0_449 = arith.constant 0 : index
    %422 = vector.load %arg4[%c6_447, %c0_448, %c0_449] : memref<9x128x128xbf16, #tpu.memory_space<vmem>>, vector<1x128x128xbf16>
    %423 = vector.shape_cast %422 : vector<1x128x128xbf16> to vector<128x128xbf16>
    %cst_450 = arith.constant dense<0.000000e+00> : vector<4x128xf32>
    %424 = tpu.matmul %421, %423, %cst_450 {dimension_numbers = #tpu.dot_dimension_numbers<[1], [0], [0], [1], [0, 0, 1, 1], [], []>} : vector<4x128xbf16>, vector<128x128xbf16>, vector<4x128xf32> -> vector<4x128xf32>
    %425 = arith.addf %418, %424 : vector<4x128xf32>
    %c1_451 = arith.constant 1 : index
    %c0_452 = arith.constant 0 : index
    %c1_453 = arith.constant 1 : index
    %c0_454 = arith.constant 0 : index
    %c0_455 = arith.constant 0 : index
    %426 = vector.load %arg13[%c1_451, %c0_452, %c1_453, %c0_454, %c0_455] : memref<16x1x3x3x128xbf16, #tpu.memory_space<vmem>>, vector<1x1x2x2x128xbf16>
    %427 = vector.shape_cast %426 : vector<1x1x2x2x128xbf16> to vector<1x2x2x128xbf16>
    %428 = vector.shape_cast %427 : vector<1x2x2x128xbf16> to vector<4x128xbf16>
    %c7_456 = arith.constant 7 : index
    %c0_457 = arith.constant 0 : index
    %c0_458 = arith.constant 0 : index
    %429 = vector.load %arg4[%c7_456, %c0_457, %c0_458] : memref<9x128x128xbf16, #tpu.memory_space<vmem>>, vector<1x128x128xbf16>
    %430 = vector.shape_cast %429 : vector<1x128x128xbf16> to vector<128x128xbf16>
    %cst_459 = arith.constant dense<0.000000e+00> : vector<4x128xf32>
    %431 = tpu.matmul %428, %430, %cst_459 {dimension_numbers = #tpu.dot_dimension_numbers<[1], [0], [0], [1], [0, 0, 1, 1], [], []>} : vector<4x128xbf16>, vector<128x128xbf16>, vector<4x128xf32> -> vector<4x128xf32>
    %432 = arith.addf %425, %431 : vector<4x128xf32>
    %c2_460 = arith.constant 2 : index
    %c0_461 = arith.constant 0 : index
    %c1_462 = arith.constant 1 : index
    %c0_463 = arith.constant 0 : index
    %c0_464 = arith.constant 0 : index
    %433 = vector.load %arg13[%c2_460, %c0_461, %c1_462, %c0_463, %c0_464] : memref<16x1x3x3x128xbf16, #tpu.memory_space<vmem>>, vector<1x1x2x2x128xbf16>
    %434 = vector.shape_cast %433 : vector<1x1x2x2x128xbf16> to vector<1x2x2x128xbf16>
    %435 = vector.shape_cast %434 : vector<1x2x2x128xbf16> to vector<4x128xbf16>
    %c8_465 = arith.constant 8 : index
    %c0_466 = arith.constant 0 : index
    %c0_467 = arith.constant 0 : index
    %436 = vector.load %arg4[%c8_465, %c0_466, %c0_467] : memref<9x128x128xbf16, #tpu.memory_space<vmem>>, vector<1x128x128xbf16>
    %437 = vector.shape_cast %436 : vector<1x128x128xbf16> to vector<128x128xbf16>
    %cst_468 = arith.constant dense<0.000000e+00> : vector<4x128xf32>
    %438 = tpu.matmul %435, %437, %cst_468 {dimension_numbers = #tpu.dot_dimension_numbers<[1], [0], [0], [1], [0, 0, 1, 1], [], []>} : vector<4x128xbf16>, vector<128x128xbf16>, vector<4x128xf32> -> vector<4x128xf32>
    %439 = arith.addf %432, %438 : vector<4x128xf32>
    %c0_469 = arith.constant 0 : index
    %c0_470 = arith.constant 0 : index
    %440 = vector.load %arg5[%c0_469, %c0_470] : memref<1x128xf32, #tpu.memory_space<vmem>>, vector<1x128xf32>
    %441 = vector.broadcast %440 : vector<1x128xf32> to vector<4x128xf32>
    %442 = arith.addf %439, %441 : vector<4x128xf32>
    %cst_471 = arith.constant 0.000000e+00 : f32
    %443 = vector.broadcast %cst_471 : f32 to vector<4x128xf32>
    %444 = arith.maximumf %442, %443 : vector<4x128xf32>
    %445 = arith.truncf %444 : vector<4x128xf32> to vector<4x128xbf16>
    %446 = vector.shape_cast %445 : vector<4x128xbf16> to vector<1x2x2x128xbf16>
    %c1_472 = arith.constant 1 : index
    %c0_473 = arith.constant 0 : index
    %c1_474 = arith.constant 1 : index
    %c0_475 = arith.constant 0 : index
    %c0_476 = arith.constant 0 : index
    %447 = vector.load %arg14[%c1_472, %c0_473, %c1_474, %c0_475, %c0_476] : memref<4x1x3x3x128xbf16, #tpu.memory_space<vmem>>, vector<1x1x2x2x128xbf16>
    %448 = vector.shape_cast %447 : vector<1x1x2x2x128xbf16> to vector<1x2x2x128xbf16>
    %449 = vector.shape_cast %446 : vector<1x2x2x128xbf16> to vector<1x1x2x2x128xbf16>
    tpu.vector_store %arg14[%c1_472, %c0_473, %c1_474, %c0_475, %c0_476], %449 {strides = array<i32>} : memref<4x1x3x3x128xbf16, #tpu.memory_space<vmem>>, vector<1x1x2x2x128xbf16>,
    %cst_477 = arith.constant 0.000000e+00 : f32
    %450 = vector.broadcast %cst_477 : f32 to vector<4x128xf32>
    %c10_478 = arith.constant 10 : index
    %c0_479 = arith.constant 0 : index
    %c0_480 = arith.constant 0 : index
    %c0_481 = arith.constant 0 : index
    %c0_482 = arith.constant 0 : index
    %451 = vector.load %arg13[%c10_478, %c0_479, %c0_480, %c0_481, %c0_482] : memref<16x1x3x3x128xbf16, #tpu.memory_space<vmem>>, vector<1x1x2x2x128xbf16>
    %452 = vector.shape_cast %451 : vector<1x1x2x2x128xbf16> to vector<1x2x2x128xbf16>
    %453 = vector.shape_cast %452 : vector<1x2x2x128xbf16> to vector<4x128xbf16>
    %c0_483 = arith.constant 0 : index
    %c0_484 = arith.constant 0 : index
    %c0_485 = arith.constant 0 : index
    %454 = vector.load %arg4[%c0_483, %c0_484, %c0_485] : memref<9x128x128xbf16, #tpu.memory_space<vmem>>, vector<1x128x128xbf16>
    %455 = vector.shape_cast %454 : vector<1x128x128xbf16> to vector<128x128xbf16>
    %cst_486 = arith.constant dense<0.000000e+00> : vector<4x128xf32>
    %456 = tpu.matmul %453, %455, %cst_486 {dimension_numbers = #tpu.dot_dimension_numbers<[1], [0], [0], [1], [0, 0, 1, 1], [], []>} : vector<4x128xbf16>, vector<128x128xbf16>, vector<4x128xf32> -> vector<4x128xf32>
    %457 = arith.addf %450, %456 : vector<4x128xf32>
    %c11_487 = arith.constant 11 : index
    %c0_488 = arith.constant 0 : index
    %c0_489 = arith.constant 0 : index
    %c0_490 = arith.constant 0 : index
    %c0_491 = arith.constant 0 : index
    %458 = vector.load %arg13[%c11_487, %c0_488, %c0_489, %c0_490, %c0_491] : memref<16x1x3x3x128xbf16, #tpu.memory_space<vmem>>, vector<1x1x2x2x128xbf16>
    %459 = vector.shape_cast %458 : vector<1x1x2x2x128xbf16> to vector<1x2x2x128xbf16>
    %460 = vector.shape_cast %459 : vector<1x2x2x128xbf16> to vector<4x128xbf16>
    %c1_492 = arith.constant 1 : index
    %c0_493 = arith.constant 0 : index
    %c0_494 = arith.constant 0 : index
    %461 = vector.load %arg4[%c1_492, %c0_493, %c0_494] : memref<9x128x128xbf16, #tpu.memory_space<vmem>>, vector<1x128x128xbf16>
    %462 = vector.shape_cast %461 : vector<1x128x128xbf16> to vector<128x128xbf16>
    %cst_495 = arith.constant dense<0.000000e+00> : vector<4x128xf32>
    %463 = tpu.matmul %460, %462, %cst_495 {dimension_numbers = #tpu.dot_dimension_numbers<[1], [0], [0], [1], [0, 0, 1, 1], [], []>} : vector<4x128xbf16>, vector<128x128xbf16>, vector<4x128xf32> -> vector<4x128xf32>
    %464 = arith.addf %457, %463 : vector<4x128xf32>
    %c8_496 = arith.constant 8 : index
    %c0_497 = arith.constant 0 : index
    %c0_498 = arith.constant 0 : index
    %c1_499 = arith.constant 1 : index
    %c0_500 = arith.constant 0 : index
    %465 = vector.load %arg13[%c8_496, %c0_497, %c0_498, %c1_499, %c0_500] : memref<16x1x3x3x128xbf16, #tpu.memory_space<vmem>>, vector<1x1x2x2x128xbf16>
    %466 = vector.shape_cast %465 : vector<1x1x2x2x128xbf16> to vector<1x2x2x128xbf16>
    %467 = vector.shape_cast %466 : vector<1x2x2x128xbf16> to vector<4x128xbf16>
    %c2_501 = arith.constant 2 : index
    %c0_502 = arith.constant 0 : index
    %c0_503 = arith.constant 0 : index
    %468 = vector.load %arg4[%c2_501, %c0_502, %c0_503] : memref<9x128x128xbf16, #tpu.memory_space<vmem>>, vector<1x128x128xbf16>
    %469 = vector.shape_cast %468 : vector<1x128x128xbf16> to vector<128x128xbf16>
    %cst_504 = arith.constant dense<0.000000e+00> : vector<4x128xf32>
    %470 = tpu.matmul %467, %469, %cst_504 {dimension_numbers = #tpu.dot_dimension_numbers<[1], [0], [0], [1], [0, 0, 1, 1], [], []>} : vector<4x128xbf16>, vector<128x128xbf16>, vector<4x128xf32> -> vector<4x128xf32>
    %471 = arith.addf %464, %470 : vector<4x128xf32>
    %c14_505 = arith.constant 14 : index
    %c0_506 = arith.constant 0 : index
    %c0_507 = arith.constant 0 : index
    %c0_508 = arith.constant 0 : index
    %c0_509 = arith.constant 0 : index
    %472 = vector.load %arg13[%c14_505, %c0_506, %c0_507, %c0_508, %c0_509] : memref<16x1x3x3x128xbf16, #tpu.memory_space<vmem>>, vector<1x1x2x2x128xbf16>
    %473 = vector.shape_cast %472 : vector<1x1x2x2x128xbf16> to vector<1x2x2x128xbf16>
    %474 = vector.shape_cast %473 : vector<1x2x2x128xbf16> to vector<4x128xbf16>
    %c3_510 = arith.constant 3 : index
    %c0_511 = arith.constant 0 : index
    %c0_512 = arith.constant 0 : index
    %475 = vector.load %arg4[%c3_510, %c0_511, %c0_512] : memref<9x128x128xbf16, #tpu.memory_space<vmem>>, vector<1x128x128xbf16>
    %476 = vector.shape_cast %475 : vector<1x128x128xbf16> to vector<128x128xbf16>
    %cst_513 = arith.constant dense<0.000000e+00> : vector<4x128xf32>
    %477 = tpu.matmul %474, %476, %cst_513 {dimension_numbers = #tpu.dot_dimension_numbers<[1], [0], [0], [1], [0, 0, 1, 1], [], []>} : vector<4x128xbf16>, vector<128x128xbf16>, vector<4x128xf32> -> vector<4x128xf32>
    %478 = arith.addf %471, %477 : vector<4x128xf32>
    %c15_514 = arith.constant 15 : index
    %c0_515 = arith.constant 0 : index
    %c0_516 = arith.constant 0 : index
    %c0_517 = arith.constant 0 : index
    %c0_518 = arith.constant 0 : index
    %479 = vector.load %arg13[%c15_514, %c0_515, %c0_516, %c0_517, %c0_518] : memref<16x1x3x3x128xbf16, #tpu.memory_space<vmem>>, vector<1x1x2x2x128xbf16>
    %480 = vector.shape_cast %479 : vector<1x1x2x2x128xbf16> to vector<1x2x2x128xbf16>
    %481 = vector.shape_cast %480 : vector<1x2x2x128xbf16> to vector<4x128xbf16>
    %c4_519 = arith.constant 4 : index
    %c0_520 = arith.constant 0 : index
    %c0_521 = arith.constant 0 : index
    %482 = vector.load %arg4[%c4_519, %c0_520, %c0_521] : memref<9x128x128xbf16, #tpu.memory_space<vmem>>, vector<1x128x128xbf16>
    %483 = vector.shape_cast %482 : vector<1x128x128xbf16> to vector<128x128xbf16>
    %cst_522 = arith.constant dense<0.000000e+00> : vector<4x128xf32>
    %484 = tpu.matmul %481, %483, %cst_522 {dimension_numbers = #tpu.dot_dimension_numbers<[1], [0], [0], [1], [0, 0, 1, 1], [], []>} : vector<4x128xbf16>, vector<128x128xbf16>, vector<4x128xf32> -> vector<4x128xf32>
    %485 = arith.addf %478, %484 : vector<4x128xf32>
    %c12_523 = arith.constant 12 : index
    %c0_524 = arith.constant 0 : index
    %c0_525 = arith.constant 0 : index
    %c1_526 = arith.constant 1 : index
    %c0_527 = arith.constant 0 : index
    %486 = vector.load %arg13[%c12_523, %c0_524, %c0_525, %c1_526, %c0_527] : memref<16x1x3x3x128xbf16, #tpu.memory_space<vmem>>, vector<1x1x2x2x128xbf16>
    %487 = vector.shape_cast %486 : vector<1x1x2x2x128xbf16> to vector<1x2x2x128xbf16>
    %488 = vector.shape_cast %487 : vector<1x2x2x128xbf16> to vector<4x128xbf16>
    %c5_528 = arith.constant 5 : index
    %c0_529 = arith.constant 0 : index
    %c0_530 = arith.constant 0 : index
    %489 = vector.load %arg4[%c5_528, %c0_529, %c0_530] : memref<9x128x128xbf16, #tpu.memory_space<vmem>>, vector<1x128x128xbf16>
    %490 = vector.shape_cast %489 : vector<1x128x128xbf16> to vector<128x128xbf16>
    %cst_531 = arith.constant dense<0.000000e+00> : vector<4x128xf32>
    %491 = tpu.matmul %488, %490, %cst_531 {dimension_numbers = #tpu.dot_dimension_numbers<[1], [0], [0], [1], [0, 0, 1, 1], [], []>} : vector<4x128xbf16>, vector<128x128xbf16>, vector<4x128xf32> -> vector<4x128xf32>
    %492 = arith.addf %485, %491 : vector<4x128xf32>
    %c2_532 = arith.constant 2 : index
    %c0_533 = arith.constant 0 : index
    %c1_534 = arith.constant 1 : index
    %c0_535 = arith.constant 0 : index
    %c0_536 = arith.constant 0 : index
    %493 = vector.load %arg13[%c2_532, %c0_533, %c1_534, %c0_535, %c0_536] : memref<16x1x3x3x128xbf16, #tpu.memory_space<vmem>>, vector<1x1x2x2x128xbf16>
    %494 = vector.shape_cast %493 : vector<1x1x2x2x128xbf16> to vector<1x2x2x128xbf16>
    %495 = vector.shape_cast %494 : vector<1x2x2x128xbf16> to vector<4x128xbf16>
    %c6_537 = arith.constant 6 : index
    %c0_538 = arith.constant 0 : index
    %c0_539 = arith.constant 0 : index
    %496 = vector.load %arg4[%c6_537, %c0_538, %c0_539] : memref<9x128x128xbf16, #tpu.memory_space<vmem>>, vector<1x128x128xbf16>
    %497 = vector.shape_cast %496 : vector<1x128x128xbf16> to vector<128x128xbf16>
    %cst_540 = arith.constant dense<0.000000e+00> : vector<4x128xf32>
    %498 = tpu.matmul %495, %497, %cst_540 {dimension_numbers = #tpu.dot_dimension_numbers<[1], [0], [0], [1], [0, 0, 1, 1], [], []>} : vector<4x128xbf16>, vector<128x128xbf16>, vector<4x128xf32> -> vector<4x128xf32>
    %499 = arith.addf %492, %498 : vector<4x128xf32>
    %c3_541 = arith.constant 3 : index
    %c0_542 = arith.constant 0 : index
    %c1_543 = arith.constant 1 : index
    %c0_544 = arith.constant 0 : index
    %c0_545 = arith.constant 0 : index
    %500 = vector.load %arg13[%c3_541, %c0_542, %c1_543, %c0_544, %c0_545] : memref<16x1x3x3x128xbf16, #tpu.memory_space<vmem>>, vector<1x1x2x2x128xbf16>
    %501 = vector.shape_cast %500 : vector<1x1x2x2x128xbf16> to vector<1x2x2x128xbf16>
    %502 = vector.shape_cast %501 : vector<1x2x2x128xbf16> to vector<4x128xbf16>
    %c7_546 = arith.constant 7 : index
    %c0_547 = arith.constant 0 : index
    %c0_548 = arith.constant 0 : index
    %503 = vector.load %arg4[%c7_546, %c0_547, %c0_548] : memref<9x128x128xbf16, #tpu.memory_space<vmem>>, vector<1x128x128xbf16>
    %504 = vector.shape_cast %503 : vector<1x128x128xbf16> to vector<128x128xbf16>
    %cst_549 = arith.constant dense<0.000000e+00> : vector<4x128xf32>
    %505 = tpu.matmul %502, %504, %cst_549 {dimension_numbers = #tpu.dot_dimension_numbers<[1], [0], [0], [1], [0, 0, 1, 1], [], []>} : vector<4x128xbf16>, vector<128x128xbf16>, vector<4x128xf32> -> vector<4x128xf32>
    %506 = arith.addf %499, %505 : vector<4x128xf32>
    %c0_550 = arith.constant 0 : index
    %c0_551 = arith.constant 0 : index
    %c1_552 = arith.constant 1 : index
    %c1_553 = arith.constant 1 : index
    %c0_554 = arith.constant 0 : index
    %507 = vector.load %arg13[%c0_550, %c0_551, %c1_552, %c1_553, %c0_554] : memref<16x1x3x3x128xbf16, #tpu.memory_space<vmem>>, vector<1x1x2x2x128xbf16>
    %508 = vector.shape_cast %507 : vector<1x1x2x2x128xbf16> to vector<1x2x2x128xbf16>
    %509 = vector.shape_cast %508 : vector<1x2x2x128xbf16> to vector<4x128xbf16>
    %c8_555 = arith.constant 8 : index
    %c0_556 = arith.constant 0 : index
    %c0_557 = arith.constant 0 : index
    %510 = vector.load %arg4[%c8_555, %c0_556, %c0_557] : memref<9x128x128xbf16, #tpu.memory_space<vmem>>, vector<1x128x128xbf16>
    %511 = vector.shape_cast %510 : vector<1x128x128xbf16> to vector<128x128xbf16>
    %cst_558 = arith.constant dense<0.000000e+00> : vector<4x128xf32>
    %512 = tpu.matmul %509, %511, %cst_558 {dimension_numbers = #tpu.dot_dimension_numbers<[1], [0], [0], [1], [0, 0, 1, 1], [], []>} : vector<4x128xbf16>, vector<128x128xbf16>, vector<4x128xf32> -> vector<4x128xf32>
    %513 = arith.addf %506, %512 : vector<4x128xf32>
    %c0_559 = arith.constant 0 : index
    %c0_560 = arith.constant 0 : index
    %514 = vector.load %arg5[%c0_559, %c0_560] : memref<1x128xf32, #tpu.memory_space<vmem>>, vector<1x128xf32>
    %515 = vector.broadcast %514 : vector<1x128xf32> to vector<4x128xf32>
    %516 = arith.addf %513, %515 : vector<4x128xf32>
    %cst_561 = arith.constant 0.000000e+00 : f32
    %517 = vector.broadcast %cst_561 : f32 to vector<4x128xf32>
    %518 = arith.maximumf %516, %517 : vector<4x128xf32>
    %519 = arith.truncf %518 : vector<4x128xf32> to vector<4x128xbf16>
    %520 = vector.shape_cast %519 : vector<4x128xbf16> to vector<1x2x2x128xbf16>
    %c0_562 = arith.constant 0 : index
    %c0_563 = arith.constant 0 : index
    %c1_564 = arith.constant 1 : index
    %c1_565 = arith.constant 1 : index
    %c0_566 = arith.constant 0 : index
    %521 = vector.load %arg14[%c0_562, %c0_563, %c1_564, %c1_565, %c0_566] : memref<4x1x3x3x128xbf16, #tpu.memory_space<vmem>>, vector<1x1x2x2x128xbf16>
    %522 = vector.shape_cast %521 : vector<1x1x2x2x128xbf16> to vector<1x2x2x128xbf16>
    %523 = vector.shape_cast %520 : vector<1x2x2x128xbf16> to vector<1x1x2x2x128xbf16>
    tpu.vector_store %arg14[%c0_562, %c0_563, %c1_564, %c1_565, %c0_566], %523 {strides = array<i32>} : memref<4x1x3x3x128xbf16, #tpu.memory_space<vmem>>, vector<1x1x2x2x128xbf16>,
    %cst_567 = arith.constant 0.000000e+00 : f32
    %524 = vector.broadcast %cst_567 : f32 to vector<4x128xf32>
    %c0_568 = arith.constant 0 : index
    %c0_569 = arith.constant 0 : index
    %c0_570 = arith.constant 0 : index
    %c0_571 = arith.constant 0 : index
    %c0_572 = arith.constant 0 : index
    %525 = vector.load %arg14[%c0_568, %c0_569, %c0_570, %c0_571, %c0_572] : memref<4x1x3x3x128xbf16, #tpu.memory_space<vmem>>, vector<1x1x2x2x128xbf16>
    %526 = vector.shape_cast %525 : vector<1x1x2x2x128xbf16> to vector<1x2x2x128xbf16>
    %527 = vector.shape_cast %526 : vector<1x2x2x128xbf16> to vector<4x128xbf16>
    %c0_573 = arith.constant 0 : index
    %c0_574 = arith.constant 0 : index
    %c0_575 = arith.constant 0 : index
    %528 = vector.load %arg6[%c0_573, %c0_574, %c0_575] : memref<9x128x128xbf16, #tpu.memory_space<vmem>>, vector<1x128x128xbf16>
    %529 = vector.shape_cast %528 : vector<1x128x128xbf16> to vector<128x128xbf16>
    %cst_576 = arith.constant dense<0.000000e+00> : vector<4x128xf32>
    %530 = tpu.matmul %527, %529, %cst_576 {dimension_numbers = #tpu.dot_dimension_numbers<[1], [0], [0], [1], [0, 0, 1, 1], [], []>} : vector<4x128xbf16>, vector<128x128xbf16>, vector<4x128xf32> -> vector<4x128xf32>
    %531 = arith.addf %524, %530 : vector<4x128xf32>
    %c1_577 = arith.constant 1 : index
    %c0_578 = arith.constant 0 : index
    %c0_579 = arith.constant 0 : index
    %c0_580 = arith.constant 0 : index
    %c0_581 = arith.constant 0 : index
    %532 = vector.load %arg14[%c1_577, %c0_578, %c0_579, %c0_580, %c0_581] : memref<4x1x3x3x128xbf16, #tpu.memory_space<vmem>>, vector<1x1x2x2x128xbf16>
    %533 = vector.shape_cast %532 : vector<1x1x2x2x128xbf16> to vector<1x2x2x128xbf16>
    %534 = vector.shape_cast %533 : vector<1x2x2x128xbf16> to vector<4x128xbf16>
    %c1_582 = arith.constant 1 : index
    %c0_583 = arith.constant 0 : index
    %c0_584 = arith.constant 0 : index
    %535 = vector.load %arg6[%c1_582, %c0_583, %c0_584] : memref<9x128x128xbf16, #tpu.memory_space<vmem>>, vector<1x128x128xbf16>
    %536 = vector.shape_cast %535 : vector<1x128x128xbf16> to vector<128x128xbf16>
    %cst_585 = arith.constant dense<0.000000e+00> : vector<4x128xf32>
    %537 = tpu.matmul %534, %536, %cst_585 {dimension_numbers = #tpu.dot_dimension_numbers<[1], [0], [0], [1], [0, 0, 1, 1], [], []>} : vector<4x128xbf16>, vector<128x128xbf16>, vector<4x128xf32> -> vector<4x128xf32>
    %538 = arith.addf %531, %537 : vector<4x128xf32>
    %c0_586 = arith.constant 0 : index
    %c0_587 = arith.constant 0 : index
    %c0_588 = arith.constant 0 : index
    %c1_589 = arith.constant 1 : index
    %c0_590 = arith.constant 0 : index
    %539 = vector.load %arg14[%c0_586, %c0_587, %c0_588, %c1_589, %c0_590] : memref<4x1x3x3x128xbf16, #tpu.memory_space<vmem>>, vector<1x1x2x2x128xbf16>
    %540 = vector.shape_cast %539 : vector<1x1x2x2x128xbf16> to vector<1x2x2x128xbf16>
    %541 = vector.shape_cast %540 : vector<1x2x2x128xbf16> to vector<4x128xbf16>
    %c2_591 = arith.constant 2 : index
    %c0_592 = arith.constant 0 : index
    %c0_593 = arith.constant 0 : index
    %542 = vector.load %arg6[%c2_591, %c0_592, %c0_593] : memref<9x128x128xbf16, #tpu.memory_space<vmem>>, vector<1x128x128xbf16>
    %543 = vector.shape_cast %542 : vector<1x128x128xbf16> to vector<128x128xbf16>
    %cst_594 = arith.constant dense<0.000000e+00> : vector<4x128xf32>
    %544 = tpu.matmul %541, %543, %cst_594 {dimension_numbers = #tpu.dot_dimension_numbers<[1], [0], [0], [1], [0, 0, 1, 1], [], []>} : vector<4x128xbf16>, vector<128x128xbf16>, vector<4x128xf32> -> vector<4x128xf32>
    %545 = arith.addf %538, %544 : vector<4x128xf32>
    %c2_595 = arith.constant 2 : index
    %c0_596 = arith.constant 0 : index
    %c0_597 = arith.constant 0 : index
    %c0_598 = arith.constant 0 : index
    %c0_599 = arith.constant 0 : index
    %546 = vector.load %arg14[%c2_595, %c0_596, %c0_597, %c0_598, %c0_599] : memref<4x1x3x3x128xbf16, #tpu.memory_space<vmem>>, vector<1x1x2x2x128xbf16>
    %547 = vector.shape_cast %546 : vector<1x1x2x2x128xbf16> to vector<1x2x2x128xbf16>
    %548 = vector.shape_cast %547 : vector<1x2x2x128xbf16> to vector<4x128xbf16>
    %c3_600 = arith.constant 3 : index
    %c0_601 = arith.constant 0 : index
    %c0_602 = arith.constant 0 : index
    %549 = vector.load %arg6[%c3_600, %c0_601, %c0_602] : memref<9x128x128xbf16, #tpu.memory_space<vmem>>, vector<1x128x128xbf16>
    %550 = vector.shape_cast %549 : vector<1x128x128xbf16> to vector<128x128xbf16>
    %cst_603 = arith.constant dense<0.000000e+00> : vector<4x128xf32>
    %551 = tpu.matmul %548, %550, %cst_603 {dimension_numbers = #tpu.dot_dimension_numbers<[1], [0], [0], [1], [0, 0, 1, 1], [], []>} : vector<4x128xbf16>, vector<128x128xbf16>, vector<4x128xf32> -> vector<4x128xf32>
    %552 = arith.addf %545, %551 : vector<4x128xf32>
    %c3_604 = arith.constant 3 : index
    %c0_605 = arith.constant 0 : index
    %c0_606 = arith.constant 0 : index
    %c0_607 = arith.constant 0 : index
    %c0_608 = arith.constant 0 : index
    %553 = vector.load %arg14[%c3_604, %c0_605, %c0_606, %c0_607, %c0_608] : memref<4x1x3x3x128xbf16, #tpu.memory_space<vmem>>, vector<1x1x2x2x128xbf16>
    %554 = vector.shape_cast %553 : vector<1x1x2x2x128xbf16> to vector<1x2x2x128xbf16>
    %555 = vector.shape_cast %554 : vector<1x2x2x128xbf16> to vector<4x128xbf16>
    %c4_609 = arith.constant 4 : index
    %c0_610 = arith.constant 0 : index
    %c0_611 = arith.constant 0 : index
    %556 = vector.load %arg6[%c4_609, %c0_610, %c0_611] : memref<9x128x128xbf16, #tpu.memory_space<vmem>>, vector<1x128x128xbf16>
    %557 = vector.shape_cast %556 : vector<1x128x128xbf16> to vector<128x128xbf16>
    %cst_612 = arith.constant dense<0.000000e+00> : vector<4x128xf32>
    %558 = tpu.matmul %555, %557, %cst_612 {dimension_numbers = #tpu.dot_dimension_numbers<[1], [0], [0], [1], [0, 0, 1, 1], [], []>} : vector<4x128xbf16>, vector<128x128xbf16>, vector<4x128xf32> -> vector<4x128xf32>
    %559 = arith.addf %552, %558 : vector<4x128xf32>
    %c2_613 = arith.constant 2 : index
    %c0_614 = arith.constant 0 : index
    %c0_615 = arith.constant 0 : index
    %c1_616 = arith.constant 1 : index
    %c0_617 = arith.constant 0 : index
    %560 = vector.load %arg14[%c2_613, %c0_614, %c0_615, %c1_616, %c0_617] : memref<4x1x3x3x128xbf16, #tpu.memory_space<vmem>>, vector<1x1x2x2x128xbf16>
    %561 = vector.shape_cast %560 : vector<1x1x2x2x128xbf16> to vector<1x2x2x128xbf16>
    %562 = vector.shape_cast %561 : vector<1x2x2x128xbf16> to vector<4x128xbf16>
    %c5_618 = arith.constant 5 : index
    %c0_619 = arith.constant 0 : index
    %c0_620 = arith.constant 0 : index
    %563 = vector.load %arg6[%c5_618, %c0_619, %c0_620] : memref<9x128x128xbf16, #tpu.memory_space<vmem>>, vector<1x128x128xbf16>
    %564 = vector.shape_cast %563 : vector<1x128x128xbf16> to vector<128x128xbf16>
    %cst_621 = arith.constant dense<0.000000e+00> : vector<4x128xf32>
    %565 = tpu.matmul %562, %564, %cst_621 {dimension_numbers = #tpu.dot_dimension_numbers<[1], [0], [0], [1], [0, 0, 1, 1], [], []>} : vector<4x128xbf16>, vector<128x128xbf16>, vector<4x128xf32> -> vector<4x128xf32>
    %566 = arith.addf %559, %565 : vector<4x128xf32>
    %c0_622 = arith.constant 0 : index
    %c0_623 = arith.constant 0 : index
    %c1_624 = arith.constant 1 : index
    %c0_625 = arith.constant 0 : index
    %c0_626 = arith.constant 0 : index
    %567 = vector.load %arg14[%c0_622, %c0_623, %c1_624, %c0_625, %c0_626] : memref<4x1x3x3x128xbf16, #tpu.memory_space<vmem>>, vector<1x1x2x2x128xbf16>
    %568 = vector.shape_cast %567 : vector<1x1x2x2x128xbf16> to vector<1x2x2x128xbf16>
    %569 = vector.shape_cast %568 : vector<1x2x2x128xbf16> to vector<4x128xbf16>
    %c6_627 = arith.constant 6 : index
    %c0_628 = arith.constant 0 : index
    %c0_629 = arith.constant 0 : index
    %570 = vector.load %arg6[%c6_627, %c0_628, %c0_629] : memref<9x128x128xbf16, #tpu.memory_space<vmem>>, vector<1x128x128xbf16>
    %571 = vector.shape_cast %570 : vector<1x128x128xbf16> to vector<128x128xbf16>
    %cst_630 = arith.constant dense<0.000000e+00> : vector<4x128xf32>
    %572 = tpu.matmul %569, %571, %cst_630 {dimension_numbers = #tpu.dot_dimension_numbers<[1], [0], [0], [1], [0, 0, 1, 1], [], []>} : vector<4x128xbf16>, vector<128x128xbf16>, vector<4x128xf32> -> vector<4x128xf32>
    %573 = arith.addf %566, %572 : vector<4x128xf32>
    %c1_631 = arith.constant 1 : index
    %c0_632 = arith.constant 0 : index
    %c1_633 = arith.constant 1 : index
    %c0_634 = arith.constant 0 : index
    %c0_635 = arith.constant 0 : index
    %574 = vector.load %arg14[%c1_631, %c0_632, %c1_633, %c0_634, %c0_635] : memref<4x1x3x3x128xbf16, #tpu.memory_space<vmem>>, vector<1x1x2x2x128xbf16>
    %575 = vector.shape_cast %574 : vector<1x1x2x2x128xbf16> to vector<1x2x2x128xbf16>
    %576 = vector.shape_cast %575 : vector<1x2x2x128xbf16> to vector<4x128xbf16>
    %c7_636 = arith.constant 7 : index
    %c0_637 = arith.constant 0 : index
    %c0_638 = arith.constant 0 : index
    %577 = vector.load %arg6[%c7_636, %c0_637, %c0_638] : memref<9x128x128xbf16, #tpu.memory_space<vmem>>, vector<1x128x128xbf16>
    %578 = vector.shape_cast %577 : vector<1x128x128xbf16> to vector<128x128xbf16>
    %cst_639 = arith.constant dense<0.000000e+00> : vector<4x128xf32>
    %579 = tpu.matmul %576, %578, %cst_639 {dimension_numbers = #tpu.dot_dimension_numbers<[1], [0], [0], [1], [0, 0, 1, 1], [], []>} : vector<4x128xbf16>, vector<128x128xbf16>, vector<4x128xf32> -> vector<4x128xf32>
    %580 = arith.addf %573, %579 : vector<4x128xf32>
    %c0_640 = arith.constant 0 : index
    %c0_641 = arith.constant 0 : index
    %c1_642 = arith.constant 1 : index
    %c1_643 = arith.constant 1 : index
    %c0_644 = arith.constant 0 : index
    %581 = vector.load %arg14[%c0_640, %c0_641, %c1_642, %c1_643, %c0_644] : memref<4x1x3x3x128xbf16, #tpu.memory_space<vmem>>, vector<1x1x2x2x128xbf16>
    %582 = vector.shape_cast %581 : vector<1x1x2x2x128xbf16> to vector<1x2x2x128xbf16>
    %583 = vector.shape_cast %582 : vector<1x2x2x128xbf16> to vector<4x128xbf16>
    %c8_645 = arith.constant 8 : index
    %c0_646 = arith.constant 0 : index
    %c0_647 = arith.constant 0 : index
    %584 = vector.load %arg6[%c8_645, %c0_646, %c0_647] : memref<9x128x128xbf16, #tpu.memory_space<vmem>>, vector<1x128x128xbf16>
    %585 = vector.shape_cast %584 : vector<1x128x128xbf16> to vector<128x128xbf16>
    %cst_648 = arith.constant dense<0.000000e+00> : vector<4x128xf32>
    %586 = tpu.matmul %583, %585, %cst_648 {dimension_numbers = #tpu.dot_dimension_numbers<[1], [0], [0], [1], [0, 0, 1, 1], [], []>} : vector<4x128xbf16>, vector<128x128xbf16>, vector<4x128xf32> -> vector<4x128xf32>
    %587 = arith.addf %580, %586 : vector<4x128xf32>
    %c0_649 = arith.constant 0 : index
    %c0_650 = arith.constant 0 : index
    %588 = vector.load %arg7[%c0_649, %c0_650] : memref<1x128xf32, #tpu.memory_space<vmem>>, vector<1x128xf32>
    %589 = vector.broadcast %588 : vector<1x128xf32> to vector<4x128xf32>
    %590 = arith.addf %587, %589 : vector<4x128xf32>
    %cst_651 = arith.constant 0.000000e+00 : f32
    %591 = vector.broadcast %cst_651 : f32 to vector<4x128xf32>
    %592 = arith.maximumf %590, %591 : vector<4x128xf32>
    %593 = arith.truncf %592 : vector<4x128xf32> to vector<4x128xbf16>
    %c0_652 = arith.constant 0 : index
    %c0_653 = arith.constant 0 : index
    %594 = vector.load %arg8[%c0_652, %c0_653] : memref<128x128xbf16, #tpu.memory_space<vmem>>, vector<128x128xbf16>
    %cst_654 = arith.constant dense<0.000000e+00> : vector<4x128xf32>
    %595 = tpu.matmul %593, %594, %cst_654 {dimension_numbers = #tpu.dot_dimension_numbers<[1], [0], [0], [1], [0, 0, 1, 1], [], []>} : vector<4x128xbf16>, vector<128x128xbf16>, vector<4x128xf32> -> vector<4x128xf32>
    %c0_655 = arith.constant 0 : index
    %c0_656 = arith.constant 0 : index
    %596 = vector.load %arg9[%c0_655, %c0_656] : memref<1x128xf32, #tpu.memory_space<vmem>>, vector<1x128xf32>
    %597 = vector.broadcast %596 : vector<1x128xf32> to vector<4x128xf32>
    %598 = arith.addf %595, %597 : vector<4x128xf32>
    %599 = arith.truncf %598 : vector<4x128xf32> to vector<4x128xbf16>
    %600 = vector.shape_cast %599 : vector<4x128xbf16> to vector<1x4x128xbf16>
    %cst_657 = arith.constant 0.000000e+00 : f32
    %601 = vector.broadcast %cst_657 : f32 to vector<1x128xf32>
    %c0_658 = arith.constant 0 : index
    %c0_659 = arith.constant 0 : index
    %602 = vector.load %arg11[%c0_658, %c0_659] : memref<1x128xf32, #tpu.memory_space<vmem>>, vector<1x128xf32>
    %603 = arith.addf %601, %602 : vector<1x128xf32>
    %604 = vector.extract_strided_slice %600 {offsets = [0, 0, 0], sizes = [1, 1, 128], strides = [1, 1, 1]} : vector<1x4x128xbf16> to vector<1x1x128xbf16>
    %605 = vector.shape_cast %604 : vector<1x1x128xbf16> to vector<1x128xbf16>
    %c0_660 = arith.constant 0 : index
    %c0_661 = arith.constant 0 : index
    %c0_662 = arith.constant 0 : index
    %606 = vector.load %arg10[%c0_660, %c0_661, %c0_662] : memref<4x128x128xbf16, #tpu.memory_space<vmem>>, vector<1x128x128xbf16>
    %607 = vector.shape_cast %606 : vector<1x128x128xbf16> to vector<128x128xbf16>
    %cst_663 = arith.constant dense<0.000000e+00> : vector<1x128xf32>
    %608 = tpu.matmul %605, %607, %cst_663 {dimension_numbers = #tpu.dot_dimension_numbers<[1], [0], [0], [1], [0, 0, 1, 1], [], []>} : vector<1x128xbf16>, vector<128x128xbf16>, vector<1x128xf32> -> vector<1x128xf32>
    %609 = arith.addf %603, %608 : vector<1x128xf32>
    %610 = vector.extract_strided_slice %600 {offsets = [0, 1, 0], sizes = [1, 1, 128], strides = [1, 1, 1]} : vector<1x4x128xbf16> to vector<1x1x128xbf16>
    %611 = vector.shape_cast %610 : vector<1x1x128xbf16> to vector<1x128xbf16>
    %c1_664 = arith.constant 1 : index
    %c0_665 = arith.constant 0 : index
    %c0_666 = arith.constant 0 : index
    %612 = vector.load %arg10[%c1_664, %c0_665, %c0_666] : memref<4x128x128xbf16, #tpu.memory_space<vmem>>, vector<1x128x128xbf16>
    %613 = vector.shape_cast %612 : vector<1x128x128xbf16> to vector<128x128xbf16>
    %cst_667 = arith.constant dense<0.000000e+00> : vector<1x128xf32>
    %614 = tpu.matmul %611, %613, %cst_667 {dimension_numbers = #tpu.dot_dimension_numbers<[1], [0], [0], [1], [0, 0, 1, 1], [], []>} : vector<1x128xbf16>, vector<128x128xbf16>, vector<1x128xf32> -> vector<1x128xf32>
    %615 = arith.addf %609, %614 : vector<1x128xf32>
    %616 = vector.extract_strided_slice %600 {offsets = [0, 2, 0], sizes = [1, 1, 128], strides = [1, 1, 1]} : vector<1x4x128xbf16> to vector<1x1x128xbf16>
    %617 = vector.shape_cast %616 : vector<1x1x128xbf16> to vector<1x128xbf16>
    %c2_668 = arith.constant 2 : index
    %c0_669 = arith.constant 0 : index
    %c0_670 = arith.constant 0 : index
    %618 = vector.load %arg10[%c2_668, %c0_669, %c0_670] : memref<4x128x128xbf16, #tpu.memory_space<vmem>>, vector<1x128x128xbf16>
    %619 = vector.shape_cast %618 : vector<1x128x128xbf16> to vector<128x128xbf16>
    %cst_671 = arith.constant dense<0.000000e+00> : vector<1x128xf32>
    %620 = tpu.matmul %617, %619, %cst_671 {dimension_numbers = #tpu.dot_dimension_numbers<[1], [0], [0], [1], [0, 0, 1, 1], [], []>} : vector<1x128xbf16>, vector<128x128xbf16>, vector<1x128xf32> -> vector<1x128xf32>
    %621 = arith.addf %615, %620 : vector<1x128xf32>
    %622 = vector.extract_strided_slice %600 {offsets = [0, 3, 0], sizes = [1, 1, 128], strides = [1, 1, 1]} : vector<1x4x128xbf16> to vector<1x1x128xbf16>
    %623 = vector.shape_cast %622 : vector<1x1x128xbf16> to vector<1x128xbf16>
    %c3_672 = arith.constant 3 : index
    %c0_673 = arith.constant 0 : index
    %c0_674 = arith.constant 0 : index
    %624 = vector.load %arg10[%c3_672, %c0_673, %c0_674] : memref<4x128x128xbf16, #tpu.memory_space<vmem>>, vector<1x128x128xbf16>
    %625 = vector.shape_cast %624 : vector<1x128x128xbf16> to vector<128x128xbf16>
    %cst_675 = arith.constant dense<0.000000e+00> : vector<1x128xf32>
    %626 = tpu.matmul %623, %625, %cst_675 {dimension_numbers = #tpu.dot_dimension_numbers<[1], [0], [0], [1], [0, 0, 1, 1], [], []>} : vector<1x128xbf16>, vector<128x128xbf16>, vector<1x128xf32> -> vector<1x128xf32>
    %627 = arith.addf %621, %626 : vector<1x128xf32>
    %c0_676 = arith.constant 0 : index
    %c0_677 = arith.constant 0 : index
    %c0_678 = arith.constant 0 : index
    %628 = vector.load %arg12[%c0_676, %c0_677, %c0_678] : memref<1x1x128xf32, #tpu.memory_space<vmem>>, vector<1x1x128xf32>
    %629 = vector.shape_cast %628 : vector<1x1x128xf32> to vector<1x128xf32>
    %630 = vector.shape_cast %627 : vector<1x128xf32> to vector<1x1x128xf32>
    tpu.vector_store %arg12[%c0_676, %c0_677, %c0_678], %630 {strides = array<i32>} : memref<1x1x128xf32, #tpu.memory_space<vmem>>, vector<1x1x128xf32>,
    return
  }
  func.func @transform_0(%arg0: i32) -> (i32, i32, i32) {
    %c0_i32 = arith.constant 0 : i32
    %c0_i32_0 = arith.constant 0 : i32
    %c0_i32_1 = arith.constant 0 : i32
    return %arg0, %c0_i32, %c0_i32_0 : i32, i32, i32
  }
  func.func @transform_1(%arg0: i32) -> (i32, i32) {
    %c0_i32 = arith.constant 0 : i32
    %c0_i32_0 = arith.constant 0 : i32
    %c0_i32_1 = arith.constant 0 : i32
    return %c0_i32, %c0_i32_0 : i32, i32
  }
  func.func @transform_2(%arg0: i32) -> (i32, i32) {
    %c0_i32 = arith.constant 0 : i32
    %c0_i32_0 = arith.constant 0 : i32
    %c0_i32_1 = arith.constant 0 : i32
    return %c0_i32, %c0_i32_0 : i32, i32
  }
  func.func @transform_3(%arg0: i32) -> (i32, i32, i32) {
    %c0_i32 = arith.constant 0 : i32
    %c0_i32_0 = arith.constant 0 : i32
    %c0_i32_1 = arith.constant 0 : i32
    %c0_i32_2 = arith.constant 0 : i32
    return %c0_i32, %c0_i32_0, %c0_i32_1 : i32, i32, i32
  }
  func.func @transform_4(%arg0: i32) -> (i32, i32) {
    %c0_i32 = arith.constant 0 : i32
    %c0_i32_0 = arith.constant 0 : i32
    %c0_i32_1 = arith.constant 0 : i32
    return %c0_i32, %c0_i32_0 : i32, i32
  }
  func.func @transform_5(%arg0: i32) -> (i32, i32, i32) {
    %c0_i32 = arith.constant 0 : i32
    %c0_i32_0 = arith.constant 0 : i32
    %c0_i32_1 = arith.constant 0 : i32
    %c0_i32_2 = arith.constant 0 : i32
    return %c0_i32, %c0_i32_0, %c0_i32_1 : i32, i32, i32
  }
  func.func @transform_6(%arg0: i32) -> (i32, i32) {
    %c0_i32 = arith.constant 0 : i32
    %c0_i32_0 = arith.constant 0 : i32
    %c0_i32_1 = arith.constant 0 : i32
    return %c0_i32, %c0_i32_0 : i32, i32
  }
  func.func @transform_7(%arg0: i32) -> (i32, i32) {
    %c0_i32 = arith.constant 0 : i32
    %c0_i32_0 = arith.constant 0 : i32
    %c0_i32_1 = arith.constant 0 : i32
    return %c0_i32, %c0_i32_0 : i32, i32
  }
  func.func @transform_8(%arg0: i32) -> (i32, i32) {
    %c0_i32 = arith.constant 0 : i32
    %c0_i32_0 = arith.constant 0 : i32
    %c0_i32_1 = arith.constant 0 : i32
    return %c0_i32, %c0_i32_0 : i32, i32
  }
  func.func @transform_9(%arg0: i32) -> (i32, i32, i32) {
    %c0_i32 = arith.constant 0 : i32
    %c0_i32_0 = arith.constant 0 : i32
    %c0_i32_1 = arith.constant 0 : i32
    %c0_i32_2 = arith.constant 0 : i32
    return %c0_i32, %c0_i32_0, %c0_i32_1 : i32, i32, i32
  }
  func.func @transform_10(%arg0: i32) -> (i32, i32) {
    %c0_i32 = arith.constant 0 : i32
    %c0_i32_0 = arith.constant 0 : i32
    %c0_i32_1 = arith.constant 0 : i32
    return %c0_i32, %c0_i32_0 : i32, i32
  }
  func.func @transform_11(%arg0: i32) -> (i32, i32, i32) {
    %c0_i32 = arith.constant 0 : i32
    %c0_i32_0 = arith.constant 0 : i32
    %c0_i32_1 = arith.constant 0 : i32
    return %arg0, %c0_i32, %c0_i32_0 : i32, i32, i32
  }
}

</mosaic_0001>

<llo_original>
// kernel: conv_embedder_forward.1
$region0: #{conv_embedder_forward.1}
  #allocation0 [shape = 'u32[]', space=smem, size = 0x4, offset = 0x4, fixed_abs, tag = 'smem constant byte address 0x4 - core index']
  #allocation1 [shape = 'u32[144,128]{1,0:T(1,128)}', space=vmem, size = 0x12000, scoped, tag = 'internal scratch']
  #allocation2 [shape = 'bf16[16,1,3,3,128]{4,3,2,1,0:T(4,128)(2,1)}', space=vmem, size = 0xc000, scoped, tag = 'scratch operand']
  #allocation3 [shape = 'bf16[4,1,3,3,128]{4,3,2,1,0:T(4,128)(2,1)}', space=vmem, size = 0x3000, scoped, tag = 'scratch operand']
  %s0 = inlined_call_operand.vmem [shape: bf16[2,64,36], index: 0, kind: input, shape index: {}]
  %s1 = inlined_call_operand.vmem [shape: bf16[36,128], index: 1, kind: input, shape index: {}]
  %s2 = inlined_call_operand.vmem [shape: f32[1,128], index: 2, kind: input, shape index: {}]
  %s3 = inlined_call_operand.vmem [shape: bf16[9,128,128], index: 3, kind: input, shape index: {}]
  %s4 = inlined_call_operand.vmem [shape: f32[1,128], index: 4, kind: input, shape index: {}]
  %s5 = inlined_call_operand.vmem [shape: bf16[9,128,128], index: 5, kind: input, shape index: {}]
  %s6 = inlined_call_operand.vmem [shape: f32[1,128], index: 6, kind: input, shape index: {}]
  %s7 = inlined_call_operand.vmem [shape: bf16[128,128], index: 7, kind: input, shape index: {}]
  %s8 = inlined_call_operand.vmem [shape: f32[1,128], index: 8, kind: input, shape index: {}]
  %s9 = inlined_call_operand.vmem [shape: bf16[4,128,128], index: 9, kind: input, shape index: {}]
  %s10 = inlined_call_operand.vmem [shape: f32[1,128], index: 10, kind: input, shape index: {}]
  %s11 = inlined_call_operand.hbm [shape: f32[2,1,128], index: 11, kind: output, shape index: {}]
  %s12 = sld [smem:[#allocation0]]
  $region77: #{conv_embedder_forward.1} parent=0
    _
  %s14 = ssub.s32 1, %s12
  %s15 = scalar_select 0, %s14, %s12
  $region1: #{conv_embedder_forward.1} parent=0
    #allocation4 [shape = 'u8[1024]{0}', space=vmem, size = 0x400, scoped, tag = 'output window, operand 0']
    #allocation5 [shape = 's32[2]{0}', space=sflag, size = 0x8, scoped, tag = 'scoped memory for conv_embedder_forward.1']
    %16 = vsyncpa [#allocation5], 0
    %s17 = scalar_lea.sflag [#allocation5], 1
    %18 = vsyncpa %s17, 0
    loop: start=0, step=1, limit=4
    $region2: #{conv_embedder_forward.1} parent=1 // loop_pre_header
      _
    $region3: #{conv_embedder_forward.1} parent=1 // loop_header
      %s20 = sphi 0, %s24
      %p21 = scmp.ge.s32.totalorder %s20, 4
      %s30 = sphi 0, %s32
      %s33 = sphi 0, %s30
      %s34 = sphi 0, %s33
      %s50 = sphi 0, %s34
      %s54 = sphi 0, %s54
      %s56 = sphi 0, %s54
      %s57 = sphi 0, %s56
      %s71 = sphi 0, %s57
      %s75 = sphi 0, %s75
      %s77 = sphi 0, %s75
      %s78 = sphi 0, %s77
      %s92 = sphi 0, %s78
      %s96 = sphi 0, %s96
      %s98 = sphi 0, %s96
      %s99 = sphi 0, %s98
      %s113 = sphi 0, %s99
      %s117 = sphi 0, %s117
      %s119 = sphi 0, %s117
      %s120 = sphi 0, %s119
      %s134 = sphi 0, %s120
      %s138 = sphi 0, %s138
      %s140 = sphi 0, %s138
      %s141 = sphi 0, %s140
      %s155 = sphi 0, %s141
      %s159 = sphi 0, %s159
      %s161 = sphi 0, %s159
      %s162 = sphi 0, %s161
      %s176 = sphi 0, %s162
      %s180 = sphi 0, %s180
      %s182 = sphi 0, %s180
      %s183 = sphi 0, %s182
      %s197 = sphi 0, %s183
      %s201 = sphi 0, %s201
      %s203 = sphi 0, %s201
      %s204 = sphi 0, %s203
      %s218 = sphi 0, %s204
      %s222 = sphi 0, %s222
      %s224 = sphi 0, %s222
      %s225 = sphi 0, %s224
      %s239 = sphi 0, %s225
      %s243 = sphi 0, %s243
      %s245 = sphi 0, %s243
      %s246 = sphi 0, %s245
      %s260 = sphi 0, %s246
      %s266 = sphi 0, %s268
      %s269 = sphi 0, %s266
      %s270 = sphi 0, %s269
      %s286 = sphi 0, %s270
    $region4: #{conv_embedder_forward.1} parent=1 // loop_header_branch
      %23 = sbr.rel (%p21) target = $region8
    $region5: #{conv_embedder_forward.1} parent=1 // loop_body
      %s25 = ssub.s32 %s20, 1
      %s26 = ssub.s32 %s20, 2
      %s27 = sadd.s32 %s20, 1
      %s28 = ssub.s32 %s20, %s27
      %p29 = scmp.eq.s32.totalorder %s28, 0
      %s31 = sadd.s32 %s30, 1
      %s32 = scalar_select %p29, %s30, %s31
      %p35 = pneg %p29
      %p36 = scmp.eq.s32.totalorder %s20, 1
      %p37 = por %p35, %p36
      %p38 = scmp.ne.s32.totalorder %s30, %s33
      %p39 = scmp.eq.s32.totalorder %s20, 0
      %p40 = por %p38, %p39
      %p41 = scmp.ne.s32.totalorder %s30, %s33
      %p42 = scmp.eq.s32.totalorder %s25, 1
      %p43 = por %p41, %p42
      %p44 = scmp.ne.s32.totalorder %s33, %s34
      %p45 = scmp.eq.s32.totalorder %s25, 0
      %p46 = por %p44, %p45
      %p47 = scmp.ne.s32.totalorder %s33, %s34
      %p48 = scmp.eq.s32.totalorder %s26, 1
      %p49 = por %p47, %p48
      %p51 = scmp.ne.s32.totalorder %s34, %s50
      %p52 = scmp.eq.s32.totalorder %s26, 0
      %p53 = por %p51, %p52
      %s55 = sadd.s32 %s54, 1
      %p58 = scmp.eq.s32.totalorder %s20, 1
      %p59 = scmp.ne.s32.totalorder %s54, %s56
      %p60 = scmp.eq.s32.totalorder %s20, 0
      %p61 = por %p59, %p60
      %p62 = scmp.ne.s32.totalorder %s54, %s56
      %p63 = scmp.eq.s32.totalorder %s25, 1
      %p64 = por %p62, %p63
      %p65 = scmp.ne.s32.totalorder %s56, %s57
      %p66 = scmp.eq.s32.totalorder %s25, 0
      %p67 = por %p65, %p66
      %p68 = scmp.ne.s32.totalorder %s56, %s57
      %p69 = scmp.eq.s32.totalorder %s26, 1
      %p70 = por %p68, %p69
      %p72 = scmp.ne.s32.totalorder %s57, %s71
      %p73 = scmp.eq.s32.totalorder %s26, 0
      %p74 = por %p72, %p73
      %s76 = sadd.s32 %s75, 1
      %p79 = scmp.eq.s32.totalorder %s20, 1
      %p80 = scmp.ne.s32.totalorder %s75, %s77
      %p81 = scmp.eq.s32.totalorder %s20, 0
      %p82 = por %p80, %p81
      %p83 = scmp.ne.s32.totalorder %s75, %s77
      %p84 = scmp.eq.s32.totalorder %s25, 1
      %p85 = por %p83, %p84
      %p86 = scmp.ne.s32.totalorder %s77, %s78
      %p87 = scmp.eq.s32.totalorder %s25, 0
      %p88 = por %p86, %p87
      %p89 = scmp.ne.s32.totalorder %s77, %s78
      %p90 = scmp.eq.s32.totalorder %s26, 1
      %p91 = por %p89, %p90
      %p93 = scmp.ne.s32.totalorder %s78, %s92
      %p94 = scmp.eq.s32.totalorder %s26, 0
      %p95 = por %p93, %p94
      %s97 = sadd.s32 %s96, 1
      %p100 = scmp.eq.s32.totalorder %s20, 1
      %p101 = scmp.ne.s32.totalorder %s96, %s98
      %p102 = scmp.eq.s32.totalorder %s20, 0
      %p103 = por %p101, %p102
      %p104 = scmp.ne.s32.totalorder %s96, %s98
      %p105 = scmp.eq.s32.totalorder %s25, 1
      %p106 = por %p104, %p105
      %p107 = scmp.ne.s32.totalorder %s98, %s99
      %p108 = scmp.eq.s32.totalorder %s25, 0
      %p109 = por %p107, %p108
      %p110 = scmp.ne.s32.totalorder %s98, %s99
      %p111 = scmp.eq.s32.totalorder %s26, 1
      %p112 = por %p110, %p111
      %p114 = scmp.ne.s32.totalorder %s99, %s113
      %p115 = scmp.eq.s32.totalorder %s26, 0
      %p116 = por %p114, %p115
      %s118 = sadd.s32 %s117, 1
      %p121 = scmp.eq.s32.totalorder %s20, 1
      %p122 = scmp.ne.s32.totalorder %s117, %s119
      %p123 = scmp.eq.s32.totalorder %s20, 0
      %p124 = por %p122, %p123
      %p125 = scmp.ne.s32.totalorder %s117, %s119
      %p126 = scmp.eq.s32.totalorder %s25, 1
      %p127 = por %p125, %p126
      %p128 = scmp.ne.s32.totalorder %s119, %s120
      %p129 = scmp.eq.s32.totalorder %s25, 0
      %p130 = por %p128, %p129
      %p131 = scmp.ne.s32.totalorder %s119, %s120
      %p132 = scmp.eq.s32.totalorder %s26, 1
      %p133 = por %p131, %p132
      %p135 = scmp.ne.s32.totalorder %s120, %s134
      %p136 = scmp.eq.s32.totalorder %s26, 0
      %p137 = por %p135, %p136
      %s139 = sadd.s32 %s138, 1
      %p142 = scmp.eq.s32.totalorder %s20, 1
      %p143 = scmp.ne.s32.totalorder %s138, %s140
      %p144 = scmp.eq.s32.totalorder %s20, 0
      %p145 = por %p143, %p144
      %p146 = scmp.ne.s32.totalorder %s138, %s140
      %p147 = scmp.eq.s32.totalorder %s25, 1
      %p148 = por %p146, %p147
      %p149 = scmp.ne.s32.totalorder %s140, %s141
      %p150 = scmp.eq.s32.totalorder %s25, 0
      %p151 = por %p149, %p150
      %p152 = scmp.ne.s32.totalorder %s140, %s141
      %p153 = scmp.eq.s32.totalorder %s26, 1
      %p154 = por %p152, %p153
      %p156 = scmp.ne.s32.totalorder %s141, %s155
      %p157 = scmp.eq.s32.totalorder %s26, 0
      %p158 = por %p156, %p157
      %s160 = sadd.s32 %s159, 1
      %p163 = scmp.eq.s32.totalorder %s20, 1
      %p164 = scmp.ne.s32.totalorder %s159, %s161
      %p165 = scmp.eq.s32.totalorder %s20, 0
      %p166 = por %p164, %p165
      %p167 = scmp.ne.s32.totalorder %s159, %s161
      %p168 = scmp.eq.s32.totalorder %s25, 1
      %p169 = por %p167, %p168
      %p170 = scmp.ne.s32.totalorder %s161, %s162
      %p171 = scmp.eq.s32.totalorder %s25, 0
      %p172 = por %p170, %p171
      %p173 = scmp.ne.s32.totalorder %s161, %s162
      %p174 = scmp.eq.s32.totalorder %s26, 1
      %p175 = por %p173, %p174
      %p177 = scmp.ne.s32.totalorder %s162, %s176
      %p178 = scmp.eq.s32.totalorder %s26, 0
      %p179 = por %p177, %p178
      %s181 = sadd.s32 %s180, 1
      %p184 = scmp.eq.s32.totalorder %s20, 1
      %p185 = scmp.ne.s32.totalorder %s180, %s182
      %p186 = scmp.eq.s32.totalorder %s20, 0
      %p187 = por %p185, %p186
      %p188 = scmp.ne.s32.totalorder %s180, %s182
      %p189 = scmp.eq.s32.totalorder %s25, 1
      %p190 = por %p188, %p189
      %p191 = scmp.ne.s32.totalorder %s182, %s183
      %p192 = scmp.eq.s32.totalorder %s25, 0
      %p193 = por %p191, %p192
      %p194 = scmp.ne.s32.totalorder %s182, %s183
      %p195 = scmp.eq.s32.totalorder %s26, 1
      %p196 = por %p194, %p195
      %p198 = scmp.ne.s32.totalorder %s183, %s197
      %p199 = scmp.eq.s32.totalorder %s26, 0
      %p200 = por %p198, %p199
      %s202 = sadd.s32 %s201, 1
      %p205 = scmp.eq.s32.totalorder %s20, 1
      %p206 = scmp.ne.s32.totalorder %s201, %s203
      %p207 = scmp.eq.s32.totalorder %s20, 0
      %p208 = por %p206, %p207
      %p209 = scmp.ne.s32.totalorder %s201, %s203
      %p210 = scmp.eq.s32.totalorder %s25, 1
      %p211 = por %p209, %p210
      %p212 = scmp.ne.s32.totalorder %s203, %s204
      %p213 = scmp.eq.s32.totalorder %s25, 0
      %p214 = por %p212, %p213
      %p215 = scmp.ne.s32.totalorder %s203, %s204
      %p216 = scmp.eq.s32.totalorder %s26, 1
      %p217 = por %p215, %p216
      %p219 = scmp.ne.s32.totalorder %s204, %s218
      %p220 = scmp.eq.s32.totalorder %s26, 0
      %p221 = por %p219, %p220
      %s223 = sadd.s32 %s222, 1
      %p226 = scmp.eq.s32.totalorder %s20, 1
      %p227 = scmp.ne.s32.totalorder %s222, %s224
      %p228 = scmp.eq.s32.totalorder %s20, 0
      %p229 = por %p227, %p228
      %p230 = scmp.ne.s32.totalorder %s222, %s224
      %p231 = scmp.eq.s32.totalorder %s25, 1
      %p232 = por %p230, %p231
      %p233 = scmp.ne.s32.totalorder %s224, %s225
      %p234 = scmp.eq.s32.totalorder %s25, 0
      %p235 = por %p233, %p234
      %p236 = scmp.ne.s32.totalorder %s224, %s225
      %p237 = scmp.eq.s32.totalorder %s26, 1
      %p238 = por %p236, %p237
      %p240 = scmp.ne.s32.totalorder %s225, %s239
      %p241 = scmp.eq.s32.totalorder %s26, 0
      %p242 = por %p240, %p241
      %s244 = sadd.s32 %s243, 1
      %p247 = scmp.eq.s32.totalorder %s20, 1
      %p248 = scmp.ne.s32.totalorder %s243, %s245
      %p249 = scmp.eq.s32.totalorder %s20, 0
      %p250 = por %p248, %p249
      %p251 = scmp.ne.s32.totalorder %s243, %s245
      %p252 = scmp.eq.s32.totalorder %s25, 1
      %p253 = por %p251, %p252
      %p254 = scmp.ne.s32.totalorder %s245, %s246
      %p255 = scmp.eq.s32.totalorder %s25, 0
      %p256 = por %p254, %p255
      %p257 = scmp.ne.s32.totalorder %s245, %s246
      %p258 = scmp.eq.s32.totalorder %s26, 1
      %p259 = por %p257, %p258
      %p261 = scmp.ne.s32.totalorder %s246, %s260
      %p262 = scmp.eq.s32.totalorder %s26, 0
      %p263 = por %p261, %p262
      %s264 = ssub.s32 %s20, %s27
      %p265 = scmp.eq.s32.totalorder %s264, 0
      %s267 = sadd.s32 %s266, 1
      %s268 = scalar_select %p265, %s266, %s267
      %p271 = pneg %p265
      %p272 = scmp.eq.s32.totalorder %s20, 1
      %p273 = por %p271, %p272
      %p274 = scmp.ne.s32.totalorder %s266, %s269
      %p275 = scmp.eq.s32.totalorder %s20, 0
      %p276 = por %p274, %p275
      %p277 = scmp.ne.s32.totalorder %s266, %s269
      %p278 = scmp.eq.s32.totalorder %s25, 1
      %p279 = por %p277, %p278
      %p280 = scmp.ne.s32.totalorder %s269, %s270
      %p281 = scmp.eq.s32.totalorder %s25, 0
      %p282 = por %p280, %p281
      %p283 = scmp.ne.s32.totalorder %s269, %s270
      %p284 = scmp.eq.s32.totalorder %s26, 1
      %p285 = por %p283, %p284
      %p287 = scmp.ne.s32.totalorder %s270, %s286
      %p288 = scmp.eq.s32.totalorder %s26, 0
      %p289 = por %p287, %p288
      %p290 = scmp.le.s32.totalorder 1, %s20
      %p291 = scmp.lt.s32.totalorder %s20, 3
      %p292 = pnand %p290, %p291
      %p293 = pneg %p292
      // Predicated region
      $region9: #{conv_embedder_forward.1} parent=5 // pred_check
        _
      $region10: #{conv_embedder_forward.1} parent=5 // pred_check_branch
        %295 = sbr.rel (%p292) target = $region12
      $region11: #{conv_embedder_forward.1} parent=5 // pred_region
        %s296 = ssub.s32 %s20, 1
        // Predicated region
        $region13: #{conv_embedder_forward.1} parent=11 // pred_check
          %p297 = pneg %p67
        $region14: #{conv_embedder_forward.1} parent=11 // pred_check_branch
          %299 = sbr.rel (%p297) target = $region16
        $region15: #{conv_embedder_forward.1} parent=11 // pred_region
          _
        $region16: #{conv_embedder_forward.1} parent=11 // pred_fallthru
          _
        // Predicated region
        $region17: #{conv_embedder_forward.1} parent=11 // pred_check
          %p300 = pneg %p88
        $region18: #{conv_embedder_forward.1} parent=11 // pred_check_branch
          %302 = sbr.rel (%p300) target = $region20
        $region19: #{conv_embedder_forward.1} parent=11 // pred_region
          _
        $region20: #{conv_embedder_forward.1} parent=11 // pred_fallthru
          _
        // Predicated region
        $region21: #{conv_embedder_forward.1} parent=11 // pred_check
          %p303 = pneg %p109
        $region22: #{conv_embedder_forward.1} parent=11 // pred_check_branch
          %305 = sbr.rel (%p303) target = $region24
        $region23: #{conv_embedder_forward.1} parent=11 // pred_region
          _
        $region24: #{conv_embedder_forward.1} parent=11 // pred_fallthru
          _
        // Predicated region
        $region25: #{conv_embedder_forward.1} parent=11 // pred_check
          %p306 = pneg %p130
        $region26: #{conv_embedder_forward.1} parent=11 // pred_check_branch
          %308 = sbr.rel (%p306) target = $region28
        $region27: #{conv_embedder_forward.1} parent=11 // pred_region
          _
        $region28: #{conv_embedder_forward.1} parent=11 // pred_fallthru
          _
        // Predicated region
        $region29: #{conv_embedder_forward.1} parent=11 // pred_check
          %p309 = pneg %p151
        $region30: #{conv_embedder_forward.1} parent=11 // pred_check_branch
          %311 = sbr.rel (%p309) target = $region32
        $region31: #{conv_embedder_forward.1} parent=11 // pred_region
          _
        $region32: #{conv_embedder_forward.1} parent=11 // pred_fallthru
          _
        // Predicated region
        $region33: #{conv_embedder_forward.1} parent=11 // pred_check
          %p312 = pneg %p172
        $region34: #{conv_embedder_forward.1} parent=11 // pred_check_branch
          %314 = sbr.rel (%p312) target = $region36
        $region35: #{conv_embedder_forward.1} parent=11 // pred_region
          _
        $region36: #{conv_embedder_forward.1} parent=11 // pred_fallthru
          _
        // Predicated region
        $region37: #{conv_embedder_forward.1} parent=11 // pred_check
          %p315 = pneg %p193
        $region38: #{conv_embedder_forward.1} parent=11 // pred_check_branch
          %317 = sbr.rel (%p315) target = $region40
        $region39: #{conv_embedder_forward.1} parent=11 // pred_region
          _
        $region40: #{conv_embedder_forward.1} parent=11 // pred_fallthru
          _
        // Predicated region
        $region41: #{conv_embedder_forward.1} parent=11 // pred_check
          %p318 = pneg %p214
        $region42: #{conv_embedder_forward.1} parent=11 // pred_check_branch
          %320 = sbr.rel (%p318) target = $region44
        $region43: #{conv_embedder_forward.1} parent=11 // pred_region
          _
        $region44: #{conv_embedder_forward.1} parent=11 // pred_fallthru
          _
        // Predicated region
        $region45: #{conv_embedder_forward.1} parent=11 // pred_check
          %p321 = pneg %p235
        $region46: #{conv_embedder_forward.1} parent=11 // pred_check_branch
          %323 = sbr.rel (%p321) target = $region48
        $region47: #{conv_embedder_forward.1} parent=11 // pred_region
          _
        $region48: #{conv_embedder_forward.1} parent=11 // pred_fallthru
          _
        // Predicated region
        $region49: #{conv_embedder_forward.1} parent=11 // pred_check
          %p324 = pneg %p256
        $region50: #{conv_embedder_forward.1} parent=11 // pred_check_branch
          %326 = sbr.rel (%p324) target = $region52
        $region51: #{conv_embedder_forward.1} parent=11 // pred_region
          _
        $region52: #{conv_embedder_forward.1} parent=11 // pred_fallthru
          _
      $region12: #{conv_embedder_forward.1} parent=5 // pred_fallthru
        _
      %p327 = scmp.lt.s32.totalorder %s20, 2
      // Predicated region
      $region53: #{conv_embedder_forward.1} parent=5 // pred_check
        %p328 = pneg %p327
      $region54: #{conv_embedder_forward.1} parent=5 // pred_check_branch
        %330 = sbr.rel (%p328) target = $region56
      $region55: #{conv_embedder_forward.1} parent=5 // pred_region
        // Predicated region
        $region57: #{conv_embedder_forward.1} parent=55 // pred_check
          %p331 = pneg %p40
        $region58: #{conv_embedder_forward.1} parent=55 // pred_check_branch
          %333 = sbr.rel (%p331) target = $region60
        $region59: #{conv_embedder_forward.1} parent=55 // pred_region
          %p334 = scmp.lt.s32.totalorder %s20, 1
          %s335 = scalar_select %p334, %s20, 1
          %s336 = smul.addr %s335, 8
          %s337 = smul.addr %s336, 4
          %s338 = scalar_lea.vmem %s0, %s337
        $region60: #{conv_embedder_forward.1} parent=55 // pred_fallthru
          _
      $region56: #{conv_embedder_forward.1} parent=5 // pred_fallthru
        _
      %p339 = scmp.le.s32.totalorder 1, %s20
      %p340 = scmp.lt.s32.totalorder %s20, 3
      %p341 = pnand %p339, %p340
      %p342 = pneg %p341
      // Predicated region
      $region61: #{conv_embedder_forward.1} parent=5 // pred_check
        _
      $region62: #{conv_embedder_forward.1} parent=5 // pred_check_branch
        %344 = sbr.rel (%p341) target = $region64
      $region63: #{conv_embedder_forward.1} parent=5 // pred_region
        %s345 = ssub.s32 %s20, 1
        %p346 = scmp.lt.s32.totalorder %s25, 1
        %s347 = scalar_select %p346, %s25, 1
        %s348 = smul.addr %s347, 8
        %s349 = smul.addr %s348, 4
        %s350 = scalar_lea.vmem %s0, %s349
        %p351 = pneg %p46
        %p352 = pneg %p43
        %p353 = pneg %p67
        %p354 = pneg %p64
        %p355 = pneg %p88
        %p356 = pneg %p85
        %p357 = pneg %p109
        %p358 = pneg %p106
        %p359 = pneg %p130
        %p360 = pneg %p127
        %p361 = pneg %p151
        %p362 = pneg %p148
        %p363 = pneg %p172
        %p364 = pneg %p169
        %p365 = pneg %p193
        %p366 = pneg %p190
        %p367 = pneg %p214
        %p368 = pneg %p211
        %p369 = pneg %p235
        %p370 = pneg %p232
        %p371 = pneg %p256
        %p372 = pneg %p253
        %p373 = pneg %p282
        %p374 = pneg %p279
        %s375 = sand.u32 %s269, 1
        %s376 = scalar_lea.sflag [#allocation5], %s375
        %s377 = sand.u32 %s269, 1
        %s378 = scalar_lea.vmem [#allocation4], %s377
        %p379 = scmp.lt.s32.totalorder %s25, 1
        %s380 = scalar_select %p379, %s25, 1
        %s381 = smul.addr %s380, 8
        %s382 = smul.addr %s381, 4
        %s383 = scalar_lea.vmem %s0, %s382
        %vm385 = vcmask 1041408
        %vm386 = vsmask.f32 1280
        %vm387 = vmand %vm385, %vm386
        %v388 = vld [vmem:[#allocation2] sm:$0x3]
        %v389 = vsel %vm387, 0, %v388
        %390 = vst [vmem:[#allocation2] sm:$0x3] %v389
        %v391 = vld [vmem:[#allocation2 + $0x2] sm:$0x3]
        %v392 = vsel %vm387, 0, %v391
        %393 = vst [vmem:[#allocation2 + $0x2] sm:$0x3] %v392
        %v394 = vld [vmem:[#allocation2 + $0x4] sm:$0x3]
        %v395 = vsel %vm387, 0, %v394
        %396 = vst [vmem:[#allocation2 + $0x4] sm:$0x3] %v395
        %v397 = vld [vmem:[#allocation2 + $0x6] sm:$0x3]
        %v398 = vsel %vm387, 0, %v397
        %399 = vst [vmem:[#allocation2 + $0x6] sm:$0x3] %v398
        %v400 = vld [vmem:[#allocation2 + $0x8] sm:$0x3]
        %v401 = vsel %vm387, 0, %v400
        %402 = vst [vmem:[#allocation2 + $0x8] sm:$0x3] %v401
        %v403 = vld [vmem:[#allocation2 + $0xa] sm:$0x3]
        %v404 = vsel %vm387, 0, %v403
        %405 = vst [vmem:[#allocation2 + $0xa] sm:$0x3] %v404
        %v406 = vld [vmem:[#allocation2 + $0xc] sm:$0x3]
        %v407 = vsel %vm387, 0, %v406
        %408 = vst [vmem:[#allocation2 + $0xc] sm:$0x3] %v407
        %v409 = vld [vmem:[#allocation2 + $0xe] sm:$0x3]
        %v410 = vsel %vm387, 0, %v409
        %411 = vst [vmem:[#allocation2 + $0xe] sm:$0x3] %v410
        %v412 = vld [vmem:[#allocation2 + $0x10] sm:$0x3]
        %v413 = vsel %vm387, 0, %v412
        %414 = vst [vmem:[#allocation2 + $0x10] sm:$0x3] %v413
        %v415 = vld [vmem:[#allocation2 + $0x12] sm:$0x3]
        %v416 = vsel %vm387, 0, %v415
        %417 = vst [vmem:[#allocation2 + $0x12] sm:$0x3] %v416
        %v418 = vld [vmem:[#allocation2 + $0x14] sm:$0x3]
        %v419 = vsel %vm387, 0, %v418
        %420 = vst [vmem:[#allocation2 + $0x14] sm:$0x3] %v419
        %v421 = vld [vmem:[#allocation2 + $0x16] sm:$0x3]
        %v422 = vsel %vm387, 0, %v421
        %423 = vst [vmem:[#allocation2 + $0x16] sm:$0x3] %v422
        %v424 = vld [vmem:[#allocation2 + $0x18] sm:$0x3]
        %v425 = vsel %vm387, 0, %v424
        %426 = vst [vmem:[#allocation2 + $0x18] sm:$0x3] %v425
        %v427 = vld [vmem:[#allocation2 + $0x1a] sm:$0x3]
        %v428 = vsel %vm387, 0, %v427
        %429 = vst [vmem:[#allocation2 + $0x1a] sm:$0x3] %v428
        %v430 = vld [vmem:[#allocation2 + $0x1c] sm:$0x3]
        %v431 = vsel %vm387, 0, %v430
        %432 = vst [vmem:[#allocation2 + $0x1c] sm:$0x3] %v431
        %v433 = vld [vmem:[#allocation2 + $0x1e] sm:$0x3]
        %v434 = vsel %vm387, 0, %v433
        %435 = vst [vmem:[#allocation2 + $0x1e] sm:$0x3] %v434
        %v436 = vld [vmem:[#allocation2 + $0x20] sm:$0x3]
        %v437 = vsel %vm387, 0, %v436
        %438 = vst [vmem:[#allocation2 + $0x20] sm:$0x3] %v437
        %v439 = vld [vmem:[#allocation2 + $0x22] sm:$0x3]
        %v440 = vsel %vm387, 0, %v439
        %441 = vst [vmem:[#allocation2 + $0x22] sm:$0x3] %v440
        %v442 = vld [vmem:[#allocation2 + $0x24] sm:$0x3]
        %v443 = vsel %vm387, 0, %v442
        %444 = vst [vmem:[#allocation2 + $0x24] sm:$0x3] %v443
        %v445 = vld [vmem:[#allocation2 + $0x26] sm:$0x3]
        %v446 = vsel %vm387, 0, %v445
        %447 = vst [vmem:[#allocation2 + $0x26] sm:$0x3] %v446
        %v448 = vld [vmem:[#allocation2 + $0x28] sm:$0x3]
        %v449 = vsel %vm387, 0, %v448
        %450 = vst [vmem:[#allocation2 + $0x28] sm:$0x3] %v449
        %v451 = vld [vmem:[#allocation2 + $0x2a] sm:$0x3]
        %v452 = vsel %vm387, 0, %v451
        %453 = vst [vmem:[#allocation2 + $0x2a] sm:$0x3] %v452
        %v454 = vld [vmem:[#allocation2 + $0x2c] sm:$0x3]
        %v455 = vsel %vm387, 0, %v454
        %456 = vst [vmem:[#allocation2 + $0x2c] sm:$0x3] %v455
        %v457 = vld [vmem:[#allocation2 + $0x2e] sm:$0x3]
        %v458 = vsel %vm387, 0, %v457
        %459 = vst [vmem:[#allocation2 + $0x2e] sm:$0x3] %v458
        %v460 = vld [vmem:[#allocation2 + $0x30] sm:$0x3]
        %v461 = vsel %vm387, 0, %v460
        %462 = vst [vmem:[#allocation2 + $0x30] sm:$0x3] %v461
        %v463 = vld [vmem:[#allocation2 + $0x32] sm:$0x3]
        %v464 = vsel %vm387, 0, %v463
        %465 = vst [vmem:[#allocation2 + $0x32] sm:$0x3] %v464
        %v466 = vld [vmem:[#allocation2 + $0x34] sm:$0x3]
        %v467 = vsel %vm387, 0, %v466
        %468 = vst [vmem:[#allocation2 + $0x34] sm:$0x3] %v467
        %v469 = vld [vmem:[#allocation2 + $0x36] sm:$0x3]
        %v470 = vsel %vm387, 0, %v469
        %471 = vst [vmem:[#allocation2 + $0x36] sm:$0x3] %v470
        %v472 = vld [vmem:[#allocation2 + $0x38] sm:$0x3]
        %v473 = vsel %vm387, 0, %v472
        %474 = vst [vmem:[#allocation2 + $0x38] sm:$0x3] %v473
        %v475 = vld [vmem:[#allocation2 + $0x3a] sm:$0x3]
        %v476 = vsel %vm387, 0, %v475
        %477 = vst [vmem:[#allocation2 + $0x3a] sm:$0x3] %v476
        %v478 = vld [vmem:[#allocation2 + $0x3c] sm:$0x3]
        %v479 = vsel %vm387, 0, %v478
        %480 = vst [vmem:[#allocation2 + $0x3c] sm:$0x3] %v479
        %v481 = vld [vmem:[#allocation2 + $0x3e] sm:$0x3]
        %v482 = vsel %vm387, 0, %v481
        %483 = vst [vmem:[#allocation2 + $0x3e] sm:$0x3] %v482
        %v484 = vld [vmem:[#allocation2 + $0x40] sm:$0x3]
        %v485 = vsel %vm387, 0, %v484
        %486 = vst [vmem:[#allocation2 + $0x40] sm:$0x3] %v485
        %v487 = vld [vmem:[#allocation2 + $0x42] sm:$0x3]
        %v488 = vsel %vm387, 0, %v487
        %489 = vst [vmem:[#allocation2 + $0x42] sm:$0x3] %v488
        %v490 = vld [vmem:[#allocation2 + $0x44] sm:$0x3]
        %v491 = vsel %vm387, 0, %v490
        %492 = vst [vmem:[#allocation2 + $0x44] sm:$0x3] %v491
        %v493 = vld [vmem:[#allocation2 + $0x46] sm:$0x3]
        %v494 = vsel %vm387, 0, %v493
        %495 = vst [vmem:[#allocation2 + $0x46] sm:$0x3] %v494
        %v496 = vld [vmem:[#allocation2 + $0x48] sm:$0x3]
        %v497 = vsel %vm387, 0, %v496
        %498 = vst [vmem:[#allocation2 + $0x48] sm:$0x3] %v497
        %v499 = vld [vmem:[#allocation2 + $0x4a] sm:$0x3]
        %v500 = vsel %vm387, 0, %v499
        %501 = vst [vmem:[#allocation2 + $0x4a] sm:$0x3] %v500
        %v502 = vld [vmem:[#allocation2 + $0x4c] sm:$0x3]
        %v503 = vsel %vm387, 0, %v502
        %504 = vst [vmem:[#allocation2 + $0x4c] sm:$0x3] %v503
        %v505 = vld [vmem:[#allocation2 + $0x4e] sm:$0x3]
        %v506 = vsel %vm387, 0, %v505
        %507 = vst [vmem:[#allocation2 + $0x4e] sm:$0x3] %v506
        %v508 = vld [vmem:[#allocation2 + $0x50] sm:$0x3]
        %v509 = vsel %vm387, 0, %v508
        %510 = vst [vmem:[#allocation2 + $0x50] sm:$0x3] %v509
        %v511 = vld [vmem:[#allocation2 + $0x52] sm:$0x3]
        %v512 = vsel %vm387, 0, %v511
        %513 = vst [vmem:[#allocation2 + $0x52] sm:$0x3] %v512
        %v514 = vld [vmem:[#allocation2 + $0x54] sm:$0x3]
        %v515 = vsel %vm387, 0, %v514
        %516 = vst [vmem:[#allocation2 + $0x54] sm:$0x3] %v515
        %v517 = vld [vmem:[#allocation2 + $0x56] sm:$0x3]
        %v518 = vsel %vm387, 0, %v517
        %519 = vst [vmem:[#allocation2 + $0x56] sm:$0x3] %v518
        %v520 = vld [vmem:[#allocation2 + $0x58] sm:$0x3]
        %v521 = vsel %vm387, 0, %v520
        %522 = vst [vmem:[#allocation2 + $0x58] sm:$0x3] %v521
        %v523 = vld [vmem:[#allocation2 + $0x5a] sm:$0x3]
        %v524 = vsel %vm387, 0, %v523
        %525 = vst [vmem:[#allocation2 + $0x5a] sm:$0x3] %v524
        %v526 = vld [vmem:[#allocation2 + $0x5c] sm:$0x3]
        %v527 = vsel %vm387, 0, %v526
        %528 = vst [vmem:[#allocation2 + $0x5c] sm:$0x3] %v527
        %v529 = vld [vmem:[#allocation2 + $0x5e] sm:$0x3]
        %v530 = vsel %vm387, 0, %v529
        %531 = vst [vmem:[#allocation2 + $0x5e] sm:$0x3] %v530
        %v532 = vld [vmem:[#allocation3] sm:$0x3]
        %v533 = vsel %vm387, 0, %v532
        %534 = vst [vmem:[#allocation3] sm:$0x3] %v533
        %v535 = vld [vmem:[#allocation3 + $0x2] sm:$0x3]
        %v536 = vsel %vm387, 0, %v535
        %537 = vst [vmem:[#allocation3 + $0x2] sm:$0x3] %v536
        %v538 = vld [vmem:[#allocation3 + $0x4] sm:$0x3]
        %v539 = vsel %vm387, 0, %v538
        %540 = vst [vmem:[#allocation3 + $0x4] sm:$0x3] %v539
        %v541 = vld [vmem:[#allocation3 + $0x6] sm:$0x3]
        %v542 = vsel %vm387, 0, %v541
        %543 = vst [vmem:[#allocation3 + $0x6] sm:$0x3] %v542
        %v544 = vld [vmem:[#allocation3 + $0x8] sm:$0x3]
        %v545 = vsel %vm387, 0, %v544
        %546 = vst [vmem:[#allocation3 + $0x8] sm:$0x3] %v545
        %v547 = vld [vmem:[#allocation3 + $0xa] sm:$0x3]
        %v548 = vsel %vm387, 0, %v547
        %549 = vst [vmem:[#allocation3 + $0xa] sm:$0x3] %v548
        %v550 = vld [vmem:[#allocation3 + $0xc] sm:$0x3]
        %v551 = vsel %vm387, 0, %v550
        %552 = vst [vmem:[#allocation3 + $0xc] sm:$0x3] %v551
        %v553 = vld [vmem:[#allocation3 + $0xe] sm:$0x3]
        %v554 = vsel %vm387, 0, %v553
        %555 = vst [vmem:[#allocation3 + $0xe] sm:$0x3] %v554
        %v556 = vld [vmem:[#allocation3 + $0x10] sm:$0x3]
        %v557 = vsel %vm387, 0, %v556
        %558 = vst [vmem:[#allocation3 + $0x10] sm:$0x3] %v557
        %v559 = vld [vmem:[#allocation3 + $0x12] sm:$0x3]
        %v560 = vsel %vm387, 0, %v559
        %561 = vst [vmem:[#allocation3 + $0x12] sm:$0x3] %v560
        %v562 = vld [vmem:[#allocation3 + $0x14] sm:$0x3]
        %v563 = vsel %vm387, 0, %v562
        %564 = vst [vmem:[#allocation3 + $0x14] sm:$0x3] %v563
        %v565 = vld [vmem:[#allocation3 + $0x16] sm:$0x3]
        %v566 = vsel %vm387, 0, %v565
        %567 = vst [vmem:[#allocation3 + $0x16] sm:$0x3] %v566
        %v568 = vld [vmem:[%s383] sm:$0x3]
        %v569 = vld [vmem:[%s1] sm:$0xf]
        %v570 = vld [vmem:[%s1 + $0x4] sm:$0xf]
        %v571 = vld [vmem:[%s1 + $0x8] sm:$0xf]
        %v572 = vld [vmem:[%s1 + $0xc] sm:$0xf]
        %v573 = vld [vmem:[%s1 + $0x10] sm:$0x3]
        %v574 = vld [vmem:[%s2] sm:$0x1]
        %v576 = vlaneseq
        %v577 = vshrl.u32 %v576, 7
        %v578 = vsub.s32 0, %v577
        %v579 = vrot.slane %v574, %v578
        %v586 = vunpack.c.l.b16 %v569
        %v587 = vunpack.c.l.b16 %v570
        %v588 = vunpack.c.l.b16 %v571
        %v589 = vunpack.c.l.b16 %v572
        %v590 = vunpack.c.l.b16 %v573
        %v591 = vpack.c.b16 %v587, %v586
        %v592 = vpack.c.b16 %v589, %v588
        %v593 = vpack.c.b16 %v590, %v590
        %vm596 = vcmask 293888
        %v598 = vsel %vm596, %v568, 0
        %vm600 = vcmask 1041408
        %v602 = vsel %vm600, %v593, 0
        %604 = vmatprep.subr.bf16.mxu0 0
        %605 = vmatpush1.bf16.msra.mxu0 %v591
        %606 = vmatprep.subr.bf16.mxu0 0
        %607 = vmatpush1.bf16.msra.mxu0 %v592
        %608 = vmatprep.subr.bf16.mxu0 0
        %609 = vmatpush1.bf16.msra.mxu0 %v602
        %610 = vmatprep.subr.bf16.mxu0 0
        %611 = vmatpush1.bf16.msra.mxu0 0
        %612 = vmatprep.subr.bf16.mxu0 0
        %613 = vmatpush1.bf16.msra.mxu0 0
        %614 = vmatprep.subr.bf16.mxu0 0
        %615 = vmatpush1.bf16.msra.mxu0 0
        %616 = vmatprep.subr.bf16.mxu0 0
        %617 = vmatpush1.bf16.msra.mxu0 0
        %618 = vmatprep.subr.bf16.mxu0 0
        %619 = vmatpush1.bf16.msra.mxu0 0
        %620 = vmatprep.subr.bf16.mxu0 0
        %621 = vmatpush1.bf16.msra.mxu0 0
        %622 = vmatprep.subr.bf16.mxu0 0
        %623 = vmatpush1.bf16.msra.mxu0 0
        %624 = vmatprep.subr.bf16.mxu0 0
        %625 = vmatpush1.bf16.msra.mxu0 0
        %626 = vmatprep.subr.bf16.mxu0 0
        %627 = vmatpush1.bf16.msra.mxu0 0
        %628 = vmatprep.subr.bf16.mxu0 0
        %629 = vmatpush1.bf16.msra.mxu0 0
        %630 = vmatprep.subr.bf16.mxu0 0
        %631 = vmatpush1.bf16.msra.mxu0 0
        %632 = vmatprep.subr.bf16.mxu0 0
        %633 = vmatpush1.bf16.msra.mxu0 0
        %634 = vmatprep.subr.bf16.mxu0 0
        %635 = vmatpush1.bf16.msra.mxu0 0
        %636 = vmatprep.mubr.bf16.mxu0 0
        %637 = vmatmul.mubr.bf16.gmra.mrb[0].mxu0 %v598
        %v638 = vpop.f32.mrb[0].mxu0
        %v639 = vadd.f32 %v579, %v638
        %v640 = vpop.f32.mrb[0].mxu0
        %v641 = vpop.f32.mrb[0].mxu0
        %v642 = vpop.f32.mrb[0].mxu0
        %643 = vdwg.mxu0
        %v644 = vmax.f32 %v639, 0.0
        %v645 = vpack.c.bf16 %v644, %v644
        %v648 = vunpack.c.l.s4 1966171168
        %v649 = vunpack.c.0.s8 %v648
        %v650 = vlaneseq
        %v651 = vshrl.u32 %v650, 7
        %v652 = vsub.s32 %v649, %v651
        %v653 = vrot.slane %v645, %v652
        %v654 = vcombine.high %v653, %v653
        %v656 = vunpack.c.l.s4 1966171168
        %v657 = vunpack.c.0.s8 %v656
        %v658 = vlaneseq
        %v659 = vshrl.u32 %v658, 7
        %v660 = vsub.s32 %v657, %v659
        %v661 = vrot.slane %v653, %v660
        %v663 = vunpack.c.l.s4 1966171168
        %v664 = vunpack.c.0.s8 %v663
        %v665 = vlaneseq
        %v666 = vshrl.u32 %v665, 7
        %v667 = vsub.s32 %v664, %v666
        %v668 = vrot.slane %v654, %v667
        %s671 = scalar_lea.vmem [#allocation2], 30
        %672 = vst [vmem:[%s671] sm:$0x1] %v661
        %673 = vst [vmem:[%s671 + $0x2] sm:$0x1] %v668
        %v674 = vld [vmem:[%s383] sm:$0xc]
        %v675 = vld [vmem:[%s1] sm:$0xf]
        %v676 = vld [vmem:[%s1 + $0x4] sm:$0xf]
        %v677 = vld [vmem:[%s1 + $0x8] sm:$0xf]
        %v678 = vld [vmem:[%s1 + $0xc] sm:$0xf]
        %v679 = vld [vmem:[%s1 + $0x10] sm:$0x3]
        %v680 = vld [vmem:[%s2] sm:$0x1]
        %v682 = vlaneseq
        %v683 = vshrl.u32 %v682, 7
        %v684 = vsub.s32 0, %v683
        %v685 = vrot.slane %v680, %v684
        %v688 = vunpack.c.l.b16 %v674
        %v689 = vpack.c.b16 %v688, %v688
        %v690 = vrot.slane %v689, 2
        %v696 = vunpack.c.l.b16 %v675
        %v697 = vunpack.c.l.b16 %v676
        %v698 = vunpack.c.l.b16 %v677
        %v699 = vunpack.c.l.b16 %v678
        %v700 = vunpack.c.l.b16 %v679
        %v701 = vpack.c.b16 %v697, %v696
        %v702 = vpack.c.b16 %v699, %v698
        %v703 = vpack.c.b16 %v700, %v700
        %v707 = vsel %vm596, %v690, 0
        %v710 = vsel %vm600, %v703, 0
        %712 = vmatprep.subr.bf16.mxu0 0
        %713 = vmatpush1.bf16.msra.mxu0 %v701
        %714 = vmatprep.subr.bf16.mxu0 0
        %715 = vmatpush1.bf16.msra.mxu0 %v702
        %716 = vmatprep.subr.bf16.mxu0 0
        %717 = vmatpush1.bf16.msra.mxu0 %v710
        %718 = vmatprep.subr.bf16.mxu0 0
        %719 = vmatpush1.bf16.msra.mxu0 0
        %720 = vmatprep.subr.bf16.mxu0 0
        %721 = vmatpush1.bf16.msra.mxu0 0
        %722 = vmatprep.subr.bf16.mxu0 0
        %723 = vmatpush1.bf16.msra.mxu0 0
        %724 = vmatprep.subr.bf16.mxu0 0
        %725 = vmatpush1.bf16.msra.mxu0 0
        %726 = vmatprep.subr.bf16.mxu0 0
        %727 = vmatpush1.bf16.msra.mxu0 0
        %728 = vmatprep.subr.bf16.mxu0 0
        %729 = vmatpush1.bf16.msra.mxu0 0
        %730 = vmatprep.subr.bf16.mxu0 0
        %731 = vmatpush1.bf16.msra.mxu0 0
        %732 = vmatprep.subr.bf16.mxu0 0
        %733 = vmatpush1.bf16.msra.mxu0 0
        %734 = vmatprep.subr.bf16.mxu0 0
        %735 = vmatpush1.bf16.msra.mxu0 0
        %736 = vmatprep.subr.bf16.mxu0 0
        %737 = vmatpush1.bf16.msra.mxu0 0
        %738 = vmatprep.subr.bf16.mxu0 0
        %739 = vmatpush1.bf16.msra.mxu0 0
        %740 = vmatprep.subr.bf16.mxu0 0
        %741 = vmatpush1.bf16.msra.mxu0 0
        %742 = vmatprep.subr.bf16.mxu0 0
        %743 = vmatpush1.bf16.msra.mxu0 0
        %744 = vmatprep.mubr.bf16.mxu0 0
        %745 = vmatmul.mubr.bf16.gmra.mrb[0].mxu0 %v707
        %v746 = vpop.f32.mrb[0].mxu0
        %v747 = vadd.f32 %v685, %v746
        %v748 = vpop.f32.mrb[0].mxu0
        %v749 = vpop.f32.mrb[0].mxu0
        %v750 = vpop.f32.mrb[0].mxu0
        %751 = vdwg.mxu0
        %v752 = vmax.f32 %v747, 0.0
        %v753 = vpack.c.bf16 %v752, %v752
        %v756 = vunpack.c.l.s4 1966171168
        %v757 = vunpack.c.0.s8 %v756
        %v758 = vlaneseq
        %v759 = vshrl.u32 %v758, 7
        %v760 = vsub.s32 %v757, %v759
        %v761 = vrot.slane %v753, %v760
        %v762 = vcombine.high %v761, %v761
        %v764 = vunpack.c.l.s4 1966171168
        %v765 = vunpack.c.0.s8 %v764
        %v766 = vlaneseq
        %v767 = vshrl.u32 %v766, 7
        %v768 = vsub.s32 %v765, %v767
        %v769 = vrot.slane %v761, %v768
        %v771 = vunpack.c.l.s4 1966171168
        %v772 = vunpack.c.0.s8 %v771
        %v773 = vlaneseq
        %v774 = vshrl.u32 %v773, 7
        %v775 = vsub.s32 %v772, %v774
        %v776 = vrot.slane %v762, %v775
        %s779 = scalar_lea.vmem [#allocation2], 36
        %780 = vst [vmem:[%s779] sm:$0x1] %v769
        %781 = vst [vmem:[%s779 + $0x2] sm:$0x1] %v776
        %v782 = vld [vmem:[%s383 + $0x4] sm:$0x3]
        %v783 = vld [vmem:[%s1] sm:$0xf]
        %v784 = vld [vmem:[%s1 + $0x4] sm:$0xf]
        %v785 = vld [vmem:[%s1 + $0x8] sm:$0xf]
        %v786 = vld [vmem:[%s1 + $0xc] sm:$0xf]
        %v787 = vld [vmem:[%s1 + $0x10] sm:$0x3]
        %v788 = vld [vmem:[%s2] sm:$0x1]
        %v790 = vlaneseq
        %v791 = vshrl.u32 %v790, 7
        %v792 = vsub.s32 0, %v791
        %v793 = vrot.slane %v788, %v792
        %v800 = vunpack.c.l.b16 %v783
        %v801 = vunpack.c.l.b16 %v784
        %v802 = vunpack.c.l.b16 %v785
        %v803 = vunpack.c.l.b16 %v786
        %v804 = vunpack.c.l.b16 %v787
        %v805 = vpack.c.b16 %v801, %v800
        %v806 = vpack.c.b16 %v803, %v802
        %v807 = vpack.c.b16 %v804, %v804
        %v811 = vsel %vm596, %v782, 0
        %v814 = vsel %vm600, %v807, 0
        %816 = vmatprep.subr.bf16.mxu0 0
        %817 = vmatpush1.bf16.msra.mxu0 %v805
        %818 = vmatprep.subr.bf16.mxu0 0
        %819 = vmatpush1.bf16.msra.mxu0 %v806
        %820 = vmatprep.subr.bf16.mxu0 0
        %821 = vmatpush1.bf16.msra.mxu0 %v814
        %822 = vmatprep.subr.bf16.mxu0 0
        %823 = vmatpush1.bf16.msra.mxu0 0
        %824 = vmatprep.subr.bf16.mxu0 0
        %825 = vmatpush1.bf16.msra.mxu0 0
        %826 = vmatprep.subr.bf16.mxu0 0
        %827 = vmatpush1.bf16.msra.mxu0 0
        %828 = vmatprep.subr.bf16.mxu0 0
        %829 = vmatpush1.bf16.msra.mxu0 0
        %830 = vmatprep.subr.bf16.mxu0 0
        %831 = vmatpush1.bf16.msra.mxu0 0
        %832 = vmatprep.subr.bf16.mxu0 0
        %833 = vmatpush1.bf16.msra.mxu0 0
        %834 = vmatprep.subr.bf16.mxu0 0
        %835 = vmatpush1.bf16.msra.mxu0 0
        %836 = vmatprep.subr.bf16.mxu0 0
        %837 = vmatpush1.bf16.msra.mxu0 0
        %838 = vmatprep.subr.bf16.mxu0 0
        %839 = vmatpush1.bf16.msra.mxu0 0
        %840 = vmatprep.subr.bf16.mxu0 0
        %841 = vmatpush1.bf16.msra.mxu0 0
        %842 = vmatprep.subr.bf16.mxu0 0
        %843 = vmatpush1.bf16.msra.mxu0 0
        %844 = vmatprep.subr.bf16.mxu0 0
        %845 = vmatpush1.bf16.msra.mxu0 0
        %846 = vmatprep.subr.bf16.mxu0 0
        %847 = vmatpush1.bf16.msra.mxu0 0
        %848 = vmatprep.mubr.bf16.mxu0 0
        %849 = vmatmul.mubr.bf16.gmra.mrb[0].mxu0 %v811
        %v850 = vpop.f32.mrb[0].mxu0
        %v851 = vadd.f32 %v793, %v850
        %v852 = vpop.f32.mrb[0].mxu0
        %v853 = vpop.f32.mrb[0].mxu0
        %v854 = vpop.f32.mrb[0].mxu0
        %855 = vdwg.mxu0
        %v856 = vmax.f32 %v851, 0.0
        %v857 = vpack.c.bf16 %v856, %v856
        %v860 = vunpack.c.l.s4 1966171168
        %v861 = vunpack.c.0.s8 %v860
        %v862 = vlaneseq
        %v863 = vshrl.u32 %v862, 7
        %v864 = vsub.s32 %v861, %v863
        %v865 = vrot.slane %v857, %v864
        %v866 = vcombine.high %v865, %v865
        %v868 = vunpack.c.l.s4 1966171168
        %v869 = vunpack.c.0.s8 %v868
        %v870 = vlaneseq
        %v871 = vshrl.u32 %v870, 7
        %v872 = vsub.s32 %v869, %v871
        %v873 = vrot.slane %v865, %v872
        %v875 = vunpack.c.l.s4 1966171168
        %v876 = vunpack.c.0.s8 %v875
        %v877 = vlaneseq
        %v878 = vshrl.u32 %v877, 7
        %v879 = vsub.s32 %v876, %v878
        %v880 = vrot.slane %v866, %v879
        %s883 = scalar_lea.vmem [#allocation2], 42
        %884 = vst [vmem:[%s883] sm:$0x1] %v873
        %885 = vst [vmem:[%s883 + $0x2] sm:$0x1] %v880
        %v886 = vld [vmem:[%s383 + $0x4] sm:$0xc]
        %v887 = vld [vmem:[%s1] sm:$0xf]
        %v888 = vld [vmem:[%s1 + $0x4] sm:$0xf]
        %v889 = vld [vmem:[%s1 + $0x8] sm:$0xf]
        %v890 = vld [vmem:[%s1 + $0xc] sm:$0xf]
        %v891 = vld [vmem:[%s1 + $0x10] sm:$0x3]
        %v892 = vld [vmem:[%s2] sm:$0x1]
        %v894 = vlaneseq
        %v895 = vshrl.u32 %v894, 7
        %v896 = vsub.s32 0, %v895
        %v897 = vrot.slane %v892, %v896
        %v900 = vunpack.c.l.b16 %v886
        %v901 = vpack.c.b16 %v900, %v900
        %v902 = vrot.slane %v901, 2
        %v908 = vunpack.c.l.b16 %v887
        %v909 = vunpack.c.l.b16 %v888
        %v910 = vunpack.c.l.b16 %v889
        %v911 = vunpack.c.l.b16 %v890
        %v912 = vunpack.c.l.b16 %v891
        %v913 = vpack.c.b16 %v909, %v908
        %v914 = vpack.c.b16 %v911, %v910
        %v915 = vpack.c.b16 %v912, %v912
        %v919 = vsel %vm596, %v902, 0
        %v922 = vsel %vm600, %v915, 0
        %924 = vmatprep.subr.bf16.mxu0 0
        %925 = vmatpush1.bf16.msra.mxu0 %v913
        %926 = vmatprep.subr.bf16.mxu0 0
        %927 = vmatpush1.bf16.msra.mxu0 %v914
        %928 = vmatprep.subr.bf16.mxu0 0
        %929 = vmatpush1.bf16.msra.mxu0 %v922
        %930 = vmatprep.subr.bf16.mxu0 0
        %931 = vmatpush1.bf16.msra.mxu0 0
        %932 = vmatprep.subr.bf16.mxu0 0
        %933 = vmatpush1.bf16.msra.mxu0 0
        %934 = vmatprep.subr.bf16.mxu0 0
        %935 = vmatpush1.bf16.msra.mxu0 0
        %936 = vmatprep.subr.bf16.mxu0 0
        %937 = vmatpush1.bf16.msra.mxu0 0
        %938 = vmatprep.subr.bf16.mxu0 0
        %939 = vmatpush1.bf16.msra.mxu0 0
        %940 = vmatprep.subr.bf16.mxu0 0
        %941 = vmatpush1.bf16.msra.mxu0 0
        %942 = vmatprep.subr.bf16.mxu0 0
        %943 = vmatpush1.bf16.msra.mxu0 0
        %944 = vmatprep.subr.bf16.mxu0 0
        %945 = vmatpush1.bf16.msra.mxu0 0
        %946 = vmatprep.subr.bf16.mxu0 0
        %947 = vmatpush1.bf16.msra.mxu0 0
        %948 = vmatprep.subr.bf16.mxu0 0
        %949 = vmatpush1.bf16.msra.mxu0 0
        %950 = vmatprep.subr.bf16.mxu0 0
        %951 = vmatpush1.bf16.msra.mxu0 0
        %952 = vmatprep.subr.bf16.mxu0 0
        %953 = vmatpush1.bf16.msra.mxu0 0
        %954 = vmatprep.subr.bf16.mxu0 0
        %955 = vmatpush1.bf16.msra.mxu0 0
        %956 = vmatprep.mubr.bf16.mxu0 0
        %957 = vmatmul.mubr.bf16.gmra.mrb[0].mxu0 %v919
        %v958 = vpop.f32.mrb[0].mxu0
        %v959 = vadd.f32 %v897, %v958
        %v960 = vpop.f32.mrb[0].mxu0
        %v961 = vpop.f32.mrb[0].mxu0
        %v962 = vpop.f32.mrb[0].mxu0
        %963 = vdwg.mxu0
        %v964 = vmax.f32 %v959, 0.0
        %v965 = vpack.c.bf16 %v964, %v964
        %v968 = vunpack.c.l.s4 1966171168
        %v969 = vunpack.c.0.s8 %v968
        %v970 = vlaneseq
        %v971 = vshrl.u32 %v970, 7
        %v972 = vsub.s32 %v969, %v971
        %v973 = vrot.slane %v965, %v972
        %v974 = vcombine.high %v973, %v973
        %v976 = vunpack.c.l.s4 1966171168
        %v977 = vunpack.c.0.s8 %v976
        %v978 = vlaneseq
        %v979 = vshrl.u32 %v978, 7
        %v980 = vsub.s32 %v977, %v979
        %v981 = vrot.slane %v973, %v980
        %v983 = vunpack.c.l.s4 1966171168
        %v984 = vunpack.c.0.s8 %v983
        %v985 = vlaneseq
        %v986 = vshrl.u32 %v985, 7
        %v987 = vsub.s32 %v984, %v986
        %v988 = vrot.slane %v974, %v987
        %v990 = vunpack.c.l.s4 1935823168
        %v991 = vunpack.c.0.s8 %v990
        %v992 = vlaneseq
        %v993 = vshrl.u32 %v992, 7
        %v994 = vsub.s32 %v991, %v993
        %v995 = vrot.slane %v981, %v994
        %v997 = vunpack.c.l.s4 1935823168
        %v998 = vunpack.c.0.s8 %v997
        %v999 = vlaneseq
        %v1000 = vshrl.u32 %v999, 7
        %v1001 = vsub.s32 %v998, %v1000
        %v1002 = vrot.slane %v988, %v1001
        %v1004 = vshrl.u32 %v995, 16
        %v1006 = vrot.slane %v1004, 7
        %v1007 = vshll.u32 %v995, 16
        %v1009 = vor.u32 %v1006, %v1007
        %v1011 = vshrl.u32 %v1002, 16
        %v1013 = vrot.slane %v1011, 7
        %v1014 = vshll.u32 %v1002, 16
        %v1016 = vor.u32 %v1013, %v1014
        %s1019 = scalar_lea.vmem [#allocation2], 24
        %vm1020 = vsmask.f32 1282
        %vm1021 = vmand %vm385, %vm1020
        %v1022 = vld [vmem:[%s1019] sm:$0x3]
        %v1023 = vsel %vm1021, %v1009, %v1022
        %1024 = vst [vmem:[%s1019] sm:$0x3] %v1023
        %v1025 = vld [vmem:[%s1019 + $0x2] sm:$0x3]
        %v1026 = vsel %vm1021, %v1016, %v1025
        %1027 = vst [vmem:[%s1019 + $0x2] sm:$0x3] %v1026
        %v1028 = vld [vmem:[%s383 + $0x8] sm:$0x3]
        %v1029 = vld [vmem:[%s1] sm:$0xf]
        %v1030 = vld [vmem:[%s1 + $0x4] sm:$0xf]
        %v1031 = vld [vmem:[%s1 + $0x8] sm:$0xf]
        %v1032 = vld [vmem:[%s1 + $0xc] sm:$0xf]
        %v1033 = vld [vmem:[%s1 + $0x10] sm:$0x3]
        %v1034 = vld [vmem:[%s2] sm:$0x1]
        %v1036 = vlaneseq
        %v1037 = vshrl.u32 %v1036, 7
        %v1038 = vsub.s32 0, %v1037
        %v1039 = vrot.slane %v1034, %v1038
        %v1046 = vunpack.c.l.b16 %v1029
        %v1047 = vunpack.c.l.b16 %v1030
        %v1048 = vunpack.c.l.b16 %v1031
        %v1049 = vunpack.c.l.b16 %v1032
        %v1050 = vunpack.c.l.b16 %v1033
        %v1051 = vpack.c.b16 %v1047, %v1046
        %v1052 = vpack.c.b16 %v1049, %v1048
        %v1053 = vpack.c.b16 %v1050, %v1050
        %v1057 = vsel %vm596, %v1028, 0
        %v1060 = vsel %vm600, %v1053, 0
        %1062 = vmatprep.subr.bf16.mxu0 0
        %1063 = vmatpush1.bf16.msra.mxu0 %v1051
        %1064 = vmatprep.subr.bf16.mxu0 0
        %1065 = vmatpush1.bf16.msra.mxu0 %v1052
        %1066 = vmatprep.subr.bf16.mxu0 0
        %1067 = vmatpush1.bf16.msra.mxu0 %v1060
        %1068 = vmatprep.subr.bf16.mxu0 0
        %1069 = vmatpush1.bf16.msra.mxu0 0
        %1070 = vmatprep.subr.bf16.mxu0 0
        %1071 = vmatpush1.bf16.msra.mxu0 0
        %1072 = vmatprep.subr.bf16.mxu0 0
        %1073 = vmatpush1.bf16.msra.mxu0 0
        %1074 = vmatprep.subr.bf16.mxu0 0
        %1075 = vmatpush1.bf16.msra.mxu0 0
        %1076 = vmatprep.subr.bf16.mxu0 0
        %1077 = vmatpush1.bf16.msra.mxu0 0
        %1078 = vmatprep.subr.bf16.mxu0 0
        %1079 = vmatpush1.bf16.msra.mxu0 0
        %1080 = vmatprep.subr.bf16.mxu0 0
        %1081 = vmatpush1.bf16.msra.mxu0 0
        %1082 = vmatprep.subr.bf16.mxu0 0
        %1083 = vmatpush1.bf16.msra.mxu0 0
        %1084 = vmatprep.subr.bf16.mxu0 0
        %1085 = vmatpush1.bf16.msra.mxu0 0
        %1086 = vmatprep.subr.bf16.mxu0 0
        %1087 = vmatpush1.bf16.msra.mxu0 0
        %1088 = vmatprep.subr.bf16.mxu0 0
        %1089 = vmatpush1.bf16.msra.mxu0 0
        %1090 = vmatprep.subr.bf16.mxu0 0
        %1091 = vmatpush1.bf16.msra.mxu0 0
        %1092 = vmatprep.subr.bf16.mxu0 0
        %1093 = vmatpush1.bf16.msra.mxu0 0
        %1094 = vmatprep.mubr.bf16.mxu0 0
        %1095 = vmatmul.mubr.bf16.gmra.mrb[0].mxu0 %v1057
        %v1096 = vpop.f32.mrb[0].mxu0
        %v1097 = vadd.f32 %v1039, %v1096
        %v1098 = vpop.f32.mrb[0].mxu0
        %v1099 = vpop.f32.mrb[0].mxu0
        %v1100 = vpop.f32.mrb[0].mxu0
        %1101 = vdwg.mxu0
        %v1102 = vmax.f32 %v1097, 0.0
        %v1103 = vpack.c.bf16 %v1102, %v1102
        %v1106 = vunpack.c.l.s4 1966171168
        %v1107 = vunpack.c.0.s8 %v1106
        %v1108 = vlaneseq
        %v1109 = vshrl.u32 %v1108, 7
        %v1110 = vsub.s32 %v1107, %v1109
        %v1111 = vrot.slane %v1103, %v1110
        %v1112 = vcombine.high %v1111, %v1111
        %v1114 = vunpack.c.l.s4 1966171168
        %v1115 = vunpack.c.0.s8 %v1114
        %v1116 = vlaneseq
        %v1117 = vshrl.u32 %v1116, 7
        %v1118 = vsub.s32 %v1115, %v1117
        %v1119 = vrot.slane %v1111, %v1118
        %v1121 = vunpack.c.l.s4 1966171168
        %v1122 = vunpack.c.0.s8 %v1121
        %v1123 = vlaneseq
        %v1124 = vshrl.u32 %v1123, 7
        %v1125 = vsub.s32 %v1122, %v1124
        %v1126 = vrot.slane %v1112, %v1125
        %s1129 = scalar_lea.vmem [#allocation2], 54
        %1130 = vst [vmem:[%s1129] sm:$0x1] %v1119
        %1131 = vst [vmem:[%s1129 + $0x2] sm:$0x1] %v1126
        %v1132 = vld [vmem:[%s383 + $0x8] sm:$0xc]
        %v1133 = vld [vmem:[%s1] sm:$0xf]
        %v1134 = vld [vmem:[%s1 + $0x4] sm:$0xf]
        %v1135 = vld [vmem:[%s1 + $0x8] sm:$0xf]
        %v1136 = vld [vmem:[%s1 + $0xc] sm:$0xf]
        %v1137 = vld [vmem:[%s1 + $0x10] sm:$0x3]
        %v1138 = vld [vmem:[%s2] sm:$0x1]
        %v1140 = vlaneseq
        %v1141 = vshrl.u32 %v1140, 7
        %v1142 = vsub.s32 0, %v1141
        %v1143 = vrot.slane %v1138, %v1142
        %v1146 = vunpack.c.l.b16 %v1132
        %v1147 = vpack.c.b16 %v1146, %v1146
        %v1148 = vrot.slane %v1147, 2
        %v1154 = vunpack.c.l.b16 %v1133
        %v1155 = vunpack.c.l.b16 %v1134
        %v1156 = vunpack.c.l.b16 %v1135
        %v1157 = vunpack.c.l.b16 %v1136
        %v1158 = vunpack.c.l.b16 %v1137
        %v1159 = vpack.c.b16 %v1155, %v1154
        %v1160 = vpack.c.b16 %v1157, %v1156
        %v1161 = vpack.c.b16 %v1158, %v1158
        %v1165 = vsel %vm596, %v1148, 0
        %v1168 = vsel %vm600, %v1161, 0
        %1170 = vmatprep.subr.bf16.mxu0 0
        %1171 = vmatpush1.bf16.msra.mxu0 %v1159
        %1172 = vmatprep.subr.bf16.mxu0 0
        %1173 = vmatpush1.bf16.msra.mxu0 %v1160
        %1174 = vmatprep.subr.bf16.mxu0 0
        %1175 = vmatpush1.bf16.msra.mxu0 %v1168
        %1176 = vmatprep.subr.bf16.mxu0 0
        %1177 = vmatpush1.bf16.msra.mxu0 0
        %1178 = vmatprep.subr.bf16.mxu0 0
        %1179 = vmatpush1.bf16.msra.mxu0 0
        %1180 = vmatprep.subr.bf16.mxu0 0
        %1181 = vmatpush1.bf16.msra.mxu0 0
        %1182 = vmatprep.subr.bf16.mxu0 0
        %1183 = vmatpush1.bf16.msra.mxu0 0
        %1184 = vmatprep.subr.bf16.mxu0 0
        %1185 = vmatpush1.bf16.msra.mxu0 0
        %1186 = vmatprep.subr.bf16.mxu0 0
        %1187 = vmatpush1.bf16.msra.mxu0 0
        %1188 = vmatprep.subr.bf16.mxu0 0
        %1189 = vmatpush1.bf16.msra.mxu0 0
        %1190 = vmatprep.subr.bf16.mxu0 0
        %1191 = vmatpush1.bf16.msra.mxu0 0
        %1192 = vmatprep.subr.bf16.mxu0 0
        %1193 = vmatpush1.bf16.msra.mxu0 0
        %1194 = vmatprep.subr.bf16.mxu0 0
        %1195 = vmatpush1.bf16.msra.mxu0 0
        %1196 = vmatprep.subr.bf16.mxu0 0
        %1197 = vmatpush1.bf16.msra.mxu0 0
        %1198 = vmatprep.subr.bf16.mxu0 0
        %1199 = vmatpush1.bf16.msra.mxu0 0
        %1200 = vmatprep.subr.bf16.mxu0 0
        %1201 = vmatpush1.bf16.msra.mxu0 0
        %1202 = vmatprep.mubr.bf16.mxu0 0
        %1203 = vmatmul.mubr.bf16.gmra.mrb[0].mxu0 %v1165
        %v1204 = vpop.f32.mrb[0].mxu0
        %v1205 = vadd.f32 %v1143, %v1204
        %v1206 = vpop.f32.mrb[0].mxu0
        %v1207 = vpop.f32.mrb[0].mxu0
        %v1208 = vpop.f32.mrb[0].mxu0
        %1209 = vdwg.mxu0
        %v1210 = vmax.f32 %v1205, 0.0
        %v1211 = vpack.c.bf16 %v1210, %v1210
        %v1214 = vunpack.c.l.s4 1966171168
        %v1215 = vunpack.c.0.s8 %v1214
        %v1216 = vlaneseq
        %v1217 = vshrl.u32 %v1216, 7
        %v1218 = vsub.s32 %v1215, %v1217
        %v1219 = vrot.slane %v1211, %v1218
        %v1220 = vcombine.high %v1219, %v1219
        %v1222 = vunpack.c.l.s4 1966171168
        %v1223 = vunpack.c.0.s8 %v1222
        %v1224 = vlaneseq
        %v1225 = vshrl.u32 %v1224, 7
        %v1226 = vsub.s32 %v1223, %v1225
        %v1227 = vrot.slane %v1219, %v1226
        %v1229 = vunpack.c.l.s4 1966171168
        %v1230 = vunpack.c.0.s8 %v1229
        %v1231 = vlaneseq
        %v1232 = vshrl.u32 %v1231, 7
        %v1233 = vsub.s32 %v1230, %v1232
        %v1234 = vrot.slane %v1220, %v1233
        %s1237 = scalar_lea.vmem [#allocation2], 60
        %1238 = vst [vmem:[%s1237] sm:$0x1] %v1227
        %1239 = vst [vmem:[%s1237 + $0x2] sm:$0x1] %v1234
        %v1240 = vld [vmem:[%s383 + $0xc] sm:$0x3]
        %v1241 = vld [vmem:[%s1] sm:$0xf]
        %v1242 = vld [vmem:[%s1 + $0x4] sm:$0xf]
        %v1243 = vld [vmem:[%s1 + $0x8] sm:$0xf]
        %v1244 = vld [vmem:[%s1 + $0xc] sm:$0xf]
        %v1245 = vld [vmem:[%s1 + $0x10] sm:$0x3]
        %v1246 = vld [vmem:[%s2] sm:$0x1]
        %v1248 = vlaneseq
        %v1249 = vshrl.u32 %v1248, 7
        %v1250 = vsub.s32 0, %v1249
        %v1251 = vrot.slane %v1246, %v1250
        %v1258 = vunpack.c.l.b16 %v1241
        %v1259 = vunpack.c.l.b16 %v1242
        %v1260 = vunpack.c.l.b16 %v1243
        %v1261 = vunpack.c.l.b16 %v1244
        %v1262 = vunpack.c.l.b16 %v1245
        %v1263 = vpack.c.b16 %v1259, %v1258
        %v1264 = vpack.c.b16 %v1261, %v1260
        %v1265 = vpack.c.b16 %v1262, %v1262
        %v1269 = vsel %vm596, %v1240, 0
        %v1272 = vsel %vm600, %v1265, 0
        %1274 = vmatprep.subr.bf16.mxu0 0
        %1275 = vmatpush1.bf16.msra.mxu0 %v1263
        %1276 = vmatprep.subr.bf16.mxu0 0
        %1277 = vmatpush1.bf16.msra.mxu0 %v1264
        %1278 = vmatprep.subr.bf16.mxu0 0
        %1279 = vmatpush1.bf16.msra.mxu0 %v1272
        %1280 = vmatprep.subr.bf16.mxu0 0
        %1281 = vmatpush1.bf16.msra.mxu0 0
        %1282 = vmatprep.subr.bf16.mxu0 0
        %1283 = vmatpush1.bf16.msra.mxu0 0
        %1284 = vmatprep.subr.bf16.mxu0 0
        %1285 = vmatpush1.bf16.msra.mxu0 0
        %1286 = vmatprep.subr.bf16.mxu0 0
        %1287 = vmatpush1.bf16.msra.mxu0 0
        %1288 = vmatprep.subr.bf16.mxu0 0
        %1289 = vmatpush1.bf16.msra.mxu0 0
        %1290 = vmatprep.subr.bf16.mxu0 0
        %1291 = vmatpush1.bf16.msra.mxu0 0
        %1292 = vmatprep.subr.bf16.mxu0 0
        %1293 = vmatpush1.bf16.msra.mxu0 0
        %1294 = vmatprep.subr.bf16.mxu0 0
        %1295 = vmatpush1.bf16.msra.mxu0 0
        %1296 = vmatprep.subr.bf16.mxu0 0
        %1297 = vmatpush1.bf16.msra.mxu0 0
        %1298 = vmatprep.subr.bf16.mxu0 0
        %1299 = vmatpush1.bf16.msra.mxu0 0
        %1300 = vmatprep.subr.bf16.mxu0 0
        %1301 = vmatpush1.bf16.msra.mxu0 0
        %1302 = vmatprep.subr.bf16.mxu0 0
        %1303 = vmatpush1.bf16.msra.mxu0 0
        %1304 = vmatprep.subr.bf16.mxu0 0
        %1305 = vmatpush1.bf16.msra.mxu0 0
        %1306 = vmatprep.mubr.bf16.mxu0 0
        %1307 = vmatmul.mubr.bf16.gmra.mrb[0].mxu0 %v1269
        %v1308 = vpop.f32.mrb[0].mxu0
        %v1309 = vadd.f32 %v1251, %v1308
        %v1310 = vpop.f32.mrb[0].mxu0
        %v1311 = vpop.f32.mrb[0].mxu0
        %v1312 = vpop.f32.mrb[0].mxu0
        %1313 = vdwg.mxu0
        %v1314 = vmax.f32 %v1309, 0.0
        %v1315 = vpack.c.bf16 %v1314, %v1314
        %v1318 = vunpack.c.l.s4 1966171168
        %v1319 = vunpack.c.0.s8 %v1318
        %v1320 = vlaneseq
        %v1321 = vshrl.u32 %v1320, 7
        %v1322 = vsub.s32 %v1319, %v1321
        %v1323 = vrot.slane %v1315, %v1322
        %v1324 = vcombine.high %v1323, %v1323
        %v1326 = vunpack.c.l.s4 1966171168
        %v1327 = vunpack.c.0.s8 %v1326
        %v1328 = vlaneseq
        %v1329 = vshrl.u32 %v1328, 7
        %v1330 = vsub.s32 %v1327, %v1329
        %v1331 = vrot.slane %v1323, %v1330
        %v1333 = vunpack.c.l.s4 1966171168
        %v1334 = vunpack.c.0.s8 %v1333
        %v1335 = vlaneseq
        %v1336 = vshrl.u32 %v1335, 7
        %v1337 = vsub.s32 %v1334, %v1336
        %v1338 = vrot.slane %v1324, %v1337
        %s1341 = scalar_lea.vmem [#allocation2], 66
        %1342 = vst [vmem:[%s1341] sm:$0x1] %v1331
        %1343 = vst [vmem:[%s1341 + $0x2] sm:$0x1] %v1338
        %v1344 = vld [vmem:[%s383 + $0xc] sm:$0xc]
        %v1345 = vld [vmem:[%s1] sm:$0xf]
        %v1346 = vld [vmem:[%s1 + $0x4] sm:$0xf]
        %v1347 = vld [vmem:[%s1 + $0x8] sm:$0xf]
        %v1348 = vld [vmem:[%s1 + $0xc] sm:$0xf]
        %v1349 = vld [vmem:[%s1 + $0x10] sm:$0x3]
        %v1350 = vld [vmem:[%s2] sm:$0x1]
        %v1352 = vlaneseq
        %v1353 = vshrl.u32 %v1352, 7
        %v1354 = vsub.s32 0, %v1353
        %v1355 = vrot.slane %v1350, %v1354
        %v1358 = vunpack.c.l.b16 %v1344
        %v1359 = vpack.c.b16 %v1358, %v1358
        %v1360 = vrot.slane %v1359, 2
        %v1366 = vunpack.c.l.b16 %v1345
        %v1367 = vunpack.c.l.b16 %v1346
        %v1368 = vunpack.c.l.b16 %v1347
        %v1369 = vunpack.c.l.b16 %v1348
        %v1370 = vunpack.c.l.b16 %v1349
        %v1371 = vpack.c.b16 %v1367, %v1366
        %v1372 = vpack.c.b16 %v1369, %v1368
        %v1373 = vpack.c.b16 %v1370, %v1370
        %v1377 = vsel %vm596, %v1360, 0
        %v1380 = vsel %vm600, %v1373, 0
        %1382 = vmatprep.subr.bf16.mxu0 0
        %1383 = vmatpush1.bf16.msra.mxu0 %v1371
        %1384 = vmatprep.subr.bf16.mxu0 0
        %1385 = vmatpush1.bf16.msra.mxu0 %v1372
        %1386 = vmatprep.subr.bf16.mxu0 0
        %1387 = vmatpush1.bf16.msra.mxu0 %v1380
        %1388 = vmatprep.subr.bf16.mxu0 0
        %1389 = vmatpush1.bf16.msra.mxu0 0
        %1390 = vmatprep.subr.bf16.mxu0 0
        %1391 = vmatpush1.bf16.msra.mxu0 0
        %1392 = vmatprep.subr.bf16.mxu0 0
        %1393 = vmatpush1.bf16.msra.mxu0 0
        %1394 = vmatprep.subr.bf16.mxu0 0
        %1395 = vmatpush1.bf16.msra.mxu0 0
        %1396 = vmatprep.subr.bf16.mxu0 0
        %1397 = vmatpush1.bf16.msra.mxu0 0
        %1398 = vmatprep.subr.bf16.mxu0 0
        %1399 = vmatpush1.bf16.msra.mxu0 0
        %1400 = vmatprep.subr.bf16.mxu0 0
        %1401 = vmatpush1.bf16.msra.mxu0 0
        %1402 = vmatprep.subr.bf16.mxu0 0
        %1403 = vmatpush1.bf16.msra.mxu0 0
        %1404 = vmatprep.subr.bf16.mxu0 0
        %1405 = vmatpush1.bf16.msra.mxu0 0
        %1406 = vmatprep.subr.bf16.mxu0 0
        %1407 = vmatpush1.bf16.msra.mxu0 0
        %1408 = vmatprep.subr.bf16.mxu0 0
        %1409 = vmatpush1.bf16.msra.mxu0 0
        %1410 = vmatprep.subr.bf16.mxu0 0
        %1411 = vmatpush1.bf16.msra.mxu0 0
        %1412 = vmatprep.subr.bf16.mxu0 0
        %1413 = vmatpush1.bf16.msra.mxu0 0
        %1414 = vmatprep.mubr.bf16.mxu0 0
        %1415 = vmatmul.mubr.bf16.gmra.mrb[0].mxu0 %v1377
        %v1416 = vpop.f32.mrb[0].mxu0
        %v1417 = vadd.f32 %v1355, %v1416
        %v1418 = vpop.f32.mrb[0].mxu0
        %v1419 = vpop.f32.mrb[0].mxu0
        %v1420 = vpop.f32.mrb[0].mxu0
        %1421 = vdwg.mxu0
        %v1422 = vmax.f32 %v1417, 0.0
        %v1423 = vpack.c.bf16 %v1422, %v1422
        %v1426 = vunpack.c.l.s4 1966171168
        %v1427 = vunpack.c.0.s8 %v1426
        %v1428 = vlaneseq
        %v1429 = vshrl.u32 %v1428, 7
        %v1430 = vsub.s32 %v1427, %v1429
        %v1431 = vrot.slane %v1423, %v1430
        %v1432 = vcombine.high %v1431, %v1431
        %v1434 = vunpack.c.l.s4 1966171168
        %v1435 = vunpack.c.0.s8 %v1434
        %v1436 = vlaneseq
        %v1437 = vshrl.u32 %v1436, 7
        %v1438 = vsub.s32 %v1435, %v1437
        %v1439 = vrot.slane %v1431, %v1438
        %v1441 = vunpack.c.l.s4 1966171168
        %v1442 = vunpack.c.0.s8 %v1441
        %v1443 = vlaneseq
        %v1444 = vshrl.u32 %v1443, 7
        %v1445 = vsub.s32 %v1442, %v1444
        %v1446 = vrot.slane %v1432, %v1445
        %v1448 = vunpack.c.l.s4 1935823168
        %v1449 = vunpack.c.0.s8 %v1448
        %v1450 = vlaneseq
        %v1451 = vshrl.u32 %v1450, 7
        %v1452 = vsub.s32 %v1449, %v1451
        %v1453 = vrot.slane %v1439, %v1452
        %v1455 = vunpack.c.l.s4 1935823168
        %v1456 = vunpack.c.0.s8 %v1455
        %v1457 = vlaneseq
        %v1458 = vshrl.u32 %v1457, 7
        %v1459 = vsub.s32 %v1456, %v1458
        %v1460 = vrot.slane %v1446, %v1459
        %v1462 = vshrl.u32 %v1453, 16
        %v1464 = vrot.slane %v1462, 7
        %v1465 = vshll.u32 %v1453, 16
        %v1467 = vor.u32 %v1464, %v1465
        %v1469 = vshrl.u32 %v1460, 16
        %v1471 = vrot.slane %v1469, 7
        %v1472 = vshll.u32 %v1460, 16
        %v1474 = vor.u32 %v1471, %v1472
        %s1477 = scalar_lea.vmem [#allocation2], 48
        %v1478 = vld [vmem:[%s1477] sm:$0x3]
        %v1479 = vsel %vm1021, %v1467, %v1478
        %1480 = vst [vmem:[%s1477] sm:$0x3] %v1479
        %v1481 = vld [vmem:[%s1477 + $0x2] sm:$0x3]
        %v1482 = vsel %vm1021, %v1474, %v1481
        %1483 = vst [vmem:[%s1477 + $0x2] sm:$0x3] %v1482
        %v1484 = vld [vmem:[%s383 + $0x10] sm:$0x3]
        %v1485 = vld [vmem:[%s1] sm:$0xf]
        %v1486 = vld [vmem:[%s1 + $0x4] sm:$0xf]
        %v1487 = vld [vmem:[%s1 + $0x8] sm:$0xf]
        %v1488 = vld [vmem:[%s1 + $0xc] sm:$0xf]
        %v1489 = vld [vmem:[%s1 + $0x10] sm:$0x3]
        %v1490 = vld [vmem:[%s2] sm:$0x1]
        %v1492 = vlaneseq
        %v1493 = vshrl.u32 %v1492, 7
        %v1494 = vsub.s32 0, %v1493
        %v1495 = vrot.slane %v1490, %v1494
        %v1502 = vunpack.c.l.b16 %v1485
        %v1503 = vunpack.c.l.b16 %v1486
        %v1504 = vunpack.c.l.b16 %v1487
        %v1505 = vunpack.c.l.b16 %v1488
        %v1506 = vunpack.c.l.b16 %v1489
        %v1507 = vpack.c.b16 %v1503, %v1502
        %v1508 = vpack.c.b16 %v1505, %v1504
        %v1509 = vpack.c.b16 %v1506, %v1506
        %v1513 = vsel %vm596, %v1484, 0
        %v1516 = vsel %vm600, %v1509, 0
        %1518 = vmatprep.subr.bf16.mxu0 0
        %1519 = vmatpush1.bf16.msra.mxu0 %v1507
        %1520 = vmatprep.subr.bf16.mxu0 0
        %1521 = vmatpush1.bf16.msra.mxu0 %v1508
        %1522 = vmatprep.subr.bf16.mxu0 0
        %1523 = vmatpush1.bf16.msra.mxu0 %v1516
        %1524 = vmatprep.subr.bf16.mxu0 0
        %1525 = vmatpush1.bf16.msra.mxu0 0
        %1526 = vmatprep.subr.bf16.mxu0 0
        %1527 = vmatpush1.bf16.msra.mxu0 0
        %1528 = vmatprep.subr.bf16.mxu0 0
        %1529 = vmatpush1.bf16.msra.mxu0 0
        %1530 = vmatprep.subr.bf16.mxu0 0
        %1531 = vmatpush1.bf16.msra.mxu0 0
        %1532 = vmatprep.subr.bf16.mxu0 0
        %1533 = vmatpush1.bf16.msra.mxu0 0
        %1534 = vmatprep.subr.bf16.mxu0 0
        %1535 = vmatpush1.bf16.msra.mxu0 0
        %1536 = vmatprep.subr.bf16.mxu0 0
        %1537 = vmatpush1.bf16.msra.mxu0 0
        %1538 = vmatprep.subr.bf16.mxu0 0
        %1539 = vmatpush1.bf16.msra.mxu0 0
        %1540 = vmatprep.subr.bf16.mxu0 0
        %1541 = vmatpush1.bf16.msra.mxu0 0
        %1542 = vmatprep.subr.bf16.mxu0 0
        %1543 = vmatpush1.bf16.msra.mxu0 0
        %1544 = vmatprep.subr.bf16.mxu0 0
        %1545 = vmatpush1.bf16.msra.mxu0 0
        %1546 = vmatprep.subr.bf16.mxu0 0
        %1547 = vmatpush1.bf16.msra.mxu0 0
        %1548 = vmatprep.subr.bf16.mxu0 0
        %1549 = vmatpush1.bf16.msra.mxu0 0
        %1550 = vmatprep.mubr.bf16.mxu0 0
        %1551 = vmatmul.mubr.bf16.gmra.mrb[0].mxu0 %v1513
        %v1552 = vpop.f32.mrb[0].mxu0
        %v1553 = vadd.f32 %v1495, %v1552
        %v1554 = vpop.f32.mrb[0].mxu0
        %v1555 = vpop.f32.mrb[0].mxu0
        %v1556 = vpop.f32.mrb[0].mxu0
        %1557 = vdwg.mxu0
        %v1558 = vmax.f32 %v1553, 0.0
        %v1559 = vpack.c.bf16 %v1558, %v1558
        %v1562 = vunpack.c.l.s4 1966171168
        %v1563 = vunpack.c.0.s8 %v1562
        %v1564 = vlaneseq
        %v1565 = vshrl.u32 %v1564, 7
        %v1566 = vsub.s32 %v1563, %v1565
        %v1567 = vrot.slane %v1559, %v1566
        %v1568 = vcombine.high %v1567, %v1567
        %v1570 = vunpack.c.l.s4 1966171168
        %v1571 = vunpack.c.0.s8 %v1570
        %v1572 = vlaneseq
        %v1573 = vshrl.u32 %v1572, 7
        %v1574 = vsub.s32 %v1571, %v1573
        %v1575 = vrot.slane %v1567, %v1574
        %v1577 = vunpack.c.l.s4 1966171168
        %v1578 = vunpack.c.0.s8 %v1577
        %v1579 = vlaneseq
        %v1580 = vshrl.u32 %v1579, 7
        %v1581 = vsub.s32 %v1578, %v1580
        %v1582 = vrot.slane %v1568, %v1581
        %s1585 = scalar_lea.vmem [#allocation2], 78
        %1586 = vst [vmem:[%s1585] sm:$0x1] %v1575
        %1587 = vst [vmem:[%s1585 + $0x2] sm:$0x1] %v1582
        %v1588 = vld [vmem:[%s383 + $0x10] sm:$0xc]
        %v1589 = vld [vmem:[%s1] sm:$0xf]
        %v1590 = vld [vmem:[%s1 + $0x4] sm:$0xf]
        %v1591 = vld [vmem:[%s1 + $0x8] sm:$0xf]
        %v1592 = vld [vmem:[%s1 + $0xc] sm:$0xf]
        %v1593 = vld [vmem:[%s1 + $0x10] sm:$0x3]
        %v1594 = vld [vmem:[%s2] sm:$0x1]
        %v1596 = vlaneseq
        %v1597 = vshrl.u32 %v1596, 7
        %v1598 = vsub.s32 0, %v1597
        %v1599 = vrot.slane %v1594, %v1598
        %v1602 = vunpack.c.l.b16 %v1588
        %v1603 = vpack.c.b16 %v1602, %v1602
        %v1604 = vrot.slane %v1603, 2
        %v1610 = vunpack.c.l.b16 %v1589
        %v1611 = vunpack.c.l.b16 %v1590
        %v1612 = vunpack.c.l.b16 %v1591
        %v1613 = vunpack.c.l.b16 %v1592
        %v1614 = vunpack.c.l.b16 %v1593
        %v1615 = vpack.c.b16 %v1611, %v1610
        %v1616 = vpack.c.b16 %v1613, %v1612
        %v1617 = vpack.c.b16 %v1614, %v1614
        %v1621 = vsel %vm596, %v1604, 0
        %v1624 = vsel %vm600, %v1617, 0
        %1626 = vmatprep.subr.bf16.mxu0 0
        %1627 = vmatpush1.bf16.msra.mxu0 %v1615
        %1628 = vmatprep.subr.bf16.mxu0 0
        %1629 = vmatpush1.bf16.msra.mxu0 %v1616
        %1630 = vmatprep.subr.bf16.mxu0 0
        %1631 = vmatpush1.bf16.msra.mxu0 %v1624
        %1632 = vmatprep.subr.bf16.mxu0 0
        %1633 = vmatpush1.bf16.msra.mxu0 0
        %1634 = vmatprep.subr.bf16.mxu0 0
        %1635 = vmatpush1.bf16.msra.mxu0 0
        %1636 = vmatprep.subr.bf16.mxu0 0
        %1637 = vmatpush1.bf16.msra.mxu0 0
        %1638 = vmatprep.subr.bf16.mxu0 0
        %1639 = vmatpush1.bf16.msra.mxu0 0
        %1640 = vmatprep.subr.bf16.mxu0 0
        %1641 = vmatpush1.bf16.msra.mxu0 0
        %1642 = vmatprep.subr.bf16.mxu0 0
        %1643 = vmatpush1.bf16.msra.mxu0 0
        %1644 = vmatprep.subr.bf16.mxu0 0
        %1645 = vmatpush1.bf16.msra.mxu0 0
        %1646 = vmatprep.subr.bf16.mxu0 0
        %1647 = vmatpush1.bf16.msra.mxu0 0
        %1648 = vmatprep.subr.bf16.mxu0 0
        %1649 = vmatpush1.bf16.msra.mxu0 0
        %1650 = vmatprep.subr.bf16.mxu0 0
        %1651 = vmatpush1.bf16.msra.mxu0 0
        %1652 = vmatprep.subr.bf16.mxu0 0
        %1653 = vmatpush1.bf16.msra.mxu0 0
        %1654 = vmatprep.subr.bf16.mxu0 0
        %1655 = vmatpush1.bf16.msra.mxu0 0
        %1656 = vmatprep.subr.bf16.mxu0 0
        %1657 = vmatpush1.bf16.msra.mxu0 0
        %1658 = vmatprep.mubr.bf16.mxu0 0
        %1659 = vmatmul.mubr.bf16.gmra.mrb[0].mxu0 %v1621
        %v1660 = vpop.f32.mrb[0].mxu0
        %v1661 = vadd.f32 %v1599, %v1660
        %v1662 = vpop.f32.mrb[0].mxu0
        %v1663 = vpop.f32.mrb[0].mxu0
        %v1664 = vpop.f32.mrb[0].mxu0
        %1665 = vdwg.mxu0
        %v1666 = vmax.f32 %v1661, 0.0
        %v1667 = vpack.c.bf16 %v1666, %v1666
        %v1670 = vunpack.c.l.s4 1966171168
        %v1671 = vunpack.c.0.s8 %v1670
        %v1672 = vlaneseq
        %v1673 = vshrl.u32 %v1672, 7
        %v1674 = vsub.s32 %v1671, %v1673
        %v1675 = vrot.slane %v1667, %v1674
        %v1676 = vcombine.high %v1675, %v1675
        %v1678 = vunpack.c.l.s4 1966171168
        %v1679 = vunpack.c.0.s8 %v1678
        %v1680 = vlaneseq
        %v1681 = vshrl.u32 %v1680, 7
        %v1682 = vsub.s32 %v1679, %v1681
        %v1683 = vrot.slane %v1675, %v1682
        %v1685 = vunpack.c.l.s4 1966171168
        %v1686 = vunpack.c.0.s8 %v1685
        %v1687 = vlaneseq
        %v1688 = vshrl.u32 %v1687, 7
        %v1689 = vsub.s32 %v1686, %v1688
        %v1690 = vrot.slane %v1676, %v1689
        %s1693 = scalar_lea.vmem [#allocation2], 84
        %1694 = vst [vmem:[%s1693] sm:$0x1] %v1683
        %1695 = vst [vmem:[%s1693 + $0x2] sm:$0x1] %v1690
        %v1696 = vld [vmem:[%s383 + $0x14] sm:$0x3]
        %v1697 = vld [vmem:[%s1] sm:$0xf]
        %v1698 = vld [vmem:[%s1 + $0x4] sm:$0xf]
        %v1699 = vld [vmem:[%s1 + $0x8] sm:$0xf]
        %v1700 = vld [vmem:[%s1 + $0xc] sm:$0xf]
        %v1701 = vld [vmem:[%s1 + $0x10] sm:$0x3]
        %v1702 = vld [vmem:[%s2] sm:$0x1]
        %v1704 = vlaneseq
        %v1705 = vshrl.u32 %v1704, 7
        %v1706 = vsub.s32 0, %v1705
        %v1707 = vrot.slane %v1702, %v1706
        %v1714 = vunpack.c.l.b16 %v1697
        %v1715 = vunpack.c.l.b16 %v1698
        %v1716 = vunpack.c.l.b16 %v1699
        %v1717 = vunpack.c.l.b16 %v1700
        %v1718 = vunpack.c.l.b16 %v1701
        %v1719 = vpack.c.b16 %v1715, %v1714
        %v1720 = vpack.c.b16 %v1717, %v1716
        %v1721 = vpack.c.b16 %v1718, %v1718
        %v1725 = vsel %vm596, %v1696, 0
        %v1728 = vsel %vm600, %v1721, 0
        %1730 = vmatprep.subr.bf16.mxu0 0
        %1731 = vmatpush1.bf16.msra.mxu0 %v1719
        %1732 = vmatprep.subr.bf16.mxu0 0
        %1733 = vmatpush1.bf16.msra.mxu0 %v1720
        %1734 = vmatprep.subr.bf16.mxu0 0
        %1735 = vmatpush1.bf16.msra.mxu0 %v1728
        %1736 = vmatprep.subr.bf16.mxu0 0
        %1737 = vmatpush1.bf16.msra.mxu0 0
        %1738 = vmatprep.subr.bf16.mxu0 0
        %1739 = vmatpush1.bf16.msra.mxu0 0
        %1740 = vmatprep.subr.bf16.mxu0 0
        %1741 = vmatpush1.bf16.msra.mxu0 0
        %1742 = vmatprep.subr.bf16.mxu0 0
        %1743 = vmatpush1.bf16.msra.mxu0 0
        %1744 = vmatprep.subr.bf16.mxu0 0
        %1745 = vmatpush1.bf16.msra.mxu0 0
        %1746 = vmatprep.subr.bf16.mxu0 0
        %1747 = vmatpush1.bf16.msra.mxu0 0
        %1748 = vmatprep.subr.bf16.mxu0 0
        %1749 = vmatpush1.bf16.msra.mxu0 0
        %1750 = vmatprep.subr.bf16.mxu0 0
        %1751 = vmatpush1.bf16.msra.mxu0 0
        %1752 = vmatprep.subr.bf16.mxu0 0
        %1753 = vmatpush1.bf16.msra.mxu0 0
        %1754 = vmatprep.subr.bf16.mxu0 0
        %1755 = vmatpush1.bf16.msra.mxu0 0
        %1756 = vmatprep.subr.bf16.mxu0 0
        %1757 = vmatpush1.bf16.msra.mxu0 0
        %1758 = vmatprep.subr.bf16.mxu0 0
        %1759 = vmatpush1.bf16.msra.mxu0 0
        %1760 = vmatprep.subr.bf16.mxu0 0
        %1761 = vmatpush1.bf16.msra.mxu0 0
        %1762 = vmatprep.mubr.bf16.mxu0 0
        %1763 = vmatmul.mubr.bf16.gmra.mrb[0].mxu0 %v1725
        %v1764 = vpop.f32.mrb[0].mxu0
        %v1765 = vadd.f32 %v1707, %v1764
        %v1766 = vpop.f32.mrb[0].mxu0
        %v1767 = vpop.f32.mrb[0].mxu0
        %v1768 = vpop.f32.mrb[0].mxu0
        %1769 = vdwg.mxu0
        %v1770 = vmax.f32 %v1765, 0.0
        %v1771 = vpack.c.bf16 %v1770, %v1770
        %v1774 = vunpack.c.l.s4 1966171168
        %v1775 = vunpack.c.0.s8 %v1774
        %v1776 = vlaneseq
        %v1777 = vshrl.u32 %v1776, 7
        %v1778 = vsub.s32 %v1775, %v1777
        %v1779 = vrot.slane %v1771, %v1778
        %v1780 = vcombine.high %v1779, %v1779
        %v1782 = vunpack.c.l.s4 1966171168
        %v1783 = vunpack.c.0.s8 %v1782
        %v1784 = vlaneseq
        %v1785 = vshrl.u32 %v1784, 7
        %v1786 = vsub.s32 %v1783, %v1785
        %v1787 = vrot.slane %v1779, %v1786
        %v1789 = vunpack.c.l.s4 1966171168
        %v1790 = vunpack.c.0.s8 %v1789
        %v1791 = vlaneseq
        %v1792 = vshrl.u32 %v1791, 7
        %v1793 = vsub.s32 %v1790, %v1792
        %v1794 = vrot.slane %v1780, %v1793
        %s1797 = scalar_lea.vmem [#allocation2], 90
        %1798 = vst [vmem:[%s1797] sm:$0x1] %v1787
        %1799 = vst [vmem:[%s1797 + $0x2] sm:$0x1] %v1794
        %v1800 = vld [vmem:[%s383 + $0x14] sm:$0xc]
        %v1801 = vld [vmem:[%s1] sm:$0xf]
        %v1802 = vld [vmem:[%s1 + $0x4] sm:$0xf]
        %v1803 = vld [vmem:[%s1 + $0x8] sm:$0xf]
        %v1804 = vld [vmem:[%s1 + $0xc] sm:$0xf]
        %v1805 = vld [vmem:[%s1 + $0x10] sm:$0x3]
        %v1806 = vld [vmem:[%s2] sm:$0x1]
        %v1808 = vlaneseq
        %v1809 = vshrl.u32 %v1808, 7
        %v1810 = vsub.s32 0, %v1809
        %v1811 = vrot.slane %v1806, %v1810
        %v1814 = vunpack.c.l.b16 %v1800
        %v1815 = vpack.c.b16 %v1814, %v1814
        %v1816 = vrot.slane %v1815, 2
        %v1822 = vunpack.c.l.b16 %v1801
        %v1823 = vunpack.c.l.b16 %v1802
        %v1824 = vunpack.c.l.b16 %v1803
        %v1825 = vunpack.c.l.b16 %v1804
        %v1826 = vunpack.c.l.b16 %v1805
        %v1827 = vpack.c.b16 %v1823, %v1822
        %v1828 = vpack.c.b16 %v1825, %v1824
        %v1829 = vpack.c.b16 %v1826, %v1826
        %v1833 = vsel %vm596, %v1816, 0
        %v1836 = vsel %vm600, %v1829, 0
        %1838 = vmatprep.subr.bf16.mxu0 0
        %1839 = vmatpush1.bf16.msra.mxu0 %v1827
        %1840 = vmatprep.subr.bf16.mxu0 0
        %1841 = vmatpush1.bf16.msra.mxu0 %v1828
        %1842 = vmatprep.subr.bf16.mxu0 0
        %1843 = vmatpush1.bf16.msra.mxu0 %v1836
        %1844 = vmatprep.subr.bf16.mxu0 0
        %1845 = vmatpush1.bf16.msra.mxu0 0
        %1846 = vmatprep.subr.bf16.mxu0 0
        %1847 = vmatpush1.bf16.msra.mxu0 0
        %1848 = vmatprep.subr.bf16.mxu0 0
        %1849 = vmatpush1.bf16.msra.mxu0 0
        %1850 = vmatprep.subr.bf16.mxu0 0
        %1851 = vmatpush1.bf16.msra.mxu0 0
        %1852 = vmatprep.subr.bf16.mxu0 0
        %1853 = vmatpush1.bf16.msra.mxu0 0
        %1854 = vmatprep.subr.bf16.mxu0 0
        %1855 = vmatpush1.bf16.msra.mxu0 0
        %1856 = vmatprep.subr.bf16.mxu0 0
        %1857 = vmatpush1.bf16.msra.mxu0 0
        %1858 = vmatprep.subr.bf16.mxu0 0
        %1859 = vmatpush1.bf16.msra.mxu0 0
        %1860 = vmatprep.subr.bf16.mxu0 0
        %1861 = vmatpush1.bf16.msra.mxu0 0
        %1862 = vmatprep.subr.bf16.mxu0 0
        %1863 = vmatpush1.bf16.msra.mxu0 0
        %1864 = vmatprep.subr.bf16.mxu0 0
        %1865 = vmatpush1.bf16.msra.mxu0 0
        %1866 = vmatprep.subr.bf16.mxu0 0
        %1867 = vmatpush1.bf16.msra.mxu0 0
        %1868 = vmatprep.subr.bf16.mxu0 0
        %1869 = vmatpush1.bf16.msra.mxu0 0
        %1870 = vmatprep.mubr.bf16.mxu0 0
        %1871 = vmatmul.mubr.bf16.gmra.mrb[0].mxu0 %v1833
        %v1872 = vpop.f32.mrb[0].mxu0
        %v1873 = vadd.f32 %v1811, %v1872
        %v1874 = vpop.f32.mrb[0].mxu0
        %v1875 = vpop.f32.mrb[0].mxu0
        %v1876 = vpop.f32.mrb[0].mxu0
        %1877 = vdwg.mxu0
        %v1878 = vmax.f32 %v1873, 0.0
        %v1879 = vpack.c.bf16 %v1878, %v1878
        %v1882 = vunpack.c.l.s4 1966171168
        %v1883 = vunpack.c.0.s8 %v1882
        %v1884 = vlaneseq
        %v1885 = vshrl.u32 %v1884, 7
        %v1886 = vsub.s32 %v1883, %v1885
        %v1887 = vrot.slane %v1879, %v1886
        %v1888 = vcombine.high %v1887, %v1887
        %v1890 = vunpack.c.l.s4 1966171168
        %v1891 = vunpack.c.0.s8 %v1890
        %v1892 = vlaneseq
        %v1893 = vshrl.u32 %v1892, 7
        %v1894 = vsub.s32 %v1891, %v1893
        %v1895 = vrot.slane %v1887, %v1894
        %v1897 = vunpack.c.l.s4 1966171168
        %v1898 = vunpack.c.0.s8 %v1897
        %v1899 = vlaneseq
        %v1900 = vshrl.u32 %v1899, 7
        %v1901 = vsub.s32 %v1898, %v1900
        %v1902 = vrot.slane %v1888, %v1901
        %v1904 = vunpack.c.l.s4 1935823168
        %v1905 = vunpack.c.0.s8 %v1904
        %v1906 = vlaneseq
        %v1907 = vshrl.u32 %v1906, 7
        %v1908 = vsub.s32 %v1905, %v1907
        %v1909 = vrot.slane %v1895, %v1908
        %v1911 = vunpack.c.l.s4 1935823168
        %v1912 = vunpack.c.0.s8 %v1911
        %v1913 = vlaneseq
        %v1914 = vshrl.u32 %v1913, 7
        %v1915 = vsub.s32 %v1912, %v1914
        %v1916 = vrot.slane %v1902, %v1915
        %v1918 = vshrl.u32 %v1909, 16
        %v1920 = vrot.slane %v1918, 7
        %v1921 = vshll.u32 %v1909, 16
        %v1923 = vor.u32 %v1920, %v1921
        %v1925 = vshrl.u32 %v1916, 16
        %v1927 = vrot.slane %v1925, 7
        %v1928 = vshll.u32 %v1916, 16
        %v1930 = vor.u32 %v1927, %v1928
        %s1933 = scalar_lea.vmem [#allocation2], 72
        %v1934 = vld [vmem:[%s1933] sm:$0x3]
        %v1935 = vsel %vm1021, %v1923, %v1934
        %1936 = vst [vmem:[%s1933] sm:$0x3] %v1935
        %v1937 = vld [vmem:[%s1933 + $0x2] sm:$0x3]
        %v1938 = vsel %vm1021, %v1930, %v1937
        %1939 = vst [vmem:[%s1933 + $0x2] sm:$0x3] %v1938
        %v1940 = vld [vmem:[%s383 + $0x18] sm:$0x3]
        %v1941 = vld [vmem:[%s1] sm:$0xf]
        %v1942 = vld [vmem:[%s1 + $0x4] sm:$0xf]
        %v1943 = vld [vmem:[%s1 + $0x8] sm:$0xf]
        %v1944 = vld [vmem:[%s1 + $0xc] sm:$0xf]
        %v1945 = vld [vmem:[%s1 + $0x10] sm:$0x3]
        %v1946 = vld [vmem:[%s2] sm:$0x1]
        %v1948 = vlaneseq
        %v1949 = vshrl.u32 %v1948, 7
        %v1950 = vsub.s32 0, %v1949
        %v1951 = vrot.slane %v1946, %v1950
        %v1958 = vunpack.c.l.b16 %v1941
        %v1959 = vunpack.c.l.b16 %v1942
        %v1960 = vunpack.c.l.b16 %v1943
        %v1961 = vunpack.c.l.b16 %v1944
        %v1962 = vunpack.c.l.b16 %v1945
        %v1963 = vpack.c.b16 %v1959, %v1958
        %v1964 = vpack.c.b16 %v1961, %v1960
        %v1965 = vpack.c.b16 %v1962, %v1962
        %v1969 = vsel %vm596, %v1940, 0
        %v1972 = vsel %vm600, %v1965, 0
        %1974 = vmatprep.subr.bf16.mxu0 0
        %1975 = vmatpush1.bf16.msra.mxu0 %v1963
        %1976 = vmatprep.subr.bf16.mxu0 0
        %1977 = vmatpush1.bf16.msra.mxu0 %v1964
        %1978 = vmatprep.subr.bf16.mxu0 0
        %1979 = vmatpush1.bf16.msra.mxu0 %v1972
        %1980 = vmatprep.subr.bf16.mxu0 0
        %1981 = vmatpush1.bf16.msra.mxu0 0
        %1982 = vmatprep.subr.bf16.mxu0 0
        %1983 = vmatpush1.bf16.msra.mxu0 0
        %1984 = vmatprep.subr.bf16.mxu0 0
        %1985 = vmatpush1.bf16.msra.mxu0 0
        %1986 = vmatprep.subr.bf16.mxu0 0
        %1987 = vmatpush1.bf16.msra.mxu0 0
        %1988 = vmatprep.subr.bf16.mxu0 0
        %1989 = vmatpush1.bf16.msra.mxu0 0
        %1990 = vmatprep.subr.bf16.mxu0 0
        %1991 = vmatpush1.bf16.msra.mxu0 0
        %1992 = vmatprep.subr.bf16.mxu0 0
        %1993 = vmatpush1.bf16.msra.mxu0 0
        %1994 = vmatprep.subr.bf16.mxu0 0
        %1995 = vmatpush1.bf16.msra.mxu0 0
        %1996 = vmatprep.subr.bf16.mxu0 0
        %1997 = vmatpush1.bf16.msra.mxu0 0
        %1998 = vmatprep.subr.bf16.mxu0 0
        %1999 = vmatpush1.bf16.msra.mxu0 0
        %2000 = vmatprep.subr.bf16.mxu0 0
        %2001 = vmatpush1.bf16.msra.mxu0 0
        %2002 = vmatprep.subr.bf16.mxu0 0
        %2003 = vmatpush1.bf16.msra.mxu0 0
        %2004 = vmatprep.subr.bf16.mxu0 0
        %2005 = vmatpush1.bf16.msra.mxu0 0
        %2006 = vmatprep.mubr.bf16.mxu0 0
        %2007 = vmatmul.mubr.bf16.gmra.mrb[0].mxu0 %v1969
        %v2008 = vpop.f32.mrb[0].mxu0
        %v2009 = vadd.f32 %v1951, %v2008
        %v2010 = vpop.f32.mrb[0].mxu0
        %v2011 = vpop.f32.mrb[0].mxu0
        %v2012 = vpop.f32.mrb[0].mxu0
        %2013 = vdwg.mxu0
        %v2014 = vmax.f32 %v2009, 0.0
        %v2015 = vpack.c.bf16 %v2014, %v2014
        %v2018 = vunpack.c.l.s4 1966171168
        %v2019 = vunpack.c.0.s8 %v2018
        %v2020 = vlaneseq
        %v2021 = vshrl.u32 %v2020, 7
        %v2022 = vsub.s32 %v2019, %v2021
        %v2023 = vrot.slane %v2015, %v2022
        %v2024 = vcombine.high %v2023, %v2023
        %v2026 = vunpack.c.l.s4 1966171168
        %v2027 = vunpack.c.0.s8 %v2026
        %v2028 = vlaneseq
        %v2029 = vshrl.u32 %v2028, 7
        %v2030 = vsub.s32 %v2027, %v2029
        %v2031 = vrot.slane %v2023, %v2030
        %v2033 = vunpack.c.l.s4 1966171168
        %v2034 = vunpack.c.0.s8 %v2033
        %v2035 = vlaneseq
        %v2036 = vshrl.u32 %v2035, 7
        %v2037 = vsub.s32 %v2034, %v2036
        %v2038 = vrot.slane %v2024, %v2037
        %s2041 = scalar_lea.vmem [#allocation2], 8
        %2042 = vst [vmem:[%s2041] sm:$0x1] %v2031
        %2043 = vst [vmem:[%s2041 + $0x2] sm:$0x1] %v2038
        %v2044 = vld [vmem:[%s383 + $0x18] sm:$0xc]
        %v2045 = vld [vmem:[%s1] sm:$0xf]
        %v2046 = vld [vmem:[%s1 + $0x4] sm:$0xf]
        %v2047 = vld [vmem:[%s1 + $0x8] sm:$0xf]
        %v2048 = vld [vmem:[%s1 + $0xc] sm:$0xf]
        %v2049 = vld [vmem:[%s1 + $0x10] sm:$0x3]
        %v2050 = vld [vmem:[%s2] sm:$0x1]
        %v2052 = vlaneseq
        %v2053 = vshrl.u32 %v2052, 7
        %v2054 = vsub.s32 0, %v2053
        %v2055 = vrot.slane %v2050, %v2054
        %v2058 = vunpack.c.l.b16 %v2044
        %v2059 = vpack.c.b16 %v2058, %v2058
        %v2060 = vrot.slane %v2059, 2
        %v2066 = vunpack.c.l.b16 %v2045
        %v2067 = vunpack.c.l.b16 %v2046
        %v2068 = vunpack.c.l.b16 %v2047
        %v2069 = vunpack.c.l.b16 %v2048
        %v2070 = vunpack.c.l.b16 %v2049
        %v2071 = vpack.c.b16 %v2067, %v2066
        %v2072 = vpack.c.b16 %v2069, %v2068
        %v2073 = vpack.c.b16 %v2070, %v2070
        %v2077 = vsel %vm596, %v2060, 0
        %v2080 = vsel %vm600, %v2073, 0
        %2082 = vmatprep.subr.bf16.mxu0 0
        %2083 = vmatpush1.bf16.msra.mxu0 %v2071
        %2084 = vmatprep.subr.bf16.mxu0 0
        %2085 = vmatpush1.bf16.msra.mxu0 %v2072
        %2086 = vmatprep.subr.bf16.mxu0 0
        %2087 = vmatpush1.bf16.msra.mxu0 %v2080
        %2088 = vmatprep.subr.bf16.mxu0 0
        %2089 = vmatpush1.bf16.msra.mxu0 0
        %2090 = vmatprep.subr.bf16.mxu0 0
        %2091 = vmatpush1.bf16.msra.mxu0 0
        %2092 = vmatprep.subr.bf16.mxu0 0
        %2093 = vmatpush1.bf16.msra.mxu0 0
        %2094 = vmatprep.subr.bf16.mxu0 0
        %2095 = vmatpush1.bf16.msra.mxu0 0
        %2096 = vmatprep.subr.bf16.mxu0 0
        %2097 = vmatpush1.bf16.msra.mxu0 0
        %2098 = vmatprep.subr.bf16.mxu0 0
        %2099 = vmatpush1.bf16.msra.mxu0 0
        %2100 = vmatprep.subr.bf16.mxu0 0
        %2101 = vmatpush1.bf16.msra.mxu0 0
        %2102 = vmatprep.subr.bf16.mxu0 0
        %2103 = vmatpush1.bf16.msra.mxu0 0
        %2104 = vmatprep.subr.bf16.mxu0 0
        %2105 = vmatpush1.bf16.msra.mxu0 0
        %2106 = vmatprep.subr.bf16.mxu0 0
        %2107 = vmatpush1.bf16.msra.mxu0 0
        %2108 = vmatprep.subr.bf16.mxu0 0
        %2109 = vmatpush1.bf16.msra.mxu0 0
        %2110 = vmatprep.subr.bf16.mxu0 0
        %2111 = vmatpush1.bf16.msra.mxu0 0
        %2112 = vmatprep.subr.bf16.mxu0 0
        %2113 = vmatpush1.bf16.msra.mxu0 0
        %2114 = vmatprep.mubr.bf16.mxu0 0
        %2115 = vmatmul.mubr.bf16.gmra.mrb[0].mxu0 %v2077
        %v2116 = vpop.f32.mrb[0].mxu0
        %v2117 = vadd.f32 %v2055, %v2116
        %v2118 = vpop.f32.mrb[0].mxu0
        %v2119 = vpop.f32.mrb[0].mxu0
        %v2120 = vpop.f32.mrb[0].mxu0
        %2121 = vdwg.mxu0
        %v2122 = vmax.f32 %v2117, 0.0
        %v2123 = vpack.c.bf16 %v2122, %v2122
        %v2126 = vunpack.c.l.s4 1966171168
        %v2127 = vunpack.c.0.s8 %v2126
        %v2128 = vlaneseq
        %v2129 = vshrl.u32 %v2128, 7
        %v2130 = vsub.s32 %v2127, %v2129
        %v2131 = vrot.slane %v2123, %v2130
        %v2132 = vcombine.high %v2131, %v2131
        %v2134 = vunpack.c.l.s4 1966171168
        %v2135 = vunpack.c.0.s8 %v2134
        %v2136 = vlaneseq
        %v2137 = vshrl.u32 %v2136, 7
        %v2138 = vsub.s32 %v2135, %v2137
        %v2139 = vrot.slane %v2131, %v2138
        %v2141 = vunpack.c.l.s4 1966171168
        %v2142 = vunpack.c.0.s8 %v2141
        %v2143 = vlaneseq
        %v2144 = vshrl.u32 %v2143, 7
        %v2145 = vsub.s32 %v2142, %v2144
        %v2146 = vrot.slane %v2132, %v2145
        %s2149 = scalar_lea.vmem [#allocation2], 14
        %2150 = vst [vmem:[%s2149] sm:$0x1] %v2139
        %2151 = vst [vmem:[%s2149 + $0x2] sm:$0x1] %v2146
        %v2152 = vld [vmem:[%s383 + $0x1c] sm:$0x3]
        %v2153 = vld [vmem:[%s1] sm:$0xf]
        %v2154 = vld [vmem:[%s1 + $0x4] sm:$0xf]
        %v2155 = vld [vmem:[%s1 + $0x8] sm:$0xf]
        %v2156 = vld [vmem:[%s1 + $0xc] sm:$0xf]
        %v2157 = vld [vmem:[%s1 + $0x10] sm:$0x3]
        %v2158 = vld [vmem:[%s2] sm:$0x1]
        %v2160 = vlaneseq
        %v2161 = vshrl.u32 %v2160, 7
        %v2162 = vsub.s32 0, %v2161
        %v2163 = vrot.slane %v2158, %v2162
        %v2170 = vunpack.c.l.b16 %v2153
        %v2171 = vunpack.c.l.b16 %v2154
        %v2172 = vunpack.c.l.b16 %v2155
        %v2173 = vunpack.c.l.b16 %v2156
        %v2174 = vunpack.c.l.b16 %v2157
        %v2175 = vpack.c.b16 %v2171, %v2170
        %v2176 = vpack.c.b16 %v2173, %v2172
        %v2177 = vpack.c.b16 %v2174, %v2174
        %v2181 = vsel %vm596, %v2152, 0
        %v2184 = vsel %vm600, %v2177, 0
        %2186 = vmatprep.subr.bf16.mxu0 0
        %2187 = vmatpush1.bf16.msra.mxu0 %v2175
        %2188 = vmatprep.subr.bf16.mxu0 0
        %2189 = vmatpush1.bf16.msra.mxu0 %v2176
        %2190 = vmatprep.subr.bf16.mxu0 0
        %2191 = vmatpush1.bf16.msra.mxu0 %v2184
        %2192 = vmatprep.subr.bf16.mxu0 0
        %2193 = vmatpush1.bf16.msra.mxu0 0
        %2194 = vmatprep.subr.bf16.mxu0 0
        %2195 = vmatpush1.bf16.msra.mxu0 0
        %2196 = vmatprep.subr.bf16.mxu0 0
        %2197 = vmatpush1.bf16.msra.mxu0 0
        %2198 = vmatprep.subr.bf16.mxu0 0
        %2199 = vmatpush1.bf16.msra.mxu0 0
        %2200 = vmatprep.subr.bf16.mxu0 0
        %2201 = vmatpush1.bf16.msra.mxu0 0
        %2202 = vmatprep.subr.bf16.mxu0 0
        %2203 = vmatpush1.bf16.msra.mxu0 0
        %2204 = vmatprep.subr.bf16.mxu0 0
        %2205 = vmatpush1.bf16.msra.mxu0 0
        %2206 = vmatprep.subr.bf16.mxu0 0
        %2207 = vmatpush1.bf16.msra.mxu0 0
        %2208 = vmatprep.subr.bf16.mxu0 0
        %2209 = vmatpush1.bf16.msra.mxu0 0
        %2210 = vmatprep.subr.bf16.mxu0 0
        %2211 = vmatpush1.bf16.msra.mxu0 0
        %2212 = vmatprep.subr.bf16.mxu0 0
        %2213 = vmatpush1.bf16.msra.mxu0 0
        %2214 = vmatprep.subr.bf16.mxu0 0
        %2215 = vmatpush1.bf16.msra.mxu0 0
        %2216 = vmatprep.subr.bf16.mxu0 0
        %2217 = vmatpush1.bf16.msra.mxu0 0
        %2218 = vmatprep.mubr.bf16.mxu0 0
        %2219 = vmatmul.mubr.bf16.gmra.mrb[0].mxu0 %v2181
        %v2220 = vpop.f32.mrb[0].mxu0
        %v2221 = vadd.f32 %v2163, %v2220
        %v2222 = vpop.f32.mrb[0].mxu0
        %v2223 = vpop.f32.mrb[0].mxu0
        %v2224 = vpop.f32.mrb[0].mxu0
        %2225 = vdwg.mxu0
        %v2226 = vmax.f32 %v2221, 0.0
        %v2227 = vpack.c.bf16 %v2226, %v2226
        %v2230 = vunpack.c.l.s4 1966171168
        %v2231 = vunpack.c.0.s8 %v2230
        %v2232 = vlaneseq
        %v2233 = vshrl.u32 %v2232, 7
        %v2234 = vsub.s32 %v2231, %v2233
        %v2235 = vrot.slane %v2227, %v2234
        %v2236 = vcombine.high %v2235, %v2235
        %v2238 = vunpack.c.l.s4 1966171168
        %v2239 = vunpack.c.0.s8 %v2238
        %v2240 = vlaneseq
        %v2241 = vshrl.u32 %v2240, 7
        %v2242 = vsub.s32 %v2239, %v2241
        %v2243 = vrot.slane %v2235, %v2242
        %v2245 = vunpack.c.l.s4 1966171168
        %v2246 = vunpack.c.0.s8 %v2245
        %v2247 = vlaneseq
        %v2248 = vshrl.u32 %v2247, 7
        %v2249 = vsub.s32 %v2246, %v2248
        %v2250 = vrot.slane %v2236, %v2249
        %s2253 = scalar_lea.vmem [#allocation2], 20
        %2254 = vst [vmem:[%s2253] sm:$0x1] %v2243
        %2255 = vst [vmem:[%s2253 + $0x2] sm:$0x1] %v2250
        %v2256 = vld [vmem:[%s383 + $0x1c] sm:$0xc]
        %v2257 = vld [vmem:[%s1] sm:$0xf]
        %v2258 = vld [vmem:[%s1 + $0x4] sm:$0xf]
        %v2259 = vld [vmem:[%s1 + $0x8] sm:$0xf]
        %v2260 = vld [vmem:[%s1 + $0xc] sm:$0xf]
        %v2261 = vld [vmem:[%s1 + $0x10] sm:$0x3]
        %v2262 = vld [vmem:[%s2] sm:$0x1]
        %v2264 = vlaneseq
        %v2265 = vshrl.u32 %v2264, 7
        %v2266 = vsub.s32 0, %v2265
        %v2267 = vrot.slane %v2262, %v2266
        %v2270 = vunpack.c.l.b16 %v2256
        %v2271 = vpack.c.b16 %v2270, %v2270
        %v2272 = vrot.slane %v2271, 2
        %v2278 = vunpack.c.l.b16 %v2257
        %v2279 = vunpack.c.l.b16 %v2258
        %v2280 = vunpack.c.l.b16 %v2259
        %v2281 = vunpack.c.l.b16 %v2260
        %v2282 = vunpack.c.l.b16 %v2261
        %v2283 = vpack.c.b16 %v2279, %v2278
        %v2284 = vpack.c.b16 %v2281, %v2280
        %v2285 = vpack.c.b16 %v2282, %v2282
        %v2289 = vsel %vm596, %v2272, 0
        %v2292 = vsel %vm600, %v2285, 0
        %2294 = vmatprep.subr.bf16.mxu0 0
        %2295 = vmatpush1.bf16.msra.mxu0 %v2283
        %2296 = vmatprep.subr.bf16.mxu0 0
        %2297 = vmatpush1.bf16.msra.mxu0 %v2284
        %2298 = vmatprep.subr.bf16.mxu0 0
        %2299 = vmatpush1.bf16.msra.mxu0 %v2292
        %2300 = vmatprep.subr.bf16.mxu0 0
        %2301 = vmatpush1.bf16.msra.mxu0 0
        %2302 = vmatprep.subr.bf16.mxu0 0
        %2303 = vmatpush1.bf16.msra.mxu0 0
        %2304 = vmatprep.subr.bf16.mxu0 0
        %2305 = vmatpush1.bf16.msra.mxu0 0
        %2306 = vmatprep.subr.bf16.mxu0 0
        %2307 = vmatpush1.bf16.msra.mxu0 0
        %2308 = vmatprep.subr.bf16.mxu0 0
        %2309 = vmatpush1.bf16.msra.mxu0 0
        %2310 = vmatprep.subr.bf16.mxu0 0
        %2311 = vmatpush1.bf16.msra.mxu0 0
        %2312 = vmatprep.subr.bf16.mxu0 0
        %2313 = vmatpush1.bf16.msra.mxu0 0
        %2314 = vmatprep.subr.bf16.mxu0 0
        %2315 = vmatpush1.bf16.msra.mxu0 0
        %2316 = vmatprep.subr.bf16.mxu0 0
        %2317 = vmatpush1.bf16.msra.mxu0 0
        %2318 = vmatprep.subr.bf16.mxu0 0
        %2319 = vmatpush1.bf16.msra.mxu0 0
        %2320 = vmatprep.subr.bf16.mxu0 0
        %2321 = vmatpush1.bf16.msra.mxu0 0
        %2322 = vmatprep.subr.bf16.mxu0 0
        %2323 = vmatpush1.bf16.msra.mxu0 0
        %2324 = vmatprep.subr.bf16.mxu0 0
        %2325 = vmatpush1.bf16.msra.mxu0 0
        %2326 = vmatprep.mubr.bf16.mxu0 0
        %2327 = vmatmul.mubr.bf16.gmra.mrb[0].mxu0 %v2289
        %v2328 = vpop.f32.mrb[0].mxu0
        %v2329 = vadd.f32 %v2267, %v2328
        %v2330 = vpop.f32.mrb[0].mxu0
        %v2331 = vpop.f32.mrb[0].mxu0
        %v2332 = vpop.f32.mrb[0].mxu0
        %2333 = vdwg.mxu0
        %v2334 = vmax.f32 %v2329, 0.0
        %v2335 = vpack.c.bf16 %v2334, %v2334
        %v2338 = vunpack.c.l.s4 1966171168
        %v2339 = vunpack.c.0.s8 %v2338
        %v2340 = vlaneseq
        %v2341 = vshrl.u32 %v2340, 7
        %v2342 = vsub.s32 %v2339, %v2341
        %v2343 = vrot.slane %v2335, %v2342
        %v2344 = vcombine.high %v2343, %v2343
        %v2346 = vunpack.c.l.s4 1966171168
        %v2347 = vunpack.c.0.s8 %v2346
        %v2348 = vlaneseq
        %v2349 = vshrl.u32 %v2348, 7
        %v2350 = vsub.s32 %v2347, %v2349
        %v2351 = vrot.slane %v2343, %v2350
        %v2353 = vunpack.c.l.s4 1966171168
        %v2354 = vunpack.c.0.s8 %v2353
        %v2355 = vlaneseq
        %v2356 = vshrl.u32 %v2355, 7
        %v2357 = vsub.s32 %v2354, %v2356
        %v2358 = vrot.slane %v2344, %v2357
        %v2360 = vunpack.c.l.s4 1935823168
        %v2361 = vunpack.c.0.s8 %v2360
        %v2362 = vlaneseq
        %v2363 = vshrl.u32 %v2362, 7
        %v2364 = vsub.s32 %v2361, %v2363
        %v2365 = vrot.slane %v2351, %v2364
        %v2367 = vunpack.c.l.s4 1935823168
        %v2368 = vunpack.c.0.s8 %v2367
        %v2369 = vlaneseq
        %v2370 = vshrl.u32 %v2369, 7
        %v2371 = vsub.s32 %v2368, %v2370
        %v2372 = vrot.slane %v2358, %v2371
        %v2374 = vshrl.u32 %v2365, 16
        %v2376 = vrot.slane %v2374, 7
        %v2377 = vshll.u32 %v2365, 16
        %v2379 = vor.u32 %v2376, %v2377
        %v2381 = vshrl.u32 %v2372, 16
        %v2383 = vrot.slane %v2381, 7
        %v2384 = vshll.u32 %v2372, 16
        %v2386 = vor.u32 %v2383, %v2384
        %s2389 = scalar_lea.vmem [#allocation2], 2
        %v2390 = vld [vmem:[%s2389] sm:$0x3]
        %v2391 = vsel %vm1021, %v2379, %v2390
        %2392 = vst [vmem:[%s2389] sm:$0x3] %v2391
        %v2393 = vld [vmem:[%s2389 + $0x2] sm:$0x3]
        %v2394 = vsel %vm1021, %v2386, %v2393
        %2395 = vst [vmem:[%s2389 + $0x2] sm:$0x3] %v2394
        %v2396 = vld [vmem:[#allocation2] sm:$0x1]
        %v2397 = vld [vmem:[#allocation2 + $0x2] sm:$0x1]
        %v2398 = vld [vmem:[%s3] sm:$0xf]
        %v2399 = vld [vmem:[%s3 + $0x4] sm:$0xf]
        %v2400 = vld [vmem:[%s3 + $0x8] sm:$0xf]
        %v2401 = vld [vmem:[%s3 + $0xc] sm:$0xf]
        %v2402 = vld [vmem:[%s3 + $0x10] sm:$0xf]
        %v2403 = vld [vmem:[%s3 + $0x14] sm:$0xf]
        %v2404 = vld [vmem:[%s3 + $0x18] sm:$0xf]
        %v2405 = vld [vmem:[%s3 + $0x1c] sm:$0xf]
        %v2406 = vld [vmem:[%s3 + $0x20] sm:$0xf]
        %v2407 = vld [vmem:[%s3 + $0x24] sm:$0xf]
        %v2408 = vld [vmem:[%s3 + $0x28] sm:$0xf]
        %v2409 = vld [vmem:[%s3 + $0x2c] sm:$0xf]
        %v2410 = vld [vmem:[%s3 + $0x30] sm:$0xf]
        %v2411 = vld [vmem:[%s3 + $0x34] sm:$0xf]
        %v2412 = vld [vmem:[%s3 + $0x38] sm:$0xf]
        %v2413 = vld [vmem:[%s3 + $0x3c] sm:$0xf]
        %s2414 = scalar_lea.vmem [#allocation2], 6
        %v2415 = vld [vmem:[%s2414] sm:$0x1]
        %v2416 = vld [vmem:[%s2414 + $0x2] sm:$0x1]
        %s2417 = scalar_lea.vmem %s3, 64
        %v2418 = vld [vmem:[%s2417] sm:$0xf]
        %v2419 = vld [vmem:[%s2417 + $0x4] sm:$0xf]
        %v2420 = vld [vmem:[%s2417 + $0x8] sm:$0xf]
        %v2421 = vld [vmem:[%s2417 + $0xc] sm:$0xf]
        %v2422 = vld [vmem:[%s2417 + $0x10] sm:$0xf]
        %v2423 = vld [vmem:[%s2417 + $0x14] sm:$0xf]
        %v2424 = vld [vmem:[%s2417 + $0x18] sm:$0xf]
        %v2425 = vld [vmem:[%s2417 + $0x1c] sm:$0xf]
        %v2426 = vld [vmem:[%s2417 + $0x20] sm:$0xf]
        %v2427 = vld [vmem:[%s2417 + $0x24] sm:$0xf]
        %v2428 = vld [vmem:[%s2417 + $0x28] sm:$0xf]
        %v2429 = vld [vmem:[%s2417 + $0x2c] sm:$0xf]
        %v2430 = vld [vmem:[%s2417 + $0x30] sm:$0xf]
        %v2431 = vld [vmem:[%s2417 + $0x34] sm:$0xf]
        %v2432 = vld [vmem:[%s2417 + $0x38] sm:$0xf]
        %v2433 = vld [vmem:[%s2417 + $0x3c] sm:$0xf]
        %v2436 = vcombine.low %v2415, %v2416
        %v2438 = vunpack.c.l.s4 1966171168
        %v2439 = vunpack.c.0.s8 %v2438
        %v2440 = vlaneseq
        %v2441 = vshrl.u32 %v2440, 7
        %v2442 = vsub.s32 %v2439, %v2441
        %v2443 = vrot.slane %v2436, %v2442
        %v2445 = vunpack.c.l.s4 1966171168
        %v2446 = vunpack.c.0.s8 %v2445
        %v2447 = vlaneseq
        %v2448 = vshrl.u32 %v2447, 7
        %v2449 = vsub.s32 %v2446, %v2448
        %v2450 = vrot.slane %v2443, %v2449
        %v2468 = vunpack.c.l.b16 %v2418
        %v2469 = vunpack.c.l.b16 %v2419
        %v2470 = vunpack.c.l.b16 %v2420
        %v2471 = vunpack.c.l.b16 %v2421
        %v2472 = vunpack.c.l.b16 %v2422
        %v2473 = vunpack.c.l.b16 %v2423
        %v2474 = vunpack.c.l.b16 %v2424
        %v2475 = vunpack.c.l.b16 %v2425
        %v2476 = vunpack.c.l.b16 %v2426
        %v2477 = vunpack.c.l.b16 %v2427
        %v2478 = vunpack.c.l.b16 %v2428
        %v2479 = vunpack.c.l.b16 %v2429
        %v2480 = vunpack.c.l.b16 %v2430
        %v2481 = vunpack.c.l.b16 %v2431
        %v2482 = vunpack.c.l.b16 %v2432
        %v2483 = vunpack.c.l.b16 %v2433
        %v2484 = vpack.c.b16 %v2469, %v2468
        %v2485 = vpack.c.b16 %v2471, %v2470
        %v2486 = vpack.c.b16 %v2473, %v2472
        %v2487 = vpack.c.b16 %v2475, %v2474
        %v2488 = vpack.c.b16 %v2477, %v2476
        %v2489 = vpack.c.b16 %v2479, %v2478
        %v2490 = vpack.c.b16 %v2481, %v2480
        %v2491 = vpack.c.b16 %v2483, %v2482
        %2500 = vmatprep.subr.bf16.mxu0 0
        %2501 = vmatpush1.bf16.msra.mxu0 %v2484
        %2502 = vmatprep.subr.bf16.mxu0 0
        %2503 = vmatpush1.bf16.msra.mxu0 %v2485
        %2504 = vmatprep.subr.bf16.mxu0 0
        %2505 = vmatpush1.bf16.msra.mxu0 %v2486
        %2506 = vmatprep.subr.bf16.mxu0 0
        %2507 = vmatpush1.bf16.msra.mxu0 %v2487
        %2508 = vmatprep.subr.bf16.mxu0 0
        %2509 = vmatpush1.bf16.msra.mxu0 %v2488
        %2510 = vmatprep.subr.bf16.mxu0 0
        %2511 = vmatpush1.bf16.msra.mxu0 %v2489
        %2512 = vmatprep.subr.bf16.mxu0 0
        %2513 = vmatpush1.bf16.msra.mxu0 %v2490
        %2514 = vmatprep.subr.bf16.mxu0 0
        %2515 = vmatpush1.bf16.msra.mxu0 %v2491
        %2516 = vmatprep.subr.bf16.mxu0 0
        %2517 = vmatpush1.bf16.msra.mxu0 0
        %2518 = vmatprep.subr.bf16.mxu0 0
        %2519 = vmatpush1.bf16.msra.mxu0 0
        %2520 = vmatprep.subr.bf16.mxu0 0
        %2521 = vmatpush1.bf16.msra.mxu0 0
        %2522 = vmatprep.subr.bf16.mxu0 0
        %2523 = vmatpush1.bf16.msra.mxu0 0
        %2524 = vmatprep.subr.bf16.mxu0 0
        %2525 = vmatpush1.bf16.msra.mxu0 0
        %2526 = vmatprep.subr.bf16.mxu0 0
        %2527 = vmatpush1.bf16.msra.mxu0 0
        %2528 = vmatprep.subr.bf16.mxu0 0
        %2529 = vmatpush1.bf16.msra.mxu0 0
        %2530 = vmatprep.subr.bf16.mxu0 0
        %2531 = vmatpush1.bf16.msra.mxu0 0
        %2532 = vmatprep.mubr.bf16.mxu0 0
        %2533 = vmatmul.mubr.bf16.gmra.mrb[0].mxu0 %v2450
        %v2534 = vpop.f32.mrb[0].mxu0
        %v2535 = vadd.f32 0.0, %v2534
        %v2536 = vpop.f32.mrb[0].mxu0
        %v2537 = vpop.f32.mrb[0].mxu0
        %v2538 = vpop.f32.mrb[0].mxu0
        %2539 = vdwg.mxu0
        %v2542 = vcombine.low %v2396, %v2397
        %v2544 = vunpack.c.l.s4 1966171168
        %v2545 = vunpack.c.0.s8 %v2544
        %v2546 = vlaneseq
        %v2547 = vshrl.u32 %v2546, 7
        %v2548 = vsub.s32 %v2545, %v2547
        %v2549 = vrot.slane %v2542, %v2548
        %v2551 = vunpack.c.l.s4 1966171168
        %v2552 = vunpack.c.0.s8 %v2551
        %v2553 = vlaneseq
        %v2554 = vshrl.u32 %v2553, 7
        %v2555 = vsub.s32 %v2552, %v2554
        %v2556 = vrot.slane %v2549, %v2555
        %v2574 = vunpack.c.l.b16 %v2398
        %v2575 = vunpack.c.l.b16 %v2399
        %v2576 = vunpack.c.l.b16 %v2400
        %v2577 = vunpack.c.l.b16 %v2401
        %v2578 = vunpack.c.l.b16 %v2402
        %v2579 = vunpack.c.l.b16 %v2403
        %v2580 = vunpack.c.l.b16 %v2404
        %v2581 = vunpack.c.l.b16 %v2405
        %v2582 = vunpack.c.l.b16 %v2406
        %v2583 = vunpack.c.l.b16 %v2407
        %v2584 = vunpack.c.l.b16 %v2408
        %v2585 = vunpack.c.l.b16 %v2409
        %v2586 = vunpack.c.l.b16 %v2410
        %v2587 = vunpack.c.l.b16 %v2411
        %v2588 = vunpack.c.l.b16 %v2412
        %v2589 = vunpack.c.l.b16 %v2413
        %v2590 = vpack.c.b16 %v2575, %v2574
        %v2591 = vpack.c.b16 %v2577, %v2576
        %v2592 = vpack.c.b16 %v2579, %v2578
        %v2593 = vpack.c.b16 %v2581, %v2580
        %v2594 = vpack.c.b16 %v2583, %v2582
        %v2595 = vpack.c.b16 %v2585, %v2584
        %v2596 = vpack.c.b16 %v2587, %v2586
        %v2597 = vpack.c.b16 %v2589, %v2588
        %2606 = vmatprep.subr.bf16.mxu0 0
        %2607 = vmatpush1.bf16.msra.mxu0 %v2590
        %2608 = vmatprep.subr.bf16.mxu0 0
        %2609 = vmatpush1.bf16.msra.mxu0 %v2591
        %2610 = vmatprep.subr.bf16.mxu0 0
        %2611 = vmatpush1.bf16.msra.mxu0 %v2592
        %2612 = vmatprep.subr.bf16.mxu0 0
        %2613 = vmatpush1.bf16.msra.mxu0 %v2593
        %2614 = vmatprep.subr.bf16.mxu0 0
        %2615 = vmatpush1.bf16.msra.mxu0 %v2594
        %2616 = vmatprep.subr.bf16.mxu0 0
        %2617 = vmatpush1.bf16.msra.mxu0 %v2595
        %2618 = vmatprep.subr.bf16.mxu0 0
        %2619 = vmatpush1.bf16.msra.mxu0 %v2596
        %2620 = vmatprep.subr.bf16.mxu0 0
        %2621 = vmatpush1.bf16.msra.mxu0 %v2597
        %2622 = vmatprep.subr.bf16.mxu0 0
        %2623 = vmatpush1.bf16.msra.mxu0 0
        %2624 = vmatprep.subr.bf16.mxu0 0
        %2625 = vmatpush1.bf16.msra.mxu0 0
        %2626 = vmatprep.subr.bf16.mxu0 0
        %2627 = vmatpush1.bf16.msra.mxu0 0
        %2628 = vmatprep.subr.bf16.mxu0 0
        %2629 = vmatpush1.bf16.msra.mxu0 0
        %2630 = vmatprep.subr.bf16.mxu0 0
        %2631 = vmatpush1.bf16.msra.mxu0 0
        %2632 = vmatprep.subr.bf16.mxu0 0
        %2633 = vmatpush1.bf16.msra.mxu0 0
        %2634 = vmatprep.subr.bf16.mxu0 0
        %2635 = vmatpush1.bf16.msra.mxu0 0
        %2636 = vmatprep.subr.bf16.mxu0 0
        %2637 = vmatpush1.bf16.msra.mxu0 0
        %2638 = vmatprep.mubr.bf16.mxu0 0
        %2639 = vmatmul.mubr.bf16.gmra.mrb[0].mxu0 %v2556
        %v2640 = vpop.f32.mrb[0].mxu0
        %v2641 = vadd.f32 %v2535, %v2640
        %v2642 = vpop.f32.mrb[0].mxu0
        %v2643 = vpop.f32.mrb[0].mxu0
        %v2644 = vpop.f32.mrb[0].mxu0
        %2645 = vdwg.mxu0
        %s2646 = scalar_lea.vmem [#allocation2], 12
        %v2647 = vld [vmem:[%s2646] sm:$0x1]
        %v2648 = vld [vmem:[%s2646 + $0x2] sm:$0x1]
        %s2649 = scalar_lea.vmem %s3, 128
        %v2650 = vld [vmem:[%s2649] sm:$0xf]
        %v2651 = vld [vmem:[%s2649 + $0x4] sm:$0xf]
        %v2652 = vld [vmem:[%s2649 + $0x8] sm:$0xf]
        %v2653 = vld [vmem:[%s2649 + $0xc] sm:$0xf]
        %v2654 = vld [vmem:[%s2649 + $0x10] sm:$0xf]
        %v2655 = vld [vmem:[%s2649 + $0x14] sm:$0xf]
        %v2656 = vld [vmem:[%s2649 + $0x18] sm:$0xf]
        %v2657 = vld [vmem:[%s2649 + $0x1c] sm:$0xf]
        %v2658 = vld [vmem:[%s2649 + $0x20] sm:$0xf]
        %v2659 = vld [vmem:[%s2649 + $0x24] sm:$0xf]
        %v2660 = vld [vmem:[%s2649 + $0x28] sm:$0xf]
        %v2661 = vld [vmem:[%s2649 + $0x2c] sm:$0xf]
        %v2662 = vld [vmem:[%s2649 + $0x30] sm:$0xf]
        %v2663 = vld [vmem:[%s2649 + $0x34] sm:$0xf]
        %v2664 = vld [vmem:[%s2649 + $0x38] sm:$0xf]
        %v2665 = vld [vmem:[%s2649 + $0x3c] sm:$0xf]
        %v2668 = vcombine.low %v2647, %v2648
        %v2670 = vunpack.c.l.s4 1966171168
        %v2671 = vunpack.c.0.s8 %v2670
        %v2672 = vlaneseq
        %v2673 = vshrl.u32 %v2672, 7
        %v2674 = vsub.s32 %v2671, %v2673
        %v2675 = vrot.slane %v2668, %v2674
        %v2677 = vunpack.c.l.s4 1966171168
        %v2678 = vunpack.c.0.s8 %v2677
        %v2679 = vlaneseq
        %v2680 = vshrl.u32 %v2679, 7
        %v2681 = vsub.s32 %v2678, %v2680
        %v2682 = vrot.slane %v2675, %v2681
        %v2700 = vunpack.c.l.b16 %v2650
        %v2701 = vunpack.c.l.b16 %v2651
        %v2702 = vunpack.c.l.b16 %v2652
        %v2703 = vunpack.c.l.b16 %v2653
        %v2704 = vunpack.c.l.b16 %v2654
        %v2705 = vunpack.c.l.b16 %v2655
        %v2706 = vunpack.c.l.b16 %v2656
        %v2707 = vunpack.c.l.b16 %v2657
        %v2708 = vunpack.c.l.b16 %v2658
        %v2709 = vunpack.c.l.b16 %v2659
        %v2710 = vunpack.c.l.b16 %v2660
        %v2711 = vunpack.c.l.b16 %v2661
        %v2712 = vunpack.c.l.b16 %v2662
        %v2713 = vunpack.c.l.b16 %v2663
        %v2714 = vunpack.c.l.b16 %v2664
        %v2715 = vunpack.c.l.b16 %v2665
        %v2716 = vpack.c.b16 %v2701, %v2700
        %v2717 = vpack.c.b16 %v2703, %v2702
        %v2718 = vpack.c.b16 %v2705, %v2704
        %v2719 = vpack.c.b16 %v2707, %v2706
        %v2720 = vpack.c.b16 %v2709, %v2708
        %v2721 = vpack.c.b16 %v2711, %v2710
        %v2722 = vpack.c.b16 %v2713, %v2712
        %v2723 = vpack.c.b16 %v2715, %v2714
        %2732 = vmatprep.subr.bf16.mxu0 0
        %2733 = vmatpush1.bf16.msra.mxu0 %v2716
        %2734 = vmatprep.subr.bf16.mxu0 0
        %2735 = vmatpush1.bf16.msra.mxu0 %v2717
        %2736 = vmatprep.subr.bf16.mxu0 0
        %2737 = vmatpush1.bf16.msra.mxu0 %v2718
        %2738 = vmatprep.subr.bf16.mxu0 0
        %2739 = vmatpush1.bf16.msra.mxu0 %v2719
        %2740 = vmatprep.subr.bf16.mxu0 0
        %2741 = vmatpush1.bf16.msra.mxu0 %v2720
        %2742 = vmatprep.subr.bf16.mxu0 0
        %2743 = vmatpush1.bf16.msra.mxu0 %v2721
        %2744 = vmatprep.subr.bf16.mxu0 0
        %2745 = vmatpush1.bf16.msra.mxu0 %v2722
        %2746 = vmatprep.subr.bf16.mxu0 0
        %2747 = vmatpush1.bf16.msra.mxu0 %v2723
        %2748 = vmatprep.subr.bf16.mxu0 0
        %2749 = vmatpush1.bf16.msra.mxu0 0
        %2750 = vmatprep.subr.bf16.mxu0 0
        %2751 = vmatpush1.bf16.msra.mxu0 0
        %2752 = vmatprep.subr.bf16.mxu0 0
        %2753 = vmatpush1.bf16.msra.mxu0 0
        %2754 = vmatprep.subr.bf16.mxu0 0
        %2755 = vmatpush1.bf16.msra.mxu0 0
        %2756 = vmatprep.subr.bf16.mxu0 0
        %2757 = vmatpush1.bf16.msra.mxu0 0
        %2758 = vmatprep.subr.bf16.mxu0 0
        %2759 = vmatpush1.bf16.msra.mxu0 0
        %2760 = vmatprep.subr.bf16.mxu0 0
        %2761 = vmatpush1.bf16.msra.mxu0 0
        %2762 = vmatprep.subr.bf16.mxu0 0
        %2763 = vmatpush1.bf16.msra.mxu0 0
        %2764 = vmatprep.mubr.bf16.mxu0 0
        %2765 = vmatmul.mubr.bf16.gmra.mrb[0].mxu0 %v2682
        %v2766 = vpop.f32.mrb[0].mxu0
        %v2767 = vadd.f32 0.0, %v2766
        %v2768 = vpop.f32.mrb[0].mxu0
        %v2769 = vpop.f32.mrb[0].mxu0
        %v2770 = vpop.f32.mrb[0].mxu0
        %2771 = vdwg.mxu0
        %v2772 = vadd.f32 %v2641, %v2767
        %v2773 = vld [vmem:[%s1019] sm:$0x1]
        %v2774 = vld [vmem:[%s1019 + $0x2] sm:$0x1]
        %s2775 = scalar_lea.vmem %s3, 192
        %v2776 = vld [vmem:[%s2775] sm:$0xf]
        %v2777 = vld [vmem:[%s2775 + $0x4] sm:$0xf]
        %v2778 = vld [vmem:[%s2775 + $0x8] sm:$0xf]
        %v2779 = vld [vmem:[%s2775 + $0xc] sm:$0xf]
        %v2780 = vld [vmem:[%s2775 + $0x10] sm:$0xf]
        %v2781 = vld [vmem:[%s2775 + $0x14] sm:$0xf]
        %v2782 = vld [vmem:[%s2775 + $0x18] sm:$0xf]
        %v2783 = vld [vmem:[%s2775 + $0x1c] sm:$0xf]
        %v2784 = vld [vmem:[%s2775 + $0x20] sm:$0xf]
        %v2785 = vld [vmem:[%s2775 + $0x24] sm:$0xf]
        %v2786 = vld [vmem:[%s2775 + $0x28] sm:$0xf]
        %v2787 = vld [vmem:[%s2775 + $0x2c] sm:$0xf]
        %v2788 = vld [vmem:[%s2775 + $0x30] sm:$0xf]
        %v2789 = vld [vmem:[%s2775 + $0x34] sm:$0xf]
        %v2790 = vld [vmem:[%s2775 + $0x38] sm:$0xf]
        %v2791 = vld [vmem:[%s2775 + $0x3c] sm:$0xf]
        %v2794 = vcombine.low %v2773, %v2774
        %v2796 = vunpack.c.l.s4 1966171168
        %v2797 = vunpack.c.0.s8 %v2796
        %v2798 = vlaneseq
        %v2799 = vshrl.u32 %v2798, 7
        %v2800 = vsub.s32 %v2797, %v2799
        %v2801 = vrot.slane %v2794, %v2800
        %v2803 = vunpack.c.l.s4 1966171168
        %v2804 = vunpack.c.0.s8 %v2803
        %v2805 = vlaneseq
        %v2806 = vshrl.u32 %v2805, 7
        %v2807 = vsub.s32 %v2804, %v2806
        %v2808 = vrot.slane %v2801, %v2807
        %v2826 = vunpack.c.l.b16 %v2776
        %v2827 = vunpack.c.l.b16 %v2777
        %v2828 = vunpack.c.l.b16 %v2778
        %v2829 = vunpack.c.l.b16 %v2779
        %v2830 = vunpack.c.l.b16 %v2780
        %v2831 = vunpack.c.l.b16 %v2781
        %v2832 = vunpack.c.l.b16 %v2782
        %v2833 = vunpack.c.l.b16 %v2783
        %v2834 = vunpack.c.l.b16 %v2784
        %v2835 = vunpack.c.l.b16 %v2785
        %v2836 = vunpack.c.l.b16 %v2786
        %v2837 = vunpack.c.l.b16 %v2787
        %v2838 = vunpack.c.l.b16 %v2788
        %v2839 = vunpack.c.l.b16 %v2789
        %v2840 = vunpack.c.l.b16 %v2790
        %v2841 = vunpack.c.l.b16 %v2791
        %v2842 = vpack.c.b16 %v2827, %v2826
        %v2843 = vpack.c.b16 %v2829, %v2828
        %v2844 = vpack.c.b16 %v2831, %v2830
        %v2845 = vpack.c.b16 %v2833, %v2832
        %v2846 = vpack.c.b16 %v2835, %v2834
        %v2847 = vpack.c.b16 %v2837, %v2836
        %v2848 = vpack.c.b16 %v2839, %v2838
        %v2849 = vpack.c.b16 %v2841, %v2840
        %2858 = vmatprep.subr.bf16.mxu0 0
        %2859 = vmatpush1.bf16.msra.mxu0 %v2842
        %2860 = vmatprep.subr.bf16.mxu0 0
        %2861 = vmatpush1.bf16.msra.mxu0 %v2843
        %2862 = vmatprep.subr.bf16.mxu0 0
        %2863 = vmatpush1.bf16.msra.mxu0 %v2844
        %2864 = vmatprep.subr.bf16.mxu0 0
        %2865 = vmatpush1.bf16.msra.mxu0 %v2845
        %2866 = vmatprep.subr.bf16.mxu0 0
        %2867 = vmatpush1.bf16.msra.mxu0 %v2846
        %2868 = vmatprep.subr.bf16.mxu0 0
        %2869 = vmatpush1.bf16.msra.mxu0 %v2847
        %2870 = vmatprep.subr.bf16.mxu0 0
        %2871 = vmatpush1.bf16.msra.mxu0 %v2848
        %2872 = vmatprep.subr.bf16.mxu0 0
        %2873 = vmatpush1.bf16.msra.mxu0 %v2849
        %2874 = vmatprep.subr.bf16.mxu0 0
        %2875 = vmatpush1.bf16.msra.mxu0 0
        %2876 = vmatprep.subr.bf16.mxu0 0
        %2877 = vmatpush1.bf16.msra.mxu0 0
        %2878 = vmatprep.subr.bf16.mxu0 0
        %2879 = vmatpush1.bf16.msra.mxu0 0
        %2880 = vmatprep.subr.bf16.mxu0 0
        %2881 = vmatpush1.bf16.msra.mxu0 0
        %2882 = vmatprep.subr.bf16.mxu0 0
        %2883 = vmatpush1.bf16.msra.mxu0 0
        %2884 = vmatprep.subr.bf16.mxu0 0
        %2885 = vmatpush1.bf16.msra.mxu0 0
        %2886 = vmatprep.subr.bf16.mxu0 0
        %2887 = vmatpush1.bf16.msra.mxu0 0
        %2888 = vmatprep.subr.bf16.mxu0 0
        %2889 = vmatpush1.bf16.msra.mxu0 0
        %2890 = vmatprep.mubr.bf16.mxu0 0
        %2891 = vmatmul.mubr.bf16.gmra.mrb[0].mxu0 %v2808
        %v2892 = vpop.f32.mrb[0].mxu0
        %v2893 = vadd.f32 0.0, %v2892
        %v2894 = vpop.f32.mrb[0].mxu0
        %v2895 = vpop.f32.mrb[0].mxu0
        %v2896 = vpop.f32.mrb[0].mxu0
        %2897 = vdwg.mxu0
        %v2898 = vadd.f32 %v2772, %v2893
        %v2899 = vld [vmem:[%s671] sm:$0x1]
        %v2900 = vld [vmem:[%s671 + $0x2] sm:$0x1]
        %s2901 = scalar_lea.vmem %s3, 256
        %v2902 = vld [vmem:[%s2901] sm:$0xf]
        %v2903 = vld [vmem:[%s2901 + $0x4] sm:$0xf]
        %v2904 = vld [vmem:[%s2901 + $0x8] sm:$0xf]
        %v2905 = vld [vmem:[%s2901 + $0xc] sm:$0xf]
        %v2906 = vld [vmem:[%s2901 + $0x10] sm:$0xf]
        %v2907 = vld [vmem:[%s2901 + $0x14] sm:$0xf]
        %v2908 = vld [vmem:[%s2901 + $0x18] sm:$0xf]
        %v2909 = vld [vmem:[%s2901 + $0x1c] sm:$0xf]
        %v2910 = vld [vmem:[%s2901 + $0x20] sm:$0xf]
        %v2911 = vld [vmem:[%s2901 + $0x24] sm:$0xf]
        %v2912 = vld [vmem:[%s2901 + $0x28] sm:$0xf]
        %v2913 = vld [vmem:[%s2901 + $0x2c] sm:$0xf]
        %v2914 = vld [vmem:[%s2901 + $0x30] sm:$0xf]
        %v2915 = vld [vmem:[%s2901 + $0x34] sm:$0xf]
        %v2916 = vld [vmem:[%s2901 + $0x38] sm:$0xf]
        %v2917 = vld [vmem:[%s2901 + $0x3c] sm:$0xf]
        %v2920 = vcombine.low %v2899, %v2900
        %v2922 = vunpack.c.l.s4 1966171168
        %v2923 = vunpack.c.0.s8 %v2922
        %v2924 = vlaneseq
        %v2925 = vshrl.u32 %v2924, 7
        %v2926 = vsub.s32 %v2923, %v2925
        %v2927 = vrot.slane %v2920, %v2926
        %v2929 = vunpack.c.l.s4 1966171168
        %v2930 = vunpack.c.0.s8 %v2929
        %v2931 = vlaneseq
        %v2932 = vshrl.u32 %v2931, 7
        %v2933 = vsub.s32 %v2930, %v2932
        %v2934 = vrot.slane %v2927, %v2933
        %v2952 = vunpack.c.l.b16 %v2902
        %v2953 = vunpack.c.l.b16 %v2903
        %v2954 = vunpack.c.l.b16 %v2904
        %v2955 = vunpack.c.l.b16 %v2905
        %v2956 = vunpack.c.l.b16 %v2906
        %v2957 = vunpack.c.l.b16 %v2907
        %v2958 = vunpack.c.l.b16 %v2908
        %v2959 = vunpack.c.l.b16 %v2909
        %v2960 = vunpack.c.l.b16 %v2910
        %v2961 = vunpack.c.l.b16 %v2911
        %v2962 = vunpack.c.l.b16 %v2912
        %v2963 = vunpack.c.l.b16 %v2913
        %v2964 = vunpack.c.l.b16 %v2914
        %v2965 = vunpack.c.l.b16 %v2915
        %v2966 = vunpack.c.l.b16 %v2916
        %v2967 = vunpack.c.l.b16 %v2917
        %v2968 = vpack.c.b16 %v2953, %v2952
        %v2969 = vpack.c.b16 %v2955, %v2954
        %v2970 = vpack.c.b16 %v2957, %v2956
        %v2971 = vpack.c.b16 %v2959, %v2958
        %v2972 = vpack.c.b16 %v2961, %v2960
        %v2973 = vpack.c.b16 %v2963, %v2962
        %v2974 = vpack.c.b16 %v2965, %v2964
        %v2975 = vpack.c.b16 %v2967, %v2966
        %2984 = vmatprep.subr.bf16.mxu0 0
        %2985 = vmatpush1.bf16.msra.mxu0 %v2968
        %2986 = vmatprep.subr.bf16.mxu0 0
        %2987 = vmatpush1.bf16.msra.mxu0 %v2969
        %2988 = vmatprep.subr.bf16.mxu0 0
        %2989 = vmatpush1.bf16.msra.mxu0 %v2970
        %2990 = vmatprep.subr.bf16.mxu0 0
        %2991 = vmatpush1.bf16.msra.mxu0 %v2971
        %2992 = vmatprep.subr.bf16.mxu0 0
        %2993 = vmatpush1.bf16.msra.mxu0 %v2972
        %2994 = vmatprep.subr.bf16.mxu0 0
        %2995 = vmatpush1.bf16.msra.mxu0 %v2973
        %2996 = vmatprep.subr.bf16.mxu0 0
        %2997 = vmatpush1.bf16.msra.mxu0 %v2974
        %2998 = vmatprep.subr.bf16.mxu0 0
        %2999 = vmatpush1.bf16.msra.mxu0 %v2975
        %3000 = vmatprep.subr.bf16.mxu0 0
        %3001 = vmatpush1.bf16.msra.mxu0 0
        %3002 = vmatprep.subr.bf16.mxu0 0
        %3003 = vmatpush1.bf16.msra.mxu0 0
        %3004 = vmatprep.subr.bf16.mxu0 0
        %3005 = vmatpush1.bf16.msra.mxu0 0
        %3006 = vmatprep.subr.bf16.mxu0 0
        %3007 = vmatpush1.bf16.msra.mxu0 0
        %3008 = vmatprep.subr.bf16.mxu0 0
        %3009 = vmatpush1.bf16.msra.mxu0 0
        %3010 = vmatprep.subr.bf16.mxu0 0
        %3011 = vmatpush1.bf16.msra.mxu0 0
        %3012 = vmatprep.subr.bf16.mxu0 0
        %3013 = vmatpush1.bf16.msra.mxu0 0
        %3014 = vmatprep.subr.bf16.mxu0 0
        %3015 = vmatpush1.bf16.msra.mxu0 0
        %3016 = vmatprep.mubr.bf16.mxu0 0
        %3017 = vmatmul.mubr.bf16.gmra.mrb[0].mxu0 %v2934
        %v3018 = vpop.f32.mrb[0].mxu0
        %v3019 = vadd.f32 0.0, %v3018
        %v3020 = vpop.f32.mrb[0].mxu0
        %v3021 = vpop.f32.mrb[0].mxu0
        %v3022 = vpop.f32.mrb[0].mxu0
        %3023 = vdwg.mxu0
        %v3024 = vadd.f32 %v2898, %v3019
        %v3025 = vld [vmem:[%s779] sm:$0x1]
        %v3026 = vld [vmem:[%s779 + $0x2] sm:$0x1]
        %s3027 = scalar_lea.vmem %s3, 320
        %v3028 = vld [vmem:[%s3027] sm:$0xf]
        %v3029 = vld [vmem:[%s3027 + $0x4] sm:$0xf]
        %v3030 = vld [vmem:[%s3027 + $0x8] sm:$0xf]
        %v3031 = vld [vmem:[%s3027 + $0xc] sm:$0xf]
        %v3032 = vld [vmem:[%s3027 + $0x10] sm:$0xf]
        %v3033 = vld [vmem:[%s3027 + $0x14] sm:$0xf]
        %v3034 = vld [vmem:[%s3027 + $0x18] sm:$0xf]
        %v3035 = vld [vmem:[%s3027 + $0x1c] sm:$0xf]
        %v3036 = vld [vmem:[%s3027 + $0x20] sm:$0xf]
        %v3037 = vld [vmem:[%s3027 + $0x24] sm:$0xf]
        %v3038 = vld [vmem:[%s3027 + $0x28] sm:$0xf]
        %v3039 = vld [vmem:[%s3027 + $0x2c] sm:$0xf]
        %v3040 = vld [vmem:[%s3027 + $0x30] sm:$0xf]
        %v3041 = vld [vmem:[%s3027 + $0x34] sm:$0xf]
        %v3042 = vld [vmem:[%s3027 + $0x38] sm:$0xf]
        %v3043 = vld [vmem:[%s3027 + $0x3c] sm:$0xf]
        %v3046 = vcombine.low %v3025, %v3026
        %v3048 = vunpack.c.l.s4 1966171168
        %v3049 = vunpack.c.0.s8 %v3048
        %v3050 = vlaneseq
        %v3051 = vshrl.u32 %v3050, 7
        %v3052 = vsub.s32 %v3049, %v3051
        %v3053 = vrot.slane %v3046, %v3052
        %v3055 = vunpack.c.l.s4 1966171168
        %v3056 = vunpack.c.0.s8 %v3055
        %v3057 = vlaneseq
        %v3058 = vshrl.u32 %v3057, 7
        %v3059 = vsub.s32 %v3056, %v3058
        %v3060 = vrot.slane %v3053, %v3059
        %v3078 = vunpack.c.l.b16 %v3028
        %v3079 = vunpack.c.l.b16 %v3029
        %v3080 = vunpack.c.l.b16 %v3030
        %v3081 = vunpack.c.l.b16 %v3031
        %v3082 = vunpack.c.l.b16 %v3032
        %v3083 = vunpack.c.l.b16 %v3033
        %v3084 = vunpack.c.l.b16 %v3034
        %v3085 = vunpack.c.l.b16 %v3035
        %v3086 = vunpack.c.l.b16 %v3036
        %v3087 = vunpack.c.l.b16 %v3037
        %v3088 = vunpack.c.l.b16 %v3038
        %v3089 = vunpack.c.l.b16 %v3039
        %v3090 = vunpack.c.l.b16 %v3040
        %v3091 = vunpack.c.l.b16 %v3041
        %v3092 = vunpack.c.l.b16 %v3042
        %v3093 = vunpack.c.l.b16 %v3043
        %v3094 = vpack.c.b16 %v3079, %v3078
        %v3095 = vpack.c.b16 %v3081, %v3080
        %v3096 = vpack.c.b16 %v3083, %v3082
        %v3097 = vpack.c.b16 %v3085, %v3084
        %v3098 = vpack.c.b16 %v3087, %v3086
        %v3099 = vpack.c.b16 %v3089, %v3088
        %v3100 = vpack.c.b16 %v3091, %v3090
        %v3101 = vpack.c.b16 %v3093, %v3092
        %3110 = vmatprep.subr.bf16.mxu0 0
        %3111 = vmatpush1.bf16.msra.mxu0 %v3094
        %3112 = vmatprep.subr.bf16.mxu0 0
        %3113 = vmatpush1.bf16.msra.mxu0 %v3095
        %3114 = vmatprep.subr.bf16.mxu0 0
        %3115 = vmatpush1.bf16.msra.mxu0 %v3096
        %3116 = vmatprep.subr.bf16.mxu0 0
        %3117 = vmatpush1.bf16.msra.mxu0 %v3097
        %3118 = vmatprep.subr.bf16.mxu0 0
        %3119 = vmatpush1.bf16.msra.mxu0 %v3098
        %3120 = vmatprep.subr.bf16.mxu0 0
        %3121 = vmatpush1.bf16.msra.mxu0 %v3099
        %3122 = vmatprep.subr.bf16.mxu0 0
        %3123 = vmatpush1.bf16.msra.mxu0 %v3100
        %3124 = vmatprep.subr.bf16.mxu0 0
        %3125 = vmatpush1.bf16.msra.mxu0 %v3101
        %3126 = vmatprep.subr.bf16.mxu0 0
        %3127 = vmatpush1.bf16.msra.mxu0 0
        %3128 = vmatprep.subr.bf16.mxu0 0
        %3129 = vmatpush1.bf16.msra.mxu0 0
        %3130 = vmatprep.subr.bf16.mxu0 0
        %3131 = vmatpush1.bf16.msra.mxu0 0
        %3132 = vmatprep.subr.bf16.mxu0 0
        %3133 = vmatpush1.bf16.msra.mxu0 0
        %3134 = vmatprep.subr.bf16.mxu0 0
        %3135 = vmatpush1.bf16.msra.mxu0 0
        %3136 = vmatprep.subr.bf16.mxu0 0
        %3137 = vmatpush1.bf16.msra.mxu0 0
        %3138 = vmatprep.subr.bf16.mxu0 0
        %3139 = vmatpush1.bf16.msra.mxu0 0
        %3140 = vmatprep.subr.bf16.mxu0 0
        %3141 = vmatpush1.bf16.msra.mxu0 0
        %3142 = vmatprep.mubr.bf16.mxu0 0
        %3143 = vmatmul.mubr.bf16.gmra.mrb[0].mxu0 %v3060
        %v3144 = vpop.f32.mrb[0].mxu0
        %v3145 = vadd.f32 0.0, %v3144
        %v3146 = vpop.f32.mrb[0].mxu0
        %v3147 = vpop.f32.mrb[0].mxu0
        %v3148 = vpop.f32.mrb[0].mxu0
        %3149 = vdwg.mxu0
        %v3150 = vadd.f32 %v3024, %v3145
        %v3151 = vld [vmem:[%s1477] sm:$0x1]
        %v3152 = vld [vmem:[%s1477 + $0x2] sm:$0x1]
        %s3153 = scalar_lea.vmem %s3, 384
        %v3154 = vld [vmem:[%s3153] sm:$0xf]
        %v3155 = vld [vmem:[%s3153 + $0x4] sm:$0xf]
        %v3156 = vld [vmem:[%s3153 + $0x8] sm:$0xf]
        %v3157 = vld [vmem:[%s3153 + $0xc] sm:$0xf]
        %v3158 = vld [vmem:[%s3153 + $0x10] sm:$0xf]
        %v3159 = vld [vmem:[%s3153 + $0x14] sm:$0xf]
        %v3160 = vld [vmem:[%s3153 + $0x18] sm:$0xf]
        %v3161 = vld [vmem:[%s3153 + $0x1c] sm:$0xf]
        %v3162 = vld [vmem:[%s3153 + $0x20] sm:$0xf]
        %v3163 = vld [vmem:[%s3153 + $0x24] sm:$0xf]
        %v3164 = vld [vmem:[%s3153 + $0x28] sm:$0xf]
        %v3165 = vld [vmem:[%s3153 + $0x2c] sm:$0xf]
        %v3166 = vld [vmem:[%s3153 + $0x30] sm:$0xf]
        %v3167 = vld [vmem:[%s3153 + $0x34] sm:$0xf]
        %v3168 = vld [vmem:[%s3153 + $0x38] sm:$0xf]
        %v3169 = vld [vmem:[%s3153 + $0x3c] sm:$0xf]
        %v3172 = vcombine.low %v3151, %v3152
        %v3174 = vunpack.c.l.s4 1966171168
        %v3175 = vunpack.c.0.s8 %v3174
        %v3176 = vlaneseq
        %v3177 = vshrl.u32 %v3176, 7
        %v3178 = vsub.s32 %v3175, %v3177
        %v3179 = vrot.slane %v3172, %v3178
        %v3181 = vunpack.c.l.s4 1966171168
        %v3182 = vunpack.c.0.s8 %v3181
        %v3183 = vlaneseq
        %v3184 = vshrl.u32 %v3183, 7
        %v3185 = vsub.s32 %v3182, %v3184
        %v3186 = vrot.slane %v3179, %v3185
        %v3204 = vunpack.c.l.b16 %v3154
        %v3205 = vunpack.c.l.b16 %v3155
        %v3206 = vunpack.c.l.b16 %v3156
        %v3207 = vunpack.c.l.b16 %v3157
        %v3208 = vunpack.c.l.b16 %v3158
        %v3209 = vunpack.c.l.b16 %v3159
        %v3210 = vunpack.c.l.b16 %v3160
        %v3211 = vunpack.c.l.b16 %v3161
        %v3212 = vunpack.c.l.b16 %v3162
        %v3213 = vunpack.c.l.b16 %v3163
        %v3214 = vunpack.c.l.b16 %v3164
        %v3215 = vunpack.c.l.b16 %v3165
        %v3216 = vunpack.c.l.b16 %v3166
        %v3217 = vunpack.c.l.b16 %v3167
        %v3218 = vunpack.c.l.b16 %v3168
        %v3219 = vunpack.c.l.b16 %v3169
        %v3220 = vpack.c.b16 %v3205, %v3204
        %v3221 = vpack.c.b16 %v3207, %v3206
        %v3222 = vpack.c.b16 %v3209, %v3208
        %v3223 = vpack.c.b16 %v3211, %v3210
        %v3224 = vpack.c.b16 %v3213, %v3212
        %v3225 = vpack.c.b16 %v3215, %v3214
        %v3226 = vpack.c.b16 %v3217, %v3216
        %v3227 = vpack.c.b16 %v3219, %v3218
        %3236 = vmatprep.subr.bf16.mxu0 0
        %3237 = vmatpush1.bf16.msra.mxu0 %v3220
        %3238 = vmatprep.subr.bf16.mxu0 0
        %3239 = vmatpush1.bf16.msra.mxu0 %v3221
        %3240 = vmatprep.subr.bf16.mxu0 0
        %3241 = vmatpush1.bf16.msra.mxu0 %v3222
        %3242 = vmatprep.subr.bf16.mxu0 0
        %3243 = vmatpush1.bf16.msra.mxu0 %v3223
        %3244 = vmatprep.subr.bf16.mxu0 0
        %3245 = vmatpush1.bf16.msra.mxu0 %v3224
        %3246 = vmatprep.subr.bf16.mxu0 0
        %3247 = vmatpush1.bf16.msra.mxu0 %v3225
        %3248 = vmatprep.subr.bf16.mxu0 0
        %3249 = vmatpush1.bf16.msra.mxu0 %v3226
        %3250 = vmatprep.subr.bf16.mxu0 0
        %3251 = vmatpush1.bf16.msra.mxu0 %v3227
        %3252 = vmatprep.subr.bf16.mxu0 0
        %3253 = vmatpush1.bf16.msra.mxu0 0
        %3254 = vmatprep.subr.bf16.mxu0 0
        %3255 = vmatpush1.bf16.msra.mxu0 0
        %3256 = vmatprep.subr.bf16.mxu0 0
        %3257 = vmatpush1.bf16.msra.mxu0 0
        %3258 = vmatprep.subr.bf16.mxu0 0
        %3259 = vmatpush1.bf16.msra.mxu0 0
        %3260 = vmatprep.subr.bf16.mxu0 0
        %3261 = vmatpush1.bf16.msra.mxu0 0
        %3262 = vmatprep.subr.bf16.mxu0 0
        %3263 = vmatpush1.bf16.msra.mxu0 0
        %3264 = vmatprep.subr.bf16.mxu0 0
        %3265 = vmatpush1.bf16.msra.mxu0 0
        %3266 = vmatprep.subr.bf16.mxu0 0
        %3267 = vmatpush1.bf16.msra.mxu0 0
        %3268 = vmatprep.mubr.bf16.mxu0 0
        %3269 = vmatmul.mubr.bf16.gmra.mrb[0].mxu0 %v3186
        %v3270 = vpop.f32.mrb[0].mxu0
        %v3271 = vadd.f32 0.0, %v3270
        %v3272 = vpop.f32.mrb[0].mxu0
        %v3273 = vpop.f32.mrb[0].mxu0
        %v3274 = vpop.f32.mrb[0].mxu0
        %3275 = vdwg.mxu0
        %v3276 = vadd.f32 %v3150, %v3271
        %v3277 = vld [vmem:[%s1129] sm:$0x1]
        %v3278 = vld [vmem:[%s1129 + $0x2] sm:$0x1]
        %s3279 = scalar_lea.vmem %s3, 448
        %v3280 = vld [vmem:[%s3279] sm:$0xf]
        %v3281 = vld [vmem:[%s3279 + $0x4] sm:$0xf]
        %v3282 = vld [vmem:[%s3279 + $0x8] sm:$0xf]
        %v3283 = vld [vmem:[%s3279 + $0xc] sm:$0xf]
        %v3284 = vld [vmem:[%s3279 + $0x10] sm:$0xf]
        %v3285 = vld [vmem:[%s3279 + $0x14] sm:$0xf]
        %v3286 = vld [vmem:[%s3279 + $0x18] sm:$0xf]
        %v3287 = vld [vmem:[%s3279 + $0x1c] sm:$0xf]
        %v3288 = vld [vmem:[%s3279 + $0x20] sm:$0xf]
        %v3289 = vld [vmem:[%s3279 + $0x24] sm:$0xf]
        %v3290 = vld [vmem:[%s3279 + $0x28] sm:$0xf]
        %v3291 = vld [vmem:[%s3279 + $0x2c] sm:$0xf]
        %v3292 = vld [vmem:[%s3279 + $0x30] sm:$0xf]
        %v3293 = vld [vmem:[%s3279 + $0x34] sm:$0xf]
        %v3294 = vld [vmem:[%s3279 + $0x38] sm:$0xf]
        %v3295 = vld [vmem:[%s3279 + $0x3c] sm:$0xf]
        %v3298 = vcombine.low %v3277, %v3278
        %v3300 = vunpack.c.l.s4 1966171168
        %v3301 = vunpack.c.0.s8 %v3300
        %v3302 = vlaneseq
        %v3303 = vshrl.u32 %v3302, 7
        %v3304 = vsub.s32 %v3301, %v3303
        %v3305 = vrot.slane %v3298, %v3304
        %v3307 = vunpack.c.l.s4 1966171168
        %v3308 = vunpack.c.0.s8 %v3307
        %v3309 = vlaneseq
        %v3310 = vshrl.u32 %v3309, 7
        %v3311 = vsub.s32 %v3308, %v3310
        %v3312 = vrot.slane %v3305, %v3311
        %v3330 = vunpack.c.l.b16 %v3280
        %v3331 = vunpack.c.l.b16 %v3281
        %v3332 = vunpack.c.l.b16 %v3282
        %v3333 = vunpack.c.l.b16 %v3283
        %v3334 = vunpack.c.l.b16 %v3284
        %v3335 = vunpack.c.l.b16 %v3285
        %v3336 = vunpack.c.l.b16 %v3286
        %v3337 = vunpack.c.l.b16 %v3287
        %v3338 = vunpack.c.l.b16 %v3288
        %v3339 = vunpack.c.l.b16 %v3289
        %v3340 = vunpack.c.l.b16 %v3290
        %v3341 = vunpack.c.l.b16 %v3291
        %v3342 = vunpack.c.l.b16 %v3292
        %v3343 = vunpack.c.l.b16 %v3293
        %v3344 = vunpack.c.l.b16 %v3294
        %v3345 = vunpack.c.l.b16 %v3295
        %v3346 = vpack.c.b16 %v3331, %v3330
        %v3347 = vpack.c.b16 %v3333, %v3332
        %v3348 = vpack.c.b16 %v3335, %v3334
        %v3349 = vpack.c.b16 %v3337, %v3336
        %v3350 = vpack.c.b16 %v3339, %v3338
        %v3351 = vpack.c.b16 %v3341, %v3340
        %v3352 = vpack.c.b16 %v3343, %v3342
        %v3353 = vpack.c.b16 %v3345, %v3344
        %3362 = vmatprep.subr.bf16.mxu0 0
        %3363 = vmatpush1.bf16.msra.mxu0 %v3346
        %3364 = vmatprep.subr.bf16.mxu0 0
        %3365 = vmatpush1.bf16.msra.mxu0 %v3347
        %3366 = vmatprep.subr.bf16.mxu0 0
        %3367 = vmatpush1.bf16.msra.mxu0 %v3348
        %3368 = vmatprep.subr.bf16.mxu0 0
        %3369 = vmatpush1.bf16.msra.mxu0 %v3349
        %3370 = vmatprep.subr.bf16.mxu0 0
        %3371 = vmatpush1.bf16.msra.mxu0 %v3350
        %3372 = vmatprep.subr.bf16.mxu0 0
        %3373 = vmatpush1.bf16.msra.mxu0 %v3351
        %3374 = vmatprep.subr.bf16.mxu0 0
        %3375 = vmatpush1.bf16.msra.mxu0 %v3352
        %3376 = vmatprep.subr.bf16.mxu0 0
        %3377 = vmatpush1.bf16.msra.mxu0 %v3353
        %3378 = vmatprep.subr.bf16.mxu0 0
        %3379 = vmatpush1.bf16.msra.mxu0 0
        %3380 = vmatprep.subr.bf16.mxu0 0
        %3381 = vmatpush1.bf16.msra.mxu0 0
        %3382 = vmatprep.subr.bf16.mxu0 0
        %3383 = vmatpush1.bf16.msra.mxu0 0
        %3384 = vmatprep.subr.bf16.mxu0 0
        %3385 = vmatpush1.bf16.msra.mxu0 0
        %3386 = vmatprep.subr.bf16.mxu0 0
        %3387 = vmatpush1.bf16.msra.mxu0 0
        %3388 = vmatprep.subr.bf16.mxu0 0
        %3389 = vmatpush1.bf16.msra.mxu0 0
        %3390 = vmatprep.subr.bf16.mxu0 0
        %3391 = vmatpush1.bf16.msra.mxu0 0
        %3392 = vmatprep.subr.bf16.mxu0 0
        %3393 = vmatpush1.bf16.msra.mxu0 0
        %3394 = vmatprep.mubr.bf16.mxu0 0
        %3395 = vmatmul.mubr.bf16.gmra.mrb[0].mxu0 %v3312
        %v3396 = vpop.f32.mrb[0].mxu0
        %v3397 = vadd.f32 0.0, %v3396
        %v3398 = vpop.f32.mrb[0].mxu0
        %v3399 = vpop.f32.mrb[0].mxu0
        %v3400 = vpop.f32.mrb[0].mxu0
        %3401 = vdwg.mxu0
        %v3402 = vadd.f32 %v3276, %v3397
        %v3403 = vld [vmem:[%s1237] sm:$0x1]
        %v3404 = vld [vmem:[%s1237 + $0x2] sm:$0x1]
        %s3405 = scalar_lea.vmem %s3, 512
        %v3406 = vld [vmem:[%s3405] sm:$0xf]
        %v3407 = vld [vmem:[%s3405 + $0x4] sm:$0xf]
        %v3408 = vld [vmem:[%s3405 + $0x8] sm:$0xf]
        %v3409 = vld [vmem:[%s3405 + $0xc] sm:$0xf]
        %v3410 = vld [vmem:[%s3405 + $0x10] sm:$0xf]
        %v3411 = vld [vmem:[%s3405 + $0x14] sm:$0xf]
        %v3412 = vld [vmem:[%s3405 + $0x18] sm:$0xf]
        %v3413 = vld [vmem:[%s3405 + $0x1c] sm:$0xf]
        %v3414 = vld [vmem:[%s3405 + $0x20] sm:$0xf]
        %v3415 = vld [vmem:[%s3405 + $0x24] sm:$0xf]
        %v3416 = vld [vmem:[%s3405 + $0x28] sm:$0xf]
        %v3417 = vld [vmem:[%s3405 + $0x2c] sm:$0xf]
        %v3418 = vld [vmem:[%s3405 + $0x30] sm:$0xf]
        %v3419 = vld [vmem:[%s3405 + $0x34] sm:$0xf]
        %v3420 = vld [vmem:[%s3405 + $0x38] sm:$0xf]
        %v3421 = vld [vmem:[%s3405 + $0x3c] sm:$0xf]
        %v3424 = vcombine.low %v3403, %v3404
        %v3426 = vunpack.c.l.s4 1966171168
        %v3427 = vunpack.c.0.s8 %v3426
        %v3428 = vlaneseq
        %v3429 = vshrl.u32 %v3428, 7
        %v3430 = vsub.s32 %v3427, %v3429
        %v3431 = vrot.slane %v3424, %v3430
        %v3433 = vunpack.c.l.s4 1966171168
        %v3434 = vunpack.c.0.s8 %v3433
        %v3435 = vlaneseq
        %v3436 = vshrl.u32 %v3435, 7
        %v3437 = vsub.s32 %v3434, %v3436
        %v3438 = vrot.slane %v3431, %v3437
        %v3456 = vunpack.c.l.b16 %v3406
        %v3457 = vunpack.c.l.b16 %v3407
        %v3458 = vunpack.c.l.b16 %v3408
        %v3459 = vunpack.c.l.b16 %v3409
        %v3460 = vunpack.c.l.b16 %v3410
        %v3461 = vunpack.c.l.b16 %v3411
        %v3462 = vunpack.c.l.b16 %v3412
        %v3463 = vunpack.c.l.b16 %v3413
        %v3464 = vunpack.c.l.b16 %v3414
        %v3465 = vunpack.c.l.b16 %v3415
        %v3466 = vunpack.c.l.b16 %v3416
        %v3467 = vunpack.c.l.b16 %v3417
        %v3468 = vunpack.c.l.b16 %v3418
        %v3469 = vunpack.c.l.b16 %v3419
        %v3470 = vunpack.c.l.b16 %v3420
        %v3471 = vunpack.c.l.b16 %v3421
        %v3472 = vpack.c.b16 %v3457, %v3456
        %v3473 = vpack.c.b16 %v3459, %v3458
        %v3474 = vpack.c.b16 %v3461, %v3460
        %v3475 = vpack.c.b16 %v3463, %v3462
        %v3476 = vpack.c.b16 %v3465, %v3464
        %v3477 = vpack.c.b16 %v3467, %v3466
        %v3478 = vpack.c.b16 %v3469, %v3468
        %v3479 = vpack.c.b16 %v3471, %v3470
        %3488 = vmatprep.subr.bf16.mxu0 0
        %3489 = vmatpush1.bf16.msra.mxu0 %v3472
        %3490 = vmatprep.subr.bf16.mxu0 0
        %3491 = vmatpush1.bf16.msra.mxu0 %v3473
        %3492 = vmatprep.subr.bf16.mxu0 0
        %3493 = vmatpush1.bf16.msra.mxu0 %v3474
        %3494 = vmatprep.subr.bf16.mxu0 0
        %3495 = vmatpush1.bf16.msra.mxu0 %v3475
        %3496 = vmatprep.subr.bf16.mxu0 0
        %3497 = vmatpush1.bf16.msra.mxu0 %v3476
        %3498 = vmatprep.subr.bf16.mxu0 0
        %3499 = vmatpush1.bf16.msra.mxu0 %v3477
        %3500 = vmatprep.subr.bf16.mxu0 0
        %3501 = vmatpush1.bf16.msra.mxu0 %v3478
        %3502 = vmatprep.subr.bf16.mxu0 0
        %3503 = vmatpush1.bf16.msra.mxu0 %v3479
        %3504 = vmatprep.subr.bf16.mxu0 0
        %3505 = vmatpush1.bf16.msra.mxu0 0
        %3506 = vmatprep.subr.bf16.mxu0 0
        %3507 = vmatpush1.bf16.msra.mxu0 0
        %3508 = vmatprep.subr.bf16.mxu0 0
        %3509 = vmatpush1.bf16.msra.mxu0 0
        %3510 = vmatprep.subr.bf16.mxu0 0
        %3511 = vmatpush1.bf16.msra.mxu0 0
        %3512 = vmatprep.subr.bf16.mxu0 0
        %3513 = vmatpush1.bf16.msra.mxu0 0
        %3514 = vmatprep.subr.bf16.mxu0 0
        %3515 = vmatpush1.bf16.msra.mxu0 0
        %3516 = vmatprep.subr.bf16.mxu0 0
        %3517 = vmatpush1.bf16.msra.mxu0 0
        %3518 = vmatprep.subr.bf16.mxu0 0
        %3519 = vmatpush1.bf16.msra.mxu0 0
        %3520 = vmatprep.mubr.bf16.mxu0 0
        %3521 = vmatmul.mubr.bf16.gmra.mrb[0].mxu0 %v3438
        %v3522 = vpop.f32.mrb[0].mxu0
        %v3523 = vadd.f32 0.0, %v3522
        %v3524 = vpop.f32.mrb[0].mxu0
        %v3525 = vpop.f32.mrb[0].mxu0
        %v3526 = vpop.f32.mrb[0].mxu0
        %3527 = vdwg.mxu0
        %v3528 = vadd.f32 %v3402, %v3523
        %v3529 = vld [vmem:[%s4] sm:$0x1]
        %v3531 = vlaneseq
        %v3532 = vshrl.u32 %v3531, 7
        %v3533 = vsub.s32 0, %v3532
        %v3534 = vrot.slane %v3529, %v3533
        %v3536 = vadd.f32 %v3528, %v3534
        %v3537 = vmax.f32 %v3536, 0.0
        %v3538 = vpack.c.bf16 %v3537, %v3537
        %v3541 = vunpack.c.l.s4 1966171168
        %v3542 = vunpack.c.0.s8 %v3541
        %v3543 = vlaneseq
        %v3544 = vshrl.u32 %v3543, 7
        %v3545 = vsub.s32 %v3542, %v3544
        %v3546 = vrot.slane %v3538, %v3545
        %v3547 = vcombine.high %v3546, %v3546
        %v3549 = vunpack.c.l.s4 1966171168
        %v3550 = vunpack.c.0.s8 %v3549
        %v3551 = vlaneseq
        %v3552 = vshrl.u32 %v3551, 7
        %v3553 = vsub.s32 %v3550, %v3552
        %v3554 = vrot.slane %v3546, %v3553
        %v3556 = vunpack.c.l.s4 1966171168
        %v3557 = vunpack.c.0.s8 %v3556
        %v3558 = vlaneseq
        %v3559 = vshrl.u32 %v3558, 7
        %v3560 = vsub.s32 %v3557, %v3559
        %v3561 = vrot.slane %v3547, %v3560
        %s3564 = scalar_lea.vmem [#allocation3], 18
        %3565 = vst [vmem:[%s3564] sm:$0x1] %v3554
        %3566 = vst [vmem:[%s3564 + $0x2] sm:$0x1] %v3561
        %v3567 = vld [vmem:[%s2646] sm:$0x1]
        %v3568 = vld [vmem:[%s2646 + $0x2] sm:$0x1]
        %v3569 = vld [vmem:[%s3] sm:$0xf]
        %v3570 = vld [vmem:[%s3 + $0x4] sm:$0xf]
        %v3571 = vld [vmem:[%s3 + $0x8] sm:$0xf]
        %v3572 = vld [vmem:[%s3 + $0xc] sm:$0xf]
        %v3573 = vld [vmem:[%s3 + $0x10] sm:$0xf]
        %v3574 = vld [vmem:[%s3 + $0x14] sm:$0xf]
        %v3575 = vld [vmem:[%s3 + $0x18] sm:$0xf]
        %v3576 = vld [vmem:[%s3 + $0x1c] sm:$0xf]
        %v3577 = vld [vmem:[%s3 + $0x20] sm:$0xf]
        %v3578 = vld [vmem:[%s3 + $0x24] sm:$0xf]
        %v3579 = vld [vmem:[%s3 + $0x28] sm:$0xf]
        %v3580 = vld [vmem:[%s3 + $0x2c] sm:$0xf]
        %v3581 = vld [vmem:[%s3 + $0x30] sm:$0xf]
        %v3582 = vld [vmem:[%s3 + $0x34] sm:$0xf]
        %v3583 = vld [vmem:[%s3 + $0x38] sm:$0xf]
        %v3584 = vld [vmem:[%s3 + $0x3c] sm:$0xf]
        %s3585 = scalar_lea.vmem [#allocation2], 18
        %v3586 = vld [vmem:[%s3585] sm:$0x1]
        %v3587 = vld [vmem:[%s3585 + $0x2] sm:$0x1]
        %v3588 = vld [vmem:[%s2417] sm:$0xf]
        %v3589 = vld [vmem:[%s2417 + $0x4] sm:$0xf]
        %v3590 = vld [vmem:[%s2417 + $0x8] sm:$0xf]
        %v3591 = vld [vmem:[%s2417 + $0xc] sm:$0xf]
        %v3592 = vld [vmem:[%s2417 + $0x10] sm:$0xf]
        %v3593 = vld [vmem:[%s2417 + $0x14] sm:$0xf]
        %v3594 = vld [vmem:[%s2417 + $0x18] sm:$0xf]
        %v3595 = vld [vmem:[%s2417 + $0x1c] sm:$0xf]
        %v3596 = vld [vmem:[%s2417 + $0x20] sm:$0xf]
        %v3597 = vld [vmem:[%s2417 + $0x24] sm:$0xf]
        %v3598 = vld [vmem:[%s2417 + $0x28] sm:$0xf]
        %v3599 = vld [vmem:[%s2417 + $0x2c] sm:$0xf]
        %v3600 = vld [vmem:[%s2417 + $0x30] sm:$0xf]
        %v3601 = vld [vmem:[%s2417 + $0x34] sm:$0xf]
        %v3602 = vld [vmem:[%s2417 + $0x38] sm:$0xf]
        %v3603 = vld [vmem:[%s2417 + $0x3c] sm:$0xf]
        %v3606 = vcombine.low %v3586, %v3587
        %v3608 = vunpack.c.l.s4 1966171168
        %v3609 = vunpack.c.0.s8 %v3608
        %v3610 = vlaneseq
        %v3611 = vshrl.u32 %v3610, 7
        %v3612 = vsub.s32 %v3609, %v3611
        %v3613 = vrot.slane %v3606, %v3612
        %v3615 = vunpack.c.l.s4 1966171168
        %v3616 = vunpack.c.0.s8 %v3615
        %v3617 = vlaneseq
        %v3618 = vshrl.u32 %v3617, 7
        %v3619 = vsub.s32 %v3616, %v3618
        %v3620 = vrot.slane %v3613, %v3619
        %v3638 = vunpack.c.l.b16 %v3588
        %v3639 = vunpack.c.l.b16 %v3589
        %v3640 = vunpack.c.l.b16 %v3590
        %v3641 = vunpack.c.l.b16 %v3591
        %v3642 = vunpack.c.l.b16 %v3592
        %v3643 = vunpack.c.l.b16 %v3593
        %v3644 = vunpack.c.l.b16 %v3594
        %v3645 = vunpack.c.l.b16 %v3595
        %v3646 = vunpack.c.l.b16 %v3596
        %v3647 = vunpack.c.l.b16 %v3597
        %v3648 = vunpack.c.l.b16 %v3598
        %v3649 = vunpack.c.l.b16 %v3599
        %v3650 = vunpack.c.l.b16 %v3600
        %v3651 = vunpack.c.l.b16 %v3601
        %v3652 = vunpack.c.l.b16 %v3602
        %v3653 = vunpack.c.l.b16 %v3603
        %v3654 = vpack.c.b16 %v3639, %v3638
        %v3655 = vpack.c.b16 %v3641, %v3640
        %v3656 = vpack.c.b16 %v3643, %v3642
        %v3657 = vpack.c.b16 %v3645, %v3644
        %v3658 = vpack.c.b16 %v3647, %v3646
        %v3659 = vpack.c.b16 %v3649, %v3648
        %v3660 = vpack.c.b16 %v3651, %v3650
        %v3661 = vpack.c.b16 %v3653, %v3652
        %3670 = vmatprep.subr.bf16.mxu0 0
        %3671 = vmatpush1.bf16.msra.mxu0 %v3654
        %3672 = vmatprep.subr.bf16.mxu0 0
        %3673 = vmatpush1.bf16.msra.mxu0 %v3655
        %3674 = vmatprep.subr.bf16.mxu0 0
        %3675 = vmatpush1.bf16.msra.mxu0 %v3656
        %3676 = vmatprep.subr.bf16.mxu0 0
        %3677 = vmatpush1.bf16.msra.mxu0 %v3657
        %3678 = vmatprep.subr.bf16.mxu0 0
        %3679 = vmatpush1.bf16.msra.mxu0 %v3658
        %3680 = vmatprep.subr.bf16.mxu0 0
        %3681 = vmatpush1.bf16.msra.mxu0 %v3659
        %3682 = vmatprep.subr.bf16.mxu0 0
        %3683 = vmatpush1.bf16.msra.mxu0 %v3660
        %3684 = vmatprep.subr.bf16.mxu0 0
        %3685 = vmatpush1.bf16.msra.mxu0 %v3661
        %3686 = vmatprep.subr.bf16.mxu0 0
        %3687 = vmatpush1.bf16.msra.mxu0 0
        %3688 = vmatprep.subr.bf16.mxu0 0
        %3689 = vmatpush1.bf16.msra.mxu0 0
        %3690 = vmatprep.subr.bf16.mxu0 0
        %3691 = vmatpush1.bf16.msra.mxu0 0
        %3692 = vmatprep.subr.bf16.mxu0 0
        %3693 = vmatpush1.bf16.msra.mxu0 0
        %3694 = vmatprep.subr.bf16.mxu0 0
        %3695 = vmatpush1.bf16.msra.mxu0 0
        %3696 = vmatprep.subr.bf16.mxu0 0
        %3697 = vmatpush1.bf16.msra.mxu0 0
        %3698 = vmatprep.subr.bf16.mxu0 0
        %3699 = vmatpush1.bf16.msra.mxu0 0
        %3700 = vmatprep.subr.bf16.mxu0 0
        %3701 = vmatpush1.bf16.msra.mxu0 0
        %3702 = vmatprep.mubr.bf16.mxu0 0
        %3703 = vmatmul.mubr.bf16.gmra.mrb[0].mxu0 %v3620
        %v3704 = vpop.f32.mrb[0].mxu0
        %v3705 = vadd.f32 0.0, %v3704
        %v3706 = vpop.f32.mrb[0].mxu0
        %v3707 = vpop.f32.mrb[0].mxu0
        %v3708 = vpop.f32.mrb[0].mxu0
        %3709 = vdwg.mxu0
        %v3712 = vcombine.low %v3567, %v3568
        %v3714 = vunpack.c.l.s4 1966171168
        %v3715 = vunpack.c.0.s8 %v3714
        %v3716 = vlaneseq
        %v3717 = vshrl.u32 %v3716, 7
        %v3718 = vsub.s32 %v3715, %v3717
        %v3719 = vrot.slane %v3712, %v3718
        %v3721 = vunpack.c.l.s4 1966171168
        %v3722 = vunpack.c.0.s8 %v3721
        %v3723 = vlaneseq
        %v3724 = vshrl.u32 %v3723, 7
        %v3725 = vsub.s32 %v3722, %v3724
        %v3726 = vrot.slane %v3719, %v3725
        %v3744 = vunpack.c.l.b16 %v3569
        %v3745 = vunpack.c.l.b16 %v3570
        %v3746 = vunpack.c.l.b16 %v3571
        %v3747 = vunpack.c.l.b16 %v3572
        %v3748 = vunpack.c.l.b16 %v3573
        %v3749 = vunpack.c.l.b16 %v3574
        %v3750 = vunpack.c.l.b16 %v3575
        %v3751 = vunpack.c.l.b16 %v3576
        %v3752 = vunpack.c.l.b16 %v3577
        %v3753 = vunpack.c.l.b16 %v3578
        %v3754 = vunpack.c.l.b16 %v3579
        %v3755 = vunpack.c.l.b16 %v3580
        %v3756 = vunpack.c.l.b16 %v3581
        %v3757 = vunpack.c.l.b16 %v3582
        %v3758 = vunpack.c.l.b16 %v3583
        %v3759 = vunpack.c.l.b16 %v3584
        %v3760 = vpack.c.b16 %v3745, %v3744
        %v3761 = vpack.c.b16 %v3747, %v3746
        %v3762 = vpack.c.b16 %v3749, %v3748
        %v3763 = vpack.c.b16 %v3751, %v3750
        %v3764 = vpack.c.b16 %v3753, %v3752
        %v3765 = vpack.c.b16 %v3755, %v3754
        %v3766 = vpack.c.b16 %v3757, %v3756
        %v3767 = vpack.c.b16 %v3759, %v3758
        %3776 = vmatprep.subr.bf16.mxu0 0
        %3777 = vmatpush1.bf16.msra.mxu0 %v3760
        %3778 = vmatprep.subr.bf16.mxu0 0
        %3779 = vmatpush1.bf16.msra.mxu0 %v3761
        %3780 = vmatprep.subr.bf16.mxu0 0
        %3781 = vmatpush1.bf16.msra.mxu0 %v3762
        %3782 = vmatprep.subr.bf16.mxu0 0
        %3783 = vmatpush1.bf16.msra.mxu0 %v3763
        %3784 = vmatprep.subr.bf16.mxu0 0
        %3785 = vmatpush1.bf16.msra.mxu0 %v3764
        %3786 = vmatprep.subr.bf16.mxu0 0
        %3787 = vmatpush1.bf16.msra.mxu0 %v3765
        %3788 = vmatprep.subr.bf16.mxu0 0
        %3789 = vmatpush1.bf16.msra.mxu0 %v3766
        %3790 = vmatprep.subr.bf16.mxu0 0
        %3791 = vmatpush1.bf16.msra.mxu0 %v3767
        %3792 = vmatprep.subr.bf16.mxu0 0
        %3793 = vmatpush1.bf16.msra.mxu0 0
        %3794 = vmatprep.subr.bf16.mxu0 0
        %3795 = vmatpush1.bf16.msra.mxu0 0
        %3796 = vmatprep.subr.bf16.mxu0 0
        %3797 = vmatpush1.bf16.msra.mxu0 0
        %3798 = vmatprep.subr.bf16.mxu0 0
        %3799 = vmatpush1.bf16.msra.mxu0 0
        %3800 = vmatprep.subr.bf16.mxu0 0
        %3801 = vmatpush1.bf16.msra.mxu0 0
        %3802 = vmatprep.subr.bf16.mxu0 0
        %3803 = vmatpush1.bf16.msra.mxu0 0
        %3804 = vmatprep.subr.bf16.mxu0 0
        %3805 = vmatpush1.bf16.msra.mxu0 0
        %3806 = vmatprep.subr.bf16.mxu0 0
        %3807 = vmatpush1.bf16.msra.mxu0 0
        %3808 = vmatprep.mubr.bf16.mxu0 0
        %3809 = vmatmul.mubr.bf16.gmra.mrb[0].mxu0 %v3726
        %v3810 = vpop.f32.mrb[0].mxu0
        %v3811 = vadd.f32 %v3705, %v3810
        %v3812 = vpop.f32.mrb[0].mxu0
        %v3813 = vpop.f32.mrb[0].mxu0
        %v3814 = vpop.f32.mrb[0].mxu0
        %3815 = vdwg.mxu0
        %v3816 = vld [vmem:[#allocation2] sm:$0x3]
        %v3817 = vld [vmem:[#allocation2 + $0x2] sm:$0x3]
        %v3821 = vunpack.c.l.s4 1966171168
        %v3822 = vunpack.c.0.s8 %v3821
        %v3823 = vlaneseq
        %v3824 = vshrl.u32 %v3823, 7
        %v3825 = vsub.s32 %v3822, %v3824
        %v3826 = vrot.slane %v3816, %v3825
        %v3827 = vcombine.high %v3826, %v3826
        %v3829 = vunpack.c.l.s4 1966171168
        %v3830 = vunpack.c.0.s8 %v3829
        %v3831 = vlaneseq
        %v3832 = vshrl.u32 %v3831, 7
        %v3833 = vsub.s32 %v3830, %v3832
        %v3834 = vrot.slane %v3817, %v3833
        %v3835 = vcombine.high %v3834, %v3834
        %vm3836 = vsmask.f32 256
        %vm3837 = vsmask.f32 1284
        %vm3838 = vmor %vm3836, %vm3837
        %vm3839 = vsmask.f32 2312
        %vm3840 = vmor %vm3838, %vm3839
        %vm3841 = vsmask.f32 3340
        %vm3842 = vmor %vm3840, %vm3841
        %vm3843 = vsmask.f32 4368
        %vm3844 = vmor %vm3842, %vm3843
        %vm3845 = vsmask.f32 5396
        %vm3846 = vmor %vm3844, %vm3845
        %vm3847 = vsmask.f32 6424
        %vm3848 = vmor %vm3846, %vm3847
        %vm3849 = vsmask.f32 7452
        %vm3850 = vmor %vm3848, %vm3849
        %v3852 = vshrl.u32 %v3826, 16
        %v3854 = vrot.slane %v3852, 7
        %v3855 = vrot.slane %v3854, 1
        %v3857 = vshll.u32 %v3827, 16
        %v3859 = vsel %vm3850, %v3855, %v3857
        %v3861 = vshrl.u32 %v3834, 16
        %v3863 = vrot.slane %v3861, 7
        %v3864 = vrot.slane %v3863, 1
        %v3866 = vshll.u32 %v3835, 16
        %v3868 = vsel %vm3850, %v3864, %v3866
        %v3869 = vld [vmem:[%s2649] sm:$0xf]
        %v3870 = vld [vmem:[%s2649 + $0x4] sm:$0xf]
        %v3871 = vld [vmem:[%s2649 + $0x8] sm:$0xf]
        %v3872 = vld [vmem:[%s2649 + $0xc] sm:$0xf]
        %v3873 = vld [vmem:[%s2649 + $0x10] sm:$0xf]
        %v3874 = vld [vmem:[%s2649 + $0x14] sm:$0xf]
        %v3875 = vld [vmem:[%s2649 + $0x18] sm:$0xf]
        %v3876 = vld [vmem:[%s2649 + $0x1c] sm:$0xf]
        %v3877 = vld [vmem:[%s2649 + $0x20] sm:$0xf]
        %v3878 = vld [vmem:[%s2649 + $0x24] sm:$0xf]
        %v3879 = vld [vmem:[%s2649 + $0x28] sm:$0xf]
        %v3880 = vld [vmem:[%s2649 + $0x2c] sm:$0xf]
        %v3881 = vld [vmem:[%s2649 + $0x30] sm:$0xf]
        %v3882 = vld [vmem:[%s2649 + $0x34] sm:$0xf]
        %v3883 = vld [vmem:[%s2649 + $0x38] sm:$0xf]
        %v3884 = vld [vmem:[%s2649 + $0x3c] sm:$0xf]
        %v3885 = vcombine.low %v3859, %v3868
        %v3887 = vunpack.c.l.s4 1966171168
        %v3888 = vunpack.c.0.s8 %v3887
        %v3889 = vlaneseq
        %v3890 = vshrl.u32 %v3889, 7
        %v3891 = vsub.s32 %v3888, %v3890
        %v3892 = vrot.slane %v3885, %v3891
        %v3894 = vunpack.c.l.s4 1966171168
        %v3895 = vunpack.c.0.s8 %v3894
        %v3896 = vlaneseq
        %v3897 = vshrl.u32 %v3896, 7
        %v3898 = vsub.s32 %v3895, %v3897
        %v3899 = vrot.slane %v3892, %v3898
        %v3917 = vunpack.c.l.b16 %v3869
        %v3918 = vunpack.c.l.b16 %v3870
        %v3919 = vunpack.c.l.b16 %v3871
        %v3920 = vunpack.c.l.b16 %v3872
        %v3921 = vunpack.c.l.b16 %v3873
        %v3922 = vunpack.c.l.b16 %v3874
        %v3923 = vunpack.c.l.b16 %v3875
        %v3924 = vunpack.c.l.b16 %v3876
        %v3925 = vunpack.c.l.b16 %v3877
        %v3926 = vunpack.c.l.b16 %v3878
        %v3927 = vunpack.c.l.b16 %v3879
        %v3928 = vunpack.c.l.b16 %v3880
        %v3929 = vunpack.c.l.b16 %v3881
        %v3930 = vunpack.c.l.b16 %v3882
        %v3931 = vunpack.c.l.b16 %v3883
        %v3932 = vunpack.c.l.b16 %v3884
        %v3933 = vpack.c.b16 %v3918, %v3917
        %v3934 = vpack.c.b16 %v3920, %v3919
        %v3935 = vpack.c.b16 %v3922, %v3921
        %v3936 = vpack.c.b16 %v3924, %v3923
        %v3937 = vpack.c.b16 %v3926, %v3925
        %v3938 = vpack.c.b16 %v3928, %v3927
        %v3939 = vpack.c.b16 %v3930, %v3929
        %v3940 = vpack.c.b16 %v3932, %v3931
        %3949 = vmatprep.subr.bf16.mxu0 0
        %3950 = vmatpush1.bf16.msra.mxu0 %v3933
        %3951 = vmatprep.subr.bf16.mxu0 0
        %3952 = vmatpush1.bf16.msra.mxu0 %v3934
        %3953 = vmatprep.subr.bf16.mxu0 0
        %3954 = vmatpush1.bf16.msra.mxu0 %v3935
        %3955 = vmatprep.subr.bf16.mxu0 0
        %3956 = vmatpush1.bf16.msra.mxu0 %v3936
        %3957 = vmatprep.subr.bf16.mxu0 0
        %3958 = vmatpush1.bf16.msra.mxu0 %v3937
        %3959 = vmatprep.subr.bf16.mxu0 0
        %3960 = vmatpush1.bf16.msra.mxu0 %v3938
        %3961 = vmatprep.subr.bf16.mxu0 0
        %3962 = vmatpush1.bf16.msra.mxu0 %v3939
        %3963 = vmatprep.subr.bf16.mxu0 0
        %3964 = vmatpush1.bf16.msra.mxu0 %v3940
        %3965 = vmatprep.subr.bf16.mxu0 0
        %3966 = vmatpush1.bf16.msra.mxu0 0
        %3967 = vmatprep.subr.bf16.mxu0 0
        %3968 = vmatpush1.bf16.msra.mxu0 0
        %3969 = vmatprep.subr.bf16.mxu0 0
        %3970 = vmatpush1.bf16.msra.mxu0 0
        %3971 = vmatprep.subr.bf16.mxu0 0
        %3972 = vmatpush1.bf16.msra.mxu0 0
        %3973 = vmatprep.subr.bf16.mxu0 0
        %3974 = vmatpush1.bf16.msra.mxu0 0
        %3975 = vmatprep.subr.bf16.mxu0 0
        %3976 = vmatpush1.bf16.msra.mxu0 0
        %3977 = vmatprep.subr.bf16.mxu0 0
        %3978 = vmatpush1.bf16.msra.mxu0 0
        %3979 = vmatprep.subr.bf16.mxu0 0
        %3980 = vmatpush1.bf16.msra.mxu0 0
        %3981 = vmatprep.mubr.bf16.mxu0 0
        %3982 = vmatmul.mubr.bf16.gmra.mrb[0].mxu0 %v3899
        %v3983 = vpop.f32.mrb[0].mxu0
        %v3984 = vadd.f32 0.0, %v3983
        %v3985 = vpop.f32.mrb[0].mxu0
        %v3986 = vpop.f32.mrb[0].mxu0
        %v3987 = vpop.f32.mrb[0].mxu0
        %3988 = vdwg.mxu0
        %v3989 = vadd.f32 %v3811, %v3984
        %v3990 = vld [vmem:[%s779] sm:$0x1]
        %v3991 = vld [vmem:[%s779 + $0x2] sm:$0x1]
        %v3992 = vld [vmem:[%s2775] sm:$0xf]
        %v3993 = vld [vmem:[%s2775 + $0x4] sm:$0xf]
        %v3994 = vld [vmem:[%s2775 + $0x8] sm:$0xf]
        %v3995 = vld [vmem:[%s2775 + $0xc] sm:$0xf]
        %v3996 = vld [vmem:[%s2775 + $0x10] sm:$0xf]
        %v3997 = vld [vmem:[%s2775 + $0x14] sm:$0xf]
        %v3998 = vld [vmem:[%s2775 + $0x18] sm:$0xf]
        %v3999 = vld [vmem:[%s2775 + $0x1c] sm:$0xf]
        %v4000 = vld [vmem:[%s2775 + $0x20] sm:$0xf]
        %v4001 = vld [vmem:[%s2775 + $0x24] sm:$0xf]
        %v4002 = vld [vmem:[%s2775 + $0x28] sm:$0xf]
        %v4003 = vld [vmem:[%s2775 + $0x2c] sm:$0xf]
        %v4004 = vld [vmem:[%s2775 + $0x30] sm:$0xf]
        %v4005 = vld [vmem:[%s2775 + $0x34] sm:$0xf]
        %v4006 = vld [vmem:[%s2775 + $0x38] sm:$0xf]
        %v4007 = vld [vmem:[%s2775 + $0x3c] sm:$0xf]
        %v4010 = vcombine.low %v3990, %v3991
        %v4012 = vunpack.c.l.s4 1966171168
        %v4013 = vunpack.c.0.s8 %v4012
        %v4014 = vlaneseq
        %v4015 = vshrl.u32 %v4014, 7
        %v4016 = vsub.s32 %v4013, %v4015
        %v4017 = vrot.slane %v4010, %v4016
        %v4019 = vunpack.c.l.s4 1966171168
        %v4020 = vunpack.c.0.s8 %v4019
        %v4021 = vlaneseq
        %v4022 = vshrl.u32 %v4021, 7
        %v4023 = vsub.s32 %v4020, %v4022
        %v4024 = vrot.slane %v4017, %v4023
        %v4042 = vunpack.c.l.b16 %v3992
        %v4043 = vunpack.c.l.b16 %v3993
        %v4044 = vunpack.c.l.b16 %v3994
        %v4045 = vunpack.c.l.b16 %v3995
        %v4046 = vunpack.c.l.b16 %v3996
        %v4047 = vunpack.c.l.b16 %v3997
        %v4048 = vunpack.c.l.b16 %v3998
        %v4049 = vunpack.c.l.b16 %v3999
        %v4050 = vunpack.c.l.b16 %v4000
        %v4051 = vunpack.c.l.b16 %v4001
        %v4052 = vunpack.c.l.b16 %v4002
        %v4053 = vunpack.c.l.b16 %v4003
        %v4054 = vunpack.c.l.b16 %v4004
        %v4055 = vunpack.c.l.b16 %v4005
        %v4056 = vunpack.c.l.b16 %v4006
        %v4057 = vunpack.c.l.b16 %v4007
        %v4058 = vpack.c.b16 %v4043, %v4042
        %v4059 = vpack.c.b16 %v4045, %v4044
        %v4060 = vpack.c.b16 %v4047, %v4046
        %v4061 = vpack.c.b16 %v4049, %v4048
        %v4062 = vpack.c.b16 %v4051, %v4050
        %v4063 = vpack.c.b16 %v4053, %v4052
        %v4064 = vpack.c.b16 %v4055, %v4054
        %v4065 = vpack.c.b16 %v4057, %v4056
        %4074 = vmatprep.subr.bf16.mxu0 0
        %4075 = vmatpush1.bf16.msra.mxu0 %v4058
        %4076 = vmatprep.subr.bf16.mxu0 0
        %4077 = vmatpush1.bf16.msra.mxu0 %v4059
        %4078 = vmatprep.subr.bf16.mxu0 0
        %4079 = vmatpush1.bf16.msra.mxu0 %v4060
        %4080 = vmatprep.subr.bf16.mxu0 0
        %4081 = vmatpush1.bf16.msra.mxu0 %v4061
        %4082 = vmatprep.subr.bf16.mxu0 0
        %4083 = vmatpush1.bf16.msra.mxu0 %v4062
        %4084 = vmatprep.subr.bf16.mxu0 0
        %4085 = vmatpush1.bf16.msra.mxu0 %v4063
        %4086 = vmatprep.subr.bf16.mxu0 0
        %4087 = vmatpush1.bf16.msra.mxu0 %v4064
        %4088 = vmatprep.subr.bf16.mxu0 0
        %4089 = vmatpush1.bf16.msra.mxu0 %v4065
        %4090 = vmatprep.subr.bf16.mxu0 0
        %4091 = vmatpush1.bf16.msra.mxu0 0
        %4092 = vmatprep.subr.bf16.mxu0 0
        %4093 = vmatpush1.bf16.msra.mxu0 0
        %4094 = vmatprep.subr.bf16.mxu0 0
        %4095 = vmatpush1.bf16.msra.mxu0 0
        %4096 = vmatprep.subr.bf16.mxu0 0
        %4097 = vmatpush1.bf16.msra.mxu0 0
        %4098 = vmatprep.subr.bf16.mxu0 0
        %4099 = vmatpush1.bf16.msra.mxu0 0
        %4100 = vmatprep.subr.bf16.mxu0 0
        %4101 = vmatpush1.bf16.msra.mxu0 0
        %4102 = vmatprep.subr.bf16.mxu0 0
        %4103 = vmatpush1.bf16.msra.mxu0 0
        %4104 = vmatprep.subr.bf16.mxu0 0
        %4105 = vmatpush1.bf16.msra.mxu0 0
        %4106 = vmatprep.mubr.bf16.mxu0 0
        %4107 = vmatmul.mubr.bf16.gmra.mrb[0].mxu0 %v4024
        %v4108 = vpop.f32.mrb[0].mxu0
        %v4109 = vadd.f32 0.0, %v4108
        %v4110 = vpop.f32.mrb[0].mxu0
        %v4111 = vpop.f32.mrb[0].mxu0
        %v4112 = vpop.f32.mrb[0].mxu0
        %4113 = vdwg.mxu0
        %v4114 = vadd.f32 %v3989, %v4109
        %v4115 = vld [vmem:[%s883] sm:$0x1]
        %v4116 = vld [vmem:[%s883 + $0x2] sm:$0x1]
        %v4117 = vld [vmem:[%s2901] sm:$0xf]
        %v4118 = vld [vmem:[%s2901 + $0x4] sm:$0xf]
        %v4119 = vld [vmem:[%s2901 + $0x8] sm:$0xf]
        %v4120 = vld [vmem:[%s2901 + $0xc] sm:$0xf]
        %v4121 = vld [vmem:[%s2901 + $0x10] sm:$0xf]
        %v4122 = vld [vmem:[%s2901 + $0x14] sm:$0xf]
        %v4123 = vld [vmem:[%s2901 + $0x18] sm:$0xf]
        %v4124 = vld [vmem:[%s2901 + $0x1c] sm:$0xf]
        %v4125 = vld [vmem:[%s2901 + $0x20] sm:$0xf]
        %v4126 = vld [vmem:[%s2901 + $0x24] sm:$0xf]
        %v4127 = vld [vmem:[%s2901 + $0x28] sm:$0xf]
        %v4128 = vld [vmem:[%s2901 + $0x2c] sm:$0xf]
        %v4129 = vld [vmem:[%s2901 + $0x30] sm:$0xf]
        %v4130 = vld [vmem:[%s2901 + $0x34] sm:$0xf]
        %v4131 = vld [vmem:[%s2901 + $0x38] sm:$0xf]
        %v4132 = vld [vmem:[%s2901 + $0x3c] sm:$0xf]
        %v4135 = vcombine.low %v4115, %v4116
        %v4137 = vunpack.c.l.s4 1966171168
        %v4138 = vunpack.c.0.s8 %v4137
        %v4139 = vlaneseq
        %v4140 = vshrl.u32 %v4139, 7
        %v4141 = vsub.s32 %v4138, %v4140
        %v4142 = vrot.slane %v4135, %v4141
        %v4144 = vunpack.c.l.s4 1966171168
        %v4145 = vunpack.c.0.s8 %v4144
        %v4146 = vlaneseq
        %v4147 = vshrl.u32 %v4146, 7
        %v4148 = vsub.s32 %v4145, %v4147
        %v4149 = vrot.slane %v4142, %v4148
        %v4167 = vunpack.c.l.b16 %v4117
        %v4168 = vunpack.c.l.b16 %v4118
        %v4169 = vunpack.c.l.b16 %v4119
        %v4170 = vunpack.c.l.b16 %v4120
        %v4171 = vunpack.c.l.b16 %v4121
        %v4172 = vunpack.c.l.b16 %v4122
        %v4173 = vunpack.c.l.b16 %v4123
        %v4174 = vunpack.c.l.b16 %v4124
        %v4175 = vunpack.c.l.b16 %v4125
        %v4176 = vunpack.c.l.b16 %v4126
        %v4177 = vunpack.c.l.b16 %v4127
        %v4178 = vunpack.c.l.b16 %v4128
        %v4179 = vunpack.c.l.b16 %v4129
        %v4180 = vunpack.c.l.b16 %v4130
        %v4181 = vunpack.c.l.b16 %v4131
        %v4182 = vunpack.c.l.b16 %v4132
        %v4183 = vpack.c.b16 %v4168, %v4167
        %v4184 = vpack.c.b16 %v4170, %v4169
        %v4185 = vpack.c.b16 %v4172, %v4171
        %v4186 = vpack.c.b16 %v4174, %v4173
        %v4187 = vpack.c.b16 %v4176, %v4175
        %v4188 = vpack.c.b16 %v4178, %v4177
        %v4189 = vpack.c.b16 %v4180, %v4179
        %v4190 = vpack.c.b16 %v4182, %v4181
        %4199 = vmatprep.subr.bf16.mxu0 0
        %4200 = vmatpush1.bf16.msra.mxu0 %v4183
        %4201 = vmatprep.subr.bf16.mxu0 0
        %4202 = vmatpush1.bf16.msra.mxu0 %v4184
        %4203 = vmatprep.subr.bf16.mxu0 0
        %4204 = vmatpush1.bf16.msra.mxu0 %v4185
        %4205 = vmatprep.subr.bf16.mxu0 0
        %4206 = vmatpush1.bf16.msra.mxu0 %v4186
        %4207 = vmatprep.subr.bf16.mxu0 0
        %4208 = vmatpush1.bf16.msra.mxu0 %v4187
        %4209 = vmatprep.subr.bf16.mxu0 0
        %4210 = vmatpush1.bf16.msra.mxu0 %v4188
        %4211 = vmatprep.subr.bf16.mxu0 0
        %4212 = vmatpush1.bf16.msra.mxu0 %v4189
        %4213 = vmatprep.subr.bf16.mxu0 0
        %4214 = vmatpush1.bf16.msra.mxu0 %v4190
        %4215 = vmatprep.subr.bf16.mxu0 0
        %4216 = vmatpush1.bf16.msra.mxu0 0
        %4217 = vmatprep.subr.bf16.mxu0 0
        %4218 = vmatpush1.bf16.msra.mxu0 0
        %4219 = vmatprep.subr.bf16.mxu0 0
        %4220 = vmatpush1.bf16.msra.mxu0 0
        %4221 = vmatprep.subr.bf16.mxu0 0
        %4222 = vmatpush1.bf16.msra.mxu0 0
        %4223 = vmatprep.subr.bf16.mxu0 0
        %4224 = vmatpush1.bf16.msra.mxu0 0
        %4225 = vmatprep.subr.bf16.mxu0 0
        %4226 = vmatpush1.bf16.msra.mxu0 0
        %4227 = vmatprep.subr.bf16.mxu0 0
        %4228 = vmatpush1.bf16.msra.mxu0 0
        %4229 = vmatprep.subr.bf16.mxu0 0
        %4230 = vmatpush1.bf16.msra.mxu0 0
        %4231 = vmatprep.mubr.bf16.mxu0 0
        %4232 = vmatmul.mubr.bf16.gmra.mrb[0].mxu0 %v4149
        %v4233 = vpop.f32.mrb[0].mxu0
        %v4234 = vadd.f32 0.0, %v4233
        %v4235 = vpop.f32.mrb[0].mxu0
        %v4236 = vpop.f32.mrb[0].mxu0
        %v4237 = vpop.f32.mrb[0].mxu0
        %4238 = vdwg.mxu0
        %v4239 = vadd.f32 %v4114, %v4234
        %v4240 = vld [vmem:[%s1019] sm:$0x3]
        %v4241 = vld [vmem:[%s1019 + $0x2] sm:$0x3]
        %v4245 = vunpack.c.l.s4 1966171168
        %v4246 = vunpack.c.0.s8 %v4245
        %v4247 = vlaneseq
        %v4248 = vshrl.u32 %v4247, 7
        %v4249 = vsub.s32 %v4246, %v4248
        %v4250 = vrot.slane %v4240, %v4249
        %v4251 = vcombine.high %v4250, %v4250
        %v4253 = vunpack.c.l.s4 1966171168
        %v4254 = vunpack.c.0.s8 %v4253
        %v4255 = vlaneseq
        %v4256 = vshrl.u32 %v4255, 7
        %v4257 = vsub.s32 %v4254, %v4256
        %v4258 = vrot.slane %v4241, %v4257
        %v4259 = vcombine.high %v4258, %v4258
        %v4261 = vshrl.u32 %v4250, 16
        %v4263 = vrot.slane %v4261, 7
        %v4264 = vrot.slane %v4263, 1
        %v4266 = vshll.u32 %v4251, 16
        %v4268 = vsel %vm3850, %v4264, %v4266
        %v4270 = vshrl.u32 %v4258, 16
        %v4272 = vrot.slane %v4270, 7
        %v4273 = vrot.slane %v4272, 1
        %v4275 = vshll.u32 %v4259, 16
        %v4277 = vsel %vm3850, %v4273, %v4275
        %v4278 = vld [vmem:[%s3027] sm:$0xf]
        %v4279 = vld [vmem:[%s3027 + $0x4] sm:$0xf]
        %v4280 = vld [vmem:[%s3027 + $0x8] sm:$0xf]
        %v4281 = vld [vmem:[%s3027 + $0xc] sm:$0xf]
        %v4282 = vld [vmem:[%s3027 + $0x10] sm:$0xf]
        %v4283 = vld [vmem:[%s3027 + $0x14] sm:$0xf]
        %v4284 = vld [vmem:[%s3027 + $0x18] sm:$0xf]
        %v4285 = vld [vmem:[%s3027 + $0x1c] sm:$0xf]
        %v4286 = vld [vmem:[%s3027 + $0x20] sm:$0xf]
        %v4287 = vld [vmem:[%s3027 + $0x24] sm:$0xf]
        %v4288 = vld [vmem:[%s3027 + $0x28] sm:$0xf]
        %v4289 = vld [vmem:[%s3027 + $0x2c] sm:$0xf]
        %v4290 = vld [vmem:[%s3027 + $0x30] sm:$0xf]
        %v4291 = vld [vmem:[%s3027 + $0x34] sm:$0xf]
        %v4292 = vld [vmem:[%s3027 + $0x38] sm:$0xf]
        %v4293 = vld [vmem:[%s3027 + $0x3c] sm:$0xf]
        %v4294 = vcombine.low %v4268, %v4277
        %v4296 = vunpack.c.l.s4 1966171168
        %v4297 = vunpack.c.0.s8 %v4296
        %v4298 = vlaneseq
        %v4299 = vshrl.u32 %v4298, 7
        %v4300 = vsub.s32 %v4297, %v4299
        %v4301 = vrot.slane %v4294, %v4300
        %v4303 = vunpack.c.l.s4 1966171168
        %v4304 = vunpack.c.0.s8 %v4303
        %v4305 = vlaneseq
        %v4306 = vshrl.u32 %v4305, 7
        %v4307 = vsub.s32 %v4304, %v4306
        %v4308 = vrot.slane %v4301, %v4307
        %v4326 = vunpack.c.l.b16 %v4278
        %v4327 = vunpack.c.l.b16 %v4279
        %v4328 = vunpack.c.l.b16 %v4280
        %v4329 = vunpack.c.l.b16 %v4281
        %v4330 = vunpack.c.l.b16 %v4282
        %v4331 = vunpack.c.l.b16 %v4283
        %v4332 = vunpack.c.l.b16 %v4284
        %v4333 = vunpack.c.l.b16 %v4285
        %v4334 = vunpack.c.l.b16 %v4286
        %v4335 = vunpack.c.l.b16 %v4287
        %v4336 = vunpack.c.l.b16 %v4288
        %v4337 = vunpack.c.l.b16 %v4289
        %v4338 = vunpack.c.l.b16 %v4290
        %v4339 = vunpack.c.l.b16 %v4291
        %v4340 = vunpack.c.l.b16 %v4292
        %v4341 = vunpack.c.l.b16 %v4293
        %v4342 = vpack.c.b16 %v4327, %v4326
        %v4343 = vpack.c.b16 %v4329, %v4328
        %v4344 = vpack.c.b16 %v4331, %v4330
        %v4345 = vpack.c.b16 %v4333, %v4332
        %v4346 = vpack.c.b16 %v4335, %v4334
        %v4347 = vpack.c.b16 %v4337, %v4336
        %v4348 = vpack.c.b16 %v4339, %v4338
        %v4349 = vpack.c.b16 %v4341, %v4340
        %4358 = vmatprep.subr.bf16.mxu0 0
        %4359 = vmatpush1.bf16.msra.mxu0 %v4342
        %4360 = vmatprep.subr.bf16.mxu0 0
        %4361 = vmatpush1.bf16.msra.mxu0 %v4343
        %4362 = vmatprep.subr.bf16.mxu0 0
        %4363 = vmatpush1.bf16.msra.mxu0 %v4344
        %4364 = vmatprep.subr.bf16.mxu0 0
        %4365 = vmatpush1.bf16.msra.mxu0 %v4345
        %4366 = vmatprep.subr.bf16.mxu0 0
        %4367 = vmatpush1.bf16.msra.mxu0 %v4346
        %4368 = vmatprep.subr.bf16.mxu0 0
        %4369 = vmatpush1.bf16.msra.mxu0 %v4347
        %4370 = vmatprep.subr.bf16.mxu0 0
        %4371 = vmatpush1.bf16.msra.mxu0 %v4348
        %4372 = vmatprep.subr.bf16.mxu0 0
        %4373 = vmatpush1.bf16.msra.mxu0 %v4349
        %4374 = vmatprep.subr.bf16.mxu0 0
        %4375 = vmatpush1.bf16.msra.mxu0 0
        %4376 = vmatprep.subr.bf16.mxu0 0
        %4377 = vmatpush1.bf16.msra.mxu0 0
        %4378 = vmatprep.subr.bf16.mxu0 0
        %4379 = vmatpush1.bf16.msra.mxu0 0
        %4380 = vmatprep.subr.bf16.mxu0 0
        %4381 = vmatpush1.bf16.msra.mxu0 0
        %4382 = vmatprep.subr.bf16.mxu0 0
        %4383 = vmatpush1.bf16.msra.mxu0 0
        %4384 = vmatprep.subr.bf16.mxu0 0
        %4385 = vmatpush1.bf16.msra.mxu0 0
        %4386 = vmatprep.subr.bf16.mxu0 0
        %4387 = vmatpush1.bf16.msra.mxu0 0
        %4388 = vmatprep.subr.bf16.mxu0 0
        %4389 = vmatpush1.bf16.msra.mxu0 0
        %4390 = vmatprep.mubr.bf16.mxu0 0
        %4391 = vmatmul.mubr.bf16.gmra.mrb[0].mxu0 %v4308
        %v4392 = vpop.f32.mrb[0].mxu0
        %v4393 = vadd.f32 0.0, %v4392
        %v4394 = vpop.f32.mrb[0].mxu0
        %v4395 = vpop.f32.mrb[0].mxu0
        %v4396 = vpop.f32.mrb[0].mxu0
        %4397 = vdwg.mxu0
        %v4398 = vadd.f32 %v4239, %v4393
        %v4399 = vld [vmem:[%s1237] sm:$0x1]
        %v4400 = vld [vmem:[%s1237 + $0x2] sm:$0x1]
        %v4401 = vld [vmem:[%s3153] sm:$0xf]
        %v4402 = vld [vmem:[%s3153 + $0x4] sm:$0xf]
        %v4403 = vld [vmem:[%s3153 + $0x8] sm:$0xf]
        %v4404 = vld [vmem:[%s3153 + $0xc] sm:$0xf]
        %v4405 = vld [vmem:[%s3153 + $0x10] sm:$0xf]
        %v4406 = vld [vmem:[%s3153 + $0x14] sm:$0xf]
        %v4407 = vld [vmem:[%s3153 + $0x18] sm:$0xf]
        %v4408 = vld [vmem:[%s3153 + $0x1c] sm:$0xf]
        %v4409 = vld [vmem:[%s3153 + $0x20] sm:$0xf]
        %v4410 = vld [vmem:[%s3153 + $0x24] sm:$0xf]
        %v4411 = vld [vmem:[%s3153 + $0x28] sm:$0xf]
        %v4412 = vld [vmem:[%s3153 + $0x2c] sm:$0xf]
        %v4413 = vld [vmem:[%s3153 + $0x30] sm:$0xf]
        %v4414 = vld [vmem:[%s3153 + $0x34] sm:$0xf]
        %v4415 = vld [vmem:[%s3153 + $0x38] sm:$0xf]
        %v4416 = vld [vmem:[%s3153 + $0x3c] sm:$0xf]
        %v4419 = vcombine.low %v4399, %v4400
        %v4421 = vunpack.c.l.s4 1966171168
        %v4422 = vunpack.c.0.s8 %v4421
        %v4423 = vlaneseq
        %v4424 = vshrl.u32 %v4423, 7
        %v4425 = vsub.s32 %v4422, %v4424
        %v4426 = vrot.slane %v4419, %v4425
        %v4428 = vunpack.c.l.s4 1966171168
        %v4429 = vunpack.c.0.s8 %v4428
        %v4430 = vlaneseq
        %v4431 = vshrl.u32 %v4430, 7
        %v4432 = vsub.s32 %v4429, %v4431
        %v4433 = vrot.slane %v4426, %v4432
        %v4451 = vunpack.c.l.b16 %v4401
        %v4452 = vunpack.c.l.b16 %v4402
        %v4453 = vunpack.c.l.b16 %v4403
        %v4454 = vunpack.c.l.b16 %v4404
        %v4455 = vunpack.c.l.b16 %v4405
        %v4456 = vunpack.c.l.b16 %v4406
        %v4457 = vunpack.c.l.b16 %v4407
        %v4458 = vunpack.c.l.b16 %v4408
        %v4459 = vunpack.c.l.b16 %v4409
        %v4460 = vunpack.c.l.b16 %v4410
        %v4461 = vunpack.c.l.b16 %v4411
        %v4462 = vunpack.c.l.b16 %v4412
        %v4463 = vunpack.c.l.b16 %v4413
        %v4464 = vunpack.c.l.b16 %v4414
        %v4465 = vunpack.c.l.b16 %v4415
        %v4466 = vunpack.c.l.b16 %v4416
        %v4467 = vpack.c.b16 %v4452, %v4451
        %v4468 = vpack.c.b16 %v4454, %v4453
        %v4469 = vpack.c.b16 %v4456, %v4455
        %v4470 = vpack.c.b16 %v4458, %v4457
        %v4471 = vpack.c.b16 %v4460, %v4459
        %v4472 = vpack.c.b16 %v4462, %v4461
        %v4473 = vpack.c.b16 %v4464, %v4463
        %v4474 = vpack.c.b16 %v4466, %v4465
        %4483 = vmatprep.subr.bf16.mxu0 0
        %4484 = vmatpush1.bf16.msra.mxu0 %v4467
        %4485 = vmatprep.subr.bf16.mxu0 0
        %4486 = vmatpush1.bf16.msra.mxu0 %v4468
        %4487 = vmatprep.subr.bf16.mxu0 0
        %4488 = vmatpush1.bf16.msra.mxu0 %v4469
        %4489 = vmatprep.subr.bf16.mxu0 0
        %4490 = vmatpush1.bf16.msra.mxu0 %v4470
        %4491 = vmatprep.subr.bf16.mxu0 0
        %4492 = vmatpush1.bf16.msra.mxu0 %v4471
        %4493 = vmatprep.subr.bf16.mxu0 0
        %4494 = vmatpush1.bf16.msra.mxu0 %v4472
        %4495 = vmatprep.subr.bf16.mxu0 0
        %4496 = vmatpush1.bf16.msra.mxu0 %v4473
        %4497 = vmatprep.subr.bf16.mxu0 0
        %4498 = vmatpush1.bf16.msra.mxu0 %v4474
        %4499 = vmatprep.subr.bf16.mxu0 0
        %4500 = vmatpush1.bf16.msra.mxu0 0
        %4501 = vmatprep.subr.bf16.mxu0 0
        %4502 = vmatpush1.bf16.msra.mxu0 0
        %4503 = vmatprep.subr.bf16.mxu0 0
        %4504 = vmatpush1.bf16.msra.mxu0 0
        %4505 = vmatprep.subr.bf16.mxu0 0
        %4506 = vmatpush1.bf16.msra.mxu0 0
        %4507 = vmatprep.subr.bf16.mxu0 0
        %4508 = vmatpush1.bf16.msra.mxu0 0
        %4509 = vmatprep.subr.bf16.mxu0 0
        %4510 = vmatpush1.bf16.msra.mxu0 0
        %4511 = vmatprep.subr.bf16.mxu0 0
        %4512 = vmatpush1.bf16.msra.mxu0 0
        %4513 = vmatprep.subr.bf16.mxu0 0
        %4514 = vmatpush1.bf16.msra.mxu0 0
        %4515 = vmatprep.mubr.bf16.mxu0 0
        %4516 = vmatmul.mubr.bf16.gmra.mrb[0].mxu0 %v4433
        %v4517 = vpop.f32.mrb[0].mxu0
        %v4518 = vadd.f32 0.0, %v4517
        %v4519 = vpop.f32.mrb[0].mxu0
        %v4520 = vpop.f32.mrb[0].mxu0
        %v4521 = vpop.f32.mrb[0].mxu0
        %4522 = vdwg.mxu0
        %v4523 = vadd.f32 %v4398, %v4518
        %v4524 = vld [vmem:[%s1341] sm:$0x1]
        %v4525 = vld [vmem:[%s1341 + $0x2] sm:$0x1]
        %v4526 = vld [vmem:[%s3279] sm:$0xf]
        %v4527 = vld [vmem:[%s3279 + $0x4] sm:$0xf]
        %v4528 = vld [vmem:[%s3279 + $0x8] sm:$0xf]
        %v4529 = vld [vmem:[%s3279 + $0xc] sm:$0xf]
        %v4530 = vld [vmem:[%s3279 + $0x10] sm:$0xf]
        %v4531 = vld [vmem:[%s3279 + $0x14] sm:$0xf]
        %v4532 = vld [vmem:[%s3279 + $0x18] sm:$0xf]
        %v4533 = vld [vmem:[%s3279 + $0x1c] sm:$0xf]
        %v4534 = vld [vmem:[%s3279 + $0x20] sm:$0xf]
        %v4535 = vld [vmem:[%s3279 + $0x24] sm:$0xf]
        %v4536 = vld [vmem:[%s3279 + $0x28] sm:$0xf]
        %v4537 = vld [vmem:[%s3279 + $0x2c] sm:$0xf]
        %v4538 = vld [vmem:[%s3279 + $0x30] sm:$0xf]
        %v4539 = vld [vmem:[%s3279 + $0x34] sm:$0xf]
        %v4540 = vld [vmem:[%s3279 + $0x38] sm:$0xf]
        %v4541 = vld [vmem:[%s3279 + $0x3c] sm:$0xf]
        %v4544 = vcombine.low %v4524, %v4525
        %v4546 = vunpack.c.l.s4 1966171168
        %v4547 = vunpack.c.0.s8 %v4546
        %v4548 = vlaneseq
        %v4549 = vshrl.u32 %v4548, 7
        %v4550 = vsub.s32 %v4547, %v4549
        %v4551 = vrot.slane %v4544, %v4550
        %v4553 = vunpack.c.l.s4 1966171168
        %v4554 = vunpack.c.0.s8 %v4553
        %v4555 = vlaneseq
        %v4556 = vshrl.u32 %v4555, 7
        %v4557 = vsub.s32 %v4554, %v4556
        %v4558 = vrot.slane %v4551, %v4557
        %v4576 = vunpack.c.l.b16 %v4526
        %v4577 = vunpack.c.l.b16 %v4527
        %v4578 = vunpack.c.l.b16 %v4528
        %v4579 = vunpack.c.l.b16 %v4529
        %v4580 = vunpack.c.l.b16 %v4530
        %v4581 = vunpack.c.l.b16 %v4531
        %v4582 = vunpack.c.l.b16 %v4532
        %v4583 = vunpack.c.l.b16 %v4533
        %v4584 = vunpack.c.l.b16 %v4534
        %v4585 = vunpack.c.l.b16 %v4535
        %v4586 = vunpack.c.l.b16 %v4536
        %v4587 = vunpack.c.l.b16 %v4537
        %v4588 = vunpack.c.l.b16 %v4538
        %v4589 = vunpack.c.l.b16 %v4539
        %v4590 = vunpack.c.l.b16 %v4540
        %v4591 = vunpack.c.l.b16 %v4541
        %v4592 = vpack.c.b16 %v4577, %v4576
        %v4593 = vpack.c.b16 %v4579, %v4578
        %v4594 = vpack.c.b16 %v4581, %v4580
        %v4595 = vpack.c.b16 %v4583, %v4582
        %v4596 = vpack.c.b16 %v4585, %v4584
        %v4597 = vpack.c.b16 %v4587, %v4586
        %v4598 = vpack.c.b16 %v4589, %v4588
        %v4599 = vpack.c.b16 %v4591, %v4590
        %4608 = vmatprep.subr.bf16.mxu0 0
        %4609 = vmatpush1.bf16.msra.mxu0 %v4592
        %4610 = vmatprep.subr.bf16.mxu0 0
        %4611 = vmatpush1.bf16.msra.mxu0 %v4593
        %4612 = vmatprep.subr.bf16.mxu0 0
        %4613 = vmatpush1.bf16.msra.mxu0 %v4594
        %4614 = vmatprep.subr.bf16.mxu0 0
        %4615 = vmatpush1.bf16.msra.mxu0 %v4595
        %4616 = vmatprep.subr.bf16.mxu0 0
        %4617 = vmatpush1.bf16.msra.mxu0 %v4596
        %4618 = vmatprep.subr.bf16.mxu0 0
        %4619 = vmatpush1.bf16.msra.mxu0 %v4597
        %4620 = vmatprep.subr.bf16.mxu0 0
        %4621 = vmatpush1.bf16.msra.mxu0 %v4598
        %4622 = vmatprep.subr.bf16.mxu0 0
        %4623 = vmatpush1.bf16.msra.mxu0 %v4599
        %4624 = vmatprep.subr.bf16.mxu0 0
        %4625 = vmatpush1.bf16.msra.mxu0 0
        %4626 = vmatprep.subr.bf16.mxu0 0
        %4627 = vmatpush1.bf16.msra.mxu0 0
        %4628 = vmatprep.subr.bf16.mxu0 0
        %4629 = vmatpush1.bf16.msra.mxu0 0
        %4630 = vmatprep.subr.bf16.mxu0 0
        %4631 = vmatpush1.bf16.msra.mxu0 0
        %4632 = vmatprep.subr.bf16.mxu0 0
        %4633 = vmatpush1.bf16.msra.mxu0 0
        %4634 = vmatprep.subr.bf16.mxu0 0
        %4635 = vmatpush1.bf16.msra.mxu0 0
        %4636 = vmatprep.subr.bf16.mxu0 0
        %4637 = vmatpush1.bf16.msra.mxu0 0
        %4638 = vmatprep.subr.bf16.mxu0 0
        %4639 = vmatpush1.bf16.msra.mxu0 0
        %4640 = vmatprep.mubr.bf16.mxu0 0
        %4641 = vmatmul.mubr.bf16.gmra.mrb[0].mxu0 %v4558
        %v4642 = vpop.f32.mrb[0].mxu0
        %v4643 = vadd.f32 0.0, %v4642
        %v4644 = vpop.f32.mrb[0].mxu0
        %v4645 = vpop.f32.mrb[0].mxu0
        %v4646 = vpop.f32.mrb[0].mxu0
        %4647 = vdwg.mxu0
        %v4648 = vadd.f32 %v4523, %v4643
        %v4649 = vld [vmem:[%s1477] sm:$0x3]
        %v4650 = vld [vmem:[%s1477 + $0x2] sm:$0x3]
        %v4654 = vunpack.c.l.s4 1966171168
        %v4655 = vunpack.c.0.s8 %v4654
        %v4656 = vlaneseq
        %v4657 = vshrl.u32 %v4656, 7
        %v4658 = vsub.s32 %v4655, %v4657
        %v4659 = vrot.slane %v4649, %v4658
        %v4660 = vcombine.high %v4659, %v4659
        %v4662 = vunpack.c.l.s4 1966171168
        %v4663 = vunpack.c.0.s8 %v4662
        %v4664 = vlaneseq
        %v4665 = vshrl.u32 %v4664, 7
        %v4666 = vsub.s32 %v4663, %v4665
        %v4667 = vrot.slane %v4650, %v4666
        %v4668 = vcombine.high %v4667, %v4667
        %v4670 = vshrl.u32 %v4659, 16
        %v4672 = vrot.slane %v4670, 7
        %v4673 = vrot.slane %v4672, 1
        %v4675 = vshll.u32 %v4660, 16
        %v4677 = vsel %vm3850, %v4673, %v4675
        %v4679 = vshrl.u32 %v4667, 16
        %v4681 = vrot.slane %v4679, 7
        %v4682 = vrot.slane %v4681, 1
        %v4684 = vshll.u32 %v4668, 16
        %v4686 = vsel %vm3850, %v4682, %v4684
        %v4687 = vld [vmem:[%s3405] sm:$0xf]
        %v4688 = vld [vmem:[%s3405 + $0x4] sm:$0xf]
        %v4689 = vld [vmem:[%s3405 + $0x8] sm:$0xf]
        %v4690 = vld [vmem:[%s3405 + $0xc] sm:$0xf]
        %v4691 = vld [vmem:[%s3405 + $0x10] sm:$0xf]
        %v4692 = vld [vmem:[%s3405 + $0x14] sm:$0xf]
        %v4693 = vld [vmem:[%s3405 + $0x18] sm:$0xf]
        %v4694 = vld [vmem:[%s3405 + $0x1c] sm:$0xf]
        %v4695 = vld [vmem:[%s3405 + $0x20] sm:$0xf]
        %v4696 = vld [vmem:[%s3405 + $0x24] sm:$0xf]
        %v4697 = vld [vmem:[%s3405 + $0x28] sm:$0xf]
        %v4698 = vld [vmem:[%s3405 + $0x2c] sm:$0xf]
        %v4699 = vld [vmem:[%s3405 + $0x30] sm:$0xf]
        %v4700 = vld [vmem:[%s3405 + $0x34] sm:$0xf]
        %v4701 = vld [vmem:[%s3405 + $0x38] sm:$0xf]
        %v4702 = vld [vmem:[%s3405 + $0x3c] sm:$0xf]
        %v4703 = vcombine.low %v4677, %v4686
        %v4705 = vunpack.c.l.s4 1966171168
        %v4706 = vunpack.c.0.s8 %v4705
        %v4707 = vlaneseq
        %v4708 = vshrl.u32 %v4707, 7
        %v4709 = vsub.s32 %v4706, %v4708
        %v4710 = vrot.slane %v4703, %v4709
        %v4712 = vunpack.c.l.s4 1966171168
        %v4713 = vunpack.c.0.s8 %v4712
        %v4714 = vlaneseq
        %v4715 = vshrl.u32 %v4714, 7
        %v4716 = vsub.s32 %v4713, %v4715
        %v4717 = vrot.slane %v4710, %v4716
        %v4735 = vunpack.c.l.b16 %v4687
        %v4736 = vunpack.c.l.b16 %v4688
        %v4737 = vunpack.c.l.b16 %v4689
        %v4738 = vunpack.c.l.b16 %v4690
        %v4739 = vunpack.c.l.b16 %v4691
        %v4740 = vunpack.c.l.b16 %v4692
        %v4741 = vunpack.c.l.b16 %v4693
        %v4742 = vunpack.c.l.b16 %v4694
        %v4743 = vunpack.c.l.b16 %v4695
        %v4744 = vunpack.c.l.b16 %v4696
        %v4745 = vunpack.c.l.b16 %v4697
        %v4746 = vunpack.c.l.b16 %v4698
        %v4747 = vunpack.c.l.b16 %v4699
        %v4748 = vunpack.c.l.b16 %v4700
        %v4749 = vunpack.c.l.b16 %v4701
        %v4750 = vunpack.c.l.b16 %v4702
        %v4751 = vpack.c.b16 %v4736, %v4735
        %v4752 = vpack.c.b16 %v4738, %v4737
        %v4753 = vpack.c.b16 %v4740, %v4739
        %v4754 = vpack.c.b16 %v4742, %v4741
        %v4755 = vpack.c.b16 %v4744, %v4743
        %v4756 = vpack.c.b16 %v4746, %v4745
        %v4757 = vpack.c.b16 %v4748, %v4747
        %v4758 = vpack.c.b16 %v4750, %v4749
        %4767 = vmatprep.subr.bf16.mxu0 0
        %4768 = vmatpush1.bf16.msra.mxu0 %v4751
        %4769 = vmatprep.subr.bf16.mxu0 0
        %4770 = vmatpush1.bf16.msra.mxu0 %v4752
        %4771 = vmatprep.subr.bf16.mxu0 0
        %4772 = vmatpush1.bf16.msra.mxu0 %v4753
        %4773 = vmatprep.subr.bf16.mxu0 0
        %4774 = vmatpush1.bf16.msra.mxu0 %v4754
        %4775 = vmatprep.subr.bf16.mxu0 0
        %4776 = vmatpush1.bf16.msra.mxu0 %v4755
        %4777 = vmatprep.subr.bf16.mxu0 0
        %4778 = vmatpush1.bf16.msra.mxu0 %v4756
        %4779 = vmatprep.subr.bf16.mxu0 0
        %4780 = vmatpush1.bf16.msra.mxu0 %v4757
        %4781 = vmatprep.subr.bf16.mxu0 0
        %4782 = vmatpush1.bf16.msra.mxu0 %v4758
        %4783 = vmatprep.subr.bf16.mxu0 0
        %4784 = vmatpush1.bf16.msra.mxu0 0
        %4785 = vmatprep.subr.bf16.mxu0 0
        %4786 = vmatpush1.bf16.msra.mxu0 0
        %4787 = vmatprep.subr.bf16.mxu0 0
        %4788 = vmatpush1.bf16.msra.mxu0 0
        %4789 = vmatprep.subr.bf16.mxu0 0
        %4790 = vmatpush1.bf16.msra.mxu0 0
        %4791 = vmatprep.subr.bf16.mxu0 0
        %4792 = vmatpush1.bf16.msra.mxu0 0
        %4793 = vmatprep.subr.bf16.mxu0 0
        %4794 = vmatpush1.bf16.msra.mxu0 0
        %4795 = vmatprep.subr.bf16.mxu0 0
        %4796 = vmatpush1.bf16.msra.mxu0 0
        %4797 = vmatprep.subr.bf16.mxu0 0
        %4798 = vmatpush1.bf16.msra.mxu0 0
        %4799 = vmatprep.mubr.bf16.mxu0 0
        %4800 = vmatmul.mubr.bf16.gmra.mrb[0].mxu0 %v4717
        %v4801 = vpop.f32.mrb[0].mxu0
        %v4802 = vadd.f32 0.0, %v4801
        %v4803 = vpop.f32.mrb[0].mxu0
        %v4804 = vpop.f32.mrb[0].mxu0
        %v4805 = vpop.f32.mrb[0].mxu0
        %4806 = vdwg.mxu0
        %v4807 = vadd.f32 %v4648, %v4802
        %v4808 = vld [vmem:[%s4] sm:$0x1]
        %v4810 = vlaneseq
        %v4811 = vshrl.u32 %v4810, 7
        %v4812 = vsub.s32 0, %v4811
        %v4813 = vrot.slane %v4808, %v4812
        %v4815 = vadd.f32 %v4807, %v4813
        %v4816 = vmax.f32 %v4815, 0.0
        %v4817 = vpack.c.bf16 %v4816, %v4816
        %v4820 = vunpack.c.l.s4 1966171168
        %v4821 = vunpack.c.0.s8 %v4820
        %v4822 = vlaneseq
        %v4823 = vshrl.u32 %v4822, 7
        %v4824 = vsub.s32 %v4821, %v4823
        %v4825 = vrot.slane %v4817, %v4824
        %v4826 = vcombine.high %v4825, %v4825
        %v4828 = vunpack.c.l.s4 1966171168
        %v4829 = vunpack.c.0.s8 %v4828
        %v4830 = vlaneseq
        %v4831 = vshrl.u32 %v4830, 7
        %v4832 = vsub.s32 %v4829, %v4831
        %v4833 = vrot.slane %v4825, %v4832
        %v4835 = vunpack.c.l.s4 1966171168
        %v4836 = vunpack.c.0.s8 %v4835
        %v4837 = vlaneseq
        %v4838 = vshrl.u32 %v4837, 7
        %v4839 = vsub.s32 %v4836, %v4838
        %v4840 = vrot.slane %v4826, %v4839
        %v4842 = vunpack.c.l.s4 1935823168
        %v4843 = vunpack.c.0.s8 %v4842
        %v4844 = vlaneseq
        %v4845 = vshrl.u32 %v4844, 7
        %v4846 = vsub.s32 %v4843, %v4845
        %v4847 = vrot.slane %v4833, %v4846
        %v4849 = vunpack.c.l.s4 1935823168
        %v4850 = vunpack.c.0.s8 %v4849
        %v4851 = vlaneseq
        %v4852 = vshrl.u32 %v4851, 7
        %v4853 = vsub.s32 %v4850, %v4852
        %v4854 = vrot.slane %v4840, %v4853
        %v4856 = vshrl.u32 %v4847, 16
        %v4858 = vrot.slane %v4856, 7
        %v4859 = vshll.u32 %v4847, 16
        %v4861 = vor.u32 %v4858, %v4859
        %v4863 = vshrl.u32 %v4854, 16
        %v4865 = vrot.slane %v4863, 7
        %v4866 = vshll.u32 %v4854, 16
        %v4868 = vor.u32 %v4865, %v4866
        %s4871 = scalar_lea.vmem [#allocation3], 12
        %v4872 = vld [vmem:[%s4871] sm:$0x3]
        %v4873 = vsel %vm1021, %v4861, %v4872
        %4874 = vst [vmem:[%s4871] sm:$0x3] %v4873
        %v4875 = vld [vmem:[%s4871 + $0x2] sm:$0x3]
        %v4876 = vsel %vm1021, %v4868, %v4875
        %4877 = vst [vmem:[%s4871 + $0x2] sm:$0x3] %v4876
        %v4878 = vld [vmem:[%s1477] sm:$0x1]
        %v4879 = vld [vmem:[%s1477 + $0x2] sm:$0x1]
        %v4880 = vld [vmem:[%s3] sm:$0xf]
        %v4881 = vld [vmem:[%s3 + $0x4] sm:$0xf]
        %v4882 = vld [vmem:[%s3 + $0x8] sm:$0xf]
        %v4883 = vld [vmem:[%s3 + $0xc] sm:$0xf]
        %v4884 = vld [vmem:[%s3 + $0x10] sm:$0xf]
        %v4885 = vld [vmem:[%s3 + $0x14] sm:$0xf]
        %v4886 = vld [vmem:[%s3 + $0x18] sm:$0xf]
        %v4887 = vld [vmem:[%s3 + $0x1c] sm:$0xf]
        %v4888 = vld [vmem:[%s3 + $0x20] sm:$0xf]
        %v4889 = vld [vmem:[%s3 + $0x24] sm:$0xf]
        %v4890 = vld [vmem:[%s3 + $0x28] sm:$0xf]
        %v4891 = vld [vmem:[%s3 + $0x2c] sm:$0xf]
        %v4892 = vld [vmem:[%s3 + $0x30] sm:$0xf]
        %v4893 = vld [vmem:[%s3 + $0x34] sm:$0xf]
        %v4894 = vld [vmem:[%s3 + $0x38] sm:$0xf]
        %v4895 = vld [vmem:[%s3 + $0x3c] sm:$0xf]
        %v4896 = vld [vmem:[%s1129] sm:$0x1]
        %v4897 = vld [vmem:[%s1129 + $0x2] sm:$0x1]
        %v4898 = vld [vmem:[%s2417] sm:$0xf]
        %v4899 = vld [vmem:[%s2417 + $0x4] sm:$0xf]
        %v4900 = vld [vmem:[%s2417 + $0x8] sm:$0xf]
        %v4901 = vld [vmem:[%s2417 + $0xc] sm:$0xf]
        %v4902 = vld [vmem:[%s2417 + $0x10] sm:$0xf]
        %v4903 = vld [vmem:[%s2417 + $0x14] sm:$0xf]
        %v4904 = vld [vmem:[%s2417 + $0x18] sm:$0xf]
        %v4905 = vld [vmem:[%s2417 + $0x1c] sm:$0xf]
        %v4906 = vld [vmem:[%s2417 + $0x20] sm:$0xf]
        %v4907 = vld [vmem:[%s2417 + $0x24] sm:$0xf]
        %v4908 = vld [vmem:[%s2417 + $0x28] sm:$0xf]
        %v4909 = vld [vmem:[%s2417 + $0x2c] sm:$0xf]
        %v4910 = vld [vmem:[%s2417 + $0x30] sm:$0xf]
        %v4911 = vld [vmem:[%s2417 + $0x34] sm:$0xf]
        %v4912 = vld [vmem:[%s2417 + $0x38] sm:$0xf]
        %v4913 = vld [vmem:[%s2417 + $0x3c] sm:$0xf]
        %v4916 = vcombine.low %v4896, %v4897
        %v4918 = vunpack.c.l.s4 1966171168
        %v4919 = vunpack.c.0.s8 %v4918
        %v4920 = vlaneseq
        %v4921 = vshrl.u32 %v4920, 7
        %v4922 = vsub.s32 %v4919, %v4921
        %v4923 = vrot.slane %v4916, %v4922
        %v4925 = vunpack.c.l.s4 1966171168
        %v4926 = vunpack.c.0.s8 %v4925
        %v4927 = vlaneseq
        %v4928 = vshrl.u32 %v4927, 7
        %v4929 = vsub.s32 %v4926, %v4928
        %v4930 = vrot.slane %v4923, %v4929
        %v4948 = vunpack.c.l.b16 %v4898
        %v4949 = vunpack.c.l.b16 %v4899
        %v4950 = vunpack.c.l.b16 %v4900
        %v4951 = vunpack.c.l.b16 %v4901
        %v4952 = vunpack.c.l.b16 %v4902
        %v4953 = vunpack.c.l.b16 %v4903
        %v4954 = vunpack.c.l.b16 %v4904
        %v4955 = vunpack.c.l.b16 %v4905
        %v4956 = vunpack.c.l.b16 %v4906
        %v4957 = vunpack.c.l.b16 %v4907
        %v4958 = vunpack.c.l.b16 %v4908
        %v4959 = vunpack.c.l.b16 %v4909
        %v4960 = vunpack.c.l.b16 %v4910
        %v4961 = vunpack.c.l.b16 %v4911
        %v4962 = vunpack.c.l.b16 %v4912
        %v4963 = vunpack.c.l.b16 %v4913
        %v4964 = vpack.c.b16 %v4949, %v4948
        %v4965 = vpack.c.b16 %v4951, %v4950
        %v4966 = vpack.c.b16 %v4953, %v4952
        %v4967 = vpack.c.b16 %v4955, %v4954
        %v4968 = vpack.c.b16 %v4957, %v4956
        %v4969 = vpack.c.b16 %v4959, %v4958
        %v4970 = vpack.c.b16 %v4961, %v4960
        %v4971 = vpack.c.b16 %v4963, %v4962
        %4980 = vmatprep.subr.bf16.mxu0 0
        %4981 = vmatpush1.bf16.msra.mxu0 %v4964
        %4982 = vmatprep.subr.bf16.mxu0 0
        %4983 = vmatpush1.bf16.msra.mxu0 %v4965
        %4984 = vmatprep.subr.bf16.mxu0 0
        %4985 = vmatpush1.bf16.msra.mxu0 %v4966
        %4986 = vmatprep.subr.bf16.mxu0 0
        %4987 = vmatpush1.bf16.msra.mxu0 %v4967
        %4988 = vmatprep.subr.bf16.mxu0 0
        %4989 = vmatpush1.bf16.msra.mxu0 %v4968
        %4990 = vmatprep.subr.bf16.mxu0 0
        %4991 = vmatpush1.bf16.msra.mxu0 %v4969
        %4992 = vmatprep.subr.bf16.mxu0 0
        %4993 = vmatpush1.bf16.msra.mxu0 %v4970
        %4994 = vmatprep.subr.bf16.mxu0 0
        %4995 = vmatpush1.bf16.msra.mxu0 %v4971
        %4996 = vmatprep.subr.bf16.mxu0 0
        %4997 = vmatpush1.bf16.msra.mxu0 0
        %4998 = vmatprep.subr.bf16.mxu0 0
        %4999 = vmatpush1.bf16.msra.mxu0 0
        %5000 = vmatprep.subr.bf16.mxu0 0
        %5001 = vmatpush1.bf16.msra.mxu0 0
        %5002 = vmatprep.subr.bf16.mxu0 0
        %5003 = vmatpush1.bf16.msra.mxu0 0
        %5004 = vmatprep.subr.bf16.mxu0 0
        %5005 = vmatpush1.bf16.msra.mxu0 0
        %5006 = vmatprep.subr.bf16.mxu0 0
        %5007 = vmatpush1.bf16.msra.mxu0 0
        %5008 = vmatprep.subr.bf16.mxu0 0
        %5009 = vmatpush1.bf16.msra.mxu0 0
        %5010 = vmatprep.subr.bf16.mxu0 0
        %5011 = vmatpush1.bf16.msra.mxu0 0
        %5012 = vmatprep.mubr.bf16.mxu0 0
        %5013 = vmatmul.mubr.bf16.gmra.mrb[0].mxu0 %v4930
        %v5014 = vpop.f32.mrb[0].mxu0
        %v5015 = vadd.f32 0.0, %v5014
        %v5016 = vpop.f32.mrb[0].mxu0
        %v5017 = vpop.f32.mrb[0].mxu0
        %v5018 = vpop.f32.mrb[0].mxu0
        %5019 = vdwg.mxu0
        %v5022 = vcombine.low %v4878, %v4879
        %v5024 = vunpack.c.l.s4 1966171168
        %v5025 = vunpack.c.0.s8 %v5024
        %v5026 = vlaneseq
        %v5027 = vshrl.u32 %v5026, 7
        %v5028 = vsub.s32 %v5025, %v5027
        %v5029 = vrot.slane %v5022, %v5028
        %v5031 = vunpack.c.l.s4 1966171168
        %v5032 = vunpack.c.0.s8 %v5031
        %v5033 = vlaneseq
        %v5034 = vshrl.u32 %v5033, 7
        %v5035 = vsub.s32 %v5032, %v5034
        %v5036 = vrot.slane %v5029, %v5035
        %v5054 = vunpack.c.l.b16 %v4880
        %v5055 = vunpack.c.l.b16 %v4881
        %v5056 = vunpack.c.l.b16 %v4882
        %v5057 = vunpack.c.l.b16 %v4883
        %v5058 = vunpack.c.l.b16 %v4884
        %v5059 = vunpack.c.l.b16 %v4885
        %v5060 = vunpack.c.l.b16 %v4886
        %v5061 = vunpack.c.l.b16 %v4887
        %v5062 = vunpack.c.l.b16 %v4888
        %v5063 = vunpack.c.l.b16 %v4889
        %v5064 = vunpack.c.l.b16 %v4890
        %v5065 = vunpack.c.l.b16 %v4891
        %v5066 = vunpack.c.l.b16 %v4892
        %v5067 = vunpack.c.l.b16 %v4893
        %v5068 = vunpack.c.l.b16 %v4894
        %v5069 = vunpack.c.l.b16 %v4895
        %v5070 = vpack.c.b16 %v5055, %v5054
        %v5071 = vpack.c.b16 %v5057, %v5056
        %v5072 = vpack.c.b16 %v5059, %v5058
        %v5073 = vpack.c.b16 %v5061, %v5060
        %v5074 = vpack.c.b16 %v5063, %v5062
        %v5075 = vpack.c.b16 %v5065, %v5064
        %v5076 = vpack.c.b16 %v5067, %v5066
        %v5077 = vpack.c.b16 %v5069, %v5068
        %5086 = vmatprep.subr.bf16.mxu0 0
        %5087 = vmatpush1.bf16.msra.mxu0 %v5070
        %5088 = vmatprep.subr.bf16.mxu0 0
        %5089 = vmatpush1.bf16.msra.mxu0 %v5071
        %5090 = vmatprep.subr.bf16.mxu0 0
        %5091 = vmatpush1.bf16.msra.mxu0 %v5072
        %5092 = vmatprep.subr.bf16.mxu0 0
        %5093 = vmatpush1.bf16.msra.mxu0 %v5073
        %5094 = vmatprep.subr.bf16.mxu0 0
        %5095 = vmatpush1.bf16.msra.mxu0 %v5074
        %5096 = vmatprep.subr.bf16.mxu0 0
        %5097 = vmatpush1.bf16.msra.mxu0 %v5075
        %5098 = vmatprep.subr.bf16.mxu0 0
        %5099 = vmatpush1.bf16.msra.mxu0 %v5076
        %5100 = vmatprep.subr.bf16.mxu0 0
        %5101 = vmatpush1.bf16.msra.mxu0 %v5077
        %5102 = vmatprep.subr.bf16.mxu0 0
        %5103 = vmatpush1.bf16.msra.mxu0 0
        %5104 = vmatprep.subr.bf16.mxu0 0
        %5105 = vmatpush1.bf16.msra.mxu0 0
        %5106 = vmatprep.subr.bf16.mxu0 0
        %5107 = vmatpush1.bf16.msra.mxu0 0
        %5108 = vmatprep.subr.bf16.mxu0 0
        %5109 = vmatpush1.bf16.msra.mxu0 0
        %5110 = vmatprep.subr.bf16.mxu0 0
        %5111 = vmatpush1.bf16.msra.mxu0 0
        %5112 = vmatprep.subr.bf16.mxu0 0
        %5113 = vmatpush1.bf16.msra.mxu0 0
        %5114 = vmatprep.subr.bf16.mxu0 0
        %5115 = vmatpush1.bf16.msra.mxu0 0
        %5116 = vmatprep.subr.bf16.mxu0 0
        %5117 = vmatpush1.bf16.msra.mxu0 0
        %5118 = vmatprep.mubr.bf16.mxu0 0
        %5119 = vmatmul.mubr.bf16.gmra.mrb[0].mxu0 %v5036
        %v5120 = vpop.f32.mrb[0].mxu0
        %v5121 = vadd.f32 %v5015, %v5120
        %v5122 = vpop.f32.mrb[0].mxu0
        %v5123 = vpop.f32.mrb[0].mxu0
        %v5124 = vpop.f32.mrb[0].mxu0
        %5125 = vdwg.mxu0
        %v5126 = vld [vmem:[%s1237] sm:$0x1]
        %v5127 = vld [vmem:[%s1237 + $0x2] sm:$0x1]
        %v5128 = vld [vmem:[%s2649] sm:$0xf]
        %v5129 = vld [vmem:[%s2649 + $0x4] sm:$0xf]
        %v5130 = vld [vmem:[%s2649 + $0x8] sm:$0xf]
        %v5131 = vld [vmem:[%s2649 + $0xc] sm:$0xf]
        %v5132 = vld [vmem:[%s2649 + $0x10] sm:$0xf]
        %v5133 = vld [vmem:[%s2649 + $0x14] sm:$0xf]
        %v5134 = vld [vmem:[%s2649 + $0x18] sm:$0xf]
        %v5135 = vld [vmem:[%s2649 + $0x1c] sm:$0xf]
        %v5136 = vld [vmem:[%s2649 + $0x20] sm:$0xf]
        %v5137 = vld [vmem:[%s2649 + $0x24] sm:$0xf]
        %v5138 = vld [vmem:[%s2649 + $0x28] sm:$0xf]
        %v5139 = vld [vmem:[%s2649 + $0x2c] sm:$0xf]
        %v5140 = vld [vmem:[%s2649 + $0x30] sm:$0xf]
        %v5141 = vld [vmem:[%s2649 + $0x34] sm:$0xf]
        %v5142 = vld [vmem:[%s2649 + $0x38] sm:$0xf]
        %v5143 = vld [vmem:[%s2649 + $0x3c] sm:$0xf]
        %v5146 = vcombine.low %v5126, %v5127
        %v5148 = vunpack.c.l.s4 1966171168
        %v5149 = vunpack.c.0.s8 %v5148
        %v5150 = vlaneseq
        %v5151 = vshrl.u32 %v5150, 7
        %v5152 = vsub.s32 %v5149, %v5151
        %v5153 = vrot.slane %v5146, %v5152
        %v5155 = vunpack.c.l.s4 1966171168
        %v5156 = vunpack.c.0.s8 %v5155
        %v5157 = vlaneseq
        %v5158 = vshrl.u32 %v5157, 7
        %v5159 = vsub.s32 %v5156, %v5158
        %v5160 = vrot.slane %v5153, %v5159
        %v5178 = vunpack.c.l.b16 %v5128
        %v5179 = vunpack.c.l.b16 %v5129
        %v5180 = vunpack.c.l.b16 %v5130
        %v5181 = vunpack.c.l.b16 %v5131
        %v5182 = vunpack.c.l.b16 %v5132
        %v5183 = vunpack.c.l.b16 %v5133
        %v5184 = vunpack.c.l.b16 %v5134
        %v5185 = vunpack.c.l.b16 %v5135
        %v5186 = vunpack.c.l.b16 %v5136
        %v5187 = vunpack.c.l.b16 %v5137
        %v5188 = vunpack.c.l.b16 %v5138
        %v5189 = vunpack.c.l.b16 %v5139
        %v5190 = vunpack.c.l.b16 %v5140
        %v5191 = vunpack.c.l.b16 %v5141
        %v5192 = vunpack.c.l.b16 %v5142
        %v5193 = vunpack.c.l.b16 %v5143
        %v5194 = vpack.c.b16 %v5179, %v5178
        %v5195 = vpack.c.b16 %v5181, %v5180
        %v5196 = vpack.c.b16 %v5183, %v5182
        %v5197 = vpack.c.b16 %v5185, %v5184
        %v5198 = vpack.c.b16 %v5187, %v5186
        %v5199 = vpack.c.b16 %v5189, %v5188
        %v5200 = vpack.c.b16 %v5191, %v5190
        %v5201 = vpack.c.b16 %v5193, %v5192
        %5210 = vmatprep.subr.bf16.mxu0 0
        %5211 = vmatpush1.bf16.msra.mxu0 %v5194
        %5212 = vmatprep.subr.bf16.mxu0 0
        %5213 = vmatpush1.bf16.msra.mxu0 %v5195
        %5214 = vmatprep.subr.bf16.mxu0 0
        %5215 = vmatpush1.bf16.msra.mxu0 %v5196
        %5216 = vmatprep.subr.bf16.mxu0 0
        %5217 = vmatpush1.bf16.msra.mxu0 %v5197
        %5218 = vmatprep.subr.bf16.mxu0 0
        %5219 = vmatpush1.bf16.msra.mxu0 %v5198
        %5220 = vmatprep.subr.bf16.mxu0 0
        %5221 = vmatpush1.bf16.msra.mxu0 %v5199
        %5222 = vmatprep.subr.bf16.mxu0 0
        %5223 = vmatpush1.bf16.msra.mxu0 %v5200
        %5224 = vmatprep.subr.bf16.mxu0 0
        %5225 = vmatpush1.bf16.msra.mxu0 %v5201
        %5226 = vmatprep.subr.bf16.mxu0 0
        %5227 = vmatpush1.bf16.msra.mxu0 0
        %5228 = vmatprep.subr.bf16.mxu0 0
        %5229 = vmatpush1.bf16.msra.mxu0 0
        %5230 = vmatprep.subr.bf16.mxu0 0
        %5231 = vmatpush1.bf16.msra.mxu0 0
        %5232 = vmatprep.subr.bf16.mxu0 0
        %5233 = vmatpush1.bf16.msra.mxu0 0
        %5234 = vmatprep.subr.bf16.mxu0 0
        %5235 = vmatpush1.bf16.msra.mxu0 0
        %5236 = vmatprep.subr.bf16.mxu0 0
        %5237 = vmatpush1.bf16.msra.mxu0 0
        %5238 = vmatprep.subr.bf16.mxu0 0
        %5239 = vmatpush1.bf16.msra.mxu0 0
        %5240 = vmatprep.subr.bf16.mxu0 0
        %5241 = vmatpush1.bf16.msra.mxu0 0
        %5242 = vmatprep.mubr.bf16.mxu0 0
        %5243 = vmatmul.mubr.bf16.gmra.mrb[0].mxu0 %v5160
        %v5244 = vpop.f32.mrb[0].mxu0
        %v5245 = vadd.f32 0.0, %v5244
        %v5246 = vpop.f32.mrb[0].mxu0
        %v5247 = vpop.f32.mrb[0].mxu0
        %v5248 = vpop.f32.mrb[0].mxu0
        %5249 = vdwg.mxu0
        %v5250 = vadd.f32 %v5121, %v5245
        %v5251 = vld [vmem:[%s1933] sm:$0x1]
        %v5252 = vld [vmem:[%s1933 + $0x2] sm:$0x1]
        %v5253 = vld [vmem:[%s2775] sm:$0xf]
        %v5254 = vld [vmem:[%s2775 + $0x4] sm:$0xf]
        %v5255 = vld [vmem:[%s2775 + $0x8] sm:$0xf]
        %v5256 = vld [vmem:[%s2775 + $0xc] sm:$0xf]
        %v5257 = vld [vmem:[%s2775 + $0x10] sm:$0xf]
        %v5258 = vld [vmem:[%s2775 + $0x14] sm:$0xf]
        %v5259 = vld [vmem:[%s2775 + $0x18] sm:$0xf]
        %v5260 = vld [vmem:[%s2775 + $0x1c] sm:$0xf]
        %v5261 = vld [vmem:[%s2775 + $0x20] sm:$0xf]
        %v5262 = vld [vmem:[%s2775 + $0x24] sm:$0xf]
        %v5263 = vld [vmem:[%s2775 + $0x28] sm:$0xf]
        %v5264 = vld [vmem:[%s2775 + $0x2c] sm:$0xf]
        %v5265 = vld [vmem:[%s2775 + $0x30] sm:$0xf]
        %v5266 = vld [vmem:[%s2775 + $0x34] sm:$0xf]
        %v5267 = vld [vmem:[%s2775 + $0x38] sm:$0xf]
        %v5268 = vld [vmem:[%s2775 + $0x3c] sm:$0xf]
        %v5271 = vcombine.low %v5251, %v5252
        %v5273 = vunpack.c.l.s4 1966171168
        %v5274 = vunpack.c.0.s8 %v5273
        %v5275 = vlaneseq
        %v5276 = vshrl.u32 %v5275, 7
        %v5277 = vsub.s32 %v5274, %v5276
        %v5278 = vrot.slane %v5271, %v5277
        %v5280 = vunpack.c.l.s4 1966171168
        %v5281 = vunpack.c.0.s8 %v5280
        %v5282 = vlaneseq
        %v5283 = vshrl.u32 %v5282, 7
        %v5284 = vsub.s32 %v5281, %v5283
        %v5285 = vrot.slane %v5278, %v5284
        %v5303 = vunpack.c.l.b16 %v5253
        %v5304 = vunpack.c.l.b16 %v5254
        %v5305 = vunpack.c.l.b16 %v5255
        %v5306 = vunpack.c.l.b16 %v5256
        %v5307 = vunpack.c.l.b16 %v5257
        %v5308 = vunpack.c.l.b16 %v5258
        %v5309 = vunpack.c.l.b16 %v5259
        %v5310 = vunpack.c.l.b16 %v5260
        %v5311 = vunpack.c.l.b16 %v5261
        %v5312 = vunpack.c.l.b16 %v5262
        %v5313 = vunpack.c.l.b16 %v5263
        %v5314 = vunpack.c.l.b16 %v5264
        %v5315 = vunpack.c.l.b16 %v5265
        %v5316 = vunpack.c.l.b16 %v5266
        %v5317 = vunpack.c.l.b16 %v5267
        %v5318 = vunpack.c.l.b16 %v5268
        %v5319 = vpack.c.b16 %v5304, %v5303
        %v5320 = vpack.c.b16 %v5306, %v5305
        %v5321 = vpack.c.b16 %v5308, %v5307
        %v5322 = vpack.c.b16 %v5310, %v5309
        %v5323 = vpack.c.b16 %v5312, %v5311
        %v5324 = vpack.c.b16 %v5314, %v5313
        %v5325 = vpack.c.b16 %v5316, %v5315
        %v5326 = vpack.c.b16 %v5318, %v5317
        %5335 = vmatprep.subr.bf16.mxu0 0
        %5336 = vmatpush1.bf16.msra.mxu0 %v5319
        %5337 = vmatprep.subr.bf16.mxu0 0
        %5338 = vmatpush1.bf16.msra.mxu0 %v5320
        %5339 = vmatprep.subr.bf16.mxu0 0
        %5340 = vmatpush1.bf16.msra.mxu0 %v5321
        %5341 = vmatprep.subr.bf16.mxu0 0
        %5342 = vmatpush1.bf16.msra.mxu0 %v5322
        %5343 = vmatprep.subr.bf16.mxu0 0
        %5344 = vmatpush1.bf16.msra.mxu0 %v5323
        %5345 = vmatprep.subr.bf16.mxu0 0
        %5346 = vmatpush1.bf16.msra.mxu0 %v5324
        %5347 = vmatprep.subr.bf16.mxu0 0
        %5348 = vmatpush1.bf16.msra.mxu0 %v5325
        %5349 = vmatprep.subr.bf16.mxu0 0
        %5350 = vmatpush1.bf16.msra.mxu0 %v5326
        %5351 = vmatprep.subr.bf16.mxu0 0
        %5352 = vmatpush1.bf16.msra.mxu0 0
        %5353 = vmatprep.subr.bf16.mxu0 0
        %5354 = vmatpush1.bf16.msra.mxu0 0
        %5355 = vmatprep.subr.bf16.mxu0 0
        %5356 = vmatpush1.bf16.msra.mxu0 0
        %5357 = vmatprep.subr.bf16.mxu0 0
        %5358 = vmatpush1.bf16.msra.mxu0 0
        %5359 = vmatprep.subr.bf16.mxu0 0
        %5360 = vmatpush1.bf16.msra.mxu0 0
        %5361 = vmatprep.subr.bf16.mxu0 0
        %5362 = vmatpush1.bf16.msra.mxu0 0
        %5363 = vmatprep.subr.bf16.mxu0 0
        %5364 = vmatpush1.bf16.msra.mxu0 0
        %5365 = vmatprep.subr.bf16.mxu0 0
        %5366 = vmatpush1.bf16.msra.mxu0 0
        %5367 = vmatprep.mubr.bf16.mxu0 0
        %5368 = vmatmul.mubr.bf16.gmra.mrb[0].mxu0 %v5285
        %v5369 = vpop.f32.mrb[0].mxu0
        %v5370 = vadd.f32 0.0, %v5369
        %v5371 = vpop.f32.mrb[0].mxu0
        %v5372 = vpop.f32.mrb[0].mxu0
        %v5373 = vpop.f32.mrb[0].mxu0
        %5374 = vdwg.mxu0
        %v5375 = vadd.f32 %v5250, %v5370
        %v5376 = vld [vmem:[%s1585] sm:$0x1]
        %v5377 = vld [vmem:[%s1585 + $0x2] sm:$0x1]
        %v5378 = vld [vmem:[%s2901] sm:$0xf]
        %v5379 = vld [vmem:[%s2901 + $0x4] sm:$0xf]
        %v5380 = vld [vmem:[%s2901 + $0x8] sm:$0xf]
        %v5381 = vld [vmem:[%s2901 + $0xc] sm:$0xf]
        %v5382 = vld [vmem:[%s2901 + $0x10] sm:$0xf]
        %v5383 = vld [vmem:[%s2901 + $0x14] sm:$0xf]
        %v5384 = vld [vmem:[%s2901 + $0x18] sm:$0xf]
        %v5385 = vld [vmem:[%s2901 + $0x1c] sm:$0xf]
        %v5386 = vld [vmem:[%s2901 + $0x20] sm:$0xf]
        %v5387 = vld [vmem:[%s2901 + $0x24] sm:$0xf]
        %v5388 = vld [vmem:[%s2901 + $0x28] sm:$0xf]
        %v5389 = vld [vmem:[%s2901 + $0x2c] sm:$0xf]
        %v5390 = vld [vmem:[%s2901 + $0x30] sm:$0xf]
        %v5391 = vld [vmem:[%s2901 + $0x34] sm:$0xf]
        %v5392 = vld [vmem:[%s2901 + $0x38] sm:$0xf]
        %v5393 = vld [vmem:[%s2901 + $0x3c] sm:$0xf]
        %v5396 = vcombine.low %v5376, %v5377
        %v5398 = vunpack.c.l.s4 1966171168
        %v5399 = vunpack.c.0.s8 %v5398
        %v5400 = vlaneseq
        %v5401 = vshrl.u32 %v5400, 7
        %v5402 = vsub.s32 %v5399, %v5401
        %v5403 = vrot.slane %v5396, %v5402
        %v5405 = vunpack.c.l.s4 1966171168
        %v5406 = vunpack.c.0.s8 %v5405
        %v5407 = vlaneseq
        %v5408 = vshrl.u32 %v5407, 7
        %v5409 = vsub.s32 %v5406, %v5408
        %v5410 = vrot.slane %v5403, %v5409
        %v5428 = vunpack.c.l.b16 %v5378
        %v5429 = vunpack.c.l.b16 %v5379
        %v5430 = vunpack.c.l.b16 %v5380
        %v5431 = vunpack.c.l.b16 %v5381
        %v5432 = vunpack.c.l.b16 %v5382
        %v5433 = vunpack.c.l.b16 %v5383
        %v5434 = vunpack.c.l.b16 %v5384
        %v5435 = vunpack.c.l.b16 %v5385
        %v5436 = vunpack.c.l.b16 %v5386
        %v5437 = vunpack.c.l.b16 %v5387
        %v5438 = vunpack.c.l.b16 %v5388
        %v5439 = vunpack.c.l.b16 %v5389
        %v5440 = vunpack.c.l.b16 %v5390
        %v5441 = vunpack.c.l.b16 %v5391
        %v5442 = vunpack.c.l.b16 %v5392
        %v5443 = vunpack.c.l.b16 %v5393
        %v5444 = vpack.c.b16 %v5429, %v5428
        %v5445 = vpack.c.b16 %v5431, %v5430
        %v5446 = vpack.c.b16 %v5433, %v5432
        %v5447 = vpack.c.b16 %v5435, %v5434
        %v5448 = vpack.c.b16 %v5437, %v5436
        %v5449 = vpack.c.b16 %v5439, %v5438
        %v5450 = vpack.c.b16 %v5441, %v5440
        %v5451 = vpack.c.b16 %v5443, %v5442
        %5460 = vmatprep.subr.bf16.mxu0 0
        %5461 = vmatpush1.bf16.msra.mxu0 %v5444
        %5462 = vmatprep.subr.bf16.mxu0 0
        %5463 = vmatpush1.bf16.msra.mxu0 %v5445
        %5464 = vmatprep.subr.bf16.mxu0 0
        %5465 = vmatpush1.bf16.msra.mxu0 %v5446
        %5466 = vmatprep.subr.bf16.mxu0 0
        %5467 = vmatpush1.bf16.msra.mxu0 %v5447
        %5468 = vmatprep.subr.bf16.mxu0 0
        %5469 = vmatpush1.bf16.msra.mxu0 %v5448
        %5470 = vmatprep.subr.bf16.mxu0 0
        %5471 = vmatpush1.bf16.msra.mxu0 %v5449
        %5472 = vmatprep.subr.bf16.mxu0 0
        %5473 = vmatpush1.bf16.msra.mxu0 %v5450
        %5474 = vmatprep.subr.bf16.mxu0 0
        %5475 = vmatpush1.bf16.msra.mxu0 %v5451
        %5476 = vmatprep.subr.bf16.mxu0 0
        %5477 = vmatpush1.bf16.msra.mxu0 0
        %5478 = vmatprep.subr.bf16.mxu0 0
        %5479 = vmatpush1.bf16.msra.mxu0 0
        %5480 = vmatprep.subr.bf16.mxu0 0
        %5481 = vmatpush1.bf16.msra.mxu0 0
        %5482 = vmatprep.subr.bf16.mxu0 0
        %5483 = vmatpush1.bf16.msra.mxu0 0
        %5484 = vmatprep.subr.bf16.mxu0 0
        %5485 = vmatpush1.bf16.msra.mxu0 0
        %5486 = vmatprep.subr.bf16.mxu0 0
        %5487 = vmatpush1.bf16.msra.mxu0 0
        %5488 = vmatprep.subr.bf16.mxu0 0
        %5489 = vmatpush1.bf16.msra.mxu0 0
        %5490 = vmatprep.subr.bf16.mxu0 0
        %5491 = vmatpush1.bf16.msra.mxu0 0
        %5492 = vmatprep.mubr.bf16.mxu0 0
        %5493 = vmatmul.mubr.bf16.gmra.mrb[0].mxu0 %v5410
        %v5494 = vpop.f32.mrb[0].mxu0
        %v5495 = vadd.f32 0.0, %v5494
        %v5496 = vpop.f32.mrb[0].mxu0
        %v5497 = vpop.f32.mrb[0].mxu0
        %v5498 = vpop.f32.mrb[0].mxu0
        %5499 = vdwg.mxu0
        %v5500 = vadd.f32 %v5375, %v5495
        %v5501 = vld [vmem:[%s1693] sm:$0x1]
        %v5502 = vld [vmem:[%s1693 + $0x2] sm:$0x1]
        %v5503 = vld [vmem:[%s3027] sm:$0xf]
        %v5504 = vld [vmem:[%s3027 + $0x4] sm:$0xf]
        %v5505 = vld [vmem:[%s3027 + $0x8] sm:$0xf]
        %v5506 = vld [vmem:[%s3027 + $0xc] sm:$0xf]
        %v5507 = vld [vmem:[%s3027 + $0x10] sm:$0xf]
        %v5508 = vld [vmem:[%s3027 + $0x14] sm:$0xf]
        %v5509 = vld [vmem:[%s3027 + $0x18] sm:$0xf]
        %v5510 = vld [vmem:[%s3027 + $0x1c] sm:$0xf]
        %v5511 = vld [vmem:[%s3027 + $0x20] sm:$0xf]
        %v5512 = vld [vmem:[%s3027 + $0x24] sm:$0xf]
        %v5513 = vld [vmem:[%s3027 + $0x28] sm:$0xf]
        %v5514 = vld [vmem:[%s3027 + $0x2c] sm:$0xf]
        %v5515 = vld [vmem:[%s3027 + $0x30] sm:$0xf]
        %v5516 = vld [vmem:[%s3027 + $0x34] sm:$0xf]
        %v5517 = vld [vmem:[%s3027 + $0x38] sm:$0xf]
        %v5518 = vld [vmem:[%s3027 + $0x3c] sm:$0xf]
        %v5521 = vcombine.low %v5501, %v5502
        %v5523 = vunpack.c.l.s4 1966171168
        %v5524 = vunpack.c.0.s8 %v5523
        %v5525 = vlaneseq
        %v5526 = vshrl.u32 %v5525, 7
        %v5527 = vsub.s32 %v5524, %v5526
        %v5528 = vrot.slane %v5521, %v5527
        %v5530 = vunpack.c.l.s4 1966171168
        %v5531 = vunpack.c.0.s8 %v5530
        %v5532 = vlaneseq
        %v5533 = vshrl.u32 %v5532, 7
        %v5534 = vsub.s32 %v5531, %v5533
        %v5535 = vrot.slane %v5528, %v5534
        %v5553 = vunpack.c.l.b16 %v5503
        %v5554 = vunpack.c.l.b16 %v5504
        %v5555 = vunpack.c.l.b16 %v5505
        %v5556 = vunpack.c.l.b16 %v5506
        %v5557 = vunpack.c.l.b16 %v5507
        %v5558 = vunpack.c.l.b16 %v5508
        %v5559 = vunpack.c.l.b16 %v5509
        %v5560 = vunpack.c.l.b16 %v5510
        %v5561 = vunpack.c.l.b16 %v5511
        %v5562 = vunpack.c.l.b16 %v5512
        %v5563 = vunpack.c.l.b16 %v5513
        %v5564 = vunpack.c.l.b16 %v5514
        %v5565 = vunpack.c.l.b16 %v5515
        %v5566 = vunpack.c.l.b16 %v5516
        %v5567 = vunpack.c.l.b16 %v5517
        %v5568 = vunpack.c.l.b16 %v5518
        %v5569 = vpack.c.b16 %v5554, %v5553
        %v5570 = vpack.c.b16 %v5556, %v5555
        %v5571 = vpack.c.b16 %v5558, %v5557
        %v5572 = vpack.c.b16 %v5560, %v5559
        %v5573 = vpack.c.b16 %v5562, %v5561
        %v5574 = vpack.c.b16 %v5564, %v5563
        %v5575 = vpack.c.b16 %v5566, %v5565
        %v5576 = vpack.c.b16 %v5568, %v5567
        %5585 = vmatprep.subr.bf16.mxu0 0
        %5586 = vmatpush1.bf16.msra.mxu0 %v5569
        %5587 = vmatprep.subr.bf16.mxu0 0
        %5588 = vmatpush1.bf16.msra.mxu0 %v5570
        %5589 = vmatprep.subr.bf16.mxu0 0
        %5590 = vmatpush1.bf16.msra.mxu0 %v5571
        %5591 = vmatprep.subr.bf16.mxu0 0
        %5592 = vmatpush1.bf16.msra.mxu0 %v5572
        %5593 = vmatprep.subr.bf16.mxu0 0
        %5594 = vmatpush1.bf16.msra.mxu0 %v5573
        %5595 = vmatprep.subr.bf16.mxu0 0
        %5596 = vmatpush1.bf16.msra.mxu0 %v5574
        %5597 = vmatprep.subr.bf16.mxu0 0
        %5598 = vmatpush1.bf16.msra.mxu0 %v5575
        %5599 = vmatprep.subr.bf16.mxu0 0
        %5600 = vmatpush1.bf16.msra.mxu0 %v5576
        %5601 = vmatprep.subr.bf16.mxu0 0
        %5602 = vmatpush1.bf16.msra.mxu0 0
        %5603 = vmatprep.subr.bf16.mxu0 0
        %5604 = vmatpush1.bf16.msra.mxu0 0
        %5605 = vmatprep.subr.bf16.mxu0 0
        %5606 = vmatpush1.bf16.msra.mxu0 0
        %5607 = vmatprep.subr.bf16.mxu0 0
        %5608 = vmatpush1.bf16.msra.mxu0 0
        %5609 = vmatprep.subr.bf16.mxu0 0
        %5610 = vmatpush1.bf16.msra.mxu0 0
        %5611 = vmatprep.subr.bf16.mxu0 0
        %5612 = vmatpush1.bf16.msra.mxu0 0
        %5613 = vmatprep.subr.bf16.mxu0 0
        %5614 = vmatpush1.bf16.msra.mxu0 0
        %5615 = vmatprep.subr.bf16.mxu0 0
        %5616 = vmatpush1.bf16.msra.mxu0 0
        %5617 = vmatprep.mubr.bf16.mxu0 0
        %5618 = vmatmul.mubr.bf16.gmra.mrb[0].mxu0 %v5535
        %v5619 = vpop.f32.mrb[0].mxu0
        %v5620 = vadd.f32 0.0, %v5619
        %v5621 = vpop.f32.mrb[0].mxu0
        %v5622 = vpop.f32.mrb[0].mxu0
        %v5623 = vpop.f32.mrb[0].mxu0
        %5624 = vdwg.mxu0
        %v5625 = vadd.f32 %v5500, %v5620
        %v5626 = vld [vmem:[%s2389] sm:$0x1]
        %v5627 = vld [vmem:[%s2389 + $0x2] sm:$0x1]
        %v5628 = vld [vmem:[%s3153] sm:$0xf]
        %v5629 = vld [vmem:[%s3153 + $0x4] sm:$0xf]
        %v5630 = vld [vmem:[%s3153 + $0x8] sm:$0xf]
        %v5631 = vld [vmem:[%s3153 + $0xc] sm:$0xf]
        %v5632 = vld [vmem:[%s3153 + $0x10] sm:$0xf]
        %v5633 = vld [vmem:[%s3153 + $0x14] sm:$0xf]
        %v5634 = vld [vmem:[%s3153 + $0x18] sm:$0xf]
        %v5635 = vld [vmem:[%s3153 + $0x1c] sm:$0xf]
        %v5636 = vld [vmem:[%s3153 + $0x20] sm:$0xf]
        %v5637 = vld [vmem:[%s3153 + $0x24] sm:$0xf]
        %v5638 = vld [vmem:[%s3153 + $0x28] sm:$0xf]
        %v5639 = vld [vmem:[%s3153 + $0x2c] sm:$0xf]
        %v5640 = vld [vmem:[%s3153 + $0x30] sm:$0xf]
        %v5641 = vld [vmem:[%s3153 + $0x34] sm:$0xf]
        %v5642 = vld [vmem:[%s3153 + $0x38] sm:$0xf]
        %v5643 = vld [vmem:[%s3153 + $0x3c] sm:$0xf]
        %v5646 = vcombine.low %v5626, %v5627
        %v5648 = vunpack.c.l.s4 1966171168
        %v5649 = vunpack.c.0.s8 %v5648
        %v5650 = vlaneseq
        %v5651 = vshrl.u32 %v5650, 7
        %v5652 = vsub.s32 %v5649, %v5651
        %v5653 = vrot.slane %v5646, %v5652
        %v5655 = vunpack.c.l.s4 1966171168
        %v5656 = vunpack.c.0.s8 %v5655
        %v5657 = vlaneseq
        %v5658 = vshrl.u32 %v5657, 7
        %v5659 = vsub.s32 %v5656, %v5658
        %v5660 = vrot.slane %v5653, %v5659
        %v5678 = vunpack.c.l.b16 %v5628
        %v5679 = vunpack.c.l.b16 %v5629
        %v5680 = vunpack.c.l.b16 %v5630
        %v5681 = vunpack.c.l.b16 %v5631
        %v5682 = vunpack.c.l.b16 %v5632
        %v5683 = vunpack.c.l.b16 %v5633
        %v5684 = vunpack.c.l.b16 %v5634
        %v5685 = vunpack.c.l.b16 %v5635
        %v5686 = vunpack.c.l.b16 %v5636
        %v5687 = vunpack.c.l.b16 %v5637
        %v5688 = vunpack.c.l.b16 %v5638
        %v5689 = vunpack.c.l.b16 %v5639
        %v5690 = vunpack.c.l.b16 %v5640
        %v5691 = vunpack.c.l.b16 %v5641
        %v5692 = vunpack.c.l.b16 %v5642
        %v5693 = vunpack.c.l.b16 %v5643
        %v5694 = vpack.c.b16 %v5679, %v5678
        %v5695 = vpack.c.b16 %v5681, %v5680
        %v5696 = vpack.c.b16 %v5683, %v5682
        %v5697 = vpack.c.b16 %v5685, %v5684
        %v5698 = vpack.c.b16 %v5687, %v5686
        %v5699 = vpack.c.b16 %v5689, %v5688
        %v5700 = vpack.c.b16 %v5691, %v5690
        %v5701 = vpack.c.b16 %v5693, %v5692
        %5710 = vmatprep.subr.bf16.mxu0 0
        %5711 = vmatpush1.bf16.msra.mxu0 %v5694
        %5712 = vmatprep.subr.bf16.mxu0 0
        %5713 = vmatpush1.bf16.msra.mxu0 %v5695
        %5714 = vmatprep.subr.bf16.mxu0 0
        %5715 = vmatpush1.bf16.msra.mxu0 %v5696
        %5716 = vmatprep.subr.bf16.mxu0 0
        %5717 = vmatpush1.bf16.msra.mxu0 %v5697
        %5718 = vmatprep.subr.bf16.mxu0 0
        %5719 = vmatpush1.bf16.msra.mxu0 %v5698
        %5720 = vmatprep.subr.bf16.mxu0 0
        %5721 = vmatpush1.bf16.msra.mxu0 %v5699
        %5722 = vmatprep.subr.bf16.mxu0 0
        %5723 = vmatpush1.bf16.msra.mxu0 %v5700
        %5724 = vmatprep.subr.bf16.mxu0 0
        %5725 = vmatpush1.bf16.msra.mxu0 %v5701
        %5726 = vmatprep.subr.bf16.mxu0 0
        %5727 = vmatpush1.bf16.msra.mxu0 0
        %5728 = vmatprep.subr.bf16.mxu0 0
        %5729 = vmatpush1.bf16.msra.mxu0 0
        %5730 = vmatprep.subr.bf16.mxu0 0
        %5731 = vmatpush1.bf16.msra.mxu0 0
        %5732 = vmatprep.subr.bf16.mxu0 0
        %5733 = vmatpush1.bf16.msra.mxu0 0
        %5734 = vmatprep.subr.bf16.mxu0 0
        %5735 = vmatpush1.bf16.msra.mxu0 0
        %5736 = vmatprep.subr.bf16.mxu0 0
        %5737 = vmatpush1.bf16.msra.mxu0 0
        %5738 = vmatprep.subr.bf16.mxu0 0
        %5739 = vmatpush1.bf16.msra.mxu0 0
        %5740 = vmatprep.subr.bf16.mxu0 0
        %5741 = vmatpush1.bf16.msra.mxu0 0
        %5742 = vmatprep.mubr.bf16.mxu0 0
        %5743 = vmatmul.mubr.bf16.gmra.mrb[0].mxu0 %v5660
        %v5744 = vpop.f32.mrb[0].mxu0
        %v5745 = vadd.f32 0.0, %v5744
        %v5746 = vpop.f32.mrb[0].mxu0
        %v5747 = vpop.f32.mrb[0].mxu0
        %v5748 = vpop.f32.mrb[0].mxu0
        %5749 = vdwg.mxu0
        %v5750 = vadd.f32 %v5625, %v5745
        %v5751 = vld [vmem:[%s2041] sm:$0x1]
        %v5752 = vld [vmem:[%s2041 + $0x2] sm:$0x1]
        %v5753 = vld [vmem:[%s3279] sm:$0xf]
        %v5754 = vld [vmem:[%s3279 + $0x4] sm:$0xf]
        %v5755 = vld [vmem:[%s3279 + $0x8] sm:$0xf]
        %v5756 = vld [vmem:[%s3279 + $0xc] sm:$0xf]
        %v5757 = vld [vmem:[%s3279 + $0x10] sm:$0xf]
        %v5758 = vld [vmem:[%s3279 + $0x14] sm:$0xf]
        %v5759 = vld [vmem:[%s3279 + $0x18] sm:$0xf]
        %v5760 = vld [vmem:[%s3279 + $0x1c] sm:$0xf]
        %v5761 = vld [vmem:[%s3279 + $0x20] sm:$0xf]
        %v5762 = vld [vmem:[%s3279 + $0x24] sm:$0xf]
        %v5763 = vld [vmem:[%s3279 + $0x28] sm:$0xf]
        %v5764 = vld [vmem:[%s3279 + $0x2c] sm:$0xf]
        %v5765 = vld [vmem:[%s3279 + $0x30] sm:$0xf]
        %v5766 = vld [vmem:[%s3279 + $0x34] sm:$0xf]
        %v5767 = vld [vmem:[%s3279 + $0x38] sm:$0xf]
        %v5768 = vld [vmem:[%s3279 + $0x3c] sm:$0xf]
        %v5771 = vcombine.low %v5751, %v5752
        %v5773 = vunpack.c.l.s4 1966171168
        %v5774 = vunpack.c.0.s8 %v5773
        %v5775 = vlaneseq
        %v5776 = vshrl.u32 %v5775, 7
        %v5777 = vsub.s32 %v5774, %v5776
        %v5778 = vrot.slane %v5771, %v5777
        %v5780 = vunpack.c.l.s4 1966171168
        %v5781 = vunpack.c.0.s8 %v5780
        %v5782 = vlaneseq
        %v5783 = vshrl.u32 %v5782, 7
        %v5784 = vsub.s32 %v5781, %v5783
        %v5785 = vrot.slane %v5778, %v5784
        %v5803 = vunpack.c.l.b16 %v5753
        %v5804 = vunpack.c.l.b16 %v5754
        %v5805 = vunpack.c.l.b16 %v5755
        %v5806 = vunpack.c.l.b16 %v5756
        %v5807 = vunpack.c.l.b16 %v5757
        %v5808 = vunpack.c.l.b16 %v5758
        %v5809 = vunpack.c.l.b16 %v5759
        %v5810 = vunpack.c.l.b16 %v5760
        %v5811 = vunpack.c.l.b16 %v5761
        %v5812 = vunpack.c.l.b16 %v5762
        %v5813 = vunpack.c.l.b16 %v5763
        %v5814 = vunpack.c.l.b16 %v5764
        %v5815 = vunpack.c.l.b16 %v5765
        %v5816 = vunpack.c.l.b16 %v5766
        %v5817 = vunpack.c.l.b16 %v5767
        %v5818 = vunpack.c.l.b16 %v5768
        %v5819 = vpack.c.b16 %v5804, %v5803
        %v5820 = vpack.c.b16 %v5806, %v5805
        %v5821 = vpack.c.b16 %v5808, %v5807
        %v5822 = vpack.c.b16 %v5810, %v5809
        %v5823 = vpack.c.b16 %v5812, %v5811
        %v5824 = vpack.c.b16 %v5814, %v5813
        %v5825 = vpack.c.b16 %v5816, %v5815
        %v5826 = vpack.c.b16 %v5818, %v5817
        %5835 = vmatprep.subr.bf16.mxu0 0
        %5836 = vmatpush1.bf16.msra.mxu0 %v5819
        %5837 = vmatprep.subr.bf16.mxu0 0
        %5838 = vmatpush1.bf16.msra.mxu0 %v5820
        %5839 = vmatprep.subr.bf16.mxu0 0
        %5840 = vmatpush1.bf16.msra.mxu0 %v5821
        %5841 = vmatprep.subr.bf16.mxu0 0
        %5842 = vmatpush1.bf16.msra.mxu0 %v5822
        %5843 = vmatprep.subr.bf16.mxu0 0
        %5844 = vmatpush1.bf16.msra.mxu0 %v5823
        %5845 = vmatprep.subr.bf16.mxu0 0
        %5846 = vmatpush1.bf16.msra.mxu0 %v5824
        %5847 = vmatprep.subr.bf16.mxu0 0
        %5848 = vmatpush1.bf16.msra.mxu0 %v5825
        %5849 = vmatprep.subr.bf16.mxu0 0
        %5850 = vmatpush1.bf16.msra.mxu0 %v5826
        %5851 = vmatprep.subr.bf16.mxu0 0
        %5852 = vmatpush1.bf16.msra.mxu0 0
        %5853 = vmatprep.subr.bf16.mxu0 0
        %5854 = vmatpush1.bf16.msra.mxu0 0
        %5855 = vmatprep.subr.bf16.mxu0 0
        %5856 = vmatpush1.bf16.msra.mxu0 0
        %5857 = vmatprep.subr.bf16.mxu0 0
        %5858 = vmatpush1.bf16.msra.mxu0 0
        %5859 = vmatprep.subr.bf16.mxu0 0
        %5860 = vmatpush1.bf16.msra.mxu0 0
        %5861 = vmatprep.subr.bf16.mxu0 0
        %5862 = vmatpush1.bf16.msra.mxu0 0
        %5863 = vmatprep.subr.bf16.mxu0 0
        %5864 = vmatpush1.bf16.msra.mxu0 0
        %5865 = vmatprep.subr.bf16.mxu0 0
        %5866 = vmatpush1.bf16.msra.mxu0 0
        %5867 = vmatprep.mubr.bf16.mxu0 0
        %5868 = vmatmul.mubr.bf16.gmra.mrb[0].mxu0 %v5785
        %v5869 = vpop.f32.mrb[0].mxu0
        %v5870 = vadd.f32 0.0, %v5869
        %v5871 = vpop.f32.mrb[0].mxu0
        %v5872 = vpop.f32.mrb[0].mxu0
        %v5873 = vpop.f32.mrb[0].mxu0
        %5874 = vdwg.mxu0
        %v5875 = vadd.f32 %v5750, %v5870
        %v5876 = vld [vmem:[%s2149] sm:$0x1]
        %v5877 = vld [vmem:[%s2149 + $0x2] sm:$0x1]
        %v5878 = vld [vmem:[%s3405] sm:$0xf]
        %v5879 = vld [vmem:[%s3405 + $0x4] sm:$0xf]
        %v5880 = vld [vmem:[%s3405 + $0x8] sm:$0xf]
        %v5881 = vld [vmem:[%s3405 + $0xc] sm:$0xf]
        %v5882 = vld [vmem:[%s3405 + $0x10] sm:$0xf]
        %v5883 = vld [vmem:[%s3405 + $0x14] sm:$0xf]
        %v5884 = vld [vmem:[%s3405 + $0x18] sm:$0xf]
        %v5885 = vld [vmem:[%s3405 + $0x1c] sm:$0xf]
        %v5886 = vld [vmem:[%s3405 + $0x20] sm:$0xf]
        %v5887 = vld [vmem:[%s3405 + $0x24] sm:$0xf]
        %v5888 = vld [vmem:[%s3405 + $0x28] sm:$0xf]
        %v5889 = vld [vmem:[%s3405 + $0x2c] sm:$0xf]
        %v5890 = vld [vmem:[%s3405 + $0x30] sm:$0xf]
        %v5891 = vld [vmem:[%s3405 + $0x34] sm:$0xf]
        %v5892 = vld [vmem:[%s3405 + $0x38] sm:$0xf]
        %v5893 = vld [vmem:[%s3405 + $0x3c] sm:$0xf]
        %v5896 = vcombine.low %v5876, %v5877
        %v5898 = vunpack.c.l.s4 1966171168
        %v5899 = vunpack.c.0.s8 %v5898
        %v5900 = vlaneseq
        %v5901 = vshrl.u32 %v5900, 7
        %v5902 = vsub.s32 %v5899, %v5901
        %v5903 = vrot.slane %v5896, %v5902
        %v5905 = vunpack.c.l.s4 1966171168
        %v5906 = vunpack.c.0.s8 %v5905
        %v5907 = vlaneseq
        %v5908 = vshrl.u32 %v5907, 7
        %v5909 = vsub.s32 %v5906, %v5908
        %v5910 = vrot.slane %v5903, %v5909
        %v5928 = vunpack.c.l.b16 %v5878
        %v5929 = vunpack.c.l.b16 %v5879
        %v5930 = vunpack.c.l.b16 %v5880
        %v5931 = vunpack.c.l.b16 %v5881
        %v5932 = vunpack.c.l.b16 %v5882
        %v5933 = vunpack.c.l.b16 %v5883
        %v5934 = vunpack.c.l.b16 %v5884
        %v5935 = vunpack.c.l.b16 %v5885
        %v5936 = vunpack.c.l.b16 %v5886
        %v5937 = vunpack.c.l.b16 %v5887
        %v5938 = vunpack.c.l.b16 %v5888
        %v5939 = vunpack.c.l.b16 %v5889
        %v5940 = vunpack.c.l.b16 %v5890
        %v5941 = vunpack.c.l.b16 %v5891
        %v5942 = vunpack.c.l.b16 %v5892
        %v5943 = vunpack.c.l.b16 %v5893
        %v5944 = vpack.c.b16 %v5929, %v5928
        %v5945 = vpack.c.b16 %v5931, %v5930
        %v5946 = vpack.c.b16 %v5933, %v5932
        %v5947 = vpack.c.b16 %v5935, %v5934
        %v5948 = vpack.c.b16 %v5937, %v5936
        %v5949 = vpack.c.b16 %v5939, %v5938
        %v5950 = vpack.c.b16 %v5941, %v5940
        %v5951 = vpack.c.b16 %v5943, %v5942
        %5960 = vmatprep.subr.bf16.mxu0 0
        %5961 = vmatpush1.bf16.msra.mxu0 %v5944
        %5962 = vmatprep.subr.bf16.mxu0 0
        %5963 = vmatpush1.bf16.msra.mxu0 %v5945
        %5964 = vmatprep.subr.bf16.mxu0 0
        %5965 = vmatpush1.bf16.msra.mxu0 %v5946
        %5966 = vmatprep.subr.bf16.mxu0 0
        %5967 = vmatpush1.bf16.msra.mxu0 %v5947
        %5968 = vmatprep.subr.bf16.mxu0 0
        %5969 = vmatpush1.bf16.msra.mxu0 %v5948
        %5970 = vmatprep.subr.bf16.mxu0 0
        %5971 = vmatpush1.bf16.msra.mxu0 %v5949
        %5972 = vmatprep.subr.bf16.mxu0 0
        %5973 = vmatpush1.bf16.msra.mxu0 %v5950
        %5974 = vmatprep.subr.bf16.mxu0 0
        %5975 = vmatpush1.bf16.msra.mxu0 %v5951
        %5976 = vmatprep.subr.bf16.mxu0 0
        %5977 = vmatpush1.bf16.msra.mxu0 0
        %5978 = vmatprep.subr.bf16.mxu0 0
        %5979 = vmatpush1.bf16.msra.mxu0 0
        %5980 = vmatprep.subr.bf16.mxu0 0
        %5981 = vmatpush1.bf16.msra.mxu0 0
        %5982 = vmatprep.subr.bf16.mxu0 0
        %5983 = vmatpush1.bf16.msra.mxu0 0
        %5984 = vmatprep.subr.bf16.mxu0 0
        %5985 = vmatpush1.bf16.msra.mxu0 0
        %5986 = vmatprep.subr.bf16.mxu0 0
        %5987 = vmatpush1.bf16.msra.mxu0 0
        %5988 = vmatprep.subr.bf16.mxu0 0
        %5989 = vmatpush1.bf16.msra.mxu0 0
        %5990 = vmatprep.subr.bf16.mxu0 0
        %5991 = vmatpush1.bf16.msra.mxu0 0
        %5992 = vmatprep.mubr.bf16.mxu0 0
        %5993 = vmatmul.mubr.bf16.gmra.mrb[0].mxu0 %v5910
        %v5994 = vpop.f32.mrb[0].mxu0
        %v5995 = vadd.f32 0.0, %v5994
        %v5996 = vpop.f32.mrb[0].mxu0
        %v5997 = vpop.f32.mrb[0].mxu0
        %v5998 = vpop.f32.mrb[0].mxu0
        %5999 = vdwg.mxu0
        %v6000 = vadd.f32 %v5875, %v5995
        %v6001 = vld [vmem:[%s4] sm:$0x1]
        %v6003 = vlaneseq
        %v6004 = vshrl.u32 %v6003, 7
        %v6005 = vsub.s32 0, %v6004
        %v6006 = vrot.slane %v6001, %v6005
        %v6008 = vadd.f32 %v6000, %v6006
        %v6009 = vmax.f32 %v6008, 0.0
        %v6010 = vpack.c.bf16 %v6009, %v6009
        %v6013 = vunpack.c.l.s4 1966171168
        %v6014 = vunpack.c.0.s8 %v6013
        %v6015 = vlaneseq
        %v6016 = vshrl.u32 %v6015, 7
        %v6017 = vsub.s32 %v6014, %v6016
        %v6018 = vrot.slane %v6010, %v6017
        %v6019 = vcombine.high %v6018, %v6018
        %v6021 = vunpack.c.l.s4 1966171168
        %v6022 = vunpack.c.0.s8 %v6021
        %v6023 = vlaneseq
        %v6024 = vshrl.u32 %v6023, 7
        %v6025 = vsub.s32 %v6022, %v6024
        %v6026 = vrot.slane %v6018, %v6025
        %v6028 = vunpack.c.l.s4 1966171168
        %v6029 = vunpack.c.0.s8 %v6028
        %v6030 = vlaneseq
        %v6031 = vshrl.u32 %v6030, 7
        %v6032 = vsub.s32 %v6029, %v6031
        %v6033 = vrot.slane %v6019, %v6032
        %s6036 = scalar_lea.vmem [#allocation3], 8
        %6037 = vst [vmem:[%s6036] sm:$0x1] %v6026
        %6038 = vst [vmem:[%s6036 + $0x2] sm:$0x1] %v6033
        %v6039 = vld [vmem:[%s1237] sm:$0x1]
        %v6040 = vld [vmem:[%s1237 + $0x2] sm:$0x1]
        %v6041 = vld [vmem:[%s3] sm:$0xf]
        %v6042 = vld [vmem:[%s3 + $0x4] sm:$0xf]
        %v6043 = vld [vmem:[%s3 + $0x8] sm:$0xf]
        %v6044 = vld [vmem:[%s3 + $0xc] sm:$0xf]
        %v6045 = vld [vmem:[%s3 + $0x10] sm:$0xf]
        %v6046 = vld [vmem:[%s3 + $0x14] sm:$0xf]
        %v6047 = vld [vmem:[%s3 + $0x18] sm:$0xf]
        %v6048 = vld [vmem:[%s3 + $0x1c] sm:$0xf]
        %v6049 = vld [vmem:[%s3 + $0x20] sm:$0xf]
        %v6050 = vld [vmem:[%s3 + $0x24] sm:$0xf]
        %v6051 = vld [vmem:[%s3 + $0x28] sm:$0xf]
        %v6052 = vld [vmem:[%s3 + $0x2c] sm:$0xf]
        %v6053 = vld [vmem:[%s3 + $0x30] sm:$0xf]
        %v6054 = vld [vmem:[%s3 + $0x34] sm:$0xf]
        %v6055 = vld [vmem:[%s3 + $0x38] sm:$0xf]
        %v6056 = vld [vmem:[%s3 + $0x3c] sm:$0xf]
        %v6057 = vld [vmem:[%s1341] sm:$0x1]
        %v6058 = vld [vmem:[%s1341 + $0x2] sm:$0x1]
        %v6059 = vld [vmem:[%s2417] sm:$0xf]
        %v6060 = vld [vmem:[%s2417 + $0x4] sm:$0xf]
        %v6061 = vld [vmem:[%s2417 + $0x8] sm:$0xf]
        %v6062 = vld [vmem:[%s2417 + $0xc] sm:$0xf]
        %v6063 = vld [vmem:[%s2417 + $0x10] sm:$0xf]
        %v6064 = vld [vmem:[%s2417 + $0x14] sm:$0xf]
        %v6065 = vld [vmem:[%s2417 + $0x18] sm:$0xf]
        %v6066 = vld [vmem:[%s2417 + $0x1c] sm:$0xf]
        %v6067 = vld [vmem:[%s2417 + $0x20] sm:$0xf]
        %v6068 = vld [vmem:[%s2417 + $0x24] sm:$0xf]
        %v6069 = vld [vmem:[%s2417 + $0x28] sm:$0xf]
        %v6070 = vld [vmem:[%s2417 + $0x2c] sm:$0xf]
        %v6071 = vld [vmem:[%s2417 + $0x30] sm:$0xf]
        %v6072 = vld [vmem:[%s2417 + $0x34] sm:$0xf]
        %v6073 = vld [vmem:[%s2417 + $0x38] sm:$0xf]
        %v6074 = vld [vmem:[%s2417 + $0x3c] sm:$0xf]
        %v6077 = vcombine.low %v6057, %v6058
        %v6079 = vunpack.c.l.s4 1966171168
        %v6080 = vunpack.c.0.s8 %v6079
        %v6081 = vlaneseq
        %v6082 = vshrl.u32 %v6081, 7
        %v6083 = vsub.s32 %v6080, %v6082
        %v6084 = vrot.slane %v6077, %v6083
        %v6086 = vunpack.c.l.s4 1966171168
        %v6087 = vunpack.c.0.s8 %v6086
        %v6088 = vlaneseq
        %v6089 = vshrl.u32 %v6088, 7
        %v6090 = vsub.s32 %v6087, %v6089
        %v6091 = vrot.slane %v6084, %v6090
        %v6109 = vunpack.c.l.b16 %v6059
        %v6110 = vunpack.c.l.b16 %v6060
        %v6111 = vunpack.c.l.b16 %v6061
        %v6112 = vunpack.c.l.b16 %v6062
        %v6113 = vunpack.c.l.b16 %v6063
        %v6114 = vunpack.c.l.b16 %v6064
        %v6115 = vunpack.c.l.b16 %v6065
        %v6116 = vunpack.c.l.b16 %v6066
        %v6117 = vunpack.c.l.b16 %v6067
        %v6118 = vunpack.c.l.b16 %v6068
        %v6119 = vunpack.c.l.b16 %v6069
        %v6120 = vunpack.c.l.b16 %v6070
        %v6121 = vunpack.c.l.b16 %v6071
        %v6122 = vunpack.c.l.b16 %v6072
        %v6123 = vunpack.c.l.b16 %v6073
        %v6124 = vunpack.c.l.b16 %v6074
        %v6125 = vpack.c.b16 %v6110, %v6109
        %v6126 = vpack.c.b16 %v6112, %v6111
        %v6127 = vpack.c.b16 %v6114, %v6113
        %v6128 = vpack.c.b16 %v6116, %v6115
        %v6129 = vpack.c.b16 %v6118, %v6117
        %v6130 = vpack.c.b16 %v6120, %v6119
        %v6131 = vpack.c.b16 %v6122, %v6121
        %v6132 = vpack.c.b16 %v6124, %v6123
        %6141 = vmatprep.subr.bf16.mxu0 0
        %6142 = vmatpush1.bf16.msra.mxu0 %v6125
        %6143 = vmatprep.subr.bf16.mxu0 0
        %6144 = vmatpush1.bf16.msra.mxu0 %v6126
        %6145 = vmatprep.subr.bf16.mxu0 0
        %6146 = vmatpush1.bf16.msra.mxu0 %v6127
        %6147 = vmatprep.subr.bf16.mxu0 0
        %6148 = vmatpush1.bf16.msra.mxu0 %v6128
        %6149 = vmatprep.subr.bf16.mxu0 0
        %6150 = vmatpush1.bf16.msra.mxu0 %v6129
        %6151 = vmatprep.subr.bf16.mxu0 0
        %6152 = vmatpush1.bf16.msra.mxu0 %v6130
        %6153 = vmatprep.subr.bf16.mxu0 0
        %6154 = vmatpush1.bf16.msra.mxu0 %v6131
        %6155 = vmatprep.subr.bf16.mxu0 0
        %6156 = vmatpush1.bf16.msra.mxu0 %v6132
        %6157 = vmatprep.subr.bf16.mxu0 0
        %6158 = vmatpush1.bf16.msra.mxu0 0
        %6159 = vmatprep.subr.bf16.mxu0 0
        %6160 = vmatpush1.bf16.msra.mxu0 0
        %6161 = vmatprep.subr.bf16.mxu0 0
        %6162 = vmatpush1.bf16.msra.mxu0 0
        %6163 = vmatprep.subr.bf16.mxu0 0
        %6164 = vmatpush1.bf16.msra.mxu0 0
        %6165 = vmatprep.subr.bf16.mxu0 0
        %6166 = vmatpush1.bf16.msra.mxu0 0
        %6167 = vmatprep.subr.bf16.mxu0 0
        %6168 = vmatpush1.bf16.msra.mxu0 0
        %6169 = vmatprep.subr.bf16.mxu0 0
        %6170 = vmatpush1.bf16.msra.mxu0 0
        %6171 = vmatprep.subr.bf16.mxu0 0
        %6172 = vmatpush1.bf16.msra.mxu0 0
        %6173 = vmatprep.mubr.bf16.mxu0 0
        %6174 = vmatmul.mubr.bf16.gmra.mrb[0].mxu0 %v6091
        %v6175 = vpop.f32.mrb[0].mxu0
        %v6176 = vadd.f32 0.0, %v6175
        %v6177 = vpop.f32.mrb[0].mxu0
        %v6178 = vpop.f32.mrb[0].mxu0
        %v6179 = vpop.f32.mrb[0].mxu0
        %6180 = vdwg.mxu0
        %v6183 = vcombine.low %v6039, %v6040
        %v6185 = vunpack.c.l.s4 1966171168
        %v6186 = vunpack.c.0.s8 %v6185
        %v6187 = vlaneseq
        %v6188 = vshrl.u32 %v6187, 7
        %v6189 = vsub.s32 %v6186, %v6188
        %v6190 = vrot.slane %v6183, %v6189
        %v6192 = vunpack.c.l.s4 1966171168
        %v6193 = vunpack.c.0.s8 %v6192
        %v6194 = vlaneseq
        %v6195 = vshrl.u32 %v6194, 7
        %v6196 = vsub.s32 %v6193, %v6195
        %v6197 = vrot.slane %v6190, %v6196
        %v6215 = vunpack.c.l.b16 %v6041
        %v6216 = vunpack.c.l.b16 %v6042
        %v6217 = vunpack.c.l.b16 %v6043
        %v6218 = vunpack.c.l.b16 %v6044
        %v6219 = vunpack.c.l.b16 %v6045
        %v6220 = vunpack.c.l.b16 %v6046
        %v6221 = vunpack.c.l.b16 %v6047
        %v6222 = vunpack.c.l.b16 %v6048
        %v6223 = vunpack.c.l.b16 %v6049
        %v6224 = vunpack.c.l.b16 %v6050
        %v6225 = vunpack.c.l.b16 %v6051
        %v6226 = vunpack.c.l.b16 %v6052
        %v6227 = vunpack.c.l.b16 %v6053
        %v6228 = vunpack.c.l.b16 %v6054
        %v6229 = vunpack.c.l.b16 %v6055
        %v6230 = vunpack.c.l.b16 %v6056
        %v6231 = vpack.c.b16 %v6216, %v6215
        %v6232 = vpack.c.b16 %v6218, %v6217
        %v6233 = vpack.c.b16 %v6220, %v6219
        %v6234 = vpack.c.b16 %v6222, %v6221
        %v6235 = vpack.c.b16 %v6224, %v6223
        %v6236 = vpack.c.b16 %v6226, %v6225
        %v6237 = vpack.c.b16 %v6228, %v6227
        %v6238 = vpack.c.b16 %v6230, %v6229
        %6247 = vmatprep.subr.bf16.mxu0 0
        %6248 = vmatpush1.bf16.msra.mxu0 %v6231
        %6249 = vmatprep.subr.bf16.mxu0 0
        %6250 = vmatpush1.bf16.msra.mxu0 %v6232
        %6251 = vmatprep.subr.bf16.mxu0 0
        %6252 = vmatpush1.bf16.msra.mxu0 %v6233
        %6253 = vmatprep.subr.bf16.mxu0 0
        %6254 = vmatpush1.bf16.msra.mxu0 %v6234
        %6255 = vmatprep.subr.bf16.mxu0 0
        %6256 = vmatpush1.bf16.msra.mxu0 %v6235
        %6257 = vmatprep.subr.bf16.mxu0 0
        %6258 = vmatpush1.bf16.msra.mxu0 %v6236
        %6259 = vmatprep.subr.bf16.mxu0 0
        %6260 = vmatpush1.bf16.msra.mxu0 %v6237
        %6261 = vmatprep.subr.bf16.mxu0 0
        %6262 = vmatpush1.bf16.msra.mxu0 %v6238
        %6263 = vmatprep.subr.bf16.mxu0 0
        %6264 = vmatpush1.bf16.msra.mxu0 0
        %6265 = vmatprep.subr.bf16.mxu0 0
        %6266 = vmatpush1.bf16.msra.mxu0 0
        %6267 = vmatprep.subr.bf16.mxu0 0
        %6268 = vmatpush1.bf16.msra.mxu0 0
        %6269 = vmatprep.subr.bf16.mxu0 0
        %6270 = vmatpush1.bf16.msra.mxu0 0
        %6271 = vmatprep.subr.bf16.mxu0 0
        %6272 = vmatpush1.bf16.msra.mxu0 0
        %6273 = vmatprep.subr.bf16.mxu0 0
        %6274 = vmatpush1.bf16.msra.mxu0 0
        %6275 = vmatprep.subr.bf16.mxu0 0
        %6276 = vmatpush1.bf16.msra.mxu0 0
        %6277 = vmatprep.subr.bf16.mxu0 0
        %6278 = vmatpush1.bf16.msra.mxu0 0
        %6279 = vmatprep.mubr.bf16.mxu0 0
        %6280 = vmatmul.mubr.bf16.gmra.mrb[0].mxu0 %v6197
        %v6281 = vpop.f32.mrb[0].mxu0
        %v6282 = vadd.f32 %v6176, %v6281
        %v6283 = vpop.f32.mrb[0].mxu0
        %v6284 = vpop.f32.mrb[0].mxu0
        %v6285 = vpop.f32.mrb[0].mxu0
        %6286 = vdwg.mxu0
        %v6287 = vld [vmem:[%s1477] sm:$0x3]
        %v6288 = vld [vmem:[%s1477 + $0x2] sm:$0x3]
        %v6292 = vunpack.c.l.s4 1966171168
        %v6293 = vunpack.c.0.s8 %v6292
        %v6294 = vlaneseq
        %v6295 = vshrl.u32 %v6294, 7
        %v6296 = vsub.s32 %v6293, %v6295
        %v6297 = vrot.slane %v6287, %v6296
        %v6298 = vcombine.high %v6297, %v6297
        %v6300 = vunpack.c.l.s4 1966171168
        %v6301 = vunpack.c.0.s8 %v6300
        %v6302 = vlaneseq
        %v6303 = vshrl.u32 %v6302, 7
        %v6304 = vsub.s32 %v6301, %v6303
        %v6305 = vrot.slane %v6288, %v6304
        %v6306 = vcombine.high %v6305, %v6305
        %v6308 = vshrl.u32 %v6297, 16
        %v6310 = vrot.slane %v6308, 7
        %v6311 = vrot.slane %v6310, 1
        %v6313 = vshll.u32 %v6298, 16
        %v6315 = vsel %vm3850, %v6311, %v6313
        %v6317 = vshrl.u32 %v6305, 16
        %v6319 = vrot.slane %v6317, 7
        %v6320 = vrot.slane %v6319, 1
        %v6322 = vshll.u32 %v6306, 16
        %v6324 = vsel %vm3850, %v6320, %v6322
        %v6325 = vld [vmem:[%s2649] sm:$0xf]
        %v6326 = vld [vmem:[%s2649 + $0x4] sm:$0xf]
        %v6327 = vld [vmem:[%s2649 + $0x8] sm:$0xf]
        %v6328 = vld [vmem:[%s2649 + $0xc] sm:$0xf]
        %v6329 = vld [vmem:[%s2649 + $0x10] sm:$0xf]
        %v6330 = vld [vmem:[%s2649 + $0x14] sm:$0xf]
        %v6331 = vld [vmem:[%s2649 + $0x18] sm:$0xf]
        %v6332 = vld [vmem:[%s2649 + $0x1c] sm:$0xf]
        %v6333 = vld [vmem:[%s2649 + $0x20] sm:$0xf]
        %v6334 = vld [vmem:[%s2649 + $0x24] sm:$0xf]
        %v6335 = vld [vmem:[%s2649 + $0x28] sm:$0xf]
        %v6336 = vld [vmem:[%s2649 + $0x2c] sm:$0xf]
        %v6337 = vld [vmem:[%s2649 + $0x30] sm:$0xf]
        %v6338 = vld [vmem:[%s2649 + $0x34] sm:$0xf]
        %v6339 = vld [vmem:[%s2649 + $0x38] sm:$0xf]
        %v6340 = vld [vmem:[%s2649 + $0x3c] sm:$0xf]
        %v6341 = vcombine.low %v6315, %v6324
        %v6343 = vunpack.c.l.s4 1966171168
        %v6344 = vunpack.c.0.s8 %v6343
        %v6345 = vlaneseq
        %v6346 = vshrl.u32 %v6345, 7
        %v6347 = vsub.s32 %v6344, %v6346
        %v6348 = vrot.slane %v6341, %v6347
        %v6350 = vunpack.c.l.s4 1966171168
        %v6351 = vunpack.c.0.s8 %v6350
        %v6352 = vlaneseq
        %v6353 = vshrl.u32 %v6352, 7
        %v6354 = vsub.s32 %v6351, %v6353
        %v6355 = vrot.slane %v6348, %v6354
        %v6373 = vunpack.c.l.b16 %v6325
        %v6374 = vunpack.c.l.b16 %v6326
        %v6375 = vunpack.c.l.b16 %v6327
        %v6376 = vunpack.c.l.b16 %v6328
        %v6377 = vunpack.c.l.b16 %v6329
        %v6378 = vunpack.c.l.b16 %v6330
        %v6379 = vunpack.c.l.b16 %v6331
        %v6380 = vunpack.c.l.b16 %v6332
        %v6381 = vunpack.c.l.b16 %v6333
        %v6382 = vunpack.c.l.b16 %v6334
        %v6383 = vunpack.c.l.b16 %v6335
        %v6384 = vunpack.c.l.b16 %v6336
        %v6385 = vunpack.c.l.b16 %v6337
        %v6386 = vunpack.c.l.b16 %v6338
        %v6387 = vunpack.c.l.b16 %v6339
        %v6388 = vunpack.c.l.b16 %v6340
        %v6389 = vpack.c.b16 %v6374, %v6373
        %v6390 = vpack.c.b16 %v6376, %v6375
        %v6391 = vpack.c.b16 %v6378, %v6377
        %v6392 = vpack.c.b16 %v6380, %v6379
        %v6393 = vpack.c.b16 %v6382, %v6381
        %v6394 = vpack.c.b16 %v6384, %v6383
        %v6395 = vpack.c.b16 %v6386, %v6385
        %v6396 = vpack.c.b16 %v6388, %v6387
        %6405 = vmatprep.subr.bf16.mxu0 0
        %6406 = vmatpush1.bf16.msra.mxu0 %v6389
        %6407 = vmatprep.subr.bf16.mxu0 0
        %6408 = vmatpush1.bf16.msra.mxu0 %v6390
        %6409 = vmatprep.subr.bf16.mxu0 0
        %6410 = vmatpush1.bf16.msra.mxu0 %v6391
        %6411 = vmatprep.subr.bf16.mxu0 0
        %6412 = vmatpush1.bf16.msra.mxu0 %v6392
        %6413 = vmatprep.subr.bf16.mxu0 0
        %6414 = vmatpush1.bf16.msra.mxu0 %v6393
        %6415 = vmatprep.subr.bf16.mxu0 0
        %6416 = vmatpush1.bf16.msra.mxu0 %v6394
        %6417 = vmatprep.subr.bf16.mxu0 0
        %6418 = vmatpush1.bf16.msra.mxu0 %v6395
        %6419 = vmatprep.subr.bf16.mxu0 0
        %6420 = vmatpush1.bf16.msra.mxu0 %v6396
        %6421 = vmatprep.subr.bf16.mxu0 0
        %6422 = vmatpush1.bf16.msra.mxu0 0
        %6423 = vmatprep.subr.bf16.mxu0 0
        %6424 = vmatpush1.bf16.msra.mxu0 0
        %6425 = vmatprep.subr.bf16.mxu0 0
        %6426 = vmatpush1.bf16.msra.mxu0 0
        %6427 = vmatprep.subr.bf16.mxu0 0
        %6428 = vmatpush1.bf16.msra.mxu0 0
        %6429 = vmatprep.subr.bf16.mxu0 0
        %6430 = vmatpush1.bf16.msra.mxu0 0
        %6431 = vmatprep.subr.bf16.mxu0 0
        %6432 = vmatpush1.bf16.msra.mxu0 0
        %6433 = vmatprep.subr.bf16.mxu0 0
        %6434 = vmatpush1.bf16.msra.mxu0 0
        %6435 = vmatprep.subr.bf16.mxu0 0
        %6436 = vmatpush1.bf16.msra.mxu0 0
        %6437 = vmatprep.mubr.bf16.mxu0 0
        %6438 = vmatmul.mubr.bf16.gmra.mrb[0].mxu0 %v6355
        %v6439 = vpop.f32.mrb[0].mxu0
        %v6440 = vadd.f32 0.0, %v6439
        %v6441 = vpop.f32.mrb[0].mxu0
        %v6442 = vpop.f32.mrb[0].mxu0
        %v6443 = vpop.f32.mrb[0].mxu0
        %6444 = vdwg.mxu0
        %v6445 = vadd.f32 %v6282, %v6440
        %v6446 = vld [vmem:[%s1693] sm:$0x1]
        %v6447 = vld [vmem:[%s1693 + $0x2] sm:$0x1]
        %v6448 = vld [vmem:[%s2775] sm:$0xf]
        %v6449 = vld [vmem:[%s2775 + $0x4] sm:$0xf]
        %v6450 = vld [vmem:[%s2775 + $0x8] sm:$0xf]
        %v6451 = vld [vmem:[%s2775 + $0xc] sm:$0xf]
        %v6452 = vld [vmem:[%s2775 + $0x10] sm:$0xf]
        %v6453 = vld [vmem:[%s2775 + $0x14] sm:$0xf]
        %v6454 = vld [vmem:[%s2775 + $0x18] sm:$0xf]
        %v6455 = vld [vmem:[%s2775 + $0x1c] sm:$0xf]
        %v6456 = vld [vmem:[%s2775 + $0x20] sm:$0xf]
        %v6457 = vld [vmem:[%s2775 + $0x24] sm:$0xf]
        %v6458 = vld [vmem:[%s2775 + $0x28] sm:$0xf]
        %v6459 = vld [vmem:[%s2775 + $0x2c] sm:$0xf]
        %v6460 = vld [vmem:[%s2775 + $0x30] sm:$0xf]
        %v6461 = vld [vmem:[%s2775 + $0x34] sm:$0xf]
        %v6462 = vld [vmem:[%s2775 + $0x38] sm:$0xf]
        %v6463 = vld [vmem:[%s2775 + $0x3c] sm:$0xf]
        %v6466 = vcombine.low %v6446, %v6447
        %v6468 = vunpack.c.l.s4 1966171168
        %v6469 = vunpack.c.0.s8 %v6468
        %v6470 = vlaneseq
        %v6471 = vshrl.u32 %v6470, 7
        %v6472 = vsub.s32 %v6469, %v6471
        %v6473 = vrot.slane %v6466, %v6472
        %v6475 = vunpack.c.l.s4 1966171168
        %v6476 = vunpack.c.0.s8 %v6475
        %v6477 = vlaneseq
        %v6478 = vshrl.u32 %v6477, 7
        %v6479 = vsub.s32 %v6476, %v6478
        %v6480 = vrot.slane %v6473, %v6479
        %v6498 = vunpack.c.l.b16 %v6448
        %v6499 = vunpack.c.l.b16 %v6449
        %v6500 = vunpack.c.l.b16 %v6450
        %v6501 = vunpack.c.l.b16 %v6451
        %v6502 = vunpack.c.l.b16 %v6452
        %v6503 = vunpack.c.l.b16 %v6453
        %v6504 = vunpack.c.l.b16 %v6454
        %v6505 = vunpack.c.l.b16 %v6455
        %v6506 = vunpack.c.l.b16 %v6456
        %v6507 = vunpack.c.l.b16 %v6457
        %v6508 = vunpack.c.l.b16 %v6458
        %v6509 = vunpack.c.l.b16 %v6459
        %v6510 = vunpack.c.l.b16 %v6460
        %v6511 = vunpack.c.l.b16 %v6461
        %v6512 = vunpack.c.l.b16 %v6462
        %v6513 = vunpack.c.l.b16 %v6463
        %v6514 = vpack.c.b16 %v6499, %v6498
        %v6515 = vpack.c.b16 %v6501, %v6500
        %v6516 = vpack.c.b16 %v6503, %v6502
        %v6517 = vpack.c.b16 %v6505, %v6504
        %v6518 = vpack.c.b16 %v6507, %v6506
        %v6519 = vpack.c.b16 %v6509, %v6508
        %v6520 = vpack.c.b16 %v6511, %v6510
        %v6521 = vpack.c.b16 %v6513, %v6512
        %6530 = vmatprep.subr.bf16.mxu0 0
        %6531 = vmatpush1.bf16.msra.mxu0 %v6514
        %6532 = vmatprep.subr.bf16.mxu0 0
        %6533 = vmatpush1.bf16.msra.mxu0 %v6515
        %6534 = vmatprep.subr.bf16.mxu0 0
        %6535 = vmatpush1.bf16.msra.mxu0 %v6516
        %6536 = vmatprep.subr.bf16.mxu0 0
        %6537 = vmatpush1.bf16.msra.mxu0 %v6517
        %6538 = vmatprep.subr.bf16.mxu0 0
        %6539 = vmatpush1.bf16.msra.mxu0 %v6518
        %6540 = vmatprep.subr.bf16.mxu0 0
        %6541 = vmatpush1.bf16.msra.mxu0 %v6519
        %6542 = vmatprep.subr.bf16.mxu0 0
        %6543 = vmatpush1.bf16.msra.mxu0 %v6520
        %6544 = vmatprep.subr.bf16.mxu0 0
        %6545 = vmatpush1.bf16.msra.mxu0 %v6521
        %6546 = vmatprep.subr.bf16.mxu0 0
        %6547 = vmatpush1.bf16.msra.mxu0 0
        %6548 = vmatprep.subr.bf16.mxu0 0
        %6549 = vmatpush1.bf16.msra.mxu0 0
        %6550 = vmatprep.subr.bf16.mxu0 0
        %6551 = vmatpush1.bf16.msra.mxu0 0
        %6552 = vmatprep.subr.bf16.mxu0 0
        %6553 = vmatpush1.bf16.msra.mxu0 0
        %6554 = vmatprep.subr.bf16.mxu0 0
        %6555 = vmatpush1.bf16.msra.mxu0 0
        %6556 = vmatprep.subr.bf16.mxu0 0
        %6557 = vmatpush1.bf16.msra.mxu0 0
        %6558 = vmatprep.subr.bf16.mxu0 0
        %6559 = vmatpush1.bf16.msra.mxu0 0
        %6560 = vmatprep.subr.bf16.mxu0 0
        %6561 = vmatpush1.bf16.msra.mxu0 0
        %6562 = vmatprep.mubr.bf16.mxu0 0
        %6563 = vmatmul.mubr.bf16.gmra.mrb[0].mxu0 %v6480
        %v6564 = vpop.f32.mrb[0].mxu0
        %v6565 = vadd.f32 0.0, %v6564
        %v6566 = vpop.f32.mrb[0].mxu0
        %v6567 = vpop.f32.mrb[0].mxu0
        %v6568 = vpop.f32.mrb[0].mxu0
        %6569 = vdwg.mxu0
        %v6570 = vadd.f32 %v6445, %v6565
        %v6571 = vld [vmem:[%s1797] sm:$0x1]
        %v6572 = vld [vmem:[%s1797 + $0x2] sm:$0x1]
        %v6573 = vld [vmem:[%s2901] sm:$0xf]
        %v6574 = vld [vmem:[%s2901 + $0x4] sm:$0xf]
        %v6575 = vld [vmem:[%s2901 + $0x8] sm:$0xf]
        %v6576 = vld [vmem:[%s2901 + $0xc] sm:$0xf]
        %v6577 = vld [vmem:[%s2901 + $0x10] sm:$0xf]
        %v6578 = vld [vmem:[%s2901 + $0x14] sm:$0xf]
        %v6579 = vld [vmem:[%s2901 + $0x18] sm:$0xf]
        %v6580 = vld [vmem:[%s2901 + $0x1c] sm:$0xf]
        %v6581 = vld [vmem:[%s2901 + $0x20] sm:$0xf]
        %v6582 = vld [vmem:[%s2901 + $0x24] sm:$0xf]
        %v6583 = vld [vmem:[%s2901 + $0x28] sm:$0xf]
        %v6584 = vld [vmem:[%s2901 + $0x2c] sm:$0xf]
        %v6585 = vld [vmem:[%s2901 + $0x30] sm:$0xf]
        %v6586 = vld [vmem:[%s2901 + $0x34] sm:$0xf]
        %v6587 = vld [vmem:[%s2901 + $0x38] sm:$0xf]
        %v6588 = vld [vmem:[%s2901 + $0x3c] sm:$0xf]
        %v6591 = vcombine.low %v6571, %v6572
        %v6593 = vunpack.c.l.s4 1966171168
        %v6594 = vunpack.c.0.s8 %v6593
        %v6595 = vlaneseq
        %v6596 = vshrl.u32 %v6595, 7
        %v6597 = vsub.s32 %v6594, %v6596
        %v6598 = vrot.slane %v6591, %v6597
        %v6600 = vunpack.c.l.s4 1966171168
        %v6601 = vunpack.c.0.s8 %v6600
        %v6602 = vlaneseq
        %v6603 = vshrl.u32 %v6602, 7
        %v6604 = vsub.s32 %v6601, %v6603
        %v6605 = vrot.slane %v6598, %v6604
        %v6623 = vunpack.c.l.b16 %v6573
        %v6624 = vunpack.c.l.b16 %v6574
        %v6625 = vunpack.c.l.b16 %v6575
        %v6626 = vunpack.c.l.b16 %v6576
        %v6627 = vunpack.c.l.b16 %v6577
        %v6628 = vunpack.c.l.b16 %v6578
        %v6629 = vunpack.c.l.b16 %v6579
        %v6630 = vunpack.c.l.b16 %v6580
        %v6631 = vunpack.c.l.b16 %v6581
        %v6632 = vunpack.c.l.b16 %v6582
        %v6633 = vunpack.c.l.b16 %v6583
        %v6634 = vunpack.c.l.b16 %v6584
        %v6635 = vunpack.c.l.b16 %v6585
        %v6636 = vunpack.c.l.b16 %v6586
        %v6637 = vunpack.c.l.b16 %v6587
        %v6638 = vunpack.c.l.b16 %v6588
        %v6639 = vpack.c.b16 %v6624, %v6623
        %v6640 = vpack.c.b16 %v6626, %v6625
        %v6641 = vpack.c.b16 %v6628, %v6627
        %v6642 = vpack.c.b16 %v6630, %v6629
        %v6643 = vpack.c.b16 %v6632, %v6631
        %v6644 = vpack.c.b16 %v6634, %v6633
        %v6645 = vpack.c.b16 %v6636, %v6635
        %v6646 = vpack.c.b16 %v6638, %v6637
        %6655 = vmatprep.subr.bf16.mxu0 0
        %6656 = vmatpush1.bf16.msra.mxu0 %v6639
        %6657 = vmatprep.subr.bf16.mxu0 0
        %6658 = vmatpush1.bf16.msra.mxu0 %v6640
        %6659 = vmatprep.subr.bf16.mxu0 0
        %6660 = vmatpush1.bf16.msra.mxu0 %v6641
        %6661 = vmatprep.subr.bf16.mxu0 0
        %6662 = vmatpush1.bf16.msra.mxu0 %v6642
        %6663 = vmatprep.subr.bf16.mxu0 0
        %6664 = vmatpush1.bf16.msra.mxu0 %v6643
        %6665 = vmatprep.subr.bf16.mxu0 0
        %6666 = vmatpush1.bf16.msra.mxu0 %v6644
        %6667 = vmatprep.subr.bf16.mxu0 0
        %6668 = vmatpush1.bf16.msra.mxu0 %v6645
        %6669 = vmatprep.subr.bf16.mxu0 0
        %6670 = vmatpush1.bf16.msra.mxu0 %v6646
        %6671 = vmatprep.subr.bf16.mxu0 0
        %6672 = vmatpush1.bf16.msra.mxu0 0
        %6673 = vmatprep.subr.bf16.mxu0 0
        %6674 = vmatpush1.bf16.msra.mxu0 0
        %6675 = vmatprep.subr.bf16.mxu0 0
        %6676 = vmatpush1.bf16.msra.mxu0 0
        %6677 = vmatprep.subr.bf16.mxu0 0
        %6678 = vmatpush1.bf16.msra.mxu0 0
        %6679 = vmatprep.subr.bf16.mxu0 0
        %6680 = vmatpush1.bf16.msra.mxu0 0
        %6681 = vmatprep.subr.bf16.mxu0 0
        %6682 = vmatpush1.bf16.msra.mxu0 0
        %6683 = vmatprep.subr.bf16.mxu0 0
        %6684 = vmatpush1.bf16.msra.mxu0 0
        %6685 = vmatprep.subr.bf16.mxu0 0
        %6686 = vmatpush1.bf16.msra.mxu0 0
        %6687 = vmatprep.mubr.bf16.mxu0 0
        %6688 = vmatmul.mubr.bf16.gmra.mrb[0].mxu0 %v6605
        %v6689 = vpop.f32.mrb[0].mxu0
        %v6690 = vadd.f32 0.0, %v6689
        %v6691 = vpop.f32.mrb[0].mxu0
        %v6692 = vpop.f32.mrb[0].mxu0
        %v6693 = vpop.f32.mrb[0].mxu0
        %6694 = vdwg.mxu0
        %v6695 = vadd.f32 %v6570, %v6690
        %v6696 = vld [vmem:[%s1933] sm:$0x3]
        %v6697 = vld [vmem:[%s1933 + $0x2] sm:$0x3]
        %v6701 = vunpack.c.l.s4 1966171168
        %v6702 = vunpack.c.0.s8 %v6701
        %v6703 = vlaneseq
        %v6704 = vshrl.u32 %v6703, 7
        %v6705 = vsub.s32 %v6702, %v6704
        %v6706 = vrot.slane %v6696, %v6705
        %v6707 = vcombine.high %v6706, %v6706
        %v6709 = vunpack.c.l.s4 1966171168
        %v6710 = vunpack.c.0.s8 %v6709
        %v6711 = vlaneseq
        %v6712 = vshrl.u32 %v6711, 7
        %v6713 = vsub.s32 %v6710, %v6712
        %v6714 = vrot.slane %v6697, %v6713
        %v6715 = vcombine.high %v6714, %v6714
        %v6717 = vshrl.u32 %v6706, 16
        %v6719 = vrot.slane %v6717, 7
        %v6720 = vrot.slane %v6719, 1
        %v6722 = vshll.u32 %v6707, 16
        %v6724 = vsel %vm3850, %v6720, %v6722
        %v6726 = vshrl.u32 %v6714, 16
        %v6728 = vrot.slane %v6726, 7
        %v6729 = vrot.slane %v6728, 1
        %v6731 = vshll.u32 %v6715, 16
        %v6733 = vsel %vm3850, %v6729, %v6731
        %v6734 = vld [vmem:[%s3027] sm:$0xf]
        %v6735 = vld [vmem:[%s3027 + $0x4] sm:$0xf]
        %v6736 = vld [vmem:[%s3027 + $0x8] sm:$0xf]
        %v6737 = vld [vmem:[%s3027 + $0xc] sm:$0xf]
        %v6738 = vld [vmem:[%s3027 + $0x10] sm:$0xf]
        %v6739 = vld [vmem:[%s3027 + $0x14] sm:$0xf]
        %v6740 = vld [vmem:[%s3027 + $0x18] sm:$0xf]
        %v6741 = vld [vmem:[%s3027 + $0x1c] sm:$0xf]
        %v6742 = vld [vmem:[%s3027 + $0x20] sm:$0xf]
        %v6743 = vld [vmem:[%s3027 + $0x24] sm:$0xf]
        %v6744 = vld [vmem:[%s3027 + $0x28] sm:$0xf]
        %v6745 = vld [vmem:[%s3027 + $0x2c] sm:$0xf]
        %v6746 = vld [vmem:[%s3027 + $0x30] sm:$0xf]
        %v6747 = vld [vmem:[%s3027 + $0x34] sm:$0xf]
        %v6748 = vld [vmem:[%s3027 + $0x38] sm:$0xf]
        %v6749 = vld [vmem:[%s3027 + $0x3c] sm:$0xf]
        %v6750 = vcombine.low %v6724, %v6733
        %v6752 = vunpack.c.l.s4 1966171168
        %v6753 = vunpack.c.0.s8 %v6752
        %v6754 = vlaneseq
        %v6755 = vshrl.u32 %v6754, 7
        %v6756 = vsub.s32 %v6753, %v6755
        %v6757 = vrot.slane %v6750, %v6756
        %v6759 = vunpack.c.l.s4 1966171168
        %v6760 = vunpack.c.0.s8 %v6759
        %v6761 = vlaneseq
        %v6762 = vshrl.u32 %v6761, 7
        %v6763 = vsub.s32 %v6760, %v6762
        %v6764 = vrot.slane %v6757, %v6763
        %v6782 = vunpack.c.l.b16 %v6734
        %v6783 = vunpack.c.l.b16 %v6735
        %v6784 = vunpack.c.l.b16 %v6736
        %v6785 = vunpack.c.l.b16 %v6737
        %v6786 = vunpack.c.l.b16 %v6738
        %v6787 = vunpack.c.l.b16 %v6739
        %v6788 = vunpack.c.l.b16 %v6740
        %v6789 = vunpack.c.l.b16 %v6741
        %v6790 = vunpack.c.l.b16 %v6742
        %v6791 = vunpack.c.l.b16 %v6743
        %v6792 = vunpack.c.l.b16 %v6744
        %v6793 = vunpack.c.l.b16 %v6745
        %v6794 = vunpack.c.l.b16 %v6746
        %v6795 = vunpack.c.l.b16 %v6747
        %v6796 = vunpack.c.l.b16 %v6748
        %v6797 = vunpack.c.l.b16 %v6749
        %v6798 = vpack.c.b16 %v6783, %v6782
        %v6799 = vpack.c.b16 %v6785, %v6784
        %v6800 = vpack.c.b16 %v6787, %v6786
        %v6801 = vpack.c.b16 %v6789, %v6788
        %v6802 = vpack.c.b16 %v6791, %v6790
        %v6803 = vpack.c.b16 %v6793, %v6792
        %v6804 = vpack.c.b16 %v6795, %v6794
        %v6805 = vpack.c.b16 %v6797, %v6796
        %6814 = vmatprep.subr.bf16.mxu0 0
        %6815 = vmatpush1.bf16.msra.mxu0 %v6798
        %6816 = vmatprep.subr.bf16.mxu0 0
        %6817 = vmatpush1.bf16.msra.mxu0 %v6799
        %6818 = vmatprep.subr.bf16.mxu0 0
        %6819 = vmatpush1.bf16.msra.mxu0 %v6800
        %6820 = vmatprep.subr.bf16.mxu0 0
        %6821 = vmatpush1.bf16.msra.mxu0 %v6801
        %6822 = vmatprep.subr.bf16.mxu0 0
        %6823 = vmatpush1.bf16.msra.mxu0 %v6802
        %6824 = vmatprep.subr.bf16.mxu0 0
        %6825 = vmatpush1.bf16.msra.mxu0 %v6803
        %6826 = vmatprep.subr.bf16.mxu0 0
        %6827 = vmatpush1.bf16.msra.mxu0 %v6804
        %6828 = vmatprep.subr.bf16.mxu0 0
        %6829 = vmatpush1.bf16.msra.mxu0 %v6805
        %6830 = vmatprep.subr.bf16.mxu0 0
        %6831 = vmatpush1.bf16.msra.mxu0 0
        %6832 = vmatprep.subr.bf16.mxu0 0
        %6833 = vmatpush1.bf16.msra.mxu0 0
        %6834 = vmatprep.subr.bf16.mxu0 0
        %6835 = vmatpush1.bf16.msra.mxu0 0
        %6836 = vmatprep.subr.bf16.mxu0 0
        %6837 = vmatpush1.bf16.msra.mxu0 0
        %6838 = vmatprep.subr.bf16.mxu0 0
        %6839 = vmatpush1.bf16.msra.mxu0 0
        %6840 = vmatprep.subr.bf16.mxu0 0
        %6841 = vmatpush1.bf16.msra.mxu0 0
        %6842 = vmatprep.subr.bf16.mxu0 0
        %6843 = vmatpush1.bf16.msra.mxu0 0
        %6844 = vmatprep.subr.bf16.mxu0 0
        %6845 = vmatpush1.bf16.msra.mxu0 0
        %6846 = vmatprep.mubr.bf16.mxu0 0
        %6847 = vmatmul.mubr.bf16.gmra.mrb[0].mxu0 %v6764
        %v6848 = vpop.f32.mrb[0].mxu0
        %v6849 = vadd.f32 0.0, %v6848
        %v6850 = vpop.f32.mrb[0].mxu0
        %v6851 = vpop.f32.mrb[0].mxu0
        %v6852 = vpop.f32.mrb[0].mxu0
        %6853 = vdwg.mxu0
        %v6854 = vadd.f32 %v6695, %v6849
        %v6855 = vld [vmem:[%s2149] sm:$0x1]
        %v6856 = vld [vmem:[%s2149 + $0x2] sm:$0x1]
        %v6857 = vld [vmem:[%s3153] sm:$0xf]
        %v6858 = vld [vmem:[%s3153 + $0x4] sm:$0xf]
        %v6859 = vld [vmem:[%s3153 + $0x8] sm:$0xf]
        %v6860 = vld [vmem:[%s3153 + $0xc] sm:$0xf]
        %v6861 = vld [vmem:[%s3153 + $0x10] sm:$0xf]
        %v6862 = vld [vmem:[%s3153 + $0x14] sm:$0xf]
        %v6863 = vld [vmem:[%s3153 + $0x18] sm:$0xf]
        %v6864 = vld [vmem:[%s3153 + $0x1c] sm:$0xf]
        %v6865 = vld [vmem:[%s3153 + $0x20] sm:$0xf]
        %v6866 = vld [vmem:[%s3153 + $0x24] sm:$0xf]
        %v6867 = vld [vmem:[%s3153 + $0x28] sm:$0xf]
        %v6868 = vld [vmem:[%s3153 + $0x2c] sm:$0xf]
        %v6869 = vld [vmem:[%s3153 + $0x30] sm:$0xf]
        %v6870 = vld [vmem:[%s3153 + $0x34] sm:$0xf]
        %v6871 = vld [vmem:[%s3153 + $0x38] sm:$0xf]
        %v6872 = vld [vmem:[%s3153 + $0x3c] sm:$0xf]
        %v6875 = vcombine.low %v6855, %v6856
        %v6877 = vunpack.c.l.s4 1966171168
        %v6878 = vunpack.c.0.s8 %v6877
        %v6879 = vlaneseq
        %v6880 = vshrl.u32 %v6879, 7
        %v6881 = vsub.s32 %v6878, %v6880
        %v6882 = vrot.slane %v6875, %v6881
        %v6884 = vunpack.c.l.s4 1966171168
        %v6885 = vunpack.c.0.s8 %v6884
        %v6886 = vlaneseq
        %v6887 = vshrl.u32 %v6886, 7
        %v6888 = vsub.s32 %v6885, %v6887
        %v6889 = vrot.slane %v6882, %v6888
        %v6907 = vunpack.c.l.b16 %v6857
        %v6908 = vunpack.c.l.b16 %v6858
        %v6909 = vunpack.c.l.b16 %v6859
        %v6910 = vunpack.c.l.b16 %v6860
        %v6911 = vunpack.c.l.b16 %v6861
        %v6912 = vunpack.c.l.b16 %v6862
        %v6913 = vunpack.c.l.b16 %v6863
        %v6914 = vunpack.c.l.b16 %v6864
        %v6915 = vunpack.c.l.b16 %v6865
        %v6916 = vunpack.c.l.b16 %v6866
        %v6917 = vunpack.c.l.b16 %v6867
        %v6918 = vunpack.c.l.b16 %v6868
        %v6919 = vunpack.c.l.b16 %v6869
        %v6920 = vunpack.c.l.b16 %v6870
        %v6921 = vunpack.c.l.b16 %v6871
        %v6922 = vunpack.c.l.b16 %v6872
        %v6923 = vpack.c.b16 %v6908, %v6907
        %v6924 = vpack.c.b16 %v6910, %v6909
        %v6925 = vpack.c.b16 %v6912, %v6911
        %v6926 = vpack.c.b16 %v6914, %v6913
        %v6927 = vpack.c.b16 %v6916, %v6915
        %v6928 = vpack.c.b16 %v6918, %v6917
        %v6929 = vpack.c.b16 %v6920, %v6919
        %v6930 = vpack.c.b16 %v6922, %v6921
        %6939 = vmatprep.subr.bf16.mxu0 0
        %6940 = vmatpush1.bf16.msra.mxu0 %v6923
        %6941 = vmatprep.subr.bf16.mxu0 0
        %6942 = vmatpush1.bf16.msra.mxu0 %v6924
        %6943 = vmatprep.subr.bf16.mxu0 0
        %6944 = vmatpush1.bf16.msra.mxu0 %v6925
        %6945 = vmatprep.subr.bf16.mxu0 0
        %6946 = vmatpush1.bf16.msra.mxu0 %v6926
        %6947 = vmatprep.subr.bf16.mxu0 0
        %6948 = vmatpush1.bf16.msra.mxu0 %v6927
        %6949 = vmatprep.subr.bf16.mxu0 0
        %6950 = vmatpush1.bf16.msra.mxu0 %v6928
        %6951 = vmatprep.subr.bf16.mxu0 0
        %6952 = vmatpush1.bf16.msra.mxu0 %v6929
        %6953 = vmatprep.subr.bf16.mxu0 0
        %6954 = vmatpush1.bf16.msra.mxu0 %v6930
        %6955 = vmatprep.subr.bf16.mxu0 0
        %6956 = vmatpush1.bf16.msra.mxu0 0
        %6957 = vmatprep.subr.bf16.mxu0 0
        %6958 = vmatpush1.bf16.msra.mxu0 0
        %6959 = vmatprep.subr.bf16.mxu0 0
        %6960 = vmatpush1.bf16.msra.mxu0 0
        %6961 = vmatprep.subr.bf16.mxu0 0
        %6962 = vmatpush1.bf16.msra.mxu0 0
        %6963 = vmatprep.subr.bf16.mxu0 0
        %6964 = vmatpush1.bf16.msra.mxu0 0
        %6965 = vmatprep.subr.bf16.mxu0 0
        %6966 = vmatpush1.bf16.msra.mxu0 0
        %6967 = vmatprep.subr.bf16.mxu0 0
        %6968 = vmatpush1.bf16.msra.mxu0 0
        %6969 = vmatprep.subr.bf16.mxu0 0
        %6970 = vmatpush1.bf16.msra.mxu0 0
        %6971 = vmatprep.mubr.bf16.mxu0 0
        %6972 = vmatmul.mubr.bf16.gmra.mrb[0].mxu0 %v6889
        %v6973 = vpop.f32.mrb[0].mxu0
        %v6974 = vadd.f32 0.0, %v6973
        %v6975 = vpop.f32.mrb[0].mxu0
        %v6976 = vpop.f32.mrb[0].mxu0
        %v6977 = vpop.f32.mrb[0].mxu0
        %6978 = vdwg.mxu0
        %v6979 = vadd.f32 %v6854, %v6974
        %v6980 = vld [vmem:[%s2253] sm:$0x1]
        %v6981 = vld [vmem:[%s2253 + $0x2] sm:$0x1]
        %v6982 = vld [vmem:[%s3279] sm:$0xf]
        %v6983 = vld [vmem:[%s3279 + $0x4] sm:$0xf]
        %v6984 = vld [vmem:[%s3279 + $0x8] sm:$0xf]
        %v6985 = vld [vmem:[%s3279 + $0xc] sm:$0xf]
        %v6986 = vld [vmem:[%s3279 + $0x10] sm:$0xf]
        %v6987 = vld [vmem:[%s3279 + $0x14] sm:$0xf]
        %v6988 = vld [vmem:[%s3279 + $0x18] sm:$0xf]
        %v6989 = vld [vmem:[%s3279 + $0x1c] sm:$0xf]
        %v6990 = vld [vmem:[%s3279 + $0x20] sm:$0xf]
        %v6991 = vld [vmem:[%s3279 + $0x24] sm:$0xf]
        %v6992 = vld [vmem:[%s3279 + $0x28] sm:$0xf]
        %v6993 = vld [vmem:[%s3279 + $0x2c] sm:$0xf]
        %v6994 = vld [vmem:[%s3279 + $0x30] sm:$0xf]
        %v6995 = vld [vmem:[%s3279 + $0x34] sm:$0xf]
        %v6996 = vld [vmem:[%s3279 + $0x38] sm:$0xf]
        %v6997 = vld [vmem:[%s3279 + $0x3c] sm:$0xf]
        %v7000 = vcombine.low %v6980, %v6981
        %v7002 = vunpack.c.l.s4 1966171168
        %v7003 = vunpack.c.0.s8 %v7002
        %v7004 = vlaneseq
        %v7005 = vshrl.u32 %v7004, 7
        %v7006 = vsub.s32 %v7003, %v7005
        %v7007 = vrot.slane %v7000, %v7006
        %v7009 = vunpack.c.l.s4 1966171168
        %v7010 = vunpack.c.0.s8 %v7009
        %v7011 = vlaneseq
        %v7012 = vshrl.u32 %v7011, 7
        %v7013 = vsub.s32 %v7010, %v7012
        %v7014 = vrot.slane %v7007, %v7013
        %v7032 = vunpack.c.l.b16 %v6982
        %v7033 = vunpack.c.l.b16 %v6983
        %v7034 = vunpack.c.l.b16 %v6984
        %v7035 = vunpack.c.l.b16 %v6985
        %v7036 = vunpack.c.l.b16 %v6986
        %v7037 = vunpack.c.l.b16 %v6987
        %v7038 = vunpack.c.l.b16 %v6988
        %v7039 = vunpack.c.l.b16 %v6989
        %v7040 = vunpack.c.l.b16 %v6990
        %v7041 = vunpack.c.l.b16 %v6991
        %v7042 = vunpack.c.l.b16 %v6992
        %v7043 = vunpack.c.l.b16 %v6993
        %v7044 = vunpack.c.l.b16 %v6994
        %v7045 = vunpack.c.l.b16 %v6995
        %v7046 = vunpack.c.l.b16 %v6996
        %v7047 = vunpack.c.l.b16 %v6997
        %v7048 = vpack.c.b16 %v7033, %v7032
        %v7049 = vpack.c.b16 %v7035, %v7034
        %v7050 = vpack.c.b16 %v7037, %v7036
        %v7051 = vpack.c.b16 %v7039, %v7038
        %v7052 = vpack.c.b16 %v7041, %v7040
        %v7053 = vpack.c.b16 %v7043, %v7042
        %v7054 = vpack.c.b16 %v7045, %v7044
        %v7055 = vpack.c.b16 %v7047, %v7046
        %7064 = vmatprep.subr.bf16.mxu0 0
        %7065 = vmatpush1.bf16.msra.mxu0 %v7048
        %7066 = vmatprep.subr.bf16.mxu0 0
        %7067 = vmatpush1.bf16.msra.mxu0 %v7049
        %7068 = vmatprep.subr.bf16.mxu0 0
        %7069 = vmatpush1.bf16.msra.mxu0 %v7050
        %7070 = vmatprep.subr.bf16.mxu0 0
        %7071 = vmatpush1.bf16.msra.mxu0 %v7051
        %7072 = vmatprep.subr.bf16.mxu0 0
        %7073 = vmatpush1.bf16.msra.mxu0 %v7052
        %7074 = vmatprep.subr.bf16.mxu0 0
        %7075 = vmatpush1.bf16.msra.mxu0 %v7053
        %7076 = vmatprep.subr.bf16.mxu0 0
        %7077 = vmatpush1.bf16.msra.mxu0 %v7054
        %7078 = vmatprep.subr.bf16.mxu0 0
        %7079 = vmatpush1.bf16.msra.mxu0 %v7055
        %7080 = vmatprep.subr.bf16.mxu0 0
        %7081 = vmatpush1.bf16.msra.mxu0 0
        %7082 = vmatprep.subr.bf16.mxu0 0
        %7083 = vmatpush1.bf16.msra.mxu0 0
        %7084 = vmatprep.subr.bf16.mxu0 0
        %7085 = vmatpush1.bf16.msra.mxu0 0
        %7086 = vmatprep.subr.bf16.mxu0 0
        %7087 = vmatpush1.bf16.msra.mxu0 0
        %7088 = vmatprep.subr.bf16.mxu0 0
        %7089 = vmatpush1.bf16.msra.mxu0 0
        %7090 = vmatprep.subr.bf16.mxu0 0
        %7091 = vmatpush1.bf16.msra.mxu0 0
        %7092 = vmatprep.subr.bf16.mxu0 0
        %7093 = vmatpush1.bf16.msra.mxu0 0
        %7094 = vmatprep.subr.bf16.mxu0 0
        %7095 = vmatpush1.bf16.msra.mxu0 0
        %7096 = vmatprep.mubr.bf16.mxu0 0
        %7097 = vmatmul.mubr.bf16.gmra.mrb[0].mxu0 %v7014
        %v7098 = vpop.f32.mrb[0].mxu0
        %v7099 = vadd.f32 0.0, %v7098
        %v7100 = vpop.f32.mrb[0].mxu0
        %v7101 = vpop.f32.mrb[0].mxu0
        %v7102 = vpop.f32.mrb[0].mxu0
        %7103 = vdwg.mxu0
        %v7104 = vadd.f32 %v6979, %v7099
        %v7105 = vld [vmem:[%s2389] sm:$0x3]
        %v7106 = vld [vmem:[%s2389 + $0x2] sm:$0x3]
        %v7110 = vunpack.c.l.s4 1966171168
        %v7111 = vunpack.c.0.s8 %v7110
        %v7112 = vlaneseq
        %v7113 = vshrl.u32 %v7112, 7
        %v7114 = vsub.s32 %v7111, %v7113
        %v7115 = vrot.slane %v7105, %v7114
        %v7116 = vcombine.high %v7115, %v7115
        %v7118 = vunpack.c.l.s4 1966171168
        %v7119 = vunpack.c.0.s8 %v7118
        %v7120 = vlaneseq
        %v7121 = vshrl.u32 %v7120, 7
        %v7122 = vsub.s32 %v7119, %v7121
        %v7123 = vrot.slane %v7106, %v7122
        %v7124 = vcombine.high %v7123, %v7123
        %v7126 = vshrl.u32 %v7115, 16
        %v7128 = vrot.slane %v7126, 7
        %v7129 = vrot.slane %v7128, 1
        %v7131 = vshll.u32 %v7116, 16
        %v7133 = vsel %vm3850, %v7129, %v7131
        %v7135 = vshrl.u32 %v7123, 16
        %v7137 = vrot.slane %v7135, 7
        %v7138 = vrot.slane %v7137, 1
        %v7140 = vshll.u32 %v7124, 16
        %v7142 = vsel %vm3850, %v7138, %v7140
        %v7143 = vld [vmem:[%s3405] sm:$0xf]
        %v7144 = vld [vmem:[%s3405 + $0x4] sm:$0xf]
        %v7145 = vld [vmem:[%s3405 + $0x8] sm:$0xf]
        %v7146 = vld [vmem:[%s3405 + $0xc] sm:$0xf]
        %v7147 = vld [vmem:[%s3405 + $0x10] sm:$0xf]
        %v7148 = vld [vmem:[%s3405 + $0x14] sm:$0xf]
        %v7149 = vld [vmem:[%s3405 + $0x18] sm:$0xf]
        %v7150 = vld [vmem:[%s3405 + $0x1c] sm:$0xf]
        %v7151 = vld [vmem:[%s3405 + $0x20] sm:$0xf]
        %v7152 = vld [vmem:[%s3405 + $0x24] sm:$0xf]
        %v7153 = vld [vmem:[%s3405 + $0x28] sm:$0xf]
        %v7154 = vld [vmem:[%s3405 + $0x2c] sm:$0xf]
        %v7155 = vld [vmem:[%s3405 + $0x30] sm:$0xf]
        %v7156 = vld [vmem:[%s3405 + $0x34] sm:$0xf]
        %v7157 = vld [vmem:[%s3405 + $0x38] sm:$0xf]
        %v7158 = vld [vmem:[%s3405 + $0x3c] sm:$0xf]
        %v7159 = vcombine.low %v7133, %v7142
        %v7161 = vunpack.c.l.s4 1966171168
        %v7162 = vunpack.c.0.s8 %v7161
        %v7163 = vlaneseq
        %v7164 = vshrl.u32 %v7163, 7
        %v7165 = vsub.s32 %v7162, %v7164
        %v7166 = vrot.slane %v7159, %v7165
        %v7168 = vunpack.c.l.s4 1966171168
        %v7169 = vunpack.c.0.s8 %v7168
        %v7170 = vlaneseq
        %v7171 = vshrl.u32 %v7170, 7
        %v7172 = vsub.s32 %v7169, %v7171
        %v7173 = vrot.slane %v7166, %v7172
        %v7191 = vunpack.c.l.b16 %v7143
        %v7192 = vunpack.c.l.b16 %v7144
        %v7193 = vunpack.c.l.b16 %v7145
        %v7194 = vunpack.c.l.b16 %v7146
        %v7195 = vunpack.c.l.b16 %v7147
        %v7196 = vunpack.c.l.b16 %v7148
        %v7197 = vunpack.c.l.b16 %v7149
        %v7198 = vunpack.c.l.b16 %v7150
        %v7199 = vunpack.c.l.b16 %v7151
        %v7200 = vunpack.c.l.b16 %v7152
        %v7201 = vunpack.c.l.b16 %v7153
        %v7202 = vunpack.c.l.b16 %v7154
        %v7203 = vunpack.c.l.b16 %v7155
        %v7204 = vunpack.c.l.b16 %v7156
        %v7205 = vunpack.c.l.b16 %v7157
        %v7206 = vunpack.c.l.b16 %v7158
        %v7207 = vpack.c.b16 %v7192, %v7191
        %v7208 = vpack.c.b16 %v7194, %v7193
        %v7209 = vpack.c.b16 %v7196, %v7195
        %v7210 = vpack.c.b16 %v7198, %v7197
        %v7211 = vpack.c.b16 %v7200, %v7199
        %v7212 = vpack.c.b16 %v7202, %v7201
        %v7213 = vpack.c.b16 %v7204, %v7203
        %v7214 = vpack.c.b16 %v7206, %v7205
        %7223 = vmatprep.subr.bf16.mxu0 0
        %7224 = vmatpush1.bf16.msra.mxu0 %v7207
        %7225 = vmatprep.subr.bf16.mxu0 0
        %7226 = vmatpush1.bf16.msra.mxu0 %v7208
        %7227 = vmatprep.subr.bf16.mxu0 0
        %7228 = vmatpush1.bf16.msra.mxu0 %v7209
        %7229 = vmatprep.subr.bf16.mxu0 0
        %7230 = vmatpush1.bf16.msra.mxu0 %v7210
        %7231 = vmatprep.subr.bf16.mxu0 0
        %7232 = vmatpush1.bf16.msra.mxu0 %v7211
        %7233 = vmatprep.subr.bf16.mxu0 0
        %7234 = vmatpush1.bf16.msra.mxu0 %v7212
        %7235 = vmatprep.subr.bf16.mxu0 0
        %7236 = vmatpush1.bf16.msra.mxu0 %v7213
        %7237 = vmatprep.subr.bf16.mxu0 0
        %7238 = vmatpush1.bf16.msra.mxu0 %v7214
        %7239 = vmatprep.subr.bf16.mxu0 0
        %7240 = vmatpush1.bf16.msra.mxu0 0
        %7241 = vmatprep.subr.bf16.mxu0 0
        %7242 = vmatpush1.bf16.msra.mxu0 0
        %7243 = vmatprep.subr.bf16.mxu0 0
        %7244 = vmatpush1.bf16.msra.mxu0 0
        %7245 = vmatprep.subr.bf16.mxu0 0
        %7246 = vmatpush1.bf16.msra.mxu0 0
        %7247 = vmatprep.subr.bf16.mxu0 0
        %7248 = vmatpush1.bf16.msra.mxu0 0
        %7249 = vmatprep.subr.bf16.mxu0 0
        %7250 = vmatpush1.bf16.msra.mxu0 0
        %7251 = vmatprep.subr.bf16.mxu0 0
        %7252 = vmatpush1.bf16.msra.mxu0 0
        %7253 = vmatprep.subr.bf16.mxu0 0
        %7254 = vmatpush1.bf16.msra.mxu0 0
        %7255 = vmatprep.mubr.bf16.mxu0 0
        %7256 = vmatmul.mubr.bf16.gmra.mrb[0].mxu0 %v7173
        %v7257 = vpop.f32.mrb[0].mxu0
        %v7258 = vadd.f32 0.0, %v7257
        %v7259 = vpop.f32.mrb[0].mxu0
        %v7260 = vpop.f32.mrb[0].mxu0
        %v7261 = vpop.f32.mrb[0].mxu0
        %7262 = vdwg.mxu0
        %v7263 = vadd.f32 %v7104, %v7258
        %v7264 = vld [vmem:[%s4] sm:$0x1]
        %v7266 = vlaneseq
        %v7267 = vshrl.u32 %v7266, 7
        %v7268 = vsub.s32 0, %v7267
        %v7269 = vrot.slane %v7264, %v7268
        %v7271 = vadd.f32 %v7263, %v7269
        %v7272 = vmax.f32 %v7271, 0.0
        %v7273 = vpack.c.bf16 %v7272, %v7272
        %v7276 = vunpack.c.l.s4 1966171168
        %v7277 = vunpack.c.0.s8 %v7276
        %v7278 = vlaneseq
        %v7279 = vshrl.u32 %v7278, 7
        %v7280 = vsub.s32 %v7277, %v7279
        %v7281 = vrot.slane %v7273, %v7280
        %v7282 = vcombine.high %v7281, %v7281
        %v7284 = vunpack.c.l.s4 1966171168
        %v7285 = vunpack.c.0.s8 %v7284
        %v7286 = vlaneseq
        %v7287 = vshrl.u32 %v7286, 7
        %v7288 = vsub.s32 %v7285, %v7287
        %v7289 = vrot.slane %v7281, %v7288
        %v7291 = vunpack.c.l.s4 1966171168
        %v7292 = vunpack.c.0.s8 %v7291
        %v7293 = vlaneseq
        %v7294 = vshrl.u32 %v7293, 7
        %v7295 = vsub.s32 %v7292, %v7294
        %v7296 = vrot.slane %v7282, %v7295
        %v7298 = vunpack.c.l.s4 1935823168
        %v7299 = vunpack.c.0.s8 %v7298
        %v7300 = vlaneseq
        %v7301 = vshrl.u32 %v7300, 7
        %v7302 = vsub.s32 %v7299, %v7301
        %v7303 = vrot.slane %v7289, %v7302
        %v7305 = vunpack.c.l.s4 1935823168
        %v7306 = vunpack.c.0.s8 %v7305
        %v7307 = vlaneseq
        %v7308 = vshrl.u32 %v7307, 7
        %v7309 = vsub.s32 %v7306, %v7308
        %v7310 = vrot.slane %v7296, %v7309
        %v7312 = vshrl.u32 %v7303, 16
        %v7314 = vrot.slane %v7312, 7
        %v7315 = vshll.u32 %v7303, 16
        %v7317 = vor.u32 %v7314, %v7315
        %v7319 = vshrl.u32 %v7310, 16
        %v7321 = vrot.slane %v7319, 7
        %v7322 = vshll.u32 %v7310, 16
        %v7324 = vor.u32 %v7321, %v7322
        %s7327 = scalar_lea.vmem [#allocation3], 2
        %v7328 = vld [vmem:[%s7327] sm:$0x3]
        %v7329 = vsel %vm1021, %v7317, %v7328
        %7330 = vst [vmem:[%s7327] sm:$0x3] %v7329
        %v7331 = vld [vmem:[%s7327 + $0x2] sm:$0x3]
        %v7332 = vsel %vm1021, %v7324, %v7331
        %7333 = vst [vmem:[%s7327 + $0x2] sm:$0x3] %v7332
        %v7334 = vld [vmem:[#allocation3] sm:$0x1]
        %v7335 = vld [vmem:[#allocation3 + $0x2] sm:$0x1]
        %v7336 = vld [vmem:[%s5] sm:$0xf]
        %v7337 = vld [vmem:[%s5 + $0x4] sm:$0xf]
        %v7338 = vld [vmem:[%s5 + $0x8] sm:$0xf]
        %v7339 = vld [vmem:[%s5 + $0xc] sm:$0xf]
        %v7340 = vld [vmem:[%s5 + $0x10] sm:$0xf]
        %v7341 = vld [vmem:[%s5 + $0x14] sm:$0xf]
        %v7342 = vld [vmem:[%s5 + $0x18] sm:$0xf]
        %v7343 = vld [vmem:[%s5 + $0x1c] sm:$0xf]
        %v7344 = vld [vmem:[%s5 + $0x20] sm:$0xf]
        %v7345 = vld [vmem:[%s5 + $0x24] sm:$0xf]
        %v7346 = vld [vmem:[%s5 + $0x28] sm:$0xf]
        %v7347 = vld [vmem:[%s5 + $0x2c] sm:$0xf]
        %v7348 = vld [vmem:[%s5 + $0x30] sm:$0xf]
        %v7349 = vld [vmem:[%s5 + $0x34] sm:$0xf]
        %v7350 = vld [vmem:[%s5 + $0x38] sm:$0xf]
        %v7351 = vld [vmem:[%s5 + $0x3c] sm:$0xf]
        %s7352 = scalar_lea.vmem [#allocation3], 6
        %v7353 = vld [vmem:[%s7352] sm:$0x1]
        %v7354 = vld [vmem:[%s7352 + $0x2] sm:$0x1]
        %s7355 = scalar_lea.vmem %s5, 64
        %v7356 = vld [vmem:[%s7355] sm:$0xf]
        %v7357 = vld [vmem:[%s7355 + $0x4] sm:$0xf]
        %v7358 = vld [vmem:[%s7355 + $0x8] sm:$0xf]
        %v7359 = vld [vmem:[%s7355 + $0xc] sm:$0xf]
        %v7360 = vld [vmem:[%s7355 + $0x10] sm:$0xf]
        %v7361 = vld [vmem:[%s7355 + $0x14] sm:$0xf]
        %v7362 = vld [vmem:[%s7355 + $0x18] sm:$0xf]
        %v7363 = vld [vmem:[%s7355 + $0x1c] sm:$0xf]
        %v7364 = vld [vmem:[%s7355 + $0x20] sm:$0xf]
        %v7365 = vld [vmem:[%s7355 + $0x24] sm:$0xf]
        %v7366 = vld [vmem:[%s7355 + $0x28] sm:$0xf]
        %v7367 = vld [vmem:[%s7355 + $0x2c] sm:$0xf]
        %v7368 = vld [vmem:[%s7355 + $0x30] sm:$0xf]
        %v7369 = vld [vmem:[%s7355 + $0x34] sm:$0xf]
        %v7370 = vld [vmem:[%s7355 + $0x38] sm:$0xf]
        %v7371 = vld [vmem:[%s7355 + $0x3c] sm:$0xf]
        %v7374 = vcombine.low %v7353, %v7354
        %v7376 = vunpack.c.l.s4 1966171168
        %v7377 = vunpack.c.0.s8 %v7376
        %v7378 = vlaneseq
        %v7379 = vshrl.u32 %v7378, 7
        %v7380 = vsub.s32 %v7377, %v7379
        %v7381 = vrot.slane %v7374, %v7380
        %v7383 = vunpack.c.l.s4 1966171168
        %v7384 = vunpack.c.0.s8 %v7383
        %v7385 = vlaneseq
        %v7386 = vshrl.u32 %v7385, 7
        %v7387 = vsub.s32 %v7384, %v7386
        %v7388 = vrot.slane %v7381, %v7387
        %v7406 = vunpack.c.l.b16 %v7356
        %v7407 = vunpack.c.l.b16 %v7357
        %v7408 = vunpack.c.l.b16 %v7358
        %v7409 = vunpack.c.l.b16 %v7359
        %v7410 = vunpack.c.l.b16 %v7360
        %v7411 = vunpack.c.l.b16 %v7361
        %v7412 = vunpack.c.l.b16 %v7362
        %v7413 = vunpack.c.l.b16 %v7363
        %v7414 = vunpack.c.l.b16 %v7364
        %v7415 = vunpack.c.l.b16 %v7365
        %v7416 = vunpack.c.l.b16 %v7366
        %v7417 = vunpack.c.l.b16 %v7367
        %v7418 = vunpack.c.l.b16 %v7368
        %v7419 = vunpack.c.l.b16 %v7369
        %v7420 = vunpack.c.l.b16 %v7370
        %v7421 = vunpack.c.l.b16 %v7371
        %v7422 = vpack.c.b16 %v7407, %v7406
        %v7423 = vpack.c.b16 %v7409, %v7408
        %v7424 = vpack.c.b16 %v7411, %v7410
        %v7425 = vpack.c.b16 %v7413, %v7412
        %v7426 = vpack.c.b16 %v7415, %v7414
        %v7427 = vpack.c.b16 %v7417, %v7416
        %v7428 = vpack.c.b16 %v7419, %v7418
        %v7429 = vpack.c.b16 %v7421, %v7420
        %7438 = vmatprep.subr.bf16.mxu0 0
        %7439 = vmatpush1.bf16.msra.mxu0 %v7422
        %7440 = vmatprep.subr.bf16.mxu0 0
        %7441 = vmatpush1.bf16.msra.mxu0 %v7423
        %7442 = vmatprep.subr.bf16.mxu0 0
        %7443 = vmatpush1.bf16.msra.mxu0 %v7424
        %7444 = vmatprep.subr.bf16.mxu0 0
        %7445 = vmatpush1.bf16.msra.mxu0 %v7425
        %7446 = vmatprep.subr.bf16.mxu0 0
        %7447 = vmatpush1.bf16.msra.mxu0 %v7426
        %7448 = vmatprep.subr.bf16.mxu0 0
        %7449 = vmatpush1.bf16.msra.mxu0 %v7427
        %7450 = vmatprep.subr.bf16.mxu0 0
        %7451 = vmatpush1.bf16.msra.mxu0 %v7428
        %7452 = vmatprep.subr.bf16.mxu0 0
        %7453 = vmatpush1.bf16.msra.mxu0 %v7429
        %7454 = vmatprep.subr.bf16.mxu0 0
        %7455 = vmatpush1.bf16.msra.mxu0 0
        %7456 = vmatprep.subr.bf16.mxu0 0
        %7457 = vmatpush1.bf16.msra.mxu0 0
        %7458 = vmatprep.subr.bf16.mxu0 0
        %7459 = vmatpush1.bf16.msra.mxu0 0
        %7460 = vmatprep.subr.bf16.mxu0 0
        %7461 = vmatpush1.bf16.msra.mxu0 0
        %7462 = vmatprep.subr.bf16.mxu0 0
        %7463 = vmatpush1.bf16.msra.mxu0 0
        %7464 = vmatprep.subr.bf16.mxu0 0
        %7465 = vmatpush1.bf16.msra.mxu0 0
        %7466 = vmatprep.subr.bf16.mxu0 0
        %7467 = vmatpush1.bf16.msra.mxu0 0
        %7468 = vmatprep.subr.bf16.mxu0 0
        %7469 = vmatpush1.bf16.msra.mxu0 0
        %7470 = vmatprep.mubr.bf16.mxu0 0
        %7471 = vmatmul.mubr.bf16.gmra.mrb[0].mxu0 %v7388
        %v7472 = vpop.f32.mrb[0].mxu0
        %v7473 = vadd.f32 0.0, %v7472
        %v7474 = vpop.f32.mrb[0].mxu0
        %v7475 = vpop.f32.mrb[0].mxu0
        %v7476 = vpop.f32.mrb[0].mxu0
        %7477 = vdwg.mxu0
        %v7480 = vcombine.low %v7334, %v7335
        %v7482 = vunpack.c.l.s4 1966171168
        %v7483 = vunpack.c.0.s8 %v7482
        %v7484 = vlaneseq
        %v7485 = vshrl.u32 %v7484, 7
        %v7486 = vsub.s32 %v7483, %v7485
        %v7487 = vrot.slane %v7480, %v7486
        %v7489 = vunpack.c.l.s4 1966171168
        %v7490 = vunpack.c.0.s8 %v7489
        %v7491 = vlaneseq
        %v7492 = vshrl.u32 %v7491, 7
        %v7493 = vsub.s32 %v7490, %v7492
        %v7494 = vrot.slane %v7487, %v7493
        %v7512 = vunpack.c.l.b16 %v7336
        %v7513 = vunpack.c.l.b16 %v7337
        %v7514 = vunpack.c.l.b16 %v7338
        %v7515 = vunpack.c.l.b16 %v7339
        %v7516 = vunpack.c.l.b16 %v7340
        %v7517 = vunpack.c.l.b16 %v7341
        %v7518 = vunpack.c.l.b16 %v7342
        %v7519 = vunpack.c.l.b16 %v7343
        %v7520 = vunpack.c.l.b16 %v7344
        %v7521 = vunpack.c.l.b16 %v7345
        %v7522 = vunpack.c.l.b16 %v7346
        %v7523 = vunpack.c.l.b16 %v7347
        %v7524 = vunpack.c.l.b16 %v7348
        %v7525 = vunpack.c.l.b16 %v7349
        %v7526 = vunpack.c.l.b16 %v7350
        %v7527 = vunpack.c.l.b16 %v7351
        %v7528 = vpack.c.b16 %v7513, %v7512
        %v7529 = vpack.c.b16 %v7515, %v7514
        %v7530 = vpack.c.b16 %v7517, %v7516
        %v7531 = vpack.c.b16 %v7519, %v7518
        %v7532 = vpack.c.b16 %v7521, %v7520
        %v7533 = vpack.c.b16 %v7523, %v7522
        %v7534 = vpack.c.b16 %v7525, %v7524
        %v7535 = vpack.c.b16 %v7527, %v7526
        %7544 = vmatprep.subr.bf16.mxu0 0
        %7545 = vmatpush1.bf16.msra.mxu0 %v7528
        %7546 = vmatprep.subr.bf16.mxu0 0
        %7547 = vmatpush1.bf16.msra.mxu0 %v7529
        %7548 = vmatprep.subr.bf16.mxu0 0
        %7549 = vmatpush1.bf16.msra.mxu0 %v7530
        %7550 = vmatprep.subr.bf16.mxu0 0
        %7551 = vmatpush1.bf16.msra.mxu0 %v7531
        %7552 = vmatprep.subr.bf16.mxu0 0
        %7553 = vmatpush1.bf16.msra.mxu0 %v7532
        %7554 = vmatprep.subr.bf16.mxu0 0
        %7555 = vmatpush1.bf16.msra.mxu0 %v7533
        %7556 = vmatprep.subr.bf16.mxu0 0
        %7557 = vmatpush1.bf16.msra.mxu0 %v7534
        %7558 = vmatprep.subr.bf16.mxu0 0
        %7559 = vmatpush1.bf16.msra.mxu0 %v7535
        %7560 = vmatprep.subr.bf16.mxu0 0
        %7561 = vmatpush1.bf16.msra.mxu0 0
        %7562 = vmatprep.subr.bf16.mxu0 0
        %7563 = vmatpush1.bf16.msra.mxu0 0
        %7564 = vmatprep.subr.bf16.mxu0 0
        %7565 = vmatpush1.bf16.msra.mxu0 0
        %7566 = vmatprep.subr.bf16.mxu0 0
        %7567 = vmatpush1.bf16.msra.mxu0 0
        %7568 = vmatprep.subr.bf16.mxu0 0
        %7569 = vmatpush1.bf16.msra.mxu0 0
        %7570 = vmatprep.subr.bf16.mxu0 0
        %7571 = vmatpush1.bf16.msra.mxu0 0
        %7572 = vmatprep.subr.bf16.mxu0 0
        %7573 = vmatpush1.bf16.msra.mxu0 0
        %7574 = vmatprep.subr.bf16.mxu0 0
        %7575 = vmatpush1.bf16.msra.mxu0 0
        %7576 = vmatprep.mubr.bf16.mxu0 0
        %7577 = vmatmul.mubr.bf16.gmra.mrb[0].mxu0 %v7494
        %v7578 = vpop.f32.mrb[0].mxu0
        %v7579 = vadd.f32 %v7473, %v7578
        %v7580 = vpop.f32.mrb[0].mxu0
        %v7581 = vpop.f32.mrb[0].mxu0
        %v7582 = vpop.f32.mrb[0].mxu0
        %7583 = vdwg.mxu0
        %v7584 = vld [vmem:[#allocation3] sm:$0x3]
        %v7585 = vld [vmem:[#allocation3 + $0x2] sm:$0x3]
        %v7589 = vunpack.c.l.s4 1966171168
        %v7590 = vunpack.c.0.s8 %v7589
        %v7591 = vlaneseq
        %v7592 = vshrl.u32 %v7591, 7
        %v7593 = vsub.s32 %v7590, %v7592
        %v7594 = vrot.slane %v7584, %v7593
        %v7595 = vcombine.high %v7594, %v7594
        %v7597 = vunpack.c.l.s4 1966171168
        %v7598 = vunpack.c.0.s8 %v7597
        %v7599 = vlaneseq
        %v7600 = vshrl.u32 %v7599, 7
        %v7601 = vsub.s32 %v7598, %v7600
        %v7602 = vrot.slane %v7585, %v7601
        %v7603 = vcombine.high %v7602, %v7602
        %v7605 = vshrl.u32 %v7594, 16
        %v7607 = vrot.slane %v7605, 7
        %v7608 = vrot.slane %v7607, 1
        %v7610 = vshll.u32 %v7595, 16
        %v7612 = vsel %vm3850, %v7608, %v7610
        %v7614 = vshrl.u32 %v7602, 16
        %v7616 = vrot.slane %v7614, 7
        %v7617 = vrot.slane %v7616, 1
        %v7619 = vshll.u32 %v7603, 16
        %v7621 = vsel %vm3850, %v7617, %v7619
        %s7622 = scalar_lea.vmem %s5, 128
        %v7623 = vld [vmem:[%s7622] sm:$0xf]
        %v7624 = vld [vmem:[%s7622 + $0x4] sm:$0xf]
        %v7625 = vld [vmem:[%s7622 + $0x8] sm:$0xf]
        %v7626 = vld [vmem:[%s7622 + $0xc] sm:$0xf]
        %v7627 = vld [vmem:[%s7622 + $0x10] sm:$0xf]
        %v7628 = vld [vmem:[%s7622 + $0x14] sm:$0xf]
        %v7629 = vld [vmem:[%s7622 + $0x18] sm:$0xf]
        %v7630 = vld [vmem:[%s7622 + $0x1c] sm:$0xf]
        %v7631 = vld [vmem:[%s7622 + $0x20] sm:$0xf]
        %v7632 = vld [vmem:[%s7622 + $0x24] sm:$0xf]
        %v7633 = vld [vmem:[%s7622 + $0x28] sm:$0xf]
        %v7634 = vld [vmem:[%s7622 + $0x2c] sm:$0xf]
        %v7635 = vld [vmem:[%s7622 + $0x30] sm:$0xf]
        %v7636 = vld [vmem:[%s7622 + $0x34] sm:$0xf]
        %v7637 = vld [vmem:[%s7622 + $0x38] sm:$0xf]
        %v7638 = vld [vmem:[%s7622 + $0x3c] sm:$0xf]
        %v7639 = vcombine.low %v7612, %v7621
        %v7641 = vunpack.c.l.s4 1966171168
        %v7642 = vunpack.c.0.s8 %v7641
        %v7643 = vlaneseq
        %v7644 = vshrl.u32 %v7643, 7
        %v7645 = vsub.s32 %v7642, %v7644
        %v7646 = vrot.slane %v7639, %v7645
        %v7648 = vunpack.c.l.s4 1966171168
        %v7649 = vunpack.c.0.s8 %v7648
        %v7650 = vlaneseq
        %v7651 = vshrl.u32 %v7650, 7
        %v7652 = vsub.s32 %v7649, %v7651
        %v7653 = vrot.slane %v7646, %v7652
        %v7671 = vunpack.c.l.b16 %v7623
        %v7672 = vunpack.c.l.b16 %v7624
        %v7673 = vunpack.c.l.b16 %v7625
        %v7674 = vunpack.c.l.b16 %v7626
        %v7675 = vunpack.c.l.b16 %v7627
        %v7676 = vunpack.c.l.b16 %v7628
        %v7677 = vunpack.c.l.b16 %v7629
        %v7678 = vunpack.c.l.b16 %v7630
        %v7679 = vunpack.c.l.b16 %v7631
        %v7680 = vunpack.c.l.b16 %v7632
        %v7681 = vunpack.c.l.b16 %v7633
        %v7682 = vunpack.c.l.b16 %v7634
        %v7683 = vunpack.c.l.b16 %v7635
        %v7684 = vunpack.c.l.b16 %v7636
        %v7685 = vunpack.c.l.b16 %v7637
        %v7686 = vunpack.c.l.b16 %v7638
        %v7687 = vpack.c.b16 %v7672, %v7671
        %v7688 = vpack.c.b16 %v7674, %v7673
        %v7689 = vpack.c.b16 %v7676, %v7675
        %v7690 = vpack.c.b16 %v7678, %v7677
        %v7691 = vpack.c.b16 %v7680, %v7679
        %v7692 = vpack.c.b16 %v7682, %v7681
        %v7693 = vpack.c.b16 %v7684, %v7683
        %v7694 = vpack.c.b16 %v7686, %v7685
        %7703 = vmatprep.subr.bf16.mxu0 0
        %7704 = vmatpush1.bf16.msra.mxu0 %v7687
        %7705 = vmatprep.subr.bf16.mxu0 0
        %7706 = vmatpush1.bf16.msra.mxu0 %v7688
        %7707 = vmatprep.subr.bf16.mxu0 0
        %7708 = vmatpush1.bf16.msra.mxu0 %v7689
        %7709 = vmatprep.subr.bf16.mxu0 0
        %7710 = vmatpush1.bf16.msra.mxu0 %v7690
        %7711 = vmatprep.subr.bf16.mxu0 0
        %7712 = vmatpush1.bf16.msra.mxu0 %v7691
        %7713 = vmatprep.subr.bf16.mxu0 0
        %7714 = vmatpush1.bf16.msra.mxu0 %v7692
        %7715 = vmatprep.subr.bf16.mxu0 0
        %7716 = vmatpush1.bf16.msra.mxu0 %v7693
        %7717 = vmatprep.subr.bf16.mxu0 0
        %7718 = vmatpush1.bf16.msra.mxu0 %v7694
        %7719 = vmatprep.subr.bf16.mxu0 0
        %7720 = vmatpush1.bf16.msra.mxu0 0
        %7721 = vmatprep.subr.bf16.mxu0 0
        %7722 = vmatpush1.bf16.msra.mxu0 0
        %7723 = vmatprep.subr.bf16.mxu0 0
        %7724 = vmatpush1.bf16.msra.mxu0 0
        %7725 = vmatprep.subr.bf16.mxu0 0
        %7726 = vmatpush1.bf16.msra.mxu0 0
        %7727 = vmatprep.subr.bf16.mxu0 0
        %7728 = vmatpush1.bf16.msra.mxu0 0
        %7729 = vmatprep.subr.bf16.mxu0 0
        %7730 = vmatpush1.bf16.msra.mxu0 0
        %7731 = vmatprep.subr.bf16.mxu0 0
        %7732 = vmatpush1.bf16.msra.mxu0 0
        %7733 = vmatprep.subr.bf16.mxu0 0
        %7734 = vmatpush1.bf16.msra.mxu0 0
        %7735 = vmatprep.mubr.bf16.mxu0 0
        %7736 = vmatmul.mubr.bf16.gmra.mrb[0].mxu0 %v7653
        %v7737 = vpop.f32.mrb[0].mxu0
        %v7738 = vadd.f32 0.0, %v7737
        %v7739 = vpop.f32.mrb[0].mxu0
        %v7740 = vpop.f32.mrb[0].mxu0
        %v7741 = vpop.f32.mrb[0].mxu0
        %7742 = vdwg.mxu0
        %v7743 = vadd.f32 %v7579, %v7738
        %v7744 = vld [vmem:[%s4871] sm:$0x1]
        %v7745 = vld [vmem:[%s4871 + $0x2] sm:$0x1]
        %s7746 = scalar_lea.vmem %s5, 192
        %v7747 = vld [vmem:[%s7746] sm:$0xf]
        %v7748 = vld [vmem:[%s7746 + $0x4] sm:$0xf]
        %v7749 = vld [vmem:[%s7746 + $0x8] sm:$0xf]
        %v7750 = vld [vmem:[%s7746 + $0xc] sm:$0xf]
        %v7751 = vld [vmem:[%s7746 + $0x10] sm:$0xf]
        %v7752 = vld [vmem:[%s7746 + $0x14] sm:$0xf]
        %v7753 = vld [vmem:[%s7746 + $0x18] sm:$0xf]
        %v7754 = vld [vmem:[%s7746 + $0x1c] sm:$0xf]
        %v7755 = vld [vmem:[%s7746 + $0x20] sm:$0xf]
        %v7756 = vld [vmem:[%s7746 + $0x24] sm:$0xf]
        %v7757 = vld [vmem:[%s7746 + $0x28] sm:$0xf]
        %v7758 = vld [vmem:[%s7746 + $0x2c] sm:$0xf]
        %v7759 = vld [vmem:[%s7746 + $0x30] sm:$0xf]
        %v7760 = vld [vmem:[%s7746 + $0x34] sm:$0xf]
        %v7761 = vld [vmem:[%s7746 + $0x38] sm:$0xf]
        %v7762 = vld [vmem:[%s7746 + $0x3c] sm:$0xf]
        %v7765 = vcombine.low %v7744, %v7745
        %v7767 = vunpack.c.l.s4 1966171168
        %v7768 = vunpack.c.0.s8 %v7767
        %v7769 = vlaneseq
        %v7770 = vshrl.u32 %v7769, 7
        %v7771 = vsub.s32 %v7768, %v7770
        %v7772 = vrot.slane %v7765, %v7771
        %v7774 = vunpack.c.l.s4 1966171168
        %v7775 = vunpack.c.0.s8 %v7774
        %v7776 = vlaneseq
        %v7777 = vshrl.u32 %v7776, 7
        %v7778 = vsub.s32 %v7775, %v7777
        %v7779 = vrot.slane %v7772, %v7778
        %v7797 = vunpack.c.l.b16 %v7747
        %v7798 = vunpack.c.l.b16 %v7748
        %v7799 = vunpack.c.l.b16 %v7749
        %v7800 = vunpack.c.l.b16 %v7750
        %v7801 = vunpack.c.l.b16 %v7751
        %v7802 = vunpack.c.l.b16 %v7752
        %v7803 = vunpack.c.l.b16 %v7753
        %v7804 = vunpack.c.l.b16 %v7754
        %v7805 = vunpack.c.l.b16 %v7755
        %v7806 = vunpack.c.l.b16 %v7756
        %v7807 = vunpack.c.l.b16 %v7757
        %v7808 = vunpack.c.l.b16 %v7758
        %v7809 = vunpack.c.l.b16 %v7759
        %v7810 = vunpack.c.l.b16 %v7760
        %v7811 = vunpack.c.l.b16 %v7761
        %v7812 = vunpack.c.l.b16 %v7762
        %v7813 = vpack.c.b16 %v7798, %v7797
        %v7814 = vpack.c.b16 %v7800, %v7799
        %v7815 = vpack.c.b16 %v7802, %v7801
        %v7816 = vpack.c.b16 %v7804, %v7803
        %v7817 = vpack.c.b16 %v7806, %v7805
        %v7818 = vpack.c.b16 %v7808, %v7807
        %v7819 = vpack.c.b16 %v7810, %v7809
        %v7820 = vpack.c.b16 %v7812, %v7811
        %7829 = vmatprep.subr.bf16.mxu0 0
        %7830 = vmatpush1.bf16.msra.mxu0 %v7813
        %7831 = vmatprep.subr.bf16.mxu0 0
        %7832 = vmatpush1.bf16.msra.mxu0 %v7814
        %7833 = vmatprep.subr.bf16.mxu0 0
        %7834 = vmatpush1.bf16.msra.mxu0 %v7815
        %7835 = vmatprep.subr.bf16.mxu0 0
        %7836 = vmatpush1.bf16.msra.mxu0 %v7816
        %7837 = vmatprep.subr.bf16.mxu0 0
        %7838 = vmatpush1.bf16.msra.mxu0 %v7817
        %7839 = vmatprep.subr.bf16.mxu0 0
        %7840 = vmatpush1.bf16.msra.mxu0 %v7818
        %7841 = vmatprep.subr.bf16.mxu0 0
        %7842 = vmatpush1.bf16.msra.mxu0 %v7819
        %7843 = vmatprep.subr.bf16.mxu0 0
        %7844 = vmatpush1.bf16.msra.mxu0 %v7820
        %7845 = vmatprep.subr.bf16.mxu0 0
        %7846 = vmatpush1.bf16.msra.mxu0 0
        %7847 = vmatprep.subr.bf16.mxu0 0
        %7848 = vmatpush1.bf16.msra.mxu0 0
        %7849 = vmatprep.subr.bf16.mxu0 0
        %7850 = vmatpush1.bf16.msra.mxu0 0
        %7851 = vmatprep.subr.bf16.mxu0 0
        %7852 = vmatpush1.bf16.msra.mxu0 0
        %7853 = vmatprep.subr.bf16.mxu0 0
        %7854 = vmatpush1.bf16.msra.mxu0 0
        %7855 = vmatprep.subr.bf16.mxu0 0
        %7856 = vmatpush1.bf16.msra.mxu0 0
        %7857 = vmatprep.subr.bf16.mxu0 0
        %7858 = vmatpush1.bf16.msra.mxu0 0
        %7859 = vmatprep.subr.bf16.mxu0 0
        %7860 = vmatpush1.bf16.msra.mxu0 0
        %7861 = vmatprep.mubr.bf16.mxu0 0
        %7862 = vmatmul.mubr.bf16.gmra.mrb[0].mxu0 %v7779
        %v7863 = vpop.f32.mrb[0].mxu0
        %v7864 = vadd.f32 0.0, %v7863
        %v7865 = vpop.f32.mrb[0].mxu0
        %v7866 = vpop.f32.mrb[0].mxu0
        %v7867 = vpop.f32.mrb[0].mxu0
        %7868 = vdwg.mxu0
        %v7869 = vadd.f32 %v7743, %v7864
        %v7870 = vld [vmem:[%s3564] sm:$0x1]
        %v7871 = vld [vmem:[%s3564 + $0x2] sm:$0x1]
        %s7872 = scalar_lea.vmem %s5, 256
        %v7873 = vld [vmem:[%s7872] sm:$0xf]
        %v7874 = vld [vmem:[%s7872 + $0x4] sm:$0xf]
        %v7875 = vld [vmem:[%s7872 + $0x8] sm:$0xf]
        %v7876 = vld [vmem:[%s7872 + $0xc] sm:$0xf]
        %v7877 = vld [vmem:[%s7872 + $0x10] sm:$0xf]
        %v7878 = vld [vmem:[%s7872 + $0x14] sm:$0xf]
        %v7879 = vld [vmem:[%s7872 + $0x18] sm:$0xf]
        %v7880 = vld [vmem:[%s7872 + $0x1c] sm:$0xf]
        %v7881 = vld [vmem:[%s7872 + $0x20] sm:$0xf]
        %v7882 = vld [vmem:[%s7872 + $0x24] sm:$0xf]
        %v7883 = vld [vmem:[%s7872 + $0x28] sm:$0xf]
        %v7884 = vld [vmem:[%s7872 + $0x2c] sm:$0xf]
        %v7885 = vld [vmem:[%s7872 + $0x30] sm:$0xf]
        %v7886 = vld [vmem:[%s7872 + $0x34] sm:$0xf]
        %v7887 = vld [vmem:[%s7872 + $0x38] sm:$0xf]
        %v7888 = vld [vmem:[%s7872 + $0x3c] sm:$0xf]
        %v7891 = vcombine.low %v7870, %v7871
        %v7893 = vunpack.c.l.s4 1966171168
        %v7894 = vunpack.c.0.s8 %v7893
        %v7895 = vlaneseq
        %v7896 = vshrl.u32 %v7895, 7
        %v7897 = vsub.s32 %v7894, %v7896
        %v7898 = vrot.slane %v7891, %v7897
        %v7900 = vunpack.c.l.s4 1966171168
        %v7901 = vunpack.c.0.s8 %v7900
        %v7902 = vlaneseq
        %v7903 = vshrl.u32 %v7902, 7
        %v7904 = vsub.s32 %v7901, %v7903
        %v7905 = vrot.slane %v7898, %v7904
        %v7923 = vunpack.c.l.b16 %v7873
        %v7924 = vunpack.c.l.b16 %v7874
        %v7925 = vunpack.c.l.b16 %v7875
        %v7926 = vunpack.c.l.b16 %v7876
        %v7927 = vunpack.c.l.b16 %v7877
        %v7928 = vunpack.c.l.b16 %v7878
        %v7929 = vunpack.c.l.b16 %v7879
        %v7930 = vunpack.c.l.b16 %v7880
        %v7931 = vunpack.c.l.b16 %v7881
        %v7932 = vunpack.c.l.b16 %v7882
        %v7933 = vunpack.c.l.b16 %v7883
        %v7934 = vunpack.c.l.b16 %v7884
        %v7935 = vunpack.c.l.b16 %v7885
        %v7936 = vunpack.c.l.b16 %v7886
        %v7937 = vunpack.c.l.b16 %v7887
        %v7938 = vunpack.c.l.b16 %v7888
        %v7939 = vpack.c.b16 %v7924, %v7923
        %v7940 = vpack.c.b16 %v7926, %v7925
        %v7941 = vpack.c.b16 %v7928, %v7927
        %v7942 = vpack.c.b16 %v7930, %v7929
        %v7943 = vpack.c.b16 %v7932, %v7931
        %v7944 = vpack.c.b16 %v7934, %v7933
        %v7945 = vpack.c.b16 %v7936, %v7935
        %v7946 = vpack.c.b16 %v7938, %v7937
        %7955 = vmatprep.subr.bf16.mxu0 0
        %7956 = vmatpush1.bf16.msra.mxu0 %v7939
        %7957 = vmatprep.subr.bf16.mxu0 0
        %7958 = vmatpush1.bf16.msra.mxu0 %v7940
        %7959 = vmatprep.subr.bf16.mxu0 0
        %7960 = vmatpush1.bf16.msra.mxu0 %v7941
        %7961 = vmatprep.subr.bf16.mxu0 0
        %7962 = vmatpush1.bf16.msra.mxu0 %v7942
        %7963 = vmatprep.subr.bf16.mxu0 0
        %7964 = vmatpush1.bf16.msra.mxu0 %v7943
        %7965 = vmatprep.subr.bf16.mxu0 0
        %7966 = vmatpush1.bf16.msra.mxu0 %v7944
        %7967 = vmatprep.subr.bf16.mxu0 0
        %7968 = vmatpush1.bf16.msra.mxu0 %v7945
        %7969 = vmatprep.subr.bf16.mxu0 0
        %7970 = vmatpush1.bf16.msra.mxu0 %v7946
        %7971 = vmatprep.subr.bf16.mxu0 0
        %7972 = vmatpush1.bf16.msra.mxu0 0
        %7973 = vmatprep.subr.bf16.mxu0 0
        %7974 = vmatpush1.bf16.msra.mxu0 0
        %7975 = vmatprep.subr.bf16.mxu0 0
        %7976 = vmatpush1.bf16.msra.mxu0 0
        %7977 = vmatprep.subr.bf16.mxu0 0
        %7978 = vmatpush1.bf16.msra.mxu0 0
        %7979 = vmatprep.subr.bf16.mxu0 0
        %7980 = vmatpush1.bf16.msra.mxu0 0
        %7981 = vmatprep.subr.bf16.mxu0 0
        %7982 = vmatpush1.bf16.msra.mxu0 0
        %7983 = vmatprep.subr.bf16.mxu0 0
        %7984 = vmatpush1.bf16.msra.mxu0 0
        %7985 = vmatprep.subr.bf16.mxu0 0
        %7986 = vmatpush1.bf16.msra.mxu0 0
        %7987 = vmatprep.mubr.bf16.mxu0 0
        %7988 = vmatmul.mubr.bf16.gmra.mrb[0].mxu0 %v7905
        %v7989 = vpop.f32.mrb[0].mxu0
        %v7990 = vadd.f32 0.0, %v7989
        %v7991 = vpop.f32.mrb[0].mxu0
        %v7992 = vpop.f32.mrb[0].mxu0
        %v7993 = vpop.f32.mrb[0].mxu0
        %7994 = vdwg.mxu0
        %v7995 = vadd.f32 %v7869, %v7990
        %v7996 = vld [vmem:[%s4871] sm:$0x3]
        %v7997 = vld [vmem:[%s4871 + $0x2] sm:$0x3]
        %v8001 = vunpack.c.l.s4 1966171168
        %v8002 = vunpack.c.0.s8 %v8001
        %v8003 = vlaneseq
        %v8004 = vshrl.u32 %v8003, 7
        %v8005 = vsub.s32 %v8002, %v8004
        %v8006 = vrot.slane %v7996, %v8005
        %v8007 = vcombine.high %v8006, %v8006
        %v8009 = vunpack.c.l.s4 1966171168
        %v8010 = vunpack.c.0.s8 %v8009
        %v8011 = vlaneseq
        %v8012 = vshrl.u32 %v8011, 7
        %v8013 = vsub.s32 %v8010, %v8012
        %v8014 = vrot.slane %v7997, %v8013
        %v8015 = vcombine.high %v8014, %v8014
        %v8017 = vshrl.u32 %v8006, 16
        %v8019 = vrot.slane %v8017, 7
        %v8020 = vrot.slane %v8019, 1
        %v8022 = vshll.u32 %v8007, 16
        %v8024 = vsel %vm3850, %v8020, %v8022
        %v8026 = vshrl.u32 %v8014, 16
        %v8028 = vrot.slane %v8026, 7
        %v8029 = vrot.slane %v8028, 1
        %v8031 = vshll.u32 %v8015, 16
        %v8033 = vsel %vm3850, %v8029, %v8031
        %s8034 = scalar_lea.vmem %s5, 320
        %v8035 = vld [vmem:[%s8034] sm:$0xf]
        %v8036 = vld [vmem:[%s8034 + $0x4] sm:$0xf]
        %v8037 = vld [vmem:[%s8034 + $0x8] sm:$0xf]
        %v8038 = vld [vmem:[%s8034 + $0xc] sm:$0xf]
        %v8039 = vld [vmem:[%s8034 + $0x10] sm:$0xf]
        %v8040 = vld [vmem:[%s8034 + $0x14] sm:$0xf]
        %v8041 = vld [vmem:[%s8034 + $0x18] sm:$0xf]
        %v8042 = vld [vmem:[%s8034 + $0x1c] sm:$0xf]
        %v8043 = vld [vmem:[%s8034 + $0x20] sm:$0xf]
        %v8044 = vld [vmem:[%s8034 + $0x24] sm:$0xf]
        %v8045 = vld [vmem:[%s8034 + $0x28] sm:$0xf]
        %v8046 = vld [vmem:[%s8034 + $0x2c] sm:$0xf]
        %v8047 = vld [vmem:[%s8034 + $0x30] sm:$0xf]
        %v8048 = vld [vmem:[%s8034 + $0x34] sm:$0xf]
        %v8049 = vld [vmem:[%s8034 + $0x38] sm:$0xf]
        %v8050 = vld [vmem:[%s8034 + $0x3c] sm:$0xf]
        %v8051 = vcombine.low %v8024, %v8033
        %v8053 = vunpack.c.l.s4 1966171168
        %v8054 = vunpack.c.0.s8 %v8053
        %v8055 = vlaneseq
        %v8056 = vshrl.u32 %v8055, 7
        %v8057 = vsub.s32 %v8054, %v8056
        %v8058 = vrot.slane %v8051, %v8057
        %v8060 = vunpack.c.l.s4 1966171168
        %v8061 = vunpack.c.0.s8 %v8060
        %v8062 = vlaneseq
        %v8063 = vshrl.u32 %v8062, 7
        %v8064 = vsub.s32 %v8061, %v8063
        %v8065 = vrot.slane %v8058, %v8064
        %v8083 = vunpack.c.l.b16 %v8035
        %v8084 = vunpack.c.l.b16 %v8036
        %v8085 = vunpack.c.l.b16 %v8037
        %v8086 = vunpack.c.l.b16 %v8038
        %v8087 = vunpack.c.l.b16 %v8039
        %v8088 = vunpack.c.l.b16 %v8040
        %v8089 = vunpack.c.l.b16 %v8041
        %v8090 = vunpack.c.l.b16 %v8042
        %v8091 = vunpack.c.l.b16 %v8043
        %v8092 = vunpack.c.l.b16 %v8044
        %v8093 = vunpack.c.l.b16 %v8045
        %v8094 = vunpack.c.l.b16 %v8046
        %v8095 = vunpack.c.l.b16 %v8047
        %v8096 = vunpack.c.l.b16 %v8048
        %v8097 = vunpack.c.l.b16 %v8049
        %v8098 = vunpack.c.l.b16 %v8050
        %v8099 = vpack.c.b16 %v8084, %v8083
        %v8100 = vpack.c.b16 %v8086, %v8085
        %v8101 = vpack.c.b16 %v8088, %v8087
        %v8102 = vpack.c.b16 %v8090, %v8089
        %v8103 = vpack.c.b16 %v8092, %v8091
        %v8104 = vpack.c.b16 %v8094, %v8093
        %v8105 = vpack.c.b16 %v8096, %v8095
        %v8106 = vpack.c.b16 %v8098, %v8097
        %8115 = vmatprep.subr.bf16.mxu0 0
        %8116 = vmatpush1.bf16.msra.mxu0 %v8099
        %8117 = vmatprep.subr.bf16.mxu0 0
        %8118 = vmatpush1.bf16.msra.mxu0 %v8100
        %8119 = vmatprep.subr.bf16.mxu0 0
        %8120 = vmatpush1.bf16.msra.mxu0 %v8101
        %8121 = vmatprep.subr.bf16.mxu0 0
        %8122 = vmatpush1.bf16.msra.mxu0 %v8102
        %8123 = vmatprep.subr.bf16.mxu0 0
        %8124 = vmatpush1.bf16.msra.mxu0 %v8103
        %8125 = vmatprep.subr.bf16.mxu0 0
        %8126 = vmatpush1.bf16.msra.mxu0 %v8104
        %8127 = vmatprep.subr.bf16.mxu0 0
        %8128 = vmatpush1.bf16.msra.mxu0 %v8105
        %8129 = vmatprep.subr.bf16.mxu0 0
        %8130 = vmatpush1.bf16.msra.mxu0 %v8106
        %8131 = vmatprep.subr.bf16.mxu0 0
        %8132 = vmatpush1.bf16.msra.mxu0 0
        %8133 = vmatprep.subr.bf16.mxu0 0
        %8134 = vmatpush1.bf16.msra.mxu0 0
        %8135 = vmatprep.subr.bf16.mxu0 0
        %8136 = vmatpush1.bf16.msra.mxu0 0
        %8137 = vmatprep.subr.bf16.mxu0 0
        %8138 = vmatpush1.bf16.msra.mxu0 0
        %8139 = vmatprep.subr.bf16.mxu0 0
        %8140 = vmatpush1.bf16.msra.mxu0 0
        %8141 = vmatprep.subr.bf16.mxu0 0
        %8142 = vmatpush1.bf16.msra.mxu0 0
        %8143 = vmatprep.subr.bf16.mxu0 0
        %8144 = vmatpush1.bf16.msra.mxu0 0
        %8145 = vmatprep.subr.bf16.mxu0 0
        %8146 = vmatpush1.bf16.msra.mxu0 0
        %8147 = vmatprep.mubr.bf16.mxu0 0
        %8148 = vmatmul.mubr.bf16.gmra.mrb[0].mxu0 %v8065
        %v8149 = vpop.f32.mrb[0].mxu0
        %v8150 = vadd.f32 0.0, %v8149
        %v8151 = vpop.f32.mrb[0].mxu0
        %v8152 = vpop.f32.mrb[0].mxu0
        %v8153 = vpop.f32.mrb[0].mxu0
        %8154 = vdwg.mxu0
        %v8155 = vadd.f32 %v7995, %v8150
        %v8156 = vld [vmem:[%s7327] sm:$0x1]
        %v8157 = vld [vmem:[%s7327 + $0x2] sm:$0x1]
        %s8158 = scalar_lea.vmem %s5, 384
        %v8159 = vld [vmem:[%s8158] sm:$0xf]
        %v8160 = vld [vmem:[%s8158 + $0x4] sm:$0xf]
        %v8161 = vld [vmem:[%s8158 + $0x8] sm:$0xf]
        %v8162 = vld [vmem:[%s8158 + $0xc] sm:$0xf]
        %v8163 = vld [vmem:[%s8158 + $0x10] sm:$0xf]
        %v8164 = vld [vmem:[%s8158 + $0x14] sm:$0xf]
        %v8165 = vld [vmem:[%s8158 + $0x18] sm:$0xf]
        %v8166 = vld [vmem:[%s8158 + $0x1c] sm:$0xf]
        %v8167 = vld [vmem:[%s8158 + $0x20] sm:$0xf]
        %v8168 = vld [vmem:[%s8158 + $0x24] sm:$0xf]
        %v8169 = vld [vmem:[%s8158 + $0x28] sm:$0xf]
        %v8170 = vld [vmem:[%s8158 + $0x2c] sm:$0xf]
        %v8171 = vld [vmem:[%s8158 + $0x30] sm:$0xf]
        %v8172 = vld [vmem:[%s8158 + $0x34] sm:$0xf]
        %v8173 = vld [vmem:[%s8158 + $0x38] sm:$0xf]
        %v8174 = vld [vmem:[%s8158 + $0x3c] sm:$0xf]
        %v8177 = vcombine.low %v8156, %v8157
        %v8179 = vunpack.c.l.s4 1966171168
        %v8180 = vunpack.c.0.s8 %v8179
        %v8181 = vlaneseq
        %v8182 = vshrl.u32 %v8181, 7
        %v8183 = vsub.s32 %v8180, %v8182
        %v8184 = vrot.slane %v8177, %v8183
        %v8186 = vunpack.c.l.s4 1966171168
        %v8187 = vunpack.c.0.s8 %v8186
        %v8188 = vlaneseq
        %v8189 = vshrl.u32 %v8188, 7
        %v8190 = vsub.s32 %v8187, %v8189
        %v8191 = vrot.slane %v8184, %v8190
        %v8209 = vunpack.c.l.b16 %v8159
        %v8210 = vunpack.c.l.b16 %v8160
        %v8211 = vunpack.c.l.b16 %v8161
        %v8212 = vunpack.c.l.b16 %v8162
        %v8213 = vunpack.c.l.b16 %v8163
        %v8214 = vunpack.c.l.b16 %v8164
        %v8215 = vunpack.c.l.b16 %v8165
        %v8216 = vunpack.c.l.b16 %v8166
        %v8217 = vunpack.c.l.b16 %v8167
        %v8218 = vunpack.c.l.b16 %v8168
        %v8219 = vunpack.c.l.b16 %v8169
        %v8220 = vunpack.c.l.b16 %v8170
        %v8221 = vunpack.c.l.b16 %v8171
        %v8222 = vunpack.c.l.b16 %v8172
        %v8223 = vunpack.c.l.b16 %v8173
        %v8224 = vunpack.c.l.b16 %v8174
        %v8225 = vpack.c.b16 %v8210, %v8209
        %v8226 = vpack.c.b16 %v8212, %v8211
        %v8227 = vpack.c.b16 %v8214, %v8213
        %v8228 = vpack.c.b16 %v8216, %v8215
        %v8229 = vpack.c.b16 %v8218, %v8217
        %v8230 = vpack.c.b16 %v8220, %v8219
        %v8231 = vpack.c.b16 %v8222, %v8221
        %v8232 = vpack.c.b16 %v8224, %v8223
        %8241 = vmatprep.subr.bf16.mxu0 0
        %8242 = vmatpush1.bf16.msra.mxu0 %v8225
        %8243 = vmatprep.subr.bf16.mxu0 0
        %8244 = vmatpush1.bf16.msra.mxu0 %v8226
        %8245 = vmatprep.subr.bf16.mxu0 0
        %8246 = vmatpush1.bf16.msra.mxu0 %v8227
        %8247 = vmatprep.subr.bf16.mxu0 0
        %8248 = vmatpush1.bf16.msra.mxu0 %v8228
        %8249 = vmatprep.subr.bf16.mxu0 0
        %8250 = vmatpush1.bf16.msra.mxu0 %v8229
        %8251 = vmatprep.subr.bf16.mxu0 0
        %8252 = vmatpush1.bf16.msra.mxu0 %v8230
        %8253 = vmatprep.subr.bf16.mxu0 0
        %8254 = vmatpush1.bf16.msra.mxu0 %v8231
        %8255 = vmatprep.subr.bf16.mxu0 0
        %8256 = vmatpush1.bf16.msra.mxu0 %v8232
        %8257 = vmatprep.subr.bf16.mxu0 0
        %8258 = vmatpush1.bf16.msra.mxu0 0
        %8259 = vmatprep.subr.bf16.mxu0 0
        %8260 = vmatpush1.bf16.msra.mxu0 0
        %8261 = vmatprep.subr.bf16.mxu0 0
        %8262 = vmatpush1.bf16.msra.mxu0 0
        %8263 = vmatprep.subr.bf16.mxu0 0
        %8264 = vmatpush1.bf16.msra.mxu0 0
        %8265 = vmatprep.subr.bf16.mxu0 0
        %8266 = vmatpush1.bf16.msra.mxu0 0
        %8267 = vmatprep.subr.bf16.mxu0 0
        %8268 = vmatpush1.bf16.msra.mxu0 0
        %8269 = vmatprep.subr.bf16.mxu0 0
        %8270 = vmatpush1.bf16.msra.mxu0 0
        %8271 = vmatprep.subr.bf16.mxu0 0
        %8272 = vmatpush1.bf16.msra.mxu0 0
        %8273 = vmatprep.mubr.bf16.mxu0 0
        %8274 = vmatmul.mubr.bf16.gmra.mrb[0].mxu0 %v8191
        %v8275 = vpop.f32.mrb[0].mxu0
        %v8276 = vadd.f32 0.0, %v8275
        %v8277 = vpop.f32.mrb[0].mxu0
        %v8278 = vpop.f32.mrb[0].mxu0
        %v8279 = vpop.f32.mrb[0].mxu0
        %8280 = vdwg.mxu0
        %v8281 = vadd.f32 %v8155, %v8276
        %v8282 = vld [vmem:[%s6036] sm:$0x1]
        %v8283 = vld [vmem:[%s6036 + $0x2] sm:$0x1]
        %s8284 = scalar_lea.vmem %s5, 448
        %v8285 = vld [vmem:[%s8284] sm:$0xf]
        %v8286 = vld [vmem:[%s8284 + $0x4] sm:$0xf]
        %v8287 = vld [vmem:[%s8284 + $0x8] sm:$0xf]
        %v8288 = vld [vmem:[%s8284 + $0xc] sm:$0xf]
        %v8289 = vld [vmem:[%s8284 + $0x10] sm:$0xf]
        %v8290 = vld [vmem:[%s8284 + $0x14] sm:$0xf]
        %v8291 = vld [vmem:[%s8284 + $0x18] sm:$0xf]
        %v8292 = vld [vmem:[%s8284 + $0x1c] sm:$0xf]
        %v8293 = vld [vmem:[%s8284 + $0x20] sm:$0xf]
        %v8294 = vld [vmem:[%s8284 + $0x24] sm:$0xf]
        %v8295 = vld [vmem:[%s8284 + $0x28] sm:$0xf]
        %v8296 = vld [vmem:[%s8284 + $0x2c] sm:$0xf]
        %v8297 = vld [vmem:[%s8284 + $0x30] sm:$0xf]
        %v8298 = vld [vmem:[%s8284 + $0x34] sm:$0xf]
        %v8299 = vld [vmem:[%s8284 + $0x38] sm:$0xf]
        %v8300 = vld [vmem:[%s8284 + $0x3c] sm:$0xf]
        %v8303 = vcombine.low %v8282, %v8283
        %v8305 = vunpack.c.l.s4 1966171168
        %v8306 = vunpack.c.0.s8 %v8305
        %v8307 = vlaneseq
        %v8308 = vshrl.u32 %v8307, 7
        %v8309 = vsub.s32 %v8306, %v8308
        %v8310 = vrot.slane %v8303, %v8309
        %v8312 = vunpack.c.l.s4 1966171168
        %v8313 = vunpack.c.0.s8 %v8312
        %v8314 = vlaneseq
        %v8315 = vshrl.u32 %v8314, 7
        %v8316 = vsub.s32 %v8313, %v8315
        %v8317 = vrot.slane %v8310, %v8316
        %v8335 = vunpack.c.l.b16 %v8285
        %v8336 = vunpack.c.l.b16 %v8286
        %v8337 = vunpack.c.l.b16 %v8287
        %v8338 = vunpack.c.l.b16 %v8288
        %v8339 = vunpack.c.l.b16 %v8289
        %v8340 = vunpack.c.l.b16 %v8290
        %v8341 = vunpack.c.l.b16 %v8291
        %v8342 = vunpack.c.l.b16 %v8292
        %v8343 = vunpack.c.l.b16 %v8293
        %v8344 = vunpack.c.l.b16 %v8294
        %v8345 = vunpack.c.l.b16 %v8295
        %v8346 = vunpack.c.l.b16 %v8296
        %v8347 = vunpack.c.l.b16 %v8297
        %v8348 = vunpack.c.l.b16 %v8298
        %v8349 = vunpack.c.l.b16 %v8299
        %v8350 = vunpack.c.l.b16 %v8300
        %v8351 = vpack.c.b16 %v8336, %v8335
        %v8352 = vpack.c.b16 %v8338, %v8337
        %v8353 = vpack.c.b16 %v8340, %v8339
        %v8354 = vpack.c.b16 %v8342, %v8341
        %v8355 = vpack.c.b16 %v8344, %v8343
        %v8356 = vpack.c.b16 %v8346, %v8345
        %v8357 = vpack.c.b16 %v8348, %v8347
        %v8358 = vpack.c.b16 %v8350, %v8349
        %8367 = vmatprep.subr.bf16.mxu0 0
        %8368 = vmatpush1.bf16.msra.mxu0 %v8351
        %8369 = vmatprep.subr.bf16.mxu0 0
        %8370 = vmatpush1.bf16.msra.mxu0 %v8352
        %8371 = vmatprep.subr.bf16.mxu0 0
        %8372 = vmatpush1.bf16.msra.mxu0 %v8353
        %8373 = vmatprep.subr.bf16.mxu0 0
        %8374 = vmatpush1.bf16.msra.mxu0 %v8354
        %8375 = vmatprep.subr.bf16.mxu0 0
        %8376 = vmatpush1.bf16.msra.mxu0 %v8355
        %8377 = vmatprep.subr.bf16.mxu0 0
        %8378 = vmatpush1.bf16.msra.mxu0 %v8356
        %8379 = vmatprep.subr.bf16.mxu0 0
        %8380 = vmatpush1.bf16.msra.mxu0 %v8357
        %8381 = vmatprep.subr.bf16.mxu0 0
        %8382 = vmatpush1.bf16.msra.mxu0 %v8358
        %8383 = vmatprep.subr.bf16.mxu0 0
        %8384 = vmatpush1.bf16.msra.mxu0 0
        %8385 = vmatprep.subr.bf16.mxu0 0
        %8386 = vmatpush1.bf16.msra.mxu0 0
        %8387 = vmatprep.subr.bf16.mxu0 0
        %8388 = vmatpush1.bf16.msra.mxu0 0
        %8389 = vmatprep.subr.bf16.mxu0 0
        %8390 = vmatpush1.bf16.msra.mxu0 0
        %8391 = vmatprep.subr.bf16.mxu0 0
        %8392 = vmatpush1.bf16.msra.mxu0 0
        %8393 = vmatprep.subr.bf16.mxu0 0
        %8394 = vmatpush1.bf16.msra.mxu0 0
        %8395 = vmatprep.subr.bf16.mxu0 0
        %8396 = vmatpush1.bf16.msra.mxu0 0
        %8397 = vmatprep.subr.bf16.mxu0 0
        %8398 = vmatpush1.bf16.msra.mxu0 0
        %8399 = vmatprep.mubr.bf16.mxu0 0
        %8400 = vmatmul.mubr.bf16.gmra.mrb[0].mxu0 %v8317
        %v8401 = vpop.f32.mrb[0].mxu0
        %v8402 = vadd.f32 0.0, %v8401
        %v8403 = vpop.f32.mrb[0].mxu0
        %v8404 = vpop.f32.mrb[0].mxu0
        %v8405 = vpop.f32.mrb[0].mxu0
        %8406 = vdwg.mxu0
        %v8407 = vadd.f32 %v8281, %v8402
        %v8408 = vld [vmem:[%s7327] sm:$0x3]
        %v8409 = vld [vmem:[%s7327 + $0x2] sm:$0x3]
        %v8413 = vunpack.c.l.s4 1966171168
        %v8414 = vunpack.c.0.s8 %v8413
        %v8415 = vlaneseq
        %v8416 = vshrl.u32 %v8415, 7
        %v8417 = vsub.s32 %v8414, %v8416
        %v8418 = vrot.slane %v8408, %v8417
        %v8419 = vcombine.high %v8418, %v8418
        %v8421 = vunpack.c.l.s4 1966171168
        %v8422 = vunpack.c.0.s8 %v8421
        %v8423 = vlaneseq
        %v8424 = vshrl.u32 %v8423, 7
        %v8425 = vsub.s32 %v8422, %v8424
        %v8426 = vrot.slane %v8409, %v8425
        %v8427 = vcombine.high %v8426, %v8426
        %v8429 = vshrl.u32 %v8418, 16
        %v8431 = vrot.slane %v8429, 7
        %v8432 = vrot.slane %v8431, 1
        %v8434 = vshll.u32 %v8419, 16
        %v8436 = vsel %vm3850, %v8432, %v8434
        %v8438 = vshrl.u32 %v8426, 16
        %v8440 = vrot.slane %v8438, 7
        %v8441 = vrot.slane %v8440, 1
        %v8443 = vshll.u32 %v8427, 16
        %v8445 = vsel %vm3850, %v8441, %v8443
        %s8446 = scalar_lea.vmem %s5, 512
        %v8447 = vld [vmem:[%s8446] sm:$0xf]
        %v8448 = vld [vmem:[%s8446 + $0x4] sm:$0xf]
        %v8449 = vld [vmem:[%s8446 + $0x8] sm:$0xf]
        %v8450 = vld [vmem:[%s8446 + $0xc] sm:$0xf]
        %v8451 = vld [vmem:[%s8446 + $0x10] sm:$0xf]
        %v8452 = vld [vmem:[%s8446 + $0x14] sm:$0xf]
        %v8453 = vld [vmem:[%s8446 + $0x18] sm:$0xf]
        %v8454 = vld [vmem:[%s8446 + $0x1c] sm:$0xf]
        %v8455 = vld [vmem:[%s8446 + $0x20] sm:$0xf]
        %v8456 = vld [vmem:[%s8446 + $0x24] sm:$0xf]
        %v8457 = vld [vmem:[%s8446 + $0x28] sm:$0xf]
        %v8458 = vld [vmem:[%s8446 + $0x2c] sm:$0xf]
        %v8459 = vld [vmem:[%s8446 + $0x30] sm:$0xf]
        %v8460 = vld [vmem:[%s8446 + $0x34] sm:$0xf]
        %v8461 = vld [vmem:[%s8446 + $0x38] sm:$0xf]
        %v8462 = vld [vmem:[%s8446 + $0x3c] sm:$0xf]
        %v8463 = vcombine.low %v8436, %v8445
        %v8465 = vunpack.c.l.s4 1966171168
        %v8466 = vunpack.c.0.s8 %v8465
        %v8467 = vlaneseq
        %v8468 = vshrl.u32 %v8467, 7
        %v8469 = vsub.s32 %v8466, %v8468
        %v8470 = vrot.slane %v8463, %v8469
        %v8472 = vunpack.c.l.s4 1966171168
        %v8473 = vunpack.c.0.s8 %v8472
        %v8474 = vlaneseq
        %v8475 = vshrl.u32 %v8474, 7
        %v8476 = vsub.s32 %v8473, %v8475
        %v8477 = vrot.slane %v8470, %v8476
        %v8495 = vunpack.c.l.b16 %v8447
        %v8496 = vunpack.c.l.b16 %v8448
        %v8497 = vunpack.c.l.b16 %v8449
        %v8498 = vunpack.c.l.b16 %v8450
        %v8499 = vunpack.c.l.b16 %v8451
        %v8500 = vunpack.c.l.b16 %v8452
        %v8501 = vunpack.c.l.b16 %v8453
        %v8502 = vunpack.c.l.b16 %v8454
        %v8503 = vunpack.c.l.b16 %v8455
        %v8504 = vunpack.c.l.b16 %v8456
        %v8505 = vunpack.c.l.b16 %v8457
        %v8506 = vunpack.c.l.b16 %v8458
        %v8507 = vunpack.c.l.b16 %v8459
        %v8508 = vunpack.c.l.b16 %v8460
        %v8509 = vunpack.c.l.b16 %v8461
        %v8510 = vunpack.c.l.b16 %v8462
        %v8511 = vpack.c.b16 %v8496, %v8495
        %v8512 = vpack.c.b16 %v8498, %v8497
        %v8513 = vpack.c.b16 %v8500, %v8499
        %v8514 = vpack.c.b16 %v8502, %v8501
        %v8515 = vpack.c.b16 %v8504, %v8503
        %v8516 = vpack.c.b16 %v8506, %v8505
        %v8517 = vpack.c.b16 %v8508, %v8507
        %v8518 = vpack.c.b16 %v8510, %v8509
        %8527 = vmatprep.subr.bf16.mxu0 0
        %8528 = vmatpush1.bf16.msra.mxu0 %v8511
        %8529 = vmatprep.subr.bf16.mxu0 0
        %8530 = vmatpush1.bf16.msra.mxu0 %v8512
        %8531 = vmatprep.subr.bf16.mxu0 0
        %8532 = vmatpush1.bf16.msra.mxu0 %v8513
        %8533 = vmatprep.subr.bf16.mxu0 0
        %8534 = vmatpush1.bf16.msra.mxu0 %v8514
        %8535 = vmatprep.subr.bf16.mxu0 0
        %8536 = vmatpush1.bf16.msra.mxu0 %v8515
        %8537 = vmatprep.subr.bf16.mxu0 0
        %8538 = vmatpush1.bf16.msra.mxu0 %v8516
        %8539 = vmatprep.subr.bf16.mxu0 0
        %8540 = vmatpush1.bf16.msra.mxu0 %v8517
        %8541 = vmatprep.subr.bf16.mxu0 0
        %8542 = vmatpush1.bf16.msra.mxu0 %v8518
        %8543 = vmatprep.subr.bf16.mxu0 0
        %8544 = vmatpush1.bf16.msra.mxu0 0
        %8545 = vmatprep.subr.bf16.mxu0 0
        %8546 = vmatpush1.bf16.msra.mxu0 0
        %8547 = vmatprep.subr.bf16.mxu0 0
        %8548 = vmatpush1.bf16.msra.mxu0 0
        %8549 = vmatprep.subr.bf16.mxu0 0
        %8550 = vmatpush1.bf16.msra.mxu0 0
        %8551 = vmatprep.subr.bf16.mxu0 0
        %8552 = vmatpush1.bf16.msra.mxu0 0
        %8553 = vmatprep.subr.bf16.mxu0 0
        %8554 = vmatpush1.bf16.msra.mxu0 0
        %8555 = vmatprep.subr.bf16.mxu0 0
        %8556 = vmatpush1.bf16.msra.mxu0 0
        %8557 = vmatprep.subr.bf16.mxu0 0
        %8558 = vmatpush1.bf16.msra.mxu0 0
        %8559 = vmatprep.mubr.bf16.mxu0 0
        %8560 = vmatmul.mubr.bf16.gmra.mrb[0].mxu0 %v8477
        %v8561 = vpop.f32.mrb[0].mxu0
        %v8562 = vadd.f32 0.0, %v8561
        %v8563 = vpop.f32.mrb[0].mxu0
        %v8564 = vpop.f32.mrb[0].mxu0
        %v8565 = vpop.f32.mrb[0].mxu0
        %8566 = vdwg.mxu0
        %v8567 = vadd.f32 %v8407, %v8562
        %v8568 = vld [vmem:[%s6] sm:$0x1]
        %v8570 = vlaneseq
        %v8571 = vshrl.u32 %v8570, 7
        %v8572 = vsub.s32 0, %v8571
        %v8573 = vrot.slane %v8568, %v8572
        %v8575 = vadd.f32 %v8567, %v8573
        %v8576 = vmax.f32 %v8575, 0.0
        %v8577 = vpack.c.bf16 %v8576, %v8576
        %v8578 = vld [vmem:[%s7] sm:$0xf]
        %v8579 = vld [vmem:[%s7 + $0x4] sm:$0xf]
        %v8580 = vld [vmem:[%s7 + $0x8] sm:$0xf]
        %v8581 = vld [vmem:[%s7 + $0xc] sm:$0xf]
        %v8582 = vld [vmem:[%s7 + $0x10] sm:$0xf]
        %v8583 = vld [vmem:[%s7 + $0x14] sm:$0xf]
        %v8584 = vld [vmem:[%s7 + $0x18] sm:$0xf]
        %v8585 = vld [vmem:[%s7 + $0x1c] sm:$0xf]
        %v8586 = vld [vmem:[%s7 + $0x20] sm:$0xf]
        %v8587 = vld [vmem:[%s7 + $0x24] sm:$0xf]
        %v8588 = vld [vmem:[%s7 + $0x28] sm:$0xf]
        %v8589 = vld [vmem:[%s7 + $0x2c] sm:$0xf]
        %v8590 = vld [vmem:[%s7 + $0x30] sm:$0xf]
        %v8591 = vld [vmem:[%s7 + $0x34] sm:$0xf]
        %v8592 = vld [vmem:[%s7 + $0x38] sm:$0xf]
        %v8593 = vld [vmem:[%s7 + $0x3c] sm:$0xf]
        %v8594 = vld [vmem:[%s8] sm:$0x1]
        %v8596 = vlaneseq
        %v8597 = vshrl.u32 %v8596, 7
        %v8598 = vsub.s32 0, %v8597
        %v8599 = vrot.slane %v8594, %v8598
        %v8617 = vunpack.c.l.b16 %v8578
        %v8618 = vunpack.c.l.b16 %v8579
        %v8619 = vunpack.c.l.b16 %v8580
        %v8620 = vunpack.c.l.b16 %v8581
        %v8621 = vunpack.c.l.b16 %v8582
        %v8622 = vunpack.c.l.b16 %v8583
        %v8623 = vunpack.c.l.b16 %v8584
        %v8624 = vunpack.c.l.b16 %v8585
        %v8625 = vunpack.c.l.b16 %v8586
        %v8626 = vunpack.c.l.b16 %v8587
        %v8627 = vunpack.c.l.b16 %v8588
        %v8628 = vunpack.c.l.b16 %v8589
        %v8629 = vunpack.c.l.b16 %v8590
        %v8630 = vunpack.c.l.b16 %v8591
        %v8631 = vunpack.c.l.b16 %v8592
        %v8632 = vunpack.c.l.b16 %v8593
        %v8633 = vpack.c.b16 %v8618, %v8617
        %v8634 = vpack.c.b16 %v8620, %v8619
        %v8635 = vpack.c.b16 %v8622, %v8621
        %v8636 = vpack.c.b16 %v8624, %v8623
        %v8637 = vpack.c.b16 %v8626, %v8625
        %v8638 = vpack.c.b16 %v8628, %v8627
        %v8639 = vpack.c.b16 %v8630, %v8629
        %v8640 = vpack.c.b16 %v8632, %v8631
        %8649 = vmatprep.subr.bf16.mxu0 0
        %8650 = vmatpush1.bf16.msra.mxu0 %v8633
        %8651 = vmatprep.subr.bf16.mxu0 0
        %8652 = vmatpush1.bf16.msra.mxu0 %v8634
        %8653 = vmatprep.subr.bf16.mxu0 0
        %8654 = vmatpush1.bf16.msra.mxu0 %v8635
        %8655 = vmatprep.subr.bf16.mxu0 0
        %8656 = vmatpush1.bf16.msra.mxu0 %v8636
        %8657 = vmatprep.subr.bf16.mxu0 0
        %8658 = vmatpush1.bf16.msra.mxu0 %v8637
        %8659 = vmatprep.subr.bf16.mxu0 0
        %8660 = vmatpush1.bf16.msra.mxu0 %v8638
        %8661 = vmatprep.subr.bf16.mxu0 0
        %8662 = vmatpush1.bf16.msra.mxu0 %v8639
        %8663 = vmatprep.subr.bf16.mxu0 0
        %8664 = vmatpush1.bf16.msra.mxu0 %v8640
        %8665 = vmatprep.subr.bf16.mxu0 0
        %8666 = vmatpush1.bf16.msra.mxu0 0
        %8667 = vmatprep.subr.bf16.mxu0 0
        %8668 = vmatpush1.bf16.msra.mxu0 0
        %8669 = vmatprep.subr.bf16.mxu0 0
        %8670 = vmatpush1.bf16.msra.mxu0 0
        %8671 = vmatprep.subr.bf16.mxu0 0
        %8672 = vmatpush1.bf16.msra.mxu0 0
        %8673 = vmatprep.subr.bf16.mxu0 0
        %8674 = vmatpush1.bf16.msra.mxu0 0
        %8675 = vmatprep.subr.bf16.mxu0 0
        %8676 = vmatpush1.bf16.msra.mxu0 0
        %8677 = vmatprep.subr.bf16.mxu0 0
        %8678 = vmatpush1.bf16.msra.mxu0 0
        %8679 = vmatprep.subr.bf16.mxu0 0
        %8680 = vmatpush1.bf16.msra.mxu0 0
        %8681 = vmatprep.mubr.bf16.mxu0 0
        %8682 = vmatmul.mubr.bf16.gmra.mrb[0].mxu0 %v8577
        %v8683 = vpop.f32.mrb[0].mxu0
        %v8684 = vadd.f32 %v8599, %v8683
        %v8685 = vpop.f32.mrb[0].mxu0
        %v8686 = vpop.f32.mrb[0].mxu0
        %v8687 = vpop.f32.mrb[0].mxu0
        %8688 = vdwg.mxu0
        %v8689 = vpack.c.bf16 %v8684, %v8684
        %v8690 = vld [vmem:[%s10] sm:$0x1]
        %v8691 = vadd.f32 %v8690, 0.0
        %v8692 = vld [vmem:[%s9] sm:$0xf]
        %v8693 = vld [vmem:[%s9 + $0x4] sm:$0xf]
        %v8694 = vld [vmem:[%s9 + $0x8] sm:$0xf]
        %v8695 = vld [vmem:[%s9 + $0xc] sm:$0xf]
        %v8696 = vld [vmem:[%s9 + $0x10] sm:$0xf]
        %v8697 = vld [vmem:[%s9 + $0x14] sm:$0xf]
        %v8698 = vld [vmem:[%s9 + $0x18] sm:$0xf]
        %v8699 = vld [vmem:[%s9 + $0x1c] sm:$0xf]
        %v8700 = vld [vmem:[%s9 + $0x20] sm:$0xf]
        %v8701 = vld [vmem:[%s9 + $0x24] sm:$0xf]
        %v8702 = vld [vmem:[%s9 + $0x28] sm:$0xf]
        %v8703 = vld [vmem:[%s9 + $0x2c] sm:$0xf]
        %v8704 = vld [vmem:[%s9 + $0x30] sm:$0xf]
        %v8705 = vld [vmem:[%s9 + $0x34] sm:$0xf]
        %v8706 = vld [vmem:[%s9 + $0x38] sm:$0xf]
        %v8707 = vld [vmem:[%s9 + $0x3c] sm:$0xf]
        %v8724 = vunpack.c.l.b16 %v8692
        %v8725 = vunpack.c.l.b16 %v8693
        %v8726 = vunpack.c.l.b16 %v8694
        %v8727 = vunpack.c.l.b16 %v8695
        %v8728 = vunpack.c.l.b16 %v8696
        %v8729 = vunpack.c.l.b16 %v8697
        %v8730 = vunpack.c.l.b16 %v8698
        %v8731 = vunpack.c.l.b16 %v8699
        %v8732 = vunpack.c.l.b16 %v8700
        %v8733 = vunpack.c.l.b16 %v8701
        %v8734 = vunpack.c.l.b16 %v8702
        %v8735 = vunpack.c.l.b16 %v8703
        %v8736 = vunpack.c.l.b16 %v8704
        %v8737 = vunpack.c.l.b16 %v8705
        %v8738 = vunpack.c.l.b16 %v8706
        %v8739 = vunpack.c.l.b16 %v8707
        %v8740 = vpack.c.b16 %v8725, %v8724
        %v8741 = vpack.c.b16 %v8727, %v8726
        %v8742 = vpack.c.b16 %v8729, %v8728
        %v8743 = vpack.c.b16 %v8731, %v8730
        %v8744 = vpack.c.b16 %v8733, %v8732
        %v8745 = vpack.c.b16 %v8735, %v8734
        %v8746 = vpack.c.b16 %v8737, %v8736
        %v8747 = vpack.c.b16 %v8739, %v8738
        %8756 = vmatprep.subr.bf16.mxu0 0
        %8757 = vmatpush1.bf16.msra.mxu0 %v8740
        %8758 = vmatprep.subr.bf16.mxu0 0
        %8759 = vmatpush1.bf16.msra.mxu0 %v8741
        %8760 = vmatprep.subr.bf16.mxu0 0
        %8761 = vmatpush1.bf16.msra.mxu0 %v8742
        %8762 = vmatprep.subr.bf16.mxu0 0
        %8763 = vmatpush1.bf16.msra.mxu0 %v8743
        %8764 = vmatprep.subr.bf16.mxu0 0
        %8765 = vmatpush1.bf16.msra.mxu0 %v8744
        %8766 = vmatprep.subr.bf16.mxu0 0
        %8767 = vmatpush1.bf16.msra.mxu0 %v8745
        %8768 = vmatprep.subr.bf16.mxu0 0
        %8769 = vmatpush1.bf16.msra.mxu0 %v8746
        %8770 = vmatprep.subr.bf16.mxu0 0
        %8771 = vmatpush1.bf16.msra.mxu0 %v8747
        %8772 = vmatprep.subr.bf16.mxu0 0
        %8773 = vmatpush1.bf16.msra.mxu0 0
        %8774 = vmatprep.subr.bf16.mxu0 0
        %8775 = vmatpush1.bf16.msra.mxu0 0
        %8776 = vmatprep.subr.bf16.mxu0 0
        %8777 = vmatpush1.bf16.msra.mxu0 0
        %8778 = vmatprep.subr.bf16.mxu0 0
        %8779 = vmatpush1.bf16.msra.mxu0 0
        %8780 = vmatprep.subr.bf16.mxu0 0
        %8781 = vmatpush1.bf16.msra.mxu0 0
        %8782 = vmatprep.subr.bf16.mxu0 0
        %8783 = vmatpush1.bf16.msra.mxu0 0
        %8784 = vmatprep.subr.bf16.mxu0 0
        %8785 = vmatpush1.bf16.msra.mxu0 0
        %8786 = vmatprep.subr.bf16.mxu0 0
        %8787 = vmatpush1.bf16.msra.mxu0 0
        %8788 = vmatprep.mubr.bf16.mxu0 0
        %8789 = vmatmul.mubr.bf16.gmra.mrb[0].mxu0 %v8689
        %v8790 = vpop.f32.mrb[0].mxu0
        %v8791 = vadd.f32 0.0, %v8790
        %v8792 = vpop.f32.mrb[0].mxu0
        %v8793 = vpop.f32.mrb[0].mxu0
        %v8794 = vpop.f32.mrb[0].mxu0
        %8795 = vdwg.mxu0
        %v8796 = vadd.f32 %v8691, %v8791
        %s8797 = scalar_lea.vmem %s9, 64
        %v8798 = vld [vmem:[%s8797] sm:$0xf]
        %v8799 = vld [vmem:[%s8797 + $0x4] sm:$0xf]
        %v8800 = vld [vmem:[%s8797 + $0x8] sm:$0xf]
        %v8801 = vld [vmem:[%s8797 + $0xc] sm:$0xf]
        %v8802 = vld [vmem:[%s8797 + $0x10] sm:$0xf]
        %v8803 = vld [vmem:[%s8797 + $0x14] sm:$0xf]
        %v8804 = vld [vmem:[%s8797 + $0x18] sm:$0xf]
        %v8805 = vld [vmem:[%s8797 + $0x1c] sm:$0xf]
        %v8806 = vld [vmem:[%s8797 + $0x20] sm:$0xf]
        %v8807 = vld [vmem:[%s8797 + $0x24] sm:$0xf]
        %v8808 = vld [vmem:[%s8797 + $0x28] sm:$0xf]
        %v8809 = vld [vmem:[%s8797 + $0x2c] sm:$0xf]
        %v8810 = vld [vmem:[%s8797 + $0x30] sm:$0xf]
        %v8811 = vld [vmem:[%s8797 + $0x34] sm:$0xf]
        %v8812 = vld [vmem:[%s8797 + $0x38] sm:$0xf]
        %v8813 = vld [vmem:[%s8797 + $0x3c] sm:$0xf]
        %v8815 = vshrl.u32 %v8689, 16
        %v8834 = vunpack.c.l.b16 %v8798
        %v8835 = vunpack.c.l.b16 %v8799
        %v8836 = vunpack.c.l.b16 %v8800
        %v8837 = vunpack.c.l.b16 %v8801
        %v8838 = vunpack.c.l.b16 %v8802
        %v8839 = vunpack.c.l.b16 %v8803
        %v8840 = vunpack.c.l.b16 %v8804
        %v8841 = vunpack.c.l.b16 %v8805
        %v8842 = vunpack.c.l.b16 %v8806
        %v8843 = vunpack.c.l.b16 %v8807
        %v8844 = vunpack.c.l.b16 %v8808
        %v8845 = vunpack.c.l.b16 %v8809
        %v8846 = vunpack.c.l.b16 %v8810
        %v8847 = vunpack.c.l.b16 %v8811
        %v8848 = vunpack.c.l.b16 %v8812
        %v8849 = vunpack.c.l.b16 %v8813
        %v8850 = vpack.c.b16 %v8835, %v8834
        %v8851 = vpack.c.b16 %v8837, %v8836
        %v8852 = vpack.c.b16 %v8839, %v8838
        %v8853 = vpack.c.b16 %v8841, %v8840
        %v8854 = vpack.c.b16 %v8843, %v8842
        %v8855 = vpack.c.b16 %v8845, %v8844
        %v8856 = vpack.c.b16 %v8847, %v8846
        %v8857 = vpack.c.b16 %v8849, %v8848
        %8866 = vmatprep.subr.bf16.mxu0 0
        %8867 = vmatpush1.bf16.msra.mxu0 %v8850
        %8868 = vmatprep.subr.bf16.mxu0 0
        %8869 = vmatpush1.bf16.msra.mxu0 %v8851
        %8870 = vmatprep.subr.bf16.mxu0 0
        %8871 = vmatpush1.bf16.msra.mxu0 %v8852
        %8872 = vmatprep.subr.bf16.mxu0 0
        %8873 = vmatpush1.bf16.msra.mxu0 %v8853
        %8874 = vmatprep.subr.bf16.mxu0 0
        %8875 = vmatpush1.bf16.msra.mxu0 %v8854
        %8876 = vmatprep.subr.bf16.mxu0 0
        %8877 = vmatpush1.bf16.msra.mxu0 %v8855
        %8878 = vmatprep.subr.bf16.mxu0 0
        %8879 = vmatpush1.bf16.msra.mxu0 %v8856
        %8880 = vmatprep.subr.bf16.mxu0 0
        %8881 = vmatpush1.bf16.msra.mxu0 %v8857
        %8882 = vmatprep.subr.bf16.mxu0 0
        %8883 = vmatpush1.bf16.msra.mxu0 0
        %8884 = vmatprep.subr.bf16.mxu0 0
        %8885 = vmatpush1.bf16.msra.mxu0 0
        %8886 = vmatprep.subr.bf16.mxu0 0
        %8887 = vmatpush1.bf16.msra.mxu0 0
        %8888 = vmatprep.subr.bf16.mxu0 0
        %8889 = vmatpush1.bf16.msra.mxu0 0
        %8890 = vmatprep.subr.bf16.mxu0 0
        %8891 = vmatpush1.bf16.msra.mxu0 0
        %8892 = vmatprep.subr.bf16.mxu0 0
        %8893 = vmatpush1.bf16.msra.mxu0 0
        %8894 = vmatprep.subr.bf16.mxu0 0
        %8895 = vmatpush1.bf16.msra.mxu0 0
        %8896 = vmatprep.subr.bf16.mxu0 0
        %8897 = vmatpush1.bf16.msra.mxu0 0
        %8898 = vmatprep.mubr.bf16.mxu0 0
        %8899 = vmatmul.mubr.bf16.gmra.mrb[0].mxu0 %v8815
        %v8900 = vpop.f32.mrb[0].mxu0
        %v8901 = vadd.f32 0.0, %v8900
        %v8902 = vpop.f32.mrb[0].mxu0
        %v8903 = vpop.f32.mrb[0].mxu0
        %v8904 = vpop.f32.mrb[0].mxu0
        %8905 = vdwg.mxu0
        %v8906 = vadd.f32 %v8796, %v8901
        %s8907 = scalar_lea.vmem %s9, 128
        %v8908 = vld [vmem:[%s8907] sm:$0xf]
        %v8909 = vld [vmem:[%s8907 + $0x4] sm:$0xf]
        %v8910 = vld [vmem:[%s8907 + $0x8] sm:$0xf]
        %v8911 = vld [vmem:[%s8907 + $0xc] sm:$0xf]
        %v8912 = vld [vmem:[%s8907 + $0x10] sm:$0xf]
        %v8913 = vld [vmem:[%s8907 + $0x14] sm:$0xf]
        %v8914 = vld [vmem:[%s8907 + $0x18] sm:$0xf]
        %v8915 = vld [vmem:[%s8907 + $0x1c] sm:$0xf]
        %v8916 = vld [vmem:[%s8907 + $0x20] sm:$0xf]
        %v8917 = vld [vmem:[%s8907 + $0x24] sm:$0xf]
        %v8918 = vld [vmem:[%s8907 + $0x28] sm:$0xf]
        %v8919 = vld [vmem:[%s8907 + $0x2c] sm:$0xf]
        %v8920 = vld [vmem:[%s8907 + $0x30] sm:$0xf]
        %v8921 = vld [vmem:[%s8907 + $0x34] sm:$0xf]
        %v8922 = vld [vmem:[%s8907 + $0x38] sm:$0xf]
        %v8923 = vld [vmem:[%s8907 + $0x3c] sm:$0xf]
        %v8925 = vrot.slane %v8689, 1
        %v8943 = vunpack.c.l.b16 %v8908
        %v8944 = vunpack.c.l.b16 %v8909
        %v8945 = vunpack.c.l.b16 %v8910
        %v8946 = vunpack.c.l.b16 %v8911
        %v8947 = vunpack.c.l.b16 %v8912
        %v8948 = vunpack.c.l.b16 %v8913
        %v8949 = vunpack.c.l.b16 %v8914
        %v8950 = vunpack.c.l.b16 %v8915
        %v8951 = vunpack.c.l.b16 %v8916
        %v8952 = vunpack.c.l.b16 %v8917
        %v8953 = vunpack.c.l.b16 %v8918
        %v8954 = vunpack.c.l.b16 %v8919
        %v8955 = vunpack.c.l.b16 %v8920
        %v8956 = vunpack.c.l.b16 %v8921
        %v8957 = vunpack.c.l.b16 %v8922
        %v8958 = vunpack.c.l.b16 %v8923
        %v8959 = vpack.c.b16 %v8944, %v8943
        %v8960 = vpack.c.b16 %v8946, %v8945
        %v8961 = vpack.c.b16 %v8948, %v8947
        %v8962 = vpack.c.b16 %v8950, %v8949
        %v8963 = vpack.c.b16 %v8952, %v8951
        %v8964 = vpack.c.b16 %v8954, %v8953
        %v8965 = vpack.c.b16 %v8956, %v8955
        %v8966 = vpack.c.b16 %v8958, %v8957
        %8975 = vmatprep.subr.bf16.mxu0 0
        %8976 = vmatpush1.bf16.msra.mxu0 %v8959
        %8977 = vmatprep.subr.bf16.mxu0 0
        %8978 = vmatpush1.bf16.msra.mxu0 %v8960
        %8979 = vmatprep.subr.bf16.mxu0 0
        %8980 = vmatpush1.bf16.msra.mxu0 %v8961
        %8981 = vmatprep.subr.bf16.mxu0 0
        %8982 = vmatpush1.bf16.msra.mxu0 %v8962
        %8983 = vmatprep.subr.bf16.mxu0 0
        %8984 = vmatpush1.bf16.msra.mxu0 %v8963
        %8985 = vmatprep.subr.bf16.mxu0 0
        %8986 = vmatpush1.bf16.msra.mxu0 %v8964
        %8987 = vmatprep.subr.bf16.mxu0 0
        %8988 = vmatpush1.bf16.msra.mxu0 %v8965
        %8989 = vmatprep.subr.bf16.mxu0 0
        %8990 = vmatpush1.bf16.msra.mxu0 %v8966
        %8991 = vmatprep.subr.bf16.mxu0 0
        %8992 = vmatpush1.bf16.msra.mxu0 0
        %8993 = vmatprep.subr.bf16.mxu0 0
        %8994 = vmatpush1.bf16.msra.mxu0 0
        %8995 = vmatprep.subr.bf16.mxu0 0
        %8996 = vmatpush1.bf16.msra.mxu0 0
        %8997 = vmatprep.subr.bf16.mxu0 0
        %8998 = vmatpush1.bf16.msra.mxu0 0
        %8999 = vmatprep.subr.bf16.mxu0 0
        %9000 = vmatpush1.bf16.msra.mxu0 0
        %9001 = vmatprep.subr.bf16.mxu0 0
        %9002 = vmatpush1.bf16.msra.mxu0 0
        %9003 = vmatprep.subr.bf16.mxu0 0
        %9004 = vmatpush1.bf16.msra.mxu0 0
        %9005 = vmatprep.subr.bf16.mxu0 0
        %9006 = vmatpush1.bf16.msra.mxu0 0
        %9007 = vmatprep.mubr.bf16.mxu0 0
        %9008 = vmatmul.mubr.bf16.gmra.mrb[0].mxu0 %v8925
        %v9009 = vpop.f32.mrb[0].mxu0
        %v9010 = vadd.f32 0.0, %v9009
        %v9011 = vpop.f32.mrb[0].mxu0
        %v9012 = vpop.f32.mrb[0].mxu0
        %v9013 = vpop.f32.mrb[0].mxu0
        %9014 = vdwg.mxu0
        %v9015 = vadd.f32 %v8906, %v9010
        %s9016 = scalar_lea.vmem %s9, 192
        %v9017 = vld [vmem:[%s9016] sm:$0xf]
        %v9018 = vld [vmem:[%s9016 + $0x4] sm:$0xf]
        %v9019 = vld [vmem:[%s9016 + $0x8] sm:$0xf]
        %v9020 = vld [vmem:[%s9016 + $0xc] sm:$0xf]
        %v9021 = vld [vmem:[%s9016 + $0x10] sm:$0xf]
        %v9022 = vld [vmem:[%s9016 + $0x14] sm:$0xf]
        %v9023 = vld [vmem:[%s9016 + $0x18] sm:$0xf]
        %v9024 = vld [vmem:[%s9016 + $0x1c] sm:$0xf]
        %v9025 = vld [vmem:[%s9016 + $0x20] sm:$0xf]
        %v9026 = vld [vmem:[%s9016 + $0x24] sm:$0xf]
        %v9027 = vld [vmem:[%s9016 + $0x28] sm:$0xf]
        %v9028 = vld [vmem:[%s9016 + $0x2c] sm:$0xf]
        %v9029 = vld [vmem:[%s9016 + $0x30] sm:$0xf]
        %v9030 = vld [vmem:[%s9016 + $0x34] sm:$0xf]
        %v9031 = vld [vmem:[%s9016 + $0x38] sm:$0xf]
        %v9032 = vld [vmem:[%s9016 + $0x3c] sm:$0xf]
        %v9033 = vrot.slane %v8815, 1
        %v9051 = vunpack.c.l.b16 %v9017
        %v9052 = vunpack.c.l.b16 %v9018
        %v9053 = vunpack.c.l.b16 %v9019
        %v9054 = vunpack.c.l.b16 %v9020
        %v9055 = vunpack.c.l.b16 %v9021
        %v9056 = vunpack.c.l.b16 %v9022
        %v9057 = vunpack.c.l.b16 %v9023
        %v9058 = vunpack.c.l.b16 %v9024
        %v9059 = vunpack.c.l.b16 %v9025
        %v9060 = vunpack.c.l.b16 %v9026
        %v9061 = vunpack.c.l.b16 %v9027
        %v9062 = vunpack.c.l.b16 %v9028
        %v9063 = vunpack.c.l.b16 %v9029
        %v9064 = vunpack.c.l.b16 %v9030
        %v9065 = vunpack.c.l.b16 %v9031
        %v9066 = vunpack.c.l.b16 %v9032
        %v9067 = vpack.c.b16 %v9052, %v9051
        %v9068 = vpack.c.b16 %v9054, %v9053
        %v9069 = vpack.c.b16 %v9056, %v9055
        %v9070 = vpack.c.b16 %v9058, %v9057
        %v9071 = vpack.c.b16 %v9060, %v9059
        %v9072 = vpack.c.b16 %v9062, %v9061
        %v9073 = vpack.c.b16 %v9064, %v9063
        %v9074 = vpack.c.b16 %v9066, %v9065
        %9083 = vmatprep.subr.bf16.mxu0 0
        %9084 = vmatpush1.bf16.msra.mxu0 %v9067
        %9085 = vmatprep.subr.bf16.mxu0 0
        %9086 = vmatpush1.bf16.msra.mxu0 %v9068
        %9087 = vmatprep.subr.bf16.mxu0 0
        %9088 = vmatpush1.bf16.msra.mxu0 %v9069
        %9089 = vmatprep.subr.bf16.mxu0 0
        %9090 = vmatpush1.bf16.msra.mxu0 %v9070
        %9091 = vmatprep.subr.bf16.mxu0 0
        %9092 = vmatpush1.bf16.msra.mxu0 %v9071
        %9093 = vmatprep.subr.bf16.mxu0 0
        %9094 = vmatpush1.bf16.msra.mxu0 %v9072
        %9095 = vmatprep.subr.bf16.mxu0 0
        %9096 = vmatpush1.bf16.msra.mxu0 %v9073
        %9097 = vmatprep.subr.bf16.mxu0 0
        %9098 = vmatpush1.bf16.msra.mxu0 %v9074
        %9099 = vmatprep.subr.bf16.mxu0 0
        %9100 = vmatpush1.bf16.msra.mxu0 0
        %9101 = vmatprep.subr.bf16.mxu0 0
        %9102 = vmatpush1.bf16.msra.mxu0 0
        %9103 = vmatprep.subr.bf16.mxu0 0
        %9104 = vmatpush1.bf16.msra.mxu0 0
        %9105 = vmatprep.subr.bf16.mxu0 0
        %9106 = vmatpush1.bf16.msra.mxu0 0
        %9107 = vmatprep.subr.bf16.mxu0 0
        %9108 = vmatpush1.bf16.msra.mxu0 0
        %9109 = vmatprep.subr.bf16.mxu0 0
        %9110 = vmatpush1.bf16.msra.mxu0 0
        %9111 = vmatprep.subr.bf16.mxu0 0
        %9112 = vmatpush1.bf16.msra.mxu0 0
        %9113 = vmatprep.subr.bf16.mxu0 0
        %9114 = vmatpush1.bf16.msra.mxu0 0
        %9115 = vmatprep.mubr.bf16.mxu0 0
        %9116 = vmatmul.mubr.bf16.gmra.mrb[0].mxu0 %v9033
        %v9117 = vpop.f32.mrb[0].mxu0
        %v9118 = vadd.f32 0.0, %v9117
        %v9119 = vpop.f32.mrb[0].mxu0
        %v9120 = vpop.f32.mrb[0].mxu0
        %v9121 = vpop.f32.mrb[0].mxu0
        %9122 = vdwg.mxu0
        %v9123 = vadd.f32 %v9015, %v9118
        %9124 = vst [vmem:[%s378] sm:$0x1] %v9123
        %s9125 = sand.u32 %s269, 1
        %s9126 = scalar_lea.sflag [#allocation5], %s9125
        %s9127 = sand.u32 %s269, 1
        %s9128 = scalar_lea.vmem [#allocation4], %s9127
        // Predicated region
        $region65: #{conv_embedder_forward.1} parent=63 // pred_check
          %p9129 = pneg %p279
        $region66: #{conv_embedder_forward.1} parent=63 // pred_check_branch
          %9131 = sbr.rel (%p9129) target = $region68
        $region67: #{conv_embedder_forward.1} parent=63 // pred_region
          %s9133 = ssub.s32 16, 16
          %9134 = vsyncadd %s9126, %s9133
          %s9135 = smul.addr %s25, 16
          %s9136 = scalar_lea.hbm %s11, %s9135
          %s9138 = sshll.u32 %s9128, 4
          %s9139 = int_to_ptr.vmem [resolvable:$true] %s9138
          %9141 = dma.vmem_to_hbm [thread:$0]  %s9139, 16, %s9136, %s9126
        $region68: #{conv_embedder_forward.1} parent=63 // pred_fallthru
          _
      $region64: #{conv_embedder_forward.1} parent=5 // pred_fallthru
        _
      %p9142 = scmp.le.s32.totalorder 2, %s20
      // Predicated region
      $region69: #{conv_embedder_forward.1} parent=5 // pred_check
        %p9143 = pneg %p9142
      $region70: #{conv_embedder_forward.1} parent=5 // pred_check_branch
        %9145 = sbr.rel (%p9143) target = $region72
      $region71: #{conv_embedder_forward.1} parent=5 // pred_region
        %s9146 = ssub.s32 %s20, 2
        // Predicated region
        $region73: #{conv_embedder_forward.1} parent=71 // pred_check
          %p9147 = pneg %p285
        $region74: #{conv_embedder_forward.1} parent=71 // pred_check_branch
          %9149 = sbr.rel (%p9147) target = $region76
        $region75: #{conv_embedder_forward.1} parent=71 // pred_region
          %s9150 = sand.u32 %s270, 1
          %s9151 = scalar_lea.sflag [#allocation5], %s9150
          %s9152 = sand.u32 %s270, 1
          %s9153 = scalar_lea.vmem [#allocation4], %s9152
          %9154 = dma.done %s9151, 16
        $region76: #{conv_embedder_forward.1} parent=71 // pred_fallthru
          _
      $region72: #{conv_embedder_forward.1} parent=5 // pred_fallthru
        _
    $region6: #{conv_embedder_forward.1} parent=1 // loop_footer
      %s24 = sadd.s32 1, %s20
    $region7: #{conv_embedder_forward.1} parent=1 // loop_footer_branch
      %19 = sbr.rel target = $region3
    $region8: #{conv_embedder_forward.1} parent=1 // loop_exit
      _
    %9155 = vsyncpa [#allocation5], 1
    %s9156 = scalar_lea.sflag [#allocation5], 1
    %9157 = vsyncpa %s9156, 1

</llo_original>
